<compile_context>
chip_gen: v5e
topology: v5e:2x2
jax: 0.10.0
libtpu: 0.0.40
codegen_flags: <defaults>
</compile_context>

<pallas_src>
import math

import jax
import jax.numpy as jnp
from jax import lax
from jax.experimental import pallas as pl
from jax.experimental.pallas import tpu as pltpu

# ---- Mamba hyper-parameters (MambaLayer(dim, d_state=16, d_conv=4, expand=2)) ----
DIM = 8                       # d_model (= channel dim C of the 3-D volume)
D_STATE = 16
D_CONV = 4
EXPAND = 2
D_INNER = EXPAND * DIM        # 16
DT_RANK = max(1, math.ceil(DIM / 16))   # 1
DN = D_INNER * D_STATE        # 256  (flattened (d_inner, d_state) state)
LN_EPS = 1e-5

NB = 8                        # batch elements packed per grid step (fills the 8 sublanes)
SCAN_UNROLL = 8               # tokens per fori_loop iteration (Python-unrolled; sweep 8/16)
PAD_ROWS = (D_CONV - 1) * NB  # rows carried across chunks for the causal conv (3 tokens)
MAX_CHUNK_TOKENS = 256        # tokens per grid step (L-tile); ~20 MiB live VMEM at 256

PARAM_ORDER = [
    "ln_w", "ln_b", "w_in", "conv_w", "conv_b",
    "w_dtc", "b_dt", "w_bcf", "w_ea", "E", "D", "w_out", "G",
]


def _round_up(a, b):
    return (a + b - 1) // b * b


def _silu(v):
    # sign-stable logistic; divide goes to the EUP via approx reciprocal.
    e = jnp.exp(-jnp.abs(v))
    r = pl.reciprocal(1.0 + e, approx=True)
    return v * jnp.where(v >= 0.0, r, e * r)


def _softplus(v):
    # numerically safe softplus matching F.softplus(beta=1, threshold=20)
    sp = jnp.maximum(v, 0.0) + jnp.log(1.0 + jnp.exp(-jnp.abs(v)))
    return jnp.where(v > 20.0, v, sp)


def mamba_layer_kernel(
    x_ref,          # (1, ROWS, DIM)   token-major rows within the chunk: row = t*NB + b
    ln_w_ref,       # (1, DIM)
    ln_b_ref,       # (1, DIM)
    w_in_ref,       # (DIM, 2*D_INNER)  fused in_proj (x | z)
    conv_w_ref,     # (D_CONV, D_INNER)
    conv_b_ref,     # (1, D_INNER)
    w_dtc_ref,      # (D_INNER, D_INNER)  dt_proj folded into x_proj
    b_dt_ref,       # (1, D_INNER)
    w_bcf_ref,      # (D_INNER, 2*DN)     x_proj(B)/x_proj(C) with state expansion folded
    w_ea_ref,       # (D_INNER, DN)       E * A  (A = -exp(A_log), flattened d*S+s)
    E_ref,          # (D_INNER, DN)       channel->flat one-hot expansion
    D_ref,          # (1, D_INNER)
    w_out_ref,      # (D_INNER, DIM)
    G_ref,          # (DN, D_INNER)       flat->channel gather (= E.T)
    o_ref,          # (1, ROWS, DIM)
    h_s,            # (NB, DN)            persistent SSM state carry
    ccarry_s,       # (PAD_ROWS, D_INNER) persistent conv tail carry (last 3 tokens of xin)
    dA_s,           # (ROWS, DN)
    dBu_s,          # (ROWS, DN)          overwritten with h during the scan
    cf_s,           # (ROWS, DN)
    xpad_s,         # (PAD_ROWS + ROWS, D_INNER)
):
    ROWS = x_ref.shape[1]
    l = pl.program_id(1)

    # ---- first chunk of each batch group: reset the carried state ----
    @pl.when(l == 0)
    def _():
        h_s[...] = jnp.zeros_like(h_s)
        ccarry_s[...] = jnp.zeros_like(ccarry_s)

    x = x_ref[0]                                              # (ROWS, DIM)

    # ---- LayerNorm over the channel dim (biased variance, eps=1e-5) ----
    # (All-zero padded batch rows give var=0 -> xn == ln_b; finite, causally inert,
    #  and sliced off in the wrapper.)
    mu = jnp.mean(x, axis=-1, keepdims=True)
    xc = x - mu
    var = jnp.mean(xc * xc, axis=-1, keepdims=True)
    xn = xc * lax.rsqrt(var + LN_EPS) * ln_w_ref[...] + ln_b_ref[...]

    # ---- fused in_proj (Linear(dim, 2*d_inner, bias=False)); split into x / z ----
    xz = jnp.dot(xn, w_in_ref[...], preferred_element_type=jnp.float32)  # (ROWS, 32)
    xin = xz[:, :D_INNER]
    z = xz[:, D_INNER:]

    # ---- causal depthwise conv1d: shifted adds (1 token shift == NB rows),
    #      with the previous chunk's last 3 tokens carried in ccarry_s ----
    xpad_s[0:PAD_ROWS, :] = ccarry_s[...]
    xpad_s[pl.ds(PAD_ROWS, ROWS), :] = xin
    ccarry_s[...] = xin[ROWS - PAD_ROWS:, :]                  # carry for the next chunk
    conv = conv_b_ref[...] + xin * conv_w_ref[D_CONV - 1:D_CONV, :]      # current-token tap
    for k in range(D_CONV - 1):                               # tap at shift (D_CONV-1-k)
        conv = conv + xpad_s[pl.ds(k * NB, ROWS), :] * conv_w_ref[k:k + 1, :]
    u = _silu(conv)                                           # (ROWS, D_INNER)

    # ---- x_proj (+ folded dt_proj, + folded B/C state expansion), softplus ----
    dt = _softplus(
        jnp.dot(u, w_dtc_ref[...], preferred_element_type=jnp.float32) + b_dt_ref[...])
    bcf = jnp.dot(u, w_bcf_ref[...], preferred_element_type=jnp.float32)   # (ROWS, 2*DN)
    cf_s[...] = bcf[:, DN:]                                   # C expanded over (d, s)

    # ---- scan coefficients, flattened over (d_inner, d_state) -> DN lanes ----
    dA_s[...] = jnp.exp(jnp.dot(dt, w_ea_ref[...], preferred_element_type=jnp.float32))
    dBu_s[...] = jnp.dot(dt * u, E_ref[...],
                         preferred_element_type=jnp.float32) * bcf[:, :DN]

    # ---- selective scan: NB batches on the sublanes, h carried across chunks.
    #      Per token: 2 slab loads + mul/add + 1 slab store (h*C is deferred). ----
    n_sub = ROWS // (SCAN_UNROLL * NB)

    def sub_body(c, h):                                       # h: (NB, DN) float32
        base = pl.multiple_of(c * (SCAN_UNROLL * NB), SCAN_UNROLL * NB)
        for j in range(SCAN_UNROLL):
            idx = pl.multiple_of(base + j * NB, NB)
            h = dA_s[pl.ds(idx, NB), :] * h + dBu_s[pl.ds(idx, NB), :]
            dBu_s[pl.ds(idx, NB), :] = h                      # consumed dBu slot is dead
        return h

    h_s[...] = lax.fori_loop(0, n_sub, sub_body, h_s[...])

    # ---- deferred h*C, contract over the state dim, skip, gate, out_proj ----
    y = jnp.dot(dBu_s[...] * cf_s[...], G_ref[...],
                preferred_element_type=jnp.float32) + D_ref[...] * u
    y = y * _silu(z)
    o_ref[0] = jnp.dot(y, w_out_ref[...],
                       preferred_element_type=jnp.float32).astype(o_ref.dtype)


def init_params(key):
    """Deterministic synthetic parameters matching the PyTorch module's shapes,
    plus the exact offline linear folds used by the kernel."""
    ks = jax.random.split(key, 8)

    def w(k, shape, scale=0.1):
        return scale * jax.random.normal(k, shape, dtype=jnp.float32)

    # PyTorch parameter shapes (out_features, in_features); transposed for x @ W.
    w_in = w(ks[0], (2 * D_INNER, DIM))                 # in_proj.weight
    conv_w = w(ks[1], (D_INNER, 1, D_CONV))             # conv1d.weight (depthwise)
    conv_b = w(ks[2], (D_INNER,))                       # conv1d.bias
    w_xp = w(ks[3], (DT_RANK + 2 * D_STATE, D_INNER))   # x_proj.weight
    w_dt = w(ks[4], (D_INNER, DT_RANK))                 # dt_proj.weight
    b_dt = w(ks[5], (D_INNER,))                         # dt_proj.bias
    w_out = w(ks[6], (DIM, D_INNER))                    # out_proj.weight
    A_log = jnp.log(jnp.broadcast_to(
        jnp.arange(1, D_STATE + 1, dtype=jnp.float32), (D_INNER, D_STATE)))
    A = -jnp.exp(A_log)                                 # (D_INNER, D_STATE)
    D_param = jnp.ones((D_INNER,), jnp.float32)

    eye_di = jnp.eye(D_INNER, dtype=jnp.float32)
    eye_ds = jnp.eye(D_STATE, dtype=jnp.float32)
    E = jnp.repeat(eye_di, D_STATE, axis=1)             # (D_INNER, DN): E[d, d*S+s] = 1
    F = jnp.tile(eye_ds, (1, D_INNER))                  # (D_STATE, DN): F[s, d*S+s] = 1

    w_xp_dt = w_xp[:DT_RANK]                            # (DT_RANK, D_INNER)
    w_xp_B = w_xp[DT_RANK:DT_RANK + D_STATE]            # (D_STATE, D_INNER)
    w_xp_C = w_xp[DT_RANK + D_STATE:]                   # (D_STATE, D_INNER)

    # exact offline folds (pure linear algebra, no semantic change):
    w_dtc = w_xp_dt.T @ w_dt.T                          # (16, 16): dt_proj ∘ x_proj_dt
    w_bcf = jnp.concatenate([w_xp_B.T @ F, w_xp_C.T @ F], axis=1)   # (16, 512)
    w_ea = E * A.reshape(1, DN)                         # (16, 256): dt @ w_ea == dt_d * A_{d,s}

    return {
        "ln_w": jnp.ones((1, DIM), jnp.float32),
        "ln_b": jnp.zeros((1, DIM), jnp.float32),
        "w_in": w_in.T,                                 # (DIM, 2*D_INNER): [x-part | z-part]
        "conv_w": conv_w[:, 0, :].T,                    # (D_CONV, D_INNER)
        "conv_b": conv_b.reshape(1, D_INNER),
        "w_dtc": w_dtc,
        "b_dt": b_dt.reshape(1, D_INNER),
        "w_bcf": w_bcf,
        "w_ea": w_ea,
        "E": E,
        "D": D_param.reshape(1, D_INNER),
        "w_out": w_out.T,                               # (D_INNER, DIM)
        "G": E.T,                                       # (DN, D_INNER)
    }


def mamba_layer_forward(x, params, *, max_chunk_tokens=MAX_CHUNK_TOKENS):
    """x: (B, C, D, H, W) float32 -> (B, C, D, H, W) float32 (scan_type='z' path)."""
    x = x.astype(jnp.float32)
    B, C, Dz, H, W = x.shape
    assert C == DIM
    L = Dz * H * W

    # flatten_for_scan(x, 'z'):  (B, C, D, H, W) -> (B, L, C)
    x_flat = jnp.transpose(x.reshape(B, C, L), (0, 2, 1))

    # L-tile size (tokens per grid step); pad L to a multiple of it and B to a
    # multiple of NB.  Causal scan => padded tail tokens never affect valid outputs;
    # padded batch rows are all-zero (LayerNorm gives finite ln_b values) and are
    # discarded after the call.
    chunk_l = min(max_chunk_tokens, _round_up(L, SCAN_UNROLL))
    Lp = _round_up(L, chunk_l)
    Bp = _round_up(B, NB)
    x_pad = jnp.pad(x_flat, ((0, Bp - B), (0, Lp - L), (0, 0)))

    GB = Bp // NB
    LNB = Lp * NB
    ROWS = chunk_l * NB
    NL = Lp // chunk_l
    # Token-major packing: row r = t*NB + b, so each scan step is a dense (NB, DN) slab
    # and each L-chunk is a contiguous ROWS-row block.
    x_tm = x_pad.reshape(GB, NB, Lp, C).transpose(0, 2, 1, 3).reshape(GB, LNB, C)

    param_vals = [params[k] for k in PARAM_ORDER]

    in_specs = [pl.BlockSpec((1, ROWS, C), lambda g, l: (g, l, 0))]
    in_specs += [pl.BlockSpec(p.shape, lambda g, l: (0, 0)) for p in param_vals]
    out_spec = pl.BlockSpec((1, ROWS, C), lambda g, l: (g, l, 0))

    scratch = [
        pltpu.VMEM((NB, DN), jnp.float32),                     # h carry (persists across l)
        pltpu.VMEM((PAD_ROWS, D_INNER), jnp.float32),          # conv tail carry
        pltpu.VMEM((ROWS, DN), jnp.float32),                   # dA
        pltpu.VMEM((ROWS, DN), jnp.float32),                   # dB*u  (overwritten with h)
        pltpu.VMEM((ROWS, DN), jnp.float32),                   # C (state-expanded)
        pltpu.VMEM((PAD_ROWS + ROWS, D_INNER), jnp.float32),   # conv shift buffer
    ]

    y_tm = pl.pallas_call(
        mamba_layer_kernel,
        out_shape=jax.ShapeDtypeStruct((GB, LNB, C), jnp.float32),
        grid_spec=pltpu.PrefetchScalarGridSpec(
            num_scalar_prefetch=0,
            grid=(GB, NL),
            in_specs=in_specs,
            out_specs=out_spec,
            scratch_shapes=scratch,
        ),
        compiler_params=pltpu.CompilerParams(
            dimension_semantics=("parallel", "arbitrary"),
            # ~20 MiB live at chunk_l=256; keep headroom under v7x's 64 MiB physical,
            # and raise above the v5e 16 MiB scoped default.
            vmem_limit_bytes=48 * 1024 * 1024,
        ),
    )(x_tm, *param_vals)

    # Unpack token-major layout and drop the padding.
    y_flat = (y_tm.reshape(GB, Lp, NB, C).transpose(0, 2, 1, 3)
              .reshape(Bp, Lp, C)[:B, :L])

    # out = x_mamba.transpose(-1, -2).reshape(B, C, D, H, W)
    out = jnp.transpose(y_flat, (0, 2, 1)).reshape(B, C, Dz, H, W)
    # Faithfully reproduce the reference module's extra `unpermute(out)` on the
    # already-reshaped tensor: transpose last two dims then row-major reshape.
    out = jnp.swapaxes(out, -1, -2).reshape(B, C, Dz, H, W)
    return out


def mamba_layer_reference(x, params):
    """Pure-JAX (non-Pallas) reference using the same (folded) parameters."""
    x = x.astype(jnp.float32)
    B, C, Dz, H, W = x.shape
    L = Dz * H * W
    xf = jnp.transpose(x.reshape(B, C, L), (0, 2, 1))          # (B, L, C)

    mu = jnp.mean(xf, -1, keepdims=True)
    var = jnp.mean((xf - mu) ** 2, -1, keepdims=True)
    xn = (xf - mu) * lax.rsqrt(var + LN_EPS) * params["ln_w"][0] + params["ln_b"][0]

    xin = xn @ params["w_in"][:, :D_INNER]
    z = xn @ params["w_in"][:, D_INNER:]

    conv = params["conv_b"][0] + xin * params["conv_w"][D_CONV - 1]
    for k in range(D_CONV - 1):
        s = D_CONV - 1 - k
        conv = conv + jnp.pad(xin, ((0, 0), (s, 0), (0, 0)))[:, :L, :] * params["conv_w"][k]
    u = conv * jax.nn.sigmoid(conv)

    dt = jax.nn.softplus(u @ params["w_dtc"] + params["b_dt"][0])
    bcf = u @ params["w_bcf"]
    BF, CF = bcf[..., :DN], bcf[..., DN:]
    dA = jnp.exp(dt @ params["w_ea"])
    dBu = (dt * u) @ params["E"] * BF

    def step(h, t):
        h = dA[:, t] * h + dBu[:, t]
        return h, h * CF[:, t]

    _, hc = lax.scan(step, jnp.zeros((B, DN), jnp.float32), jnp.arange(L))
    hc = jnp.transpose(hc, (1, 0, 2))                           # (B, L, DN)

    y = hc @ params["G"] + params["D"][0] * u
    y = y * (z * jax.nn.sigmoid(z))
    out = y @ params["w_out"]                                   # (B, L, C)

    out = jnp.transpose(out, (0, 2, 1)).reshape(B, C, Dz, H, W)
    out = jnp.swapaxes(out, -1, -2).reshape(B, C, Dz, H, W)
    return out


if __name__ == "__main__":
    key = jax.random.PRNGKey(0)
    kx, kp = jax.random.split(key)
    B, C, Dz, H, W = 2, DIM, 4, 4, 4
    x = jax.random.normal(kx, (B, C, Dz, H, W), dtype=jnp.float32)
    params = init_params(kp)

    out = mamba_layer_forward(x, params)
    out = jax.block_until_ready(out)
    assert out.shape == (B, C, Dz, H, W)
    assert out.dtype == jnp.float32
    assert bool(jnp.all(jnp.isfinite(out)))

    ref = jax.block_until_ready(mamba_layer_reference(x, params))
    max_err = float(jnp.max(jnp.abs(out - ref)))
    scale = float(jnp.max(jnp.abs(ref))) + 1e-12
    # tolerance accounts for the approx-reciprocal EUP silu in the kernel
    assert max_err / scale < 1e-2, f"kernel/reference mismatch: rel_err={max_err / scale:.3e}"
    print("KERNEL_OK")
</pallas_src>

<mosaic_0001>
module attributes {stable_mosaic.version = 11 : i64} {
  func.func @mamba_layer_kernel(%arg0: i32, %arg1: i32, %arg2: memref<1x512x8xf32, #tpu.memory_space<vmem>>, %arg3: memref<1x8xf32, #tpu.memory_space<vmem>>, %arg4: memref<1x8xf32, #tpu.memory_space<vmem>>, %arg5: memref<8x32xf32, #tpu.memory_space<vmem>>, %arg6: memref<4x16xf32, #tpu.memory_space<vmem>>, %arg7: memref<1x16xf32, #tpu.memory_space<vmem>>, %arg8: memref<16x16xf32, #tpu.memory_space<vmem>>, %arg9: memref<1x16xf32, #tpu.memory_space<vmem>>, %arg10: memref<16x512xf32, #tpu.memory_space<vmem>>, %arg11: memref<16x256xf32, #tpu.memory_space<vmem>>, %arg12: memref<16x256xf32, #tpu.memory_space<vmem>>, %arg13: memref<1x16xf32, #tpu.memory_space<vmem>>, %arg14: memref<16x8xf32, #tpu.memory_space<vmem>>, %arg15: memref<256x16xf32, #tpu.memory_space<vmem>>, %arg16: memref<1x512x8xf32, #tpu.memory_space<vmem>>, %arg17: memref<8x256xf32, #tpu.memory_space<vmem>>, %arg18: memref<24x16xf32, #tpu.memory_space<vmem>>, %arg19: memref<512x256xf32, #tpu.memory_space<vmem>>, %arg20: memref<512x256xf32, #tpu.memory_space<vmem>>, %arg21: memref<512x256xf32, #tpu.memory_space<vmem>>, %arg22: memref<536x16xf32, #tpu.memory_space<vmem>>) attributes {dimension_semantics = [#tpu.dimension_semantics<parallel>, #tpu.dimension_semantics<arbitrary>], iteration_bounds = array<i64: 1, 1>, scalar_prefetch = 0 : i64, scratch_operands = 6 : i64, tpu.core_type = #tpu.core_type<tc>, window_params = [{transform_indices = @transform_0, window_bounds = array<i64: 1, 512, 8>}, {pipeline_mode = #tpu.pipeline_mode<synchronous>, transform_indices = @transform_1, window_bounds = array<i64: 1, 8>}, {pipeline_mode = #tpu.pipeline_mode<synchronous>, transform_indices = @transform_2, window_bounds = array<i64: 1, 8>}, {pipeline_mode = #tpu.pipeline_mode<synchronous>, transform_indices = @transform_3, window_bounds = array<i64: 8, 32>}, {pipeline_mode = #tpu.pipeline_mode<synchronous>, transform_indices = @transform_4, window_bounds = array<i64: 4, 16>}, {pipeline_mode = #tpu.pipeline_mode<synchronous>, transform_indices = @transform_5, window_bounds = array<i64: 1, 16>}, {pipeline_mode = #tpu.pipeline_mode<synchronous>, transform_indices = @transform_6, window_bounds = array<i64: 16, 16>}, {pipeline_mode = #tpu.pipeline_mode<synchronous>, transform_indices = @transform_7, window_bounds = array<i64: 1, 16>}, {pipeline_mode = #tpu.pipeline_mode<synchronous>, transform_indices = @transform_8, window_bounds = array<i64: 16, 512>}, {pipeline_mode = #tpu.pipeline_mode<synchronous>, transform_indices = @transform_9, window_bounds = array<i64: 16, 256>}, {pipeline_mode = #tpu.pipeline_mode<synchronous>, transform_indices = @transform_10, window_bounds = array<i64: 16, 256>}, {pipeline_mode = #tpu.pipeline_mode<synchronous>, transform_indices = @transform_11, window_bounds = array<i64: 1, 16>}, {pipeline_mode = #tpu.pipeline_mode<synchronous>, transform_indices = @transform_12, window_bounds = array<i64: 16, 8>}, {pipeline_mode = #tpu.pipeline_mode<synchronous>, transform_indices = @transform_13, window_bounds = array<i64: 256, 16>}, {transform_indices = @transform_14, window_bounds = array<i64: 1, 512, 8>}]} {
    %c0_i32 = arith.constant 0 : i32
    %0 = arith.cmpi eq, %arg1, %c0_i32 : i32
    %1 = arith.extui %0 : i1 to i32
    %c0_i32_0 = arith.constant 0 : i32
    %2 = arith.cmpi ne, %1, %c0_i32_0 : i32
    scf.if %2 {
      %cst_83 = arith.constant 0.000000e+00 : f32
      %132 = vector.broadcast %cst_83 : f32 to vector<8x256xf32>
      %c0_84 = arith.constant 0 : index
      %c0_85 = arith.constant 0 : index
      %133 = vector.load %arg17[%c0_84, %c0_85] : memref<8x256xf32, #tpu.memory_space<vmem>>, vector<8x256xf32>
      tpu.vector_store %arg17[%c0_84, %c0_85], %132 {strides = array<i32>} : memref<8x256xf32, #tpu.memory_space<vmem>>, vector<8x256xf32>,
      %cst_86 = arith.constant 0.000000e+00 : f32
      %134 = vector.broadcast %cst_86 : f32 to vector<24x16xf32>
      %c0_87 = arith.constant 0 : index
      %c0_88 = arith.constant 0 : index
      %135 = vector.load %arg18[%c0_87, %c0_88] : memref<24x16xf32, #tpu.memory_space<vmem>>, vector<24x16xf32>
      tpu.vector_store %arg18[%c0_87, %c0_88], %134 {strides = array<i32>} : memref<24x16xf32, #tpu.memory_space<vmem>>, vector<24x16xf32>,
    } else {
    }
    %c0 = arith.constant 0 : index
    %c0_1 = arith.constant 0 : index
    %c0_2 = arith.constant 0 : index
    %3 = vector.load %arg2[%c0, %c0_1, %c0_2] : memref<1x512x8xf32, #tpu.memory_space<vmem>>, vector<1x512x8xf32>
    %4 = vector.shape_cast %3 : vector<1x512x8xf32> to vector<512x8xf32>
    %cst = arith.constant dense<0.000000e+00> : vector<512xf32>
    %5 = vector.multi_reduction <add>, %4, %cst [1] : vector<512x8xf32> to vector<512xf32>
    %6 = vector.shape_cast %5 : vector<512xf32> to vector<512x1xf32>
    %cst_3 = arith.constant 8.000000e+00 : f32
    %7 = vector.broadcast %cst_3 : f32 to vector<512x1xf32>
    %8 = arith.divf %6, %7 : vector<512x1xf32>
    %9 = vector.broadcast %8 : vector<512x1xf32> to vector<512x8xf32>
    %10 = arith.subf %4, %9 : vector<512x8xf32>
    %11 = arith.mulf %10, %10 : vector<512x8xf32>
    %cst_4 = arith.constant dense<0.000000e+00> : vector<512xf32>
    %12 = vector.multi_reduction <add>, %11, %cst_4 [1] : vector<512x8xf32> to vector<512xf32>
    %13 = vector.shape_cast %12 : vector<512xf32> to vector<512x1xf32>
    %cst_5 = arith.constant 8.000000e+00 : f32
    %14 = vector.broadcast %cst_5 : f32 to vector<512x1xf32>
    %15 = arith.divf %13, %14 : vector<512x1xf32>
    %cst_6 = arith.constant 9.99999974E-6 : f32
    %16 = vector.broadcast %cst_6 : f32 to vector<512x1xf32>
    %17 = arith.addf %15, %16 : vector<512x1xf32>
    %18 = math.rsqrt %17 : vector<512x1xf32>
    %19 = vector.broadcast %18 : vector<512x1xf32> to vector<512x8xf32>
    %20 = arith.mulf %10, %19 : vector<512x8xf32>
    %c0_7 = arith.constant 0 : index
    %c0_8 = arith.constant 0 : index
    %21 = vector.load %arg3[%c0_7, %c0_8] : memref<1x8xf32, #tpu.memory_space<vmem>>, vector<1x8xf32>
    %22 = vector.broadcast %21 : vector<1x8xf32> to vector<512x8xf32>
    %23 = arith.mulf %20, %22 : vector<512x8xf32>
    %c0_9 = arith.constant 0 : index
    %c0_10 = arith.constant 0 : index
    %24 = vector.load %arg4[%c0_9, %c0_10] : memref<1x8xf32, #tpu.memory_space<vmem>>, vector<1x8xf32>
    %25 = vector.broadcast %24 : vector<1x8xf32> to vector<512x8xf32>
    %26 = arith.addf %23, %25 : vector<512x8xf32>
    %c0_11 = arith.constant 0 : index
    %c0_12 = arith.constant 0 : index
    %27 = vector.load %arg5[%c0_11, %c0_12] : memref<8x32xf32, #tpu.memory_space<vmem>>, vector<8x32xf32>
    %cst_13 = arith.constant dense<0.000000e+00> : vector<512x32xf32>
    %28 = tpu.matmul %26, %27, %cst_13 {dimension_numbers = #tpu.dot_dimension_numbers<[1], [0], [0], [1], [0, 0, 1, 1], [], []>} : vector<512x8xf32>, vector<8x32xf32>, vector<512x32xf32> -> vector<512x32xf32>
    %29 = vector.extract_strided_slice %28 {offsets = [0, 0], sizes = [512, 16], strides = [1, 1]} : vector<512x32xf32> to vector<512x16xf32>
    %30 = vector.extract_strided_slice %28 {offsets = [0, 16], sizes = [512, 16], strides = [1, 1]} : vector<512x32xf32> to vector<512x16xf32>
    %c0_14 = arith.constant 0 : index
    %c0_15 = arith.constant 0 : index
    %31 = vector.load %arg18[%c0_14, %c0_15] : memref<24x16xf32, #tpu.memory_space<vmem>>, vector<24x16xf32>
    %c0_16 = arith.constant 0 : index
    %c0_17 = arith.constant 0 : index
    %32 = vector.load %arg22[%c0_16, %c0_17] : memref<536x16xf32, #tpu.memory_space<vmem>>, vector<24x16xf32>
    tpu.vector_store %arg22[%c0_16, %c0_17], %31 {strides = array<i32>} : memref<536x16xf32, #tpu.memory_space<vmem>>, vector<24x16xf32>,
    %c24 = arith.constant 24 : index
    %c0_18 = arith.constant 0 : index
    %33 = vector.load %arg22[%c24, %c0_18] : memref<536x16xf32, #tpu.memory_space<vmem>>, vector<512x16xf32>
    tpu.vector_store %arg22[%c24, %c0_18], %29 {strides = array<i32>} : memref<536x16xf32, #tpu.memory_space<vmem>>, vector<512x16xf32>,
    %34 = vector.extract_strided_slice %29 {offsets = [488, 0], sizes = [24, 16], strides = [1, 1]} : vector<512x16xf32> to vector<24x16xf32>
    %c0_19 = arith.constant 0 : index
    %c0_20 = arith.constant 0 : index
    %35 = vector.load %arg18[%c0_19, %c0_20] : memref<24x16xf32, #tpu.memory_space<vmem>>, vector<24x16xf32>
    tpu.vector_store %arg18[%c0_19, %c0_20], %34 {strides = array<i32>} : memref<24x16xf32, #tpu.memory_space<vmem>>, vector<24x16xf32>,
    %c0_21 = arith.constant 0 : index
    %c0_22 = arith.constant 0 : index
    %36 = vector.load %arg7[%c0_21, %c0_22] : memref<1x16xf32, #tpu.memory_space<vmem>>, vector<1x16xf32>
    %c3 = arith.constant 3 : index
    %c0_23 = arith.constant 0 : index
    %37 = vector.load %arg6[%c3, %c0_23] : memref<4x16xf32, #tpu.memory_space<vmem>>, vector<1x16xf32>
    %38 = vector.broadcast %37 : vector<1x16xf32> to vector<512x16xf32>
    %39 = arith.mulf %29, %38 : vector<512x16xf32>
    %40 = vector.broadcast %36 : vector<1x16xf32> to vector<512x16xf32>
    %41 = arith.addf %40, %39 : vector<512x16xf32>
    %c0_24 = arith.constant 0 : index
    %c0_25 = arith.constant 0 : index
    %42 = vector.load %arg22[%c0_24, %c0_25] : memref<536x16xf32, #tpu.memory_space<vmem>>, vector<512x16xf32>
    %c0_26 = arith.constant 0 : index
    %c0_27 = arith.constant 0 : index
    %43 = vector.load %arg6[%c0_26, %c0_27] : memref<4x16xf32, #tpu.memory_space<vmem>>, vector<1x16xf32>
    %44 = vector.broadcast %43 : vector<1x16xf32> to vector<512x16xf32>
    %45 = arith.mulf %42, %44 : vector<512x16xf32>
    %46 = arith.addf %41, %45 : vector<512x16xf32>
    %c8 = arith.constant 8 : index
    %c0_28 = arith.constant 0 : index
    %47 = vector.load %arg22[%c8, %c0_28] : memref<536x16xf32, #tpu.memory_space<vmem>>, vector<512x16xf32>
    %c1 = arith.constant 1 : index
    %c0_29 = arith.constant 0 : index
    %48 = vector.load %arg6[%c1, %c0_29] : memref<4x16xf32, #tpu.memory_space<vmem>>, vector<1x16xf32>
    %49 = vector.broadcast %48 : vector<1x16xf32> to vector<512x16xf32>
    %50 = arith.mulf %47, %49 : vector<512x16xf32>
    %51 = arith.addf %46, %50 : vector<512x16xf32>
    %c16 = arith.constant 16 : index
    %c0_30 = arith.constant 0 : index
    %52 = vector.load %arg22[%c16, %c0_30] : memref<536x16xf32, #tpu.memory_space<vmem>>, vector<512x16xf32>
    %c2 = arith.constant 2 : index
    %c0_31 = arith.constant 0 : index
    %53 = vector.load %arg6[%c2, %c0_31] : memref<4x16xf32, #tpu.memory_space<vmem>>, vector<1x16xf32>
    %54 = vector.broadcast %53 : vector<1x16xf32> to vector<512x16xf32>
    %55 = arith.mulf %52, %54 : vector<512x16xf32>
    %56 = arith.addf %51, %55 : vector<512x16xf32>
    %57 = math.absf %56 : vector<512x16xf32>
    %cst_32 = arith.constant 0.000000e+00 : f32
    %58 = vector.broadcast %cst_32 : f32 to vector<512x16xf32>
    %59 = arith.subf %58, %57 : vector<512x16xf32>
    %60 = math.exp %59 : vector<512x16xf32>
    %cst_33 = arith.constant 1.000000e+00 : f32
    %61 = vector.broadcast %cst_33 : f32 to vector<512x16xf32>
    %62 = arith.addf %61, %60 : vector<512x16xf32>
    %63 = tpu.reciprocal %62 {approx = true} : vector<512x16xf32> -> vector<512x16xf32>
    %cst_34 = arith.constant 0.000000e+00 : f32
    %64 = vector.broadcast %cst_34 : f32 to vector<512x16xf32>
    %65 = arith.cmpf oge, %56, %64 : vector<512x16xf32>
    %66 = arith.mulf %60, %63 : vector<512x16xf32>
    %67 = arith.select %65, %63, %66 : vector<512x16xi1>, vector<512x16xf32>
    %68 = arith.mulf %56, %67 : vector<512x16xf32>
    %c0_35 = arith.constant 0 : index
    %c0_36 = arith.constant 0 : index
    %69 = vector.load %arg8[%c0_35, %c0_36] : memref<16x16xf32, #tpu.memory_space<vmem>>, vector<16x16xf32>
    %cst_37 = arith.constant dense<0.000000e+00> : vector<512x16xf32>
    %70 = tpu.matmul %68, %69, %cst_37 {dimension_numbers = #tpu.dot_dimension_numbers<[1], [0], [0], [1], [0, 0, 1, 1], [], []>} : vector<512x16xf32>, vector<16x16xf32>, vector<512x16xf32> -> vector<512x16xf32>
    %c0_38 = arith.constant 0 : index
    %c0_39 = arith.constant 0 : index
    %71 = vector.load %arg9[%c0_38, %c0_39] : memref<1x16xf32, #tpu.memory_space<vmem>>, vector<1x16xf32>
    %72 = vector.broadcast %71 : vector<1x16xf32> to vector<512x16xf32>
    %73 = arith.addf %70, %72 : vector<512x16xf32>
    %cst_40 = arith.constant 0.000000e+00 : f32
    %74 = vector.broadcast %cst_40 : f32 to vector<512x16xf32>
    %75 = arith.maximumf %73, %74 : vector<512x16xf32>
    %76 = math.absf %73 : vector<512x16xf32>
    %cst_41 = arith.constant 0.000000e+00 : f32
    %77 = vector.broadcast %cst_41 : f32 to vector<512x16xf32>
    %78 = arith.subf %77, %76 : vector<512x16xf32>
    %79 = math.exp %78 : vector<512x16xf32>
    %cst_42 = arith.constant 1.000000e+00 : f32
    %80 = vector.broadcast %cst_42 : f32 to vector<512x16xf32>
    %81 = arith.addf %80, %79 : vector<512x16xf32>
    %82 = math.log %81 : vector<512x16xf32>
    %83 = arith.addf %75, %82 : vector<512x16xf32>
    %cst_43 = arith.constant 2.000000e+01 : f32
    %84 = vector.broadcast %cst_43 : f32 to vector<512x16xf32>
    %85 = arith.cmpf ogt, %73, %84 : vector<512x16xf32>
    %86 = arith.select %85, %73, %83 : vector<512x16xi1>, vector<512x16xf32>
    %c0_44 = arith.constant 0 : index
    %c0_45 = arith.constant 0 : index
    %87 = vector.load %arg10[%c0_44, %c0_45] : memref<16x512xf32, #tpu.memory_space<vmem>>, vector<16x512xf32>
    %cst_46 = arith.constant dense<0.000000e+00> : vector<512x512xf32>
    %88 = tpu.matmul %68, %87, %cst_46 {dimension_numbers = #tpu.dot_dimension_numbers<[1], [0], [0], [1], [0, 0, 1, 1], [], []>} : vector<512x16xf32>, vector<16x512xf32>, vector<512x512xf32> -> vector<512x512xf32>
    %89 = vector.extract_strided_slice %88 {offsets = [0, 256], sizes = [512, 256], strides = [1, 1]} : vector<512x512xf32> to vector<512x256xf32>
    %c0_47 = arith.constant 0 : index
    %c0_48 = arith.constant 0 : index
    %90 = vector.load %arg21[%c0_47, %c0_48] : memref<512x256xf32, #tpu.memory_space<vmem>>, vector<512x256xf32>
    tpu.vector_store %arg21[%c0_47, %c0_48], %89 {strides = array<i32>} : memref<512x256xf32, #tpu.memory_space<vmem>>, vector<512x256xf32>,
    %c0_49 = arith.constant 0 : index
    %c0_50 = arith.constant 0 : index
    %91 = vector.load %arg11[%c0_49, %c0_50] : memref<16x256xf32, #tpu.memory_space<vmem>>, vector<16x256xf32>
    %cst_51 = arith.constant dense<0.000000e+00> : vector<512x256xf32>
    %92 = tpu.matmul %86, %91, %cst_51 {dimension_numbers = #tpu.dot_dimension_numbers<[1], [0], [0], [1], [0, 0, 1, 1], [], []>} : vector<512x16xf32>, vector<16x256xf32>, vector<512x256xf32> -> vector<512x256xf32>
    %93 = math.exp %92 : vector<512x256xf32>
    %c0_52 = arith.constant 0 : index
    %c0_53 = arith.constant 0 : index
    %94 = vector.load %arg19[%c0_52, %c0_53] : memref<512x256xf32, #tpu.memory_space<vmem>>, vector<512x256xf32>
    tpu.vector_store %arg19[%c0_52, %c0_53], %93 {strides = array<i32>} : memref<512x256xf32, #tpu.memory_space<vmem>>, vector<512x256xf32>,
    %95 = arith.mulf %86, %68 : vector<512x16xf32>
    %c0_54 = arith.constant 0 : index
    %c0_55 = arith.constant 0 : index
    %96 = vector.load %arg12[%c0_54, %c0_55] : memref<16x256xf32, #tpu.memory_space<vmem>>, vector<16x256xf32>
    %cst_56 = arith.constant dense<0.000000e+00> : vector<512x256xf32>
    %97 = tpu.matmul %95, %96, %cst_56 {dimension_numbers = #tpu.dot_dimension_numbers<[1], [0], [0], [1], [0, 0, 1, 1], [], []>} : vector<512x16xf32>, vector<16x256xf32>, vector<512x256xf32> -> vector<512x256xf32>
    %98 = vector.extract_strided_slice %88 {offsets = [0, 0], sizes = [512, 256], strides = [1, 1]} : vector<512x512xf32> to vector<512x256xf32>
    %99 = arith.mulf %97, %98 : vector<512x256xf32>
    %c0_57 = arith.constant 0 : index
    %c0_58 = arith.constant 0 : index
    %100 = vector.load %arg20[%c0_57, %c0_58] : memref<512x256xf32, #tpu.memory_space<vmem>>, vector<512x256xf32>
    tpu.vector_store %arg20[%c0_57, %c0_58], %99 {strides = array<i32>} : memref<512x256xf32, #tpu.memory_space<vmem>>, vector<512x256xf32>,
    %c0_59 = arith.constant 0 : index
    %c0_60 = arith.constant 0 : index
    %101 = vector.load %arg17[%c0_59, %c0_60] : memref<8x256xf32, #tpu.memory_space<vmem>>, vector<8x256xf32>
    %c0_i32_61 = arith.constant 0 : i32
    %c8_i32 = arith.constant 8 : i32
    %102 = arith.addi %c0_i32_61, %c8_i32 : i32
    %c1_i32 = arith.constant 1 : i32
    %103 = scf.for %arg23 = %c0_i32_61 to %102 step %c1_i32 iter_args(%arg24 = %101) -> (vector<8x256xf32>)  : i32 {
      %c64_i32 = arith.constant 64 : i32
      %132 = arith.muli %arg23, %c64_i32 : i32
      %133 = tpu.assume_multiple %132, 64 : i32
      %c0_i32_83 = arith.constant 0 : i32
      %134 = arith.addi %133, %c0_i32_83 : i32
      %135 = tpu.assume_multiple %134, 8 : i32
      %136 = arith.index_cast %135 : i32 to index
      %c0_84 = arith.constant 0 : index
      %137 = vector.load %arg19[%136, %c0_84] : memref<512x256xf32, #tpu.memory_space<vmem>>, vector<8x256xf32>
      %138 = arith.mulf %137, %arg24 : vector<8x256xf32>
      %139 = arith.index_cast %135 : i32 to index
      %c0_85 = arith.constant 0 : index
      %140 = vector.load %arg20[%139, %c0_85] : memref<512x256xf32, #tpu.memory_space<vmem>>, vector<8x256xf32>
      %141 = arith.addf %138, %140 : vector<8x256xf32>
      %142 = arith.index_cast %135 : i32 to index
      %c0_86 = arith.constant 0 : index
      %143 = vector.load %arg20[%142, %c0_86] : memref<512x256xf32, #tpu.memory_space<vmem>>, vector<8x256xf32>
      tpu.vector_store %arg20[%142, %c0_86], %141 {strides = array<i32>} : memref<512x256xf32, #tpu.memory_space<vmem>>, vector<8x256xf32>,
      %c8_i32_87 = arith.constant 8 : i32
      %144 = arith.addi %133, %c8_i32_87 : i32
      %145 = tpu.assume_multiple %144, 8 : i32
      %146 = arith.index_cast %145 : i32 to index
      %c0_88 = arith.constant 0 : index
      %147 = vector.load %arg19[%146, %c0_88] : memref<512x256xf32, #tpu.memory_space<vmem>>, vector<8x256xf32>
      %148 = arith.mulf %147, %141 : vector<8x256xf32>
      %149 = arith.index_cast %145 : i32 to index
      %c0_89 = arith.constant 0 : index
      %150 = vector.load %arg20[%149, %c0_89] : memref<512x256xf32, #tpu.memory_space<vmem>>, vector<8x256xf32>
      %151 = arith.addf %148, %150 : vector<8x256xf32>
      %152 = arith.index_cast %145 : i32 to index
      %c0_90 = arith.constant 0 : index
      %153 = vector.load %arg20[%152, %c0_90] : memref<512x256xf32, #tpu.memory_space<vmem>>, vector<8x256xf32>
      tpu.vector_store %arg20[%152, %c0_90], %151 {strides = array<i32>} : memref<512x256xf32, #tpu.memory_space<vmem>>, vector<8x256xf32>,
      %c16_i32 = arith.constant 16 : i32
      %154 = arith.addi %133, %c16_i32 : i32
      %155 = tpu.assume_multiple %154, 8 : i32
      %156 = arith.index_cast %155 : i32 to index
      %c0_91 = arith.constant 0 : index
      %157 = vector.load %arg19[%156, %c0_91] : memref<512x256xf32, #tpu.memory_space<vmem>>, vector<8x256xf32>
      %158 = arith.mulf %157, %151 : vector<8x256xf32>
      %159 = arith.index_cast %155 : i32 to index
      %c0_92 = arith.constant 0 : index
      %160 = vector.load %arg20[%159, %c0_92] : memref<512x256xf32, #tpu.memory_space<vmem>>, vector<8x256xf32>
      %161 = arith.addf %158, %160 : vector<8x256xf32>
      %162 = arith.index_cast %155 : i32 to index
      %c0_93 = arith.constant 0 : index
      %163 = vector.load %arg20[%162, %c0_93] : memref<512x256xf32, #tpu.memory_space<vmem>>, vector<8x256xf32>
      tpu.vector_store %arg20[%162, %c0_93], %161 {strides = array<i32>} : memref<512x256xf32, #tpu.memory_space<vmem>>, vector<8x256xf32>,
      %c24_i32 = arith.constant 24 : i32
      %164 = arith.addi %133, %c24_i32 : i32
      %165 = tpu.assume_multiple %164, 8 : i32
      %166 = arith.index_cast %165 : i32 to index
      %c0_94 = arith.constant 0 : index
      %167 = vector.load %arg19[%166, %c0_94] : memref<512x256xf32, #tpu.memory_space<vmem>>, vector<8x256xf32>
      %168 = arith.mulf %167, %161 : vector<8x256xf32>
      %169 = arith.index_cast %165 : i32 to index
      %c0_95 = arith.constant 0 : index
      %170 = vector.load %arg20[%169, %c0_95] : memref<512x256xf32, #tpu.memory_space<vmem>>, vector<8x256xf32>
      %171 = arith.addf %168, %170 : vector<8x256xf32>
      %172 = arith.index_cast %165 : i32 to index
      %c0_96 = arith.constant 0 : index
      %173 = vector.load %arg20[%172, %c0_96] : memref<512x256xf32, #tpu.memory_space<vmem>>, vector<8x256xf32>
      tpu.vector_store %arg20[%172, %c0_96], %171 {strides = array<i32>} : memref<512x256xf32, #tpu.memory_space<vmem>>, vector<8x256xf32>,
      %c32_i32 = arith.constant 32 : i32
      %174 = arith.addi %133, %c32_i32 : i32
      %175 = tpu.assume_multiple %174, 8 : i32
      %176 = arith.index_cast %175 : i32 to index
      %c0_97 = arith.constant 0 : index
      %177 = vector.load %arg19[%176, %c0_97] : memref<512x256xf32, #tpu.memory_space<vmem>>, vector<8x256xf32>
      %178 = arith.mulf %177, %171 : vector<8x256xf32>
      %179 = arith.index_cast %175 : i32 to index
      %c0_98 = arith.constant 0 : index
      %180 = vector.load %arg20[%179, %c0_98] : memref<512x256xf32, #tpu.memory_space<vmem>>, vector<8x256xf32>
      %181 = arith.addf %178, %180 : vector<8x256xf32>
      %182 = arith.index_cast %175 : i32 to index
      %c0_99 = arith.constant 0 : index
      %183 = vector.load %arg20[%182, %c0_99] : memref<512x256xf32, #tpu.memory_space<vmem>>, vector<8x256xf32>
      tpu.vector_store %arg20[%182, %c0_99], %181 {strides = array<i32>} : memref<512x256xf32, #tpu.memory_space<vmem>>, vector<8x256xf32>,
      %c40_i32 = arith.constant 40 : i32
      %184 = arith.addi %133, %c40_i32 : i32
      %185 = tpu.assume_multiple %184, 8 : i32
      %186 = arith.index_cast %185 : i32 to index
      %c0_100 = arith.constant 0 : index
      %187 = vector.load %arg19[%186, %c0_100] : memref<512x256xf32, #tpu.memory_space<vmem>>, vector<8x256xf32>
      %188 = arith.mulf %187, %181 : vector<8x256xf32>
      %189 = arith.index_cast %185 : i32 to index
      %c0_101 = arith.constant 0 : index
      %190 = vector.load %arg20[%189, %c0_101] : memref<512x256xf32, #tpu.memory_space<vmem>>, vector<8x256xf32>
      %191 = arith.addf %188, %190 : vector<8x256xf32>
      %192 = arith.index_cast %185 : i32 to index
      %c0_102 = arith.constant 0 : index
      %193 = vector.load %arg20[%192, %c0_102] : memref<512x256xf32, #tpu.memory_space<vmem>>, vector<8x256xf32>
      tpu.vector_store %arg20[%192, %c0_102], %191 {strides = array<i32>} : memref<512x256xf32, #tpu.memory_space<vmem>>, vector<8x256xf32>,
      %c48_i32 = arith.constant 48 : i32
      %194 = arith.addi %133, %c48_i32 : i32
      %195 = tpu.assume_multiple %194, 8 : i32
      %196 = arith.index_cast %195 : i32 to index
      %c0_103 = arith.constant 0 : index
      %197 = vector.load %arg19[%196, %c0_103] : memref<512x256xf32, #tpu.memory_space<vmem>>, vector<8x256xf32>
      %198 = arith.mulf %197, %191 : vector<8x256xf32>
      %199 = arith.index_cast %195 : i32 to index
      %c0_104 = arith.constant 0 : index
      %200 = vector.load %arg20[%199, %c0_104] : memref<512x256xf32, #tpu.memory_space<vmem>>, vector<8x256xf32>
      %201 = arith.addf %198, %200 : vector<8x256xf32>
      %202 = arith.index_cast %195 : i32 to index
      %c0_105 = arith.constant 0 : index
      %203 = vector.load %arg20[%202, %c0_105] : memref<512x256xf32, #tpu.memory_space<vmem>>, vector<8x256xf32>
      tpu.vector_store %arg20[%202, %c0_105], %201 {strides = array<i32>} : memref<512x256xf32, #tpu.memory_space<vmem>>, vector<8x256xf32>,
      %c56_i32 = arith.constant 56 : i32
      %204 = arith.addi %133, %c56_i32 : i32
      %205 = tpu.assume_multiple %204, 8 : i32
      %206 = arith.index_cast %205 : i32 to index
      %c0_106 = arith.constant 0 : index
      %207 = vector.load %arg19[%206, %c0_106] : memref<512x256xf32, #tpu.memory_space<vmem>>, vector<8x256xf32>
      %208 = arith.mulf %207, %201 : vector<8x256xf32>
      %209 = arith.index_cast %205 : i32 to index
      %c0_107 = arith.constant 0 : index
      %210 = vector.load %arg20[%209, %c0_107] : memref<512x256xf32, #tpu.memory_space<vmem>>, vector<8x256xf32>
      %211 = arith.addf %208, %210 : vector<8x256xf32>
      %212 = arith.index_cast %205 : i32 to index
      %c0_108 = arith.constant 0 : index
      %213 = vector.load %arg20[%212, %c0_108] : memref<512x256xf32, #tpu.memory_space<vmem>>, vector<8x256xf32>
      tpu.vector_store %arg20[%212, %c0_108], %211 {strides = array<i32>} : memref<512x256xf32, #tpu.memory_space<vmem>>, vector<8x256xf32>,
      scf.yield %211 : vector<8x256xf32>
    }
    %c8_i32_62 = arith.constant 8 : i32
    %c0_63 = arith.constant 0 : index
    %c0_64 = arith.constant 0 : index
    %104 = vector.load %arg17[%c0_63, %c0_64] : memref<8x256xf32, #tpu.memory_space<vmem>>, vector<8x256xf32>
    tpu.vector_store %arg17[%c0_63, %c0_64], %103 {strides = array<i32>} : memref<8x256xf32, #tpu.memory_space<vmem>>, vector<8x256xf32>,
    %c0_65 = arith.constant 0 : index
    %c0_66 = arith.constant 0 : index
    %105 = vector.load %arg20[%c0_65, %c0_66] : memref<512x256xf32, #tpu.memory_space<vmem>>, vector<512x256xf32>
    %c0_67 = arith.constant 0 : index
    %c0_68 = arith.constant 0 : index
    %106 = vector.load %arg21[%c0_67, %c0_68] : memref<512x256xf32, #tpu.memory_space<vmem>>, vector<512x256xf32>
    %107 = arith.mulf %105, %106 : vector<512x256xf32>
    %c0_69 = arith.constant 0 : index
    %c0_70 = arith.constant 0 : index
    %108 = vector.load %arg15[%c0_69, %c0_70] : memref<256x16xf32, #tpu.memory_space<vmem>>, vector<256x16xf32>
    %cst_71 = arith.constant dense<0.000000e+00> : vector<512x16xf32>
    %109 = tpu.matmul %107, %108, %cst_71 {dimension_numbers = #tpu.dot_dimension_numbers<[1], [0], [0], [1], [0, 0, 1, 1], [], []>} : vector<512x256xf32>, vector<256x16xf32>, vector<512x16xf32> -> vector<512x16xf32>
    %c0_72 = arith.constant 0 : index
    %c0_73 = arith.constant 0 : index
    %110 = vector.load %arg13[%c0_72, %c0_73] : memref<1x16xf32, #tpu.memory_space<vmem>>, vector<1x16xf32>
    %111 = vector.broadcast %110 : vector<1x16xf32> to vector<512x16xf32>
    %112 = arith.mulf %111, %68 : vector<512x16xf32>
    %113 = arith.addf %109, %112 : vector<512x16xf32>
    %114 = math.absf %30 : vector<512x16xf32>
    %cst_74 = arith.constant 0.000000e+00 : f32
    %115 = vector.broadcast %cst_74 : f32 to vector<512x16xf32>
    %116 = arith.subf %115, %114 : vector<512x16xf32>
    %117 = math.exp %116 : vector<512x16xf32>
    %cst_75 = arith.constant 1.000000e+00 : f32
    %118 = vector.broadcast %cst_75 : f32 to vector<512x16xf32>
    %119 = arith.addf %118, %117 : vector<512x16xf32>
    %120 = tpu.reciprocal %119 {approx = true} : vector<512x16xf32> -> vector<512x16xf32>
    %cst_76 = arith.constant 0.000000e+00 : f32
    %121 = vector.broadcast %cst_76 : f32 to vector<512x16xf32>
    %122 = arith.cmpf oge, %30, %121 : vector<512x16xf32>
    %123 = arith.mulf %117, %120 : vector<512x16xf32>
    %124 = arith.select %122, %120, %123 : vector<512x16xi1>, vector<512x16xf32>
    %125 = arith.mulf %30, %124 : vector<512x16xf32>
    %126 = arith.mulf %113, %125 : vector<512x16xf32>
    %c0_77 = arith.constant 0 : index
    %c0_78 = arith.constant 0 : index
    %127 = vector.load %arg14[%c0_77, %c0_78] : memref<16x8xf32, #tpu.memory_space<vmem>>, vector<16x8xf32>
    %cst_79 = arith.constant dense<0.000000e+00> : vector<512x8xf32>
    %128 = tpu.matmul %126, %127, %cst_79 {dimension_numbers = #tpu.dot_dimension_numbers<[1], [0], [0], [1], [0, 0, 1, 1], [], []>} : vector<512x16xf32>, vector<16x8xf32>, vector<512x8xf32> -> vector<512x8xf32>
    %c0_80 = arith.constant 0 : index
    %c0_81 = arith.constant 0 : index
    %c0_82 = arith.constant 0 : index
    %129 = vector.load %arg16[%c0_80, %c0_81, %c0_82] : memref<1x512x8xf32, #tpu.memory_space<vmem>>, vector<1x512x8xf32>
    %130 = vector.shape_cast %129 : vector<1x512x8xf32> to vector<512x8xf32>
    %131 = vector.shape_cast %128 : vector<512x8xf32> to vector<1x512x8xf32>
    tpu.vector_store %arg16[%c0_80, %c0_81, %c0_82], %131 {strides = array<i32>} : memref<1x512x8xf32, #tpu.memory_space<vmem>>, vector<1x512x8xf32>,
    return
  }
  func.func @transform_0(%arg0: i32, %arg1: i32) -> (i32, i32, i32) {
    %c0_i32 = arith.constant 0 : i32
    %c0_i32_0 = arith.constant 0 : i32
    return %arg0, %arg1, %c0_i32 : i32, i32, i32
  }
  func.func @transform_1(%arg0: i32, %arg1: i32) -> (i32, i32) {
    %c0_i32 = arith.constant 0 : i32
    %c0_i32_0 = arith.constant 0 : i32
    %c0_i32_1 = arith.constant 0 : i32
    return %c0_i32, %c0_i32_0 : i32, i32
  }
  func.func @transform_2(%arg0: i32, %arg1: i32) -> (i32, i32) {
    %c0_i32 = arith.constant 0 : i32
    %c0_i32_0 = arith.constant 0 : i32
    %c0_i32_1 = arith.constant 0 : i32
    return %c0_i32, %c0_i32_0 : i32, i32
  }
  func.func @transform_3(%arg0: i32, %arg1: i32) -> (i32, i32) {
    %c0_i32 = arith.constant 0 : i32
    %c0_i32_0 = arith.constant 0 : i32
    %c0_i32_1 = arith.constant 0 : i32
    return %c0_i32, %c0_i32_0 : i32, i32
  }
  func.func @transform_4(%arg0: i32, %arg1: i32) -> (i32, i32) {
    %c0_i32 = arith.constant 0 : i32
    %c0_i32_0 = arith.constant 0 : i32
    %c0_i32_1 = arith.constant 0 : i32
    return %c0_i32, %c0_i32_0 : i32, i32
  }
  func.func @transform_5(%arg0: i32, %arg1: i32) -> (i32, i32) {
    %c0_i32 = arith.constant 0 : i32
    %c0_i32_0 = arith.constant 0 : i32
    %c0_i32_1 = arith.constant 0 : i32
    return %c0_i32, %c0_i32_0 : i32, i32
  }
  func.func @transform_6(%arg0: i32, %arg1: i32) -> (i32, i32) {
    %c0_i32 = arith.constant 0 : i32
    %c0_i32_0 = arith.constant 0 : i32
    %c0_i32_1 = arith.constant 0 : i32
    return %c0_i32, %c0_i32_0 : i32, i32
  }
  func.func @transform_7(%arg0: i32, %arg1: i32) -> (i32, i32) {
    %c0_i32 = arith.constant 0 : i32
    %c0_i32_0 = arith.constant 0 : i32
    %c0_i32_1 = arith.constant 0 : i32
    return %c0_i32, %c0_i32_0 : i32, i32
  }
  func.func @transform_8(%arg0: i32, %arg1: i32) -> (i32, i32) {
    %c0_i32 = arith.constant 0 : i32
    %c0_i32_0 = arith.constant 0 : i32
    %c0_i32_1 = arith.constant 0 : i32
    return %c0_i32, %c0_i32_0 : i32, i32
  }
  func.func @transform_9(%arg0: i32, %arg1: i32) -> (i32, i32) {
    %c0_i32 = arith.constant 0 : i32
    %c0_i32_0 = arith.constant 0 : i32
    %c0_i32_1 = arith.constant 0 : i32
    return %c0_i32, %c0_i32_0 : i32, i32
  }
  func.func @transform_10(%arg0: i32, %arg1: i32) -> (i32, i32) {
    %c0_i32 = arith.constant 0 : i32
    %c0_i32_0 = arith.constant 0 : i32
    %c0_i32_1 = arith.constant 0 : i32
    return %c0_i32, %c0_i32_0 : i32, i32
  }
  func.func @transform_11(%arg0: i32, %arg1: i32) -> (i32, i32) {
    %c0_i32 = arith.constant 0 : i32
    %c0_i32_0 = arith.constant 0 : i32
    %c0_i32_1 = arith.constant 0 : i32
    return %c0_i32, %c0_i32_0 : i32, i32
  }
  func.func @transform_12(%arg0: i32, %arg1: i32) -> (i32, i32) {
    %c0_i32 = arith.constant 0 : i32
    %c0_i32_0 = arith.constant 0 : i32
    %c0_i32_1 = arith.constant 0 : i32
    return %c0_i32, %c0_i32_0 : i32, i32
  }
  func.func @transform_13(%arg0: i32, %arg1: i32) -> (i32, i32) {
    %c0_i32 = arith.constant 0 : i32
    %c0_i32_0 = arith.constant 0 : i32
    %c0_i32_1 = arith.constant 0 : i32
    return %c0_i32, %c0_i32_0 : i32, i32
  }
  func.func @transform_14(%arg0: i32, %arg1: i32) -> (i32, i32, i32) {
    %c0_i32 = arith.constant 0 : i32
    %c0_i32_0 = arith.constant 0 : i32
    return %arg0, %arg1, %c0_i32 : i32, i32, i32
  }
}

</mosaic_0001>

<llo_original>
// kernel: tpu_custom_call.1
$region0: #{tpu_custom_call.1}
  #allocation0 [shape = 'u32[]', space=smem, size = 0x4, offset = 0x4, fixed_abs, tag = 'smem constant byte address 0x4 - core index']
  #allocation1 [shape = 'u32[72,128]{1,0:T(1,128)}', space=vmem, size = 0x9000, scoped, tag = 'internal scratch']
  #allocation2 [shape = 'f32[8,256]{1,0:T(8,128)}', space=vmem, size = 0x2000, scoped, tag = 'scratch operand']
  #allocation3 [shape = 'f32[24,16]{1,0:T(8,128)}', space=vmem, size = 0x3000, scoped, tag = 'scratch operand']
  #allocation4 [shape = 'f32[512,256]{1,0:T(8,128)}', space=vmem, size = 0x80000, scoped, tag = 'scratch operand']
  #allocation5 [shape = 'f32[512,256]{1,0:T(8,128)}', space=vmem, size = 0x80000, scoped, tag = 'scratch operand']
  #allocation6 [shape = 'f32[512,256]{1,0:T(8,128)}', space=vmem, size = 0x80000, scoped, tag = 'scratch operand']
  #allocation7 [shape = 'f32[536,16]{1,0:T(8,128)}', space=vmem, size = 0x43000, scoped, tag = 'scratch operand']
  %s0 = inlined_call_operand.vmem [shape: f32[1,512,8], index: 0, kind: input, shape index: {}]
  %s1 = inlined_call_operand.vmem [shape: f32[1,8], index: 1, kind: input, shape index: {}]
  %s2 = inlined_call_operand.vmem [shape: f32[1,8], index: 2, kind: input, shape index: {}]
  %s3 = inlined_call_operand.vmem [shape: f32[8,32], index: 3, kind: input, shape index: {}]
  %s4 = inlined_call_operand.vmem [shape: f32[4,16], index: 4, kind: input, shape index: {}]
  %s5 = inlined_call_operand.vmem [shape: f32[1,16], index: 5, kind: input, shape index: {}]
  %s6 = inlined_call_operand.vmem [shape: f32[16,16], index: 6, kind: input, shape index: {}]
  %s7 = inlined_call_operand.vmem [shape: f32[1,16], index: 7, kind: input, shape index: {}]
  %s8 = inlined_call_operand.vmem [shape: f32[16,512], index: 8, kind: input, shape index: {}]
  %s9 = inlined_call_operand.vmem [shape: f32[16,256], index: 9, kind: input, shape index: {}]
  %s10 = inlined_call_operand.vmem [shape: f32[16,256], index: 10, kind: input, shape index: {}]
  %s11 = inlined_call_operand.vmem [shape: f32[1,16], index: 11, kind: input, shape index: {}]
  %s12 = inlined_call_operand.vmem [shape: f32[16,8], index: 12, kind: input, shape index: {}]
  %s13 = inlined_call_operand.vmem [shape: f32[256,16], index: 13, kind: input, shape index: {}]
  %s14 = inlined_call_operand.vmem [shape: f32[1,512,8], index: 14, kind: output, shape index: {}]
  %s15 = sld [smem:[#allocation0]]
  $region77: #{tpu_custom_call.1} parent=0
    _
  %s17 = ssub.s32 1, %s15
  %s18 = scalar_select 0, %s17, %s15
  // Predicated region
  $region2: #{tpu_custom_call.1} parent=0 // pred_check
    _
  $region3: #{tpu_custom_call.1} parent=0 // pred_check_branch
    %20 = sbr.rel (0) target = $region5
  $region4: #{tpu_custom_call.1} parent=0 // pred_region
    _
  $region5: #{tpu_custom_call.1} parent=0 // pred_fallthru
    _
  // Predicated region
  $region6: #{tpu_custom_call.1} parent=0 // pred_check
    _
  $region7: #{tpu_custom_call.1} parent=0 // pred_check_branch
    %22 = sbr.rel (0) target = $region9
  $region8: #{tpu_custom_call.1} parent=0 // pred_region
    _
  $region9: #{tpu_custom_call.1} parent=0 // pred_fallthru
    _
  // Predicated region
  $region10: #{tpu_custom_call.1} parent=0 // pred_check
    _
  $region11: #{tpu_custom_call.1} parent=0 // pred_check_branch
    %24 = sbr.rel (0) target = $region13
  $region12: #{tpu_custom_call.1} parent=0 // pred_region
    _
  $region13: #{tpu_custom_call.1} parent=0 // pred_fallthru
    _
  // Predicated region
  $region14: #{tpu_custom_call.1} parent=0 // pred_check
    _
  $region15: #{tpu_custom_call.1} parent=0 // pred_check_branch
    %26 = sbr.rel (0) target = $region17
  $region16: #{tpu_custom_call.1} parent=0 // pred_region
    _
  $region17: #{tpu_custom_call.1} parent=0 // pred_fallthru
    _
  // Predicated region
  $region18: #{tpu_custom_call.1} parent=0 // pred_check
    _
  $region19: #{tpu_custom_call.1} parent=0 // pred_check_branch
    %28 = sbr.rel (0) target = $region21
  $region20: #{tpu_custom_call.1} parent=0 // pred_region
    _
  $region21: #{tpu_custom_call.1} parent=0 // pred_fallthru
    _
  // Predicated region
  $region22: #{tpu_custom_call.1} parent=0 // pred_check
    _
  $region23: #{tpu_custom_call.1} parent=0 // pred_check_branch
    %30 = sbr.rel (0) target = $region25
  $region24: #{tpu_custom_call.1} parent=0 // pred_region
    _
  $region25: #{tpu_custom_call.1} parent=0 // pred_fallthru
    _
  // Predicated region
  $region26: #{tpu_custom_call.1} parent=0 // pred_check
    _
  $region27: #{tpu_custom_call.1} parent=0 // pred_check_branch
    %32 = sbr.rel (0) target = $region29
  $region28: #{tpu_custom_call.1} parent=0 // pred_region
    _
  $region29: #{tpu_custom_call.1} parent=0 // pred_fallthru
    _
  // Predicated region
  $region30: #{tpu_custom_call.1} parent=0 // pred_check
    _
  $region31: #{tpu_custom_call.1} parent=0 // pred_check_branch
    %34 = sbr.rel (0) target = $region33
  $region32: #{tpu_custom_call.1} parent=0 // pred_region
    _
  $region33: #{tpu_custom_call.1} parent=0 // pred_fallthru
    _
  // Predicated region
  $region34: #{tpu_custom_call.1} parent=0 // pred_check
    _
  $region35: #{tpu_custom_call.1} parent=0 // pred_check_branch
    %36 = sbr.rel (0) target = $region37
  $region36: #{tpu_custom_call.1} parent=0 // pred_region
    _
  $region37: #{tpu_custom_call.1} parent=0 // pred_fallthru
    _
  // Predicated region
  $region38: #{tpu_custom_call.1} parent=0 // pred_check
    _
  $region39: #{tpu_custom_call.1} parent=0 // pred_check_branch
    %38 = sbr.rel (0) target = $region41
  $region40: #{tpu_custom_call.1} parent=0 // pred_region
    _
  $region41: #{tpu_custom_call.1} parent=0 // pred_fallthru
    _
  // Predicated region
  $region42: #{tpu_custom_call.1} parent=0 // pred_check
    _
  $region43: #{tpu_custom_call.1} parent=0 // pred_check_branch
    %40 = sbr.rel (0) target = $region45
  $region44: #{tpu_custom_call.1} parent=0 // pred_region
    _
  $region45: #{tpu_custom_call.1} parent=0 // pred_fallthru
    _
  // Predicated region
  $region46: #{tpu_custom_call.1} parent=0 // pred_check
    _
  $region47: #{tpu_custom_call.1} parent=0 // pred_check_branch
    %42 = sbr.rel (0) target = $region49
  $region48: #{tpu_custom_call.1} parent=0 // pred_region
    _
  $region49: #{tpu_custom_call.1} parent=0 // pred_fallthru
    _
  // Predicated region
  $region50: #{tpu_custom_call.1} parent=0 // pred_check
    _
  $region51: #{tpu_custom_call.1} parent=0 // pred_check_branch
    %44 = sbr.rel (0) target = $region53
  $region52: #{tpu_custom_call.1} parent=0 // pred_region
    _
  $region53: #{tpu_custom_call.1} parent=0 // pred_fallthru
    _
  // Predicated region
  $region54: #{tpu_custom_call.1} parent=0 // pred_check
    _
  $region55: #{tpu_custom_call.1} parent=0 // pred_check_branch
    %46 = sbr.rel (0) target = $region57
  $region56: #{tpu_custom_call.1} parent=0 // pred_region
    _
  $region57: #{tpu_custom_call.1} parent=0 // pred_fallthru
    _
  %p47 = scmp.eq.s32.totalorder 0, 0
  // Predicated region
  $region58: #{tpu_custom_call.1} parent=0 // pred_check
    %p48 = pneg %p47
  $region59: #{tpu_custom_call.1} parent=0 // pred_check_branch
    %50 = sbr.rel (%p48) target = $region61
  $region60: #{tpu_custom_call.1} parent=0 // pred_region
    %51 = vst [vmem:[#allocation2] sm:$0xff] 0.0
    %52 = vst [vmem:[#allocation2 + $0x8] sm:$0xff] 0.0
    %vm53 = vcmask 130048
    %54 = vst.msk [vmem:[#allocation3] sm:$0xff] %vm53, 0.0
    %55 = vst.msk [vmem:[#allocation3 + $0x8] sm:$0xff] %vm53, 0.0
    %56 = vst.msk [vmem:[#allocation3 + $0x10] sm:$0xff] %vm53, 0.0
  $region61: #{tpu_custom_call.1} parent=0 // pred_fallthru
    _
  %v57 = vld [vmem:[%s0] sm:$0xff]
  %v58 = vld [vmem:[%s0 + $0x8] sm:$0xff]
  %v59 = vld [vmem:[%s0 + $0x10] sm:$0xff]
  %v60 = vld [vmem:[%s0 + $0x18] sm:$0xff]
  %v61 = vld [vmem:[%s0 + $0x20] sm:$0xff]
  %v62 = vld [vmem:[%s0 + $0x28] sm:$0xff]
  %v63 = vld [vmem:[%s0 + $0x30] sm:$0xff]
  %v64 = vld [vmem:[%s0 + $0x38] sm:$0xff]
  %v65 = vld [vmem:[%s0 + $0x40] sm:$0xff]
  %v66 = vld [vmem:[%s0 + $0x48] sm:$0xff]
  %v67 = vld [vmem:[%s0 + $0x50] sm:$0xff]
  %v68 = vld [vmem:[%s0 + $0x58] sm:$0xff]
  %v69 = vld [vmem:[%s0 + $0x60] sm:$0xff]
  %v70 = vld [vmem:[%s0 + $0x68] sm:$0xff]
  %v71 = vld [vmem:[%s0 + $0x70] sm:$0xff]
  %v72 = vld [vmem:[%s0 + $0x78] sm:$0xff]
  %v73 = vld [vmem:[%s0 + $0x80] sm:$0xff]
  %v74 = vld [vmem:[%s0 + $0x88] sm:$0xff]
  %v75 = vld [vmem:[%s0 + $0x90] sm:$0xff]
  %v76 = vld [vmem:[%s0 + $0x98] sm:$0xff]
  %v77 = vld [vmem:[%s0 + $0xa0] sm:$0xff]
  %v78 = vld [vmem:[%s0 + $0xa8] sm:$0xff]
  %v79 = vld [vmem:[%s0 + $0xb0] sm:$0xff]
  %v80 = vld [vmem:[%s0 + $0xb8] sm:$0xff]
  %v81 = vld [vmem:[%s0 + $0xc0] sm:$0xff]
  %v82 = vld [vmem:[%s0 + $0xc8] sm:$0xff]
  %v83 = vld [vmem:[%s0 + $0xd0] sm:$0xff]
  %v84 = vld [vmem:[%s0 + $0xd8] sm:$0xff]
  %v85 = vld [vmem:[%s0 + $0xe0] sm:$0xff]
  %v86 = vld [vmem:[%s0 + $0xe8] sm:$0xff]
  %v87 = vld [vmem:[%s0 + $0xf0] sm:$0xff]
  %v88 = vld [vmem:[%s0 + $0xf8] sm:$0xff]
  %v89 = vld [vmem:[%s0 + $0x100] sm:$0xff]
  %v90 = vld [vmem:[%s0 + $0x108] sm:$0xff]
  %v91 = vld [vmem:[%s0 + $0x110] sm:$0xff]
  %v92 = vld [vmem:[%s0 + $0x118] sm:$0xff]
  %v93 = vld [vmem:[%s0 + $0x120] sm:$0xff]
  %v94 = vld [vmem:[%s0 + $0x128] sm:$0xff]
  %v95 = vld [vmem:[%s0 + $0x130] sm:$0xff]
  %v96 = vld [vmem:[%s0 + $0x138] sm:$0xff]
  %v97 = vld [vmem:[%s0 + $0x140] sm:$0xff]
  %v98 = vld [vmem:[%s0 + $0x148] sm:$0xff]
  %v99 = vld [vmem:[%s0 + $0x150] sm:$0xff]
  %v100 = vld [vmem:[%s0 + $0x158] sm:$0xff]
  %v101 = vld [vmem:[%s0 + $0x160] sm:$0xff]
  %v102 = vld [vmem:[%s0 + $0x168] sm:$0xff]
  %v103 = vld [vmem:[%s0 + $0x170] sm:$0xff]
  %v104 = vld [vmem:[%s0 + $0x178] sm:$0xff]
  %v105 = vld [vmem:[%s0 + $0x180] sm:$0xff]
  %v106 = vld [vmem:[%s0 + $0x188] sm:$0xff]
  %v107 = vld [vmem:[%s0 + $0x190] sm:$0xff]
  %v108 = vld [vmem:[%s0 + $0x198] sm:$0xff]
  %v109 = vld [vmem:[%s0 + $0x1a0] sm:$0xff]
  %v110 = vld [vmem:[%s0 + $0x1a8] sm:$0xff]
  %v111 = vld [vmem:[%s0 + $0x1b0] sm:$0xff]
  %v112 = vld [vmem:[%s0 + $0x1b8] sm:$0xff]
  %v113 = vld [vmem:[%s0 + $0x1c0] sm:$0xff]
  %v114 = vld [vmem:[%s0 + $0x1c8] sm:$0xff]
  %v115 = vld [vmem:[%s0 + $0x1d0] sm:$0xff]
  %v116 = vld [vmem:[%s0 + $0x1d8] sm:$0xff]
  %v117 = vld [vmem:[%s0 + $0x1e0] sm:$0xff]
  %v118 = vld [vmem:[%s0 + $0x1e8] sm:$0xff]
  %v119 = vld [vmem:[%s0 + $0x1f0] sm:$0xff]
  %v120 = vld [vmem:[%s0 + $0x1f8] sm:$0xff]
  %vm121 = vcmask 64512
  %v122 = vsel %vm121, %v57, 0.0
  %123 = vadd.xlane.f32.xlu0 %v122
  %v124 = vpop.xlane.xlu0 %123
  %v125 = vsel %vm121, %v58, 0.0
  %126 = vadd.xlane.f32.xlu0 %v125
  %v127 = vpop.xlane.xlu0 %126
  %v128 = vsel %vm121, %v59, 0.0
  %129 = vadd.xlane.f32.xlu0 %v128
  %v130 = vpop.xlane.xlu0 %129
  %v131 = vsel %vm121, %v60, 0.0
  %132 = vadd.xlane.f32.xlu0 %v131
  %v133 = vpop.xlane.xlu0 %132
  %v134 = vsel %vm121, %v61, 0.0
  %135 = vadd.xlane.f32.xlu0 %v134
  %v136 = vpop.xlane.xlu0 %135
  %v137 = vsel %vm121, %v62, 0.0
  %138 = vadd.xlane.f32.xlu0 %v137
  %v139 = vpop.xlane.xlu0 %138
  %v140 = vsel %vm121, %v63, 0.0
  %141 = vadd.xlane.f32.xlu0 %v140
  %v142 = vpop.xlane.xlu0 %141
  %v143 = vsel %vm121, %v64, 0.0
  %144 = vadd.xlane.f32.xlu0 %v143
  %v145 = vpop.xlane.xlu0 %144
  %v146 = vsel %vm121, %v65, 0.0
  %147 = vadd.xlane.f32.xlu0 %v146
  %v148 = vpop.xlane.xlu0 %147
  %v149 = vsel %vm121, %v66, 0.0
  %150 = vadd.xlane.f32.xlu0 %v149
  %v151 = vpop.xlane.xlu0 %150
  %v152 = vsel %vm121, %v67, 0.0
  %153 = vadd.xlane.f32.xlu0 %v152
  %v154 = vpop.xlane.xlu0 %153
  %v155 = vsel %vm121, %v68, 0.0
  %156 = vadd.xlane.f32.xlu0 %v155
  %v157 = vpop.xlane.xlu0 %156
  %v158 = vsel %vm121, %v69, 0.0
  %159 = vadd.xlane.f32.xlu0 %v158
  %v160 = vpop.xlane.xlu0 %159
  %v161 = vsel %vm121, %v70, 0.0
  %162 = vadd.xlane.f32.xlu0 %v161
  %v163 = vpop.xlane.xlu0 %162
  %v164 = vsel %vm121, %v71, 0.0
  %165 = vadd.xlane.f32.xlu0 %v164
  %v166 = vpop.xlane.xlu0 %165
  %v167 = vsel %vm121, %v72, 0.0
  %168 = vadd.xlane.f32.xlu0 %v167
  %v169 = vpop.xlane.xlu0 %168
  %v170 = vsel %vm121, %v73, 0.0
  %171 = vadd.xlane.f32.xlu0 %v170
  %v172 = vpop.xlane.xlu0 %171
  %v173 = vsel %vm121, %v74, 0.0
  %174 = vadd.xlane.f32.xlu0 %v173
  %v175 = vpop.xlane.xlu0 %174
  %v176 = vsel %vm121, %v75, 0.0
  %177 = vadd.xlane.f32.xlu0 %v176
  %v178 = vpop.xlane.xlu0 %177
  %v179 = vsel %vm121, %v76, 0.0
  %180 = vadd.xlane.f32.xlu0 %v179
  %v181 = vpop.xlane.xlu0 %180
  %v182 = vsel %vm121, %v77, 0.0
  %183 = vadd.xlane.f32.xlu0 %v182
  %v184 = vpop.xlane.xlu0 %183
  %v185 = vsel %vm121, %v78, 0.0
  %186 = vadd.xlane.f32.xlu0 %v185
  %v187 = vpop.xlane.xlu0 %186
  %v188 = vsel %vm121, %v79, 0.0
  %189 = vadd.xlane.f32.xlu0 %v188
  %v190 = vpop.xlane.xlu0 %189
  %v191 = vsel %vm121, %v80, 0.0
  %192 = vadd.xlane.f32.xlu0 %v191
  %v193 = vpop.xlane.xlu0 %192
  %v194 = vsel %vm121, %v81, 0.0
  %195 = vadd.xlane.f32.xlu0 %v194
  %v196 = vpop.xlane.xlu0 %195
  %v197 = vsel %vm121, %v82, 0.0
  %198 = vadd.xlane.f32.xlu0 %v197
  %v199 = vpop.xlane.xlu0 %198
  %v200 = vsel %vm121, %v83, 0.0
  %201 = vadd.xlane.f32.xlu0 %v200
  %v202 = vpop.xlane.xlu0 %201
  %v203 = vsel %vm121, %v84, 0.0
  %204 = vadd.xlane.f32.xlu0 %v203
  %v205 = vpop.xlane.xlu0 %204
  %v206 = vsel %vm121, %v85, 0.0
  %207 = vadd.xlane.f32.xlu0 %v206
  %v208 = vpop.xlane.xlu0 %207
  %v209 = vsel %vm121, %v86, 0.0
  %210 = vadd.xlane.f32.xlu0 %v209
  %v211 = vpop.xlane.xlu0 %210
  %v212 = vsel %vm121, %v87, 0.0
  %213 = vadd.xlane.f32.xlu0 %v212
  %v214 = vpop.xlane.xlu0 %213
  %v215 = vsel %vm121, %v88, 0.0
  %216 = vadd.xlane.f32.xlu0 %v215
  %v217 = vpop.xlane.xlu0 %216
  %v218 = vsel %vm121, %v89, 0.0
  %219 = vadd.xlane.f32.xlu0 %v218
  %v220 = vpop.xlane.xlu0 %219
  %v221 = vsel %vm121, %v90, 0.0
  %222 = vadd.xlane.f32.xlu0 %v221
  %v223 = vpop.xlane.xlu0 %222
  %v224 = vsel %vm121, %v91, 0.0
  %225 = vadd.xlane.f32.xlu0 %v224
  %v226 = vpop.xlane.xlu0 %225
  %v227 = vsel %vm121, %v92, 0.0
  %228 = vadd.xlane.f32.xlu0 %v227
  %v229 = vpop.xlane.xlu0 %228
  %v230 = vsel %vm121, %v93, 0.0
  %231 = vadd.xlane.f32.xlu0 %v230
  %v232 = vpop.xlane.xlu0 %231
  %v233 = vsel %vm121, %v94, 0.0
  %234 = vadd.xlane.f32.xlu0 %v233
  %v235 = vpop.xlane.xlu0 %234
  %v236 = vsel %vm121, %v95, 0.0
  %237 = vadd.xlane.f32.xlu0 %v236
  %v238 = vpop.xlane.xlu0 %237
  %v239 = vsel %vm121, %v96, 0.0
  %240 = vadd.xlane.f32.xlu0 %v239
  %v241 = vpop.xlane.xlu0 %240
  %v242 = vsel %vm121, %v97, 0.0
  %243 = vadd.xlane.f32.xlu0 %v242
  %v244 = vpop.xlane.xlu0 %243
  %v245 = vsel %vm121, %v98, 0.0
  %246 = vadd.xlane.f32.xlu0 %v245
  %v247 = vpop.xlane.xlu0 %246
  %v248 = vsel %vm121, %v99, 0.0
  %249 = vadd.xlane.f32.xlu0 %v248
  %v250 = vpop.xlane.xlu0 %249
  %v251 = vsel %vm121, %v100, 0.0
  %252 = vadd.xlane.f32.xlu0 %v251
  %v253 = vpop.xlane.xlu0 %252
  %v254 = vsel %vm121, %v101, 0.0
  %255 = vadd.xlane.f32.xlu0 %v254
  %v256 = vpop.xlane.xlu0 %255
  %v257 = vsel %vm121, %v102, 0.0
  %258 = vadd.xlane.f32.xlu0 %v257
  %v259 = vpop.xlane.xlu0 %258
  %v260 = vsel %vm121, %v103, 0.0
  %261 = vadd.xlane.f32.xlu0 %v260
  %v262 = vpop.xlane.xlu0 %261
  %v263 = vsel %vm121, %v104, 0.0
  %264 = vadd.xlane.f32.xlu0 %v263
  %v265 = vpop.xlane.xlu0 %264
  %v266 = vsel %vm121, %v105, 0.0
  %267 = vadd.xlane.f32.xlu0 %v266
  %v268 = vpop.xlane.xlu0 %267
  %v269 = vsel %vm121, %v106, 0.0
  %270 = vadd.xlane.f32.xlu0 %v269
  %v271 = vpop.xlane.xlu0 %270
  %v272 = vsel %vm121, %v107, 0.0
  %273 = vadd.xlane.f32.xlu0 %v272
  %v274 = vpop.xlane.xlu0 %273
  %v275 = vsel %vm121, %v108, 0.0
  %276 = vadd.xlane.f32.xlu0 %v275
  %v277 = vpop.xlane.xlu0 %276
  %v278 = vsel %vm121, %v109, 0.0
  %279 = vadd.xlane.f32.xlu0 %v278
  %v280 = vpop.xlane.xlu0 %279
  %v281 = vsel %vm121, %v110, 0.0
  %282 = vadd.xlane.f32.xlu0 %v281
  %v283 = vpop.xlane.xlu0 %282
  %v284 = vsel %vm121, %v111, 0.0
  %285 = vadd.xlane.f32.xlu0 %v284
  %v286 = vpop.xlane.xlu0 %285
  %v287 = vsel %vm121, %v112, 0.0
  %288 = vadd.xlane.f32.xlu0 %v287
  %v289 = vpop.xlane.xlu0 %288
  %v290 = vsel %vm121, %v113, 0.0
  %291 = vadd.xlane.f32.xlu0 %v290
  %v292 = vpop.xlane.xlu0 %291
  %v293 = vsel %vm121, %v114, 0.0
  %294 = vadd.xlane.f32.xlu0 %v293
  %v295 = vpop.xlane.xlu0 %294
  %v296 = vsel %vm121, %v115, 0.0
  %297 = vadd.xlane.f32.xlu0 %v296
  %v298 = vpop.xlane.xlu0 %297
  %v299 = vsel %vm121, %v116, 0.0
  %300 = vadd.xlane.f32.xlu0 %v299
  %v301 = vpop.xlane.xlu0 %300
  %v302 = vsel %vm121, %v117, 0.0
  %303 = vadd.xlane.f32.xlu0 %v302
  %v304 = vpop.xlane.xlu0 %303
  %v305 = vsel %vm121, %v118, 0.0
  %306 = vadd.xlane.f32.xlu0 %v305
  %v307 = vpop.xlane.xlu0 %306
  %v308 = vsel %vm121, %v119, 0.0
  %309 = vadd.xlane.f32.xlu0 %v308
  %v310 = vpop.xlane.xlu0 %309
  %v311 = vsel %vm121, %v120, 0.0
  %312 = vadd.xlane.f32.xlu0 %v311
  %v313 = vpop.xlane.xlu0 %312
  %v314 = vrcp.pop 8.0
  %v315 = vmul.f32 8.0, %v314
  %v316 = vsub.f32 1.0, %v315
  %v317 = vmul.f32 %v314, %v316
  %v318 = vadd.f32 %v314, %v317
  %vm319 = vweird.f32 %v314
  %v320 = vsel %vm319, %v314, %v318
  %v321 = vmul.f32 %v124, %v320
  %v322 = vmul.f32 %v127, %v320
  %v323 = vmul.f32 %v130, %v320
  %v324 = vmul.f32 %v133, %v320
  %v325 = vmul.f32 %v136, %v320
  %v326 = vmul.f32 %v139, %v320
  %v327 = vmul.f32 %v142, %v320
  %v328 = vmul.f32 %v145, %v320
  %v329 = vmul.f32 %v148, %v320
  %v330 = vmul.f32 %v151, %v320
  %v331 = vmul.f32 %v154, %v320
  %v332 = vmul.f32 %v157, %v320
  %v333 = vmul.f32 %v160, %v320
  %v334 = vmul.f32 %v163, %v320
  %v335 = vmul.f32 %v166, %v320
  %v336 = vmul.f32 %v169, %v320
  %v337 = vmul.f32 %v172, %v320
  %v338 = vmul.f32 %v175, %v320
  %v339 = vmul.f32 %v178, %v320
  %v340 = vmul.f32 %v181, %v320
  %v341 = vmul.f32 %v184, %v320
  %v342 = vmul.f32 %v187, %v320
  %v343 = vmul.f32 %v190, %v320
  %v344 = vmul.f32 %v193, %v320
  %v345 = vmul.f32 %v196, %v320
  %v346 = vmul.f32 %v199, %v320
  %v347 = vmul.f32 %v202, %v320
  %v348 = vmul.f32 %v205, %v320
  %v349 = vmul.f32 %v208, %v320
  %v350 = vmul.f32 %v211, %v320
  %v351 = vmul.f32 %v214, %v320
  %v352 = vmul.f32 %v217, %v320
  %v353 = vmul.f32 %v220, %v320
  %v354 = vmul.f32 %v223, %v320
  %v355 = vmul.f32 %v226, %v320
  %v356 = vmul.f32 %v229, %v320
  %v357 = vmul.f32 %v232, %v320
  %v358 = vmul.f32 %v235, %v320
  %v359 = vmul.f32 %v238, %v320
  %v360 = vmul.f32 %v241, %v320
  %v361 = vmul.f32 %v244, %v320
  %v362 = vmul.f32 %v247, %v320
  %v363 = vmul.f32 %v250, %v320
  %v364 = vmul.f32 %v253, %v320
  %v365 = vmul.f32 %v256, %v320
  %v366 = vmul.f32 %v259, %v320
  %v367 = vmul.f32 %v262, %v320
  %v368 = vmul.f32 %v265, %v320
  %v369 = vmul.f32 %v268, %v320
  %v370 = vmul.f32 %v271, %v320
  %v371 = vmul.f32 %v274, %v320
  %v372 = vmul.f32 %v277, %v320
  %v373 = vmul.f32 %v280, %v320
  %v374 = vmul.f32 %v283, %v320
  %v375 = vmul.f32 %v286, %v320
  %v376 = vmul.f32 %v289, %v320
  %v377 = vmul.f32 %v292, %v320
  %v378 = vmul.f32 %v295, %v320
  %v379 = vmul.f32 %v298, %v320
  %v380 = vmul.f32 %v301, %v320
  %v381 = vmul.f32 %v304, %v320
  %v382 = vmul.f32 %v307, %v320
  %v383 = vmul.f32 %v310, %v320
  %v384 = vmul.f32 %v313, %v320
  %v385 = vsub.f32 %v57, %v321
  %v386 = vsub.f32 %v58, %v322
  %v387 = vsub.f32 %v59, %v323
  %v388 = vsub.f32 %v60, %v324
  %v389 = vsub.f32 %v61, %v325
  %v390 = vsub.f32 %v62, %v326
  %v391 = vsub.f32 %v63, %v327
  %v392 = vsub.f32 %v64, %v328
  %v393 = vsub.f32 %v65, %v329
  %v394 = vsub.f32 %v66, %v330
  %v395 = vsub.f32 %v67, %v331
  %v396 = vsub.f32 %v68, %v332
  %v397 = vsub.f32 %v69, %v333
  %v398 = vsub.f32 %v70, %v334
  %v399 = vsub.f32 %v71, %v335
  %v400 = vsub.f32 %v72, %v336
  %v401 = vsub.f32 %v73, %v337
  %v402 = vsub.f32 %v74, %v338
  %v403 = vsub.f32 %v75, %v339
  %v404 = vsub.f32 %v76, %v340
  %v405 = vsub.f32 %v77, %v341
  %v406 = vsub.f32 %v78, %v342
  %v407 = vsub.f32 %v79, %v343
  %v408 = vsub.f32 %v80, %v344
  %v409 = vsub.f32 %v81, %v345
  %v410 = vsub.f32 %v82, %v346
  %v411 = vsub.f32 %v83, %v347
  %v412 = vsub.f32 %v84, %v348
  %v413 = vsub.f32 %v85, %v349
  %v414 = vsub.f32 %v86, %v350
  %v415 = vsub.f32 %v87, %v351
  %v416 = vsub.f32 %v88, %v352
  %v417 = vsub.f32 %v89, %v353
  %v418 = vsub.f32 %v90, %v354
  %v419 = vsub.f32 %v91, %v355
  %v420 = vsub.f32 %v92, %v356
  %v421 = vsub.f32 %v93, %v357
  %v422 = vsub.f32 %v94, %v358
  %v423 = vsub.f32 %v95, %v359
  %v424 = vsub.f32 %v96, %v360
  %v425 = vsub.f32 %v97, %v361
  %v426 = vsub.f32 %v98, %v362
  %v427 = vsub.f32 %v99, %v363
  %v428 = vsub.f32 %v100, %v364
  %v429 = vsub.f32 %v101, %v365
  %v430 = vsub.f32 %v102, %v366
  %v431 = vsub.f32 %v103, %v367
  %v432 = vsub.f32 %v104, %v368
  %v433 = vsub.f32 %v105, %v369
  %v434 = vsub.f32 %v106, %v370
  %v435 = vsub.f32 %v107, %v371
  %v436 = vsub.f32 %v108, %v372
  %v437 = vsub.f32 %v109, %v373
  %v438 = vsub.f32 %v110, %v374
  %v439 = vsub.f32 %v111, %v375
  %v440 = vsub.f32 %v112, %v376
  %v441 = vsub.f32 %v113, %v377
  %v442 = vsub.f32 %v114, %v378
  %v443 = vsub.f32 %v115, %v379
  %v444 = vsub.f32 %v116, %v380
  %v445 = vsub.f32 %v117, %v381
  %v446 = vsub.f32 %v118, %v382
  %v447 = vsub.f32 %v119, %v383
  %v448 = vsub.f32 %v120, %v384
  %v449 = vmul.f32 %v385, %v385
  %v450 = vmul.f32 %v386, %v386
  %v451 = vmul.f32 %v387, %v387
  %v452 = vmul.f32 %v388, %v388
  %v453 = vmul.f32 %v389, %v389
  %v454 = vmul.f32 %v390, %v390
  %v455 = vmul.f32 %v391, %v391
  %v456 = vmul.f32 %v392, %v392
  %v457 = vmul.f32 %v393, %v393
  %v458 = vmul.f32 %v394, %v394
  %v459 = vmul.f32 %v395, %v395
  %v460 = vmul.f32 %v396, %v396
  %v461 = vmul.f32 %v397, %v397
  %v462 = vmul.f32 %v398, %v398
  %v463 = vmul.f32 %v399, %v399
  %v464 = vmul.f32 %v400, %v400
  %v465 = vmul.f32 %v401, %v401
  %v466 = vmul.f32 %v402, %v402
  %v467 = vmul.f32 %v403, %v403
  %v468 = vmul.f32 %v404, %v404
  %v469 = vmul.f32 %v405, %v405
  %v470 = vmul.f32 %v406, %v406
  %v471 = vmul.f32 %v407, %v407
  %v472 = vmul.f32 %v408, %v408
  %v473 = vmul.f32 %v409, %v409
  %v474 = vmul.f32 %v410, %v410
  %v475 = vmul.f32 %v411, %v411
  %v476 = vmul.f32 %v412, %v412
  %v477 = vmul.f32 %v413, %v413
  %v478 = vmul.f32 %v414, %v414
  %v479 = vmul.f32 %v415, %v415
  %v480 = vmul.f32 %v416, %v416
  %v481 = vmul.f32 %v417, %v417
  %v482 = vmul.f32 %v418, %v418
  %v483 = vmul.f32 %v419, %v419
  %v484 = vmul.f32 %v420, %v420
  %v485 = vmul.f32 %v421, %v421
  %v486 = vmul.f32 %v422, %v422
  %v487 = vmul.f32 %v423, %v423
  %v488 = vmul.f32 %v424, %v424
  %v489 = vmul.f32 %v425, %v425
  %v490 = vmul.f32 %v426, %v426
  %v491 = vmul.f32 %v427, %v427
  %v492 = vmul.f32 %v428, %v428
  %v493 = vmul.f32 %v429, %v429
  %v494 = vmul.f32 %v430, %v430
  %v495 = vmul.f32 %v431, %v431
  %v496 = vmul.f32 %v432, %v432
  %v497 = vmul.f32 %v433, %v433
  %v498 = vmul.f32 %v434, %v434
  %v499 = vmul.f32 %v435, %v435
  %v500 = vmul.f32 %v436, %v436
  %v501 = vmul.f32 %v437, %v437
  %v502 = vmul.f32 %v438, %v438
  %v503 = vmul.f32 %v439, %v439
  %v504 = vmul.f32 %v440, %v440
  %v505 = vmul.f32 %v441, %v441
  %v506 = vmul.f32 %v442, %v442
  %v507 = vmul.f32 %v443, %v443
  %v508 = vmul.f32 %v444, %v444
  %v509 = vmul.f32 %v445, %v445
  %v510 = vmul.f32 %v446, %v446
  %v511 = vmul.f32 %v447, %v447
  %v512 = vmul.f32 %v448, %v448
  %v513 = vsel %vm121, %v449, 0.0
  %514 = vadd.xlane.f32.xlu0 %v513
  %v515 = vpop.xlane.xlu0 %514
  %v516 = vsel %vm121, %v450, 0.0
  %517 = vadd.xlane.f32.xlu0 %v516
  %v518 = vpop.xlane.xlu0 %517
  %v519 = vsel %vm121, %v451, 0.0
  %520 = vadd.xlane.f32.xlu0 %v519
  %v521 = vpop.xlane.xlu0 %520
  %v522 = vsel %vm121, %v452, 0.0
  %523 = vadd.xlane.f32.xlu0 %v522
  %v524 = vpop.xlane.xlu0 %523
  %v525 = vsel %vm121, %v453, 0.0
  %526 = vadd.xlane.f32.xlu0 %v525
  %v527 = vpop.xlane.xlu0 %526
  %v528 = vsel %vm121, %v454, 0.0
  %529 = vadd.xlane.f32.xlu0 %v528
  %v530 = vpop.xlane.xlu0 %529
  %v531 = vsel %vm121, %v455, 0.0
  %532 = vadd.xlane.f32.xlu0 %v531
  %v533 = vpop.xlane.xlu0 %532
  %v534 = vsel %vm121, %v456, 0.0
  %535 = vadd.xlane.f32.xlu0 %v534
  %v536 = vpop.xlane.xlu0 %535
  %v537 = vsel %vm121, %v457, 0.0
  %538 = vadd.xlane.f32.xlu0 %v537
  %v539 = vpop.xlane.xlu0 %538
  %v540 = vsel %vm121, %v458, 0.0
  %541 = vadd.xlane.f32.xlu0 %v540
  %v542 = vpop.xlane.xlu0 %541
  %v543 = vsel %vm121, %v459, 0.0
  %544 = vadd.xlane.f32.xlu0 %v543
  %v545 = vpop.xlane.xlu0 %544
  %v546 = vsel %vm121, %v460, 0.0
  %547 = vadd.xlane.f32.xlu0 %v546
  %v548 = vpop.xlane.xlu0 %547
  %v549 = vsel %vm121, %v461, 0.0
  %550 = vadd.xlane.f32.xlu0 %v549
  %v551 = vpop.xlane.xlu0 %550
  %v552 = vsel %vm121, %v462, 0.0
  %553 = vadd.xlane.f32.xlu0 %v552
  %v554 = vpop.xlane.xlu0 %553
  %v555 = vsel %vm121, %v463, 0.0
  %556 = vadd.xlane.f32.xlu0 %v555
  %v557 = vpop.xlane.xlu0 %556
  %v558 = vsel %vm121, %v464, 0.0
  %559 = vadd.xlane.f32.xlu0 %v558
  %v560 = vpop.xlane.xlu0 %559
  %v561 = vsel %vm121, %v465, 0.0
  %562 = vadd.xlane.f32.xlu0 %v561
  %v563 = vpop.xlane.xlu0 %562
  %v564 = vsel %vm121, %v466, 0.0
  %565 = vadd.xlane.f32.xlu0 %v564
  %v566 = vpop.xlane.xlu0 %565
  %v567 = vsel %vm121, %v467, 0.0
  %568 = vadd.xlane.f32.xlu0 %v567
  %v569 = vpop.xlane.xlu0 %568
  %v570 = vsel %vm121, %v468, 0.0
  %571 = vadd.xlane.f32.xlu0 %v570
  %v572 = vpop.xlane.xlu0 %571
  %v573 = vsel %vm121, %v469, 0.0
  %574 = vadd.xlane.f32.xlu0 %v573
  %v575 = vpop.xlane.xlu0 %574
  %v576 = vsel %vm121, %v470, 0.0
  %577 = vadd.xlane.f32.xlu0 %v576
  %v578 = vpop.xlane.xlu0 %577
  %v579 = vsel %vm121, %v471, 0.0
  %580 = vadd.xlane.f32.xlu0 %v579
  %v581 = vpop.xlane.xlu0 %580
  %v582 = vsel %vm121, %v472, 0.0
  %583 = vadd.xlane.f32.xlu0 %v582
  %v584 = vpop.xlane.xlu0 %583
  %v585 = vsel %vm121, %v473, 0.0
  %586 = vadd.xlane.f32.xlu0 %v585
  %v587 = vpop.xlane.xlu0 %586
  %v588 = vsel %vm121, %v474, 0.0
  %589 = vadd.xlane.f32.xlu0 %v588
  %v590 = vpop.xlane.xlu0 %589
  %v591 = vsel %vm121, %v475, 0.0
  %592 = vadd.xlane.f32.xlu0 %v591
  %v593 = vpop.xlane.xlu0 %592
  %v594 = vsel %vm121, %v476, 0.0
  %595 = vadd.xlane.f32.xlu0 %v594
  %v596 = vpop.xlane.xlu0 %595
  %v597 = vsel %vm121, %v477, 0.0
  %598 = vadd.xlane.f32.xlu0 %v597
  %v599 = vpop.xlane.xlu0 %598
  %v600 = vsel %vm121, %v478, 0.0
  %601 = vadd.xlane.f32.xlu0 %v600
  %v602 = vpop.xlane.xlu0 %601
  %v603 = vsel %vm121, %v479, 0.0
  %604 = vadd.xlane.f32.xlu0 %v603
  %v605 = vpop.xlane.xlu0 %604
  %v606 = vsel %vm121, %v480, 0.0
  %607 = vadd.xlane.f32.xlu0 %v606
  %v608 = vpop.xlane.xlu0 %607
  %v609 = vsel %vm121, %v481, 0.0
  %610 = vadd.xlane.f32.xlu0 %v609
  %v611 = vpop.xlane.xlu0 %610
  %v612 = vsel %vm121, %v482, 0.0
  %613 = vadd.xlane.f32.xlu0 %v612
  %v614 = vpop.xlane.xlu0 %613
  %v615 = vsel %vm121, %v483, 0.0
  %616 = vadd.xlane.f32.xlu0 %v615
  %v617 = vpop.xlane.xlu0 %616
  %v618 = vsel %vm121, %v484, 0.0
  %619 = vadd.xlane.f32.xlu0 %v618
  %v620 = vpop.xlane.xlu0 %619
  %v621 = vsel %vm121, %v485, 0.0
  %622 = vadd.xlane.f32.xlu0 %v621
  %v623 = vpop.xlane.xlu0 %622
  %v624 = vsel %vm121, %v486, 0.0
  %625 = vadd.xlane.f32.xlu0 %v624
  %v626 = vpop.xlane.xlu0 %625
  %v627 = vsel %vm121, %v487, 0.0
  %628 = vadd.xlane.f32.xlu0 %v627
  %v629 = vpop.xlane.xlu0 %628
  %v630 = vsel %vm121, %v488, 0.0
  %631 = vadd.xlane.f32.xlu0 %v630
  %v632 = vpop.xlane.xlu0 %631
  %v633 = vsel %vm121, %v489, 0.0
  %634 = vadd.xlane.f32.xlu0 %v633
  %v635 = vpop.xlane.xlu0 %634
  %v636 = vsel %vm121, %v490, 0.0
  %637 = vadd.xlane.f32.xlu0 %v636
  %v638 = vpop.xlane.xlu0 %637
  %v639 = vsel %vm121, %v491, 0.0
  %640 = vadd.xlane.f32.xlu0 %v639
  %v641 = vpop.xlane.xlu0 %640
  %v642 = vsel %vm121, %v492, 0.0
  %643 = vadd.xlane.f32.xlu0 %v642
  %v644 = vpop.xlane.xlu0 %643
  %v645 = vsel %vm121, %v493, 0.0
  %646 = vadd.xlane.f32.xlu0 %v645
  %v647 = vpop.xlane.xlu0 %646
  %v648 = vsel %vm121, %v494, 0.0
  %649 = vadd.xlane.f32.xlu0 %v648
  %v650 = vpop.xlane.xlu0 %649
  %v651 = vsel %vm121, %v495, 0.0
  %652 = vadd.xlane.f32.xlu0 %v651
  %v653 = vpop.xlane.xlu0 %652
  %v654 = vsel %vm121, %v496, 0.0
  %655 = vadd.xlane.f32.xlu0 %v654
  %v656 = vpop.xlane.xlu0 %655
  %v657 = vsel %vm121, %v497, 0.0
  %658 = vadd.xlane.f32.xlu0 %v657
  %v659 = vpop.xlane.xlu0 %658
  %v660 = vsel %vm121, %v498, 0.0
  %661 = vadd.xlane.f32.xlu0 %v660
  %v662 = vpop.xlane.xlu0 %661
  %v663 = vsel %vm121, %v499, 0.0
  %664 = vadd.xlane.f32.xlu0 %v663
  %v665 = vpop.xlane.xlu0 %664
  %v666 = vsel %vm121, %v500, 0.0
  %667 = vadd.xlane.f32.xlu0 %v666
  %v668 = vpop.xlane.xlu0 %667
  %v669 = vsel %vm121, %v501, 0.0
  %670 = vadd.xlane.f32.xlu0 %v669
  %v671 = vpop.xlane.xlu0 %670
  %v672 = vsel %vm121, %v502, 0.0
  %673 = vadd.xlane.f32.xlu0 %v672
  %v674 = vpop.xlane.xlu0 %673
  %v675 = vsel %vm121, %v503, 0.0
  %676 = vadd.xlane.f32.xlu0 %v675
  %v677 = vpop.xlane.xlu0 %676
  %v678 = vsel %vm121, %v504, 0.0
  %679 = vadd.xlane.f32.xlu0 %v678
  %v680 = vpop.xlane.xlu0 %679
  %v681 = vsel %vm121, %v505, 0.0
  %682 = vadd.xlane.f32.xlu0 %v681
  %v683 = vpop.xlane.xlu0 %682
  %v684 = vsel %vm121, %v506, 0.0
  %685 = vadd.xlane.f32.xlu0 %v684
  %v686 = vpop.xlane.xlu0 %685
  %v687 = vsel %vm121, %v507, 0.0
  %688 = vadd.xlane.f32.xlu0 %v687
  %v689 = vpop.xlane.xlu0 %688
  %v690 = vsel %vm121, %v508, 0.0
  %691 = vadd.xlane.f32.xlu0 %v690
  %v692 = vpop.xlane.xlu0 %691
  %v693 = vsel %vm121, %v509, 0.0
  %694 = vadd.xlane.f32.xlu0 %v693
  %v695 = vpop.xlane.xlu0 %694
  %v696 = vsel %vm121, %v510, 0.0
  %697 = vadd.xlane.f32.xlu0 %v696
  %v698 = vpop.xlane.xlu0 %697
  %v699 = vsel %vm121, %v511, 0.0
  %700 = vadd.xlane.f32.xlu0 %v699
  %v701 = vpop.xlane.xlu0 %700
  %v702 = vsel %vm121, %v512, 0.0
  %703 = vadd.xlane.f32.xlu0 %v702
  %v704 = vpop.xlane.xlu0 %703
  %v705 = vmul.f32 %v515, %v320
  %v706 = vmul.f32 %v518, %v320
  %v707 = vmul.f32 %v521, %v320
  %v708 = vmul.f32 %v524, %v320
  %v709 = vmul.f32 %v527, %v320
  %v710 = vmul.f32 %v530, %v320
  %v711 = vmul.f32 %v533, %v320
  %v712 = vmul.f32 %v536, %v320
  %v713 = vmul.f32 %v539, %v320
  %v714 = vmul.f32 %v542, %v320
  %v715 = vmul.f32 %v545, %v320
  %v716 = vmul.f32 %v548, %v320
  %v717 = vmul.f32 %v551, %v320
  %v718 = vmul.f32 %v554, %v320
  %v719 = vmul.f32 %v557, %v320
  %v720 = vmul.f32 %v560, %v320
  %v721 = vmul.f32 %v563, %v320
  %v722 = vmul.f32 %v566, %v320
  %v723 = vmul.f32 %v569, %v320
  %v724 = vmul.f32 %v572, %v320
  %v725 = vmul.f32 %v575, %v320
  %v726 = vmul.f32 %v578, %v320
  %v727 = vmul.f32 %v581, %v320
  %v728 = vmul.f32 %v584, %v320
  %v729 = vmul.f32 %v587, %v320
  %v730 = vmul.f32 %v590, %v320
  %v731 = vmul.f32 %v593, %v320
  %v732 = vmul.f32 %v596, %v320
  %v733 = vmul.f32 %v599, %v320
  %v734 = vmul.f32 %v602, %v320
  %v735 = vmul.f32 %v605, %v320
  %v736 = vmul.f32 %v608, %v320
  %v737 = vmul.f32 %v611, %v320
  %v738 = vmul.f32 %v614, %v320
  %v739 = vmul.f32 %v617, %v320
  %v740 = vmul.f32 %v620, %v320
  %v741 = vmul.f32 %v623, %v320
  %v742 = vmul.f32 %v626, %v320
  %v743 = vmul.f32 %v629, %v320
  %v744 = vmul.f32 %v632, %v320
  %v745 = vmul.f32 %v635, %v320
  %v746 = vmul.f32 %v638, %v320
  %v747 = vmul.f32 %v641, %v320
  %v748 = vmul.f32 %v644, %v320
  %v749 = vmul.f32 %v647, %v320
  %v750 = vmul.f32 %v650, %v320
  %v751 = vmul.f32 %v653, %v320
  %v752 = vmul.f32 %v656, %v320
  %v753 = vmul.f32 %v659, %v320
  %v754 = vmul.f32 %v662, %v320
  %v755 = vmul.f32 %v665, %v320
  %v756 = vmul.f32 %v668, %v320
  %v757 = vmul.f32 %v671, %v320
  %v758 = vmul.f32 %v674, %v320
  %v759 = vmul.f32 %v677, %v320
  %v760 = vmul.f32 %v680, %v320
  %v761 = vmul.f32 %v683, %v320
  %v762 = vmul.f32 %v686, %v320
  %v763 = vmul.f32 %v689, %v320
  %v764 = vmul.f32 %v692, %v320
  %v765 = vmul.f32 %v695, %v320
  %v766 = vmul.f32 %v698, %v320
  %v767 = vmul.f32 %v701, %v320
  %v768 = vmul.f32 %v704, %v320
  %v769 = vadd.f32 %v705, 1e-05
  %v770 = vadd.f32 %v706, 1e-05
  %v771 = vadd.f32 %v707, 1e-05
  %v772 = vadd.f32 %v708, 1e-05
  %v773 = vadd.f32 %v709, 1e-05
  %v774 = vadd.f32 %v710, 1e-05
  %v775 = vadd.f32 %v711, 1e-05
  %v776 = vadd.f32 %v712, 1e-05
  %v777 = vadd.f32 %v713, 1e-05
  %v778 = vadd.f32 %v714, 1e-05
  %v779 = vadd.f32 %v715, 1e-05
  %v780 = vadd.f32 %v716, 1e-05
  %v781 = vadd.f32 %v717, 1e-05
  %v782 = vadd.f32 %v718, 1e-05
  %v783 = vadd.f32 %v719, 1e-05
  %v784 = vadd.f32 %v720, 1e-05
  %v785 = vadd.f32 %v721, 1e-05
  %v786 = vadd.f32 %v722, 1e-05
  %v787 = vadd.f32 %v723, 1e-05
  %v788 = vadd.f32 %v724, 1e-05
  %v789 = vadd.f32 %v725, 1e-05
  %v790 = vadd.f32 %v726, 1e-05
  %v791 = vadd.f32 %v727, 1e-05
  %v792 = vadd.f32 %v728, 1e-05
  %v793 = vadd.f32 %v729, 1e-05
  %v794 = vadd.f32 %v730, 1e-05
  %v795 = vadd.f32 %v731, 1e-05
  %v796 = vadd.f32 %v732, 1e-05
  %v797 = vadd.f32 %v733, 1e-05
  %v798 = vadd.f32 %v734, 1e-05
  %v799 = vadd.f32 %v735, 1e-05
  %v800 = vadd.f32 %v736, 1e-05
  %v801 = vadd.f32 %v737, 1e-05
  %v802 = vadd.f32 %v738, 1e-05
  %v803 = vadd.f32 %v739, 1e-05
  %v804 = vadd.f32 %v740, 1e-05
  %v805 = vadd.f32 %v741, 1e-05
  %v806 = vadd.f32 %v742, 1e-05
  %v807 = vadd.f32 %v743, 1e-05
  %v808 = vadd.f32 %v744, 1e-05
  %v809 = vadd.f32 %v745, 1e-05
  %v810 = vadd.f32 %v746, 1e-05
  %v811 = vadd.f32 %v747, 1e-05
  %v812 = vadd.f32 %v748, 1e-05
  %v813 = vadd.f32 %v749, 1e-05
  %v814 = vadd.f32 %v750, 1e-05
  %v815 = vadd.f32 %v751, 1e-05
  %v816 = vadd.f32 %v752, 1e-05
  %v817 = vadd.f32 %v753, 1e-05
  %v818 = vadd.f32 %v754, 1e-05
  %v819 = vadd.f32 %v755, 1e-05
  %v820 = vadd.f32 %v756, 1e-05
  %v821 = vadd.f32 %v757, 1e-05
  %v822 = vadd.f32 %v758, 1e-05
  %v823 = vadd.f32 %v759, 1e-05
  %v824 = vadd.f32 %v760, 1e-05
  %v825 = vadd.f32 %v761, 1e-05
  %v826 = vadd.f32 %v762, 1e-05
  %v827 = vadd.f32 %v763, 1e-05
  %v828 = vadd.f32 %v764, 1e-05
  %v829 = vadd.f32 %v765, 1e-05
  %v830 = vadd.f32 %v766, 1e-05
  %v831 = vadd.f32 %v767, 1e-05
  %v832 = vadd.f32 %v768, 1e-05
  %v833 = vrsqrt.pop %v769
  %v834 = vmul.f32 %v833, %v769
  %v835 = vmul.f32 %v834, %v833
  %v836 = vmul.f32 0.5, %v835
  %v837 = vsub.f32 1.5, %v836
  %v838 = vmul.f32 %v833, %v837
  %vm839 = vweird.f32 %v769
  %vm840 = vweird.f32 %v833
  %vm841 = vmor %vm839, %vm840
  %v842 = vsel %vm841, %v833, %v838
  %v843 = vrsqrt.pop %v770
  %v844 = vmul.f32 %v843, %v770
  %v845 = vmul.f32 %v844, %v843
  %v846 = vmul.f32 0.5, %v845
  %v847 = vsub.f32 1.5, %v846
  %v848 = vmul.f32 %v843, %v847
  %vm849 = vweird.f32 %v770
  %vm850 = vweird.f32 %v843
  %vm851 = vmor %vm849, %vm850
  %v852 = vsel %vm851, %v843, %v848
  %v853 = vrsqrt.pop %v771
  %v854 = vmul.f32 %v853, %v771
  %v855 = vmul.f32 %v854, %v853
  %v856 = vmul.f32 0.5, %v855
  %v857 = vsub.f32 1.5, %v856
  %v858 = vmul.f32 %v853, %v857
  %vm859 = vweird.f32 %v771
  %vm860 = vweird.f32 %v853
  %vm861 = vmor %vm859, %vm860
  %v862 = vsel %vm861, %v853, %v858
  %v863 = vrsqrt.pop %v772
  %v864 = vmul.f32 %v863, %v772
  %v865 = vmul.f32 %v864, %v863
  %v866 = vmul.f32 0.5, %v865
  %v867 = vsub.f32 1.5, %v866
  %v868 = vmul.f32 %v863, %v867
  %vm869 = vweird.f32 %v772
  %vm870 = vweird.f32 %v863
  %vm871 = vmor %vm869, %vm870
  %v872 = vsel %vm871, %v863, %v868
  %v873 = vrsqrt.pop %v773
  %v874 = vmul.f32 %v873, %v773
  %v875 = vmul.f32 %v874, %v873
  %v876 = vmul.f32 0.5, %v875
  %v877 = vsub.f32 1.5, %v876
  %v878 = vmul.f32 %v873, %v877
  %vm879 = vweird.f32 %v773
  %vm880 = vweird.f32 %v873
  %vm881 = vmor %vm879, %vm880
  %v882 = vsel %vm881, %v873, %v878
  %v883 = vrsqrt.pop %v774
  %v884 = vmul.f32 %v883, %v774
  %v885 = vmul.f32 %v884, %v883
  %v886 = vmul.f32 0.5, %v885
  %v887 = vsub.f32 1.5, %v886
  %v888 = vmul.f32 %v883, %v887
  %vm889 = vweird.f32 %v774
  %vm890 = vweird.f32 %v883
  %vm891 = vmor %vm889, %vm890
  %v892 = vsel %vm891, %v883, %v888
  %v893 = vrsqrt.pop %v775
  %v894 = vmul.f32 %v893, %v775
  %v895 = vmul.f32 %v894, %v893
  %v896 = vmul.f32 0.5, %v895
  %v897 = vsub.f32 1.5, %v896
  %v898 = vmul.f32 %v893, %v897
  %vm899 = vweird.f32 %v775
  %vm900 = vweird.f32 %v893
  %vm901 = vmor %vm899, %vm900
  %v902 = vsel %vm901, %v893, %v898
  %v903 = vrsqrt.pop %v776
  %v904 = vmul.f32 %v903, %v776
  %v905 = vmul.f32 %v904, %v903
  %v906 = vmul.f32 0.5, %v905
  %v907 = vsub.f32 1.5, %v906
  %v908 = vmul.f32 %v903, %v907
  %vm909 = vweird.f32 %v776
  %vm910 = vweird.f32 %v903
  %vm911 = vmor %vm909, %vm910
  %v912 = vsel %vm911, %v903, %v908
  %v913 = vrsqrt.pop %v777
  %v914 = vmul.f32 %v913, %v777
  %v915 = vmul.f32 %v914, %v913
  %v916 = vmul.f32 0.5, %v915
  %v917 = vsub.f32 1.5, %v916
  %v918 = vmul.f32 %v913, %v917
  %vm919 = vweird.f32 %v777
  %vm920 = vweird.f32 %v913
  %vm921 = vmor %vm919, %vm920
  %v922 = vsel %vm921, %v913, %v918
  %v923 = vrsqrt.pop %v778
  %v924 = vmul.f32 %v923, %v778
  %v925 = vmul.f32 %v924, %v923
  %v926 = vmul.f32 0.5, %v925
  %v927 = vsub.f32 1.5, %v926
  %v928 = vmul.f32 %v923, %v927
  %vm929 = vweird.f32 %v778
  %vm930 = vweird.f32 %v923
  %vm931 = vmor %vm929, %vm930
  %v932 = vsel %vm931, %v923, %v928
  %v933 = vrsqrt.pop %v779
  %v934 = vmul.f32 %v933, %v779
  %v935 = vmul.f32 %v934, %v933
  %v936 = vmul.f32 0.5, %v935
  %v937 = vsub.f32 1.5, %v936
  %v938 = vmul.f32 %v933, %v937
  %vm939 = vweird.f32 %v779
  %vm940 = vweird.f32 %v933
  %vm941 = vmor %vm939, %vm940
  %v942 = vsel %vm941, %v933, %v938
  %v943 = vrsqrt.pop %v780
  %v944 = vmul.f32 %v943, %v780
  %v945 = vmul.f32 %v944, %v943
  %v946 = vmul.f32 0.5, %v945
  %v947 = vsub.f32 1.5, %v946
  %v948 = vmul.f32 %v943, %v947
  %vm949 = vweird.f32 %v780
  %vm950 = vweird.f32 %v943
  %vm951 = vmor %vm949, %vm950
  %v952 = vsel %vm951, %v943, %v948
  %v953 = vrsqrt.pop %v781
  %v954 = vmul.f32 %v953, %v781
  %v955 = vmul.f32 %v954, %v953
  %v956 = vmul.f32 0.5, %v955
  %v957 = vsub.f32 1.5, %v956
  %v958 = vmul.f32 %v953, %v957
  %vm959 = vweird.f32 %v781
  %vm960 = vweird.f32 %v953
  %vm961 = vmor %vm959, %vm960
  %v962 = vsel %vm961, %v953, %v958
  %v963 = vrsqrt.pop %v782
  %v964 = vmul.f32 %v963, %v782
  %v965 = vmul.f32 %v964, %v963
  %v966 = vmul.f32 0.5, %v965
  %v967 = vsub.f32 1.5, %v966
  %v968 = vmul.f32 %v963, %v967
  %vm969 = vweird.f32 %v782
  %vm970 = vweird.f32 %v963
  %vm971 = vmor %vm969, %vm970
  %v972 = vsel %vm971, %v963, %v968
  %v973 = vrsqrt.pop %v783
  %v974 = vmul.f32 %v973, %v783
  %v975 = vmul.f32 %v974, %v973
  %v976 = vmul.f32 0.5, %v975
  %v977 = vsub.f32 1.5, %v976
  %v978 = vmul.f32 %v973, %v977
  %vm979 = vweird.f32 %v783
  %vm980 = vweird.f32 %v973
  %vm981 = vmor %vm979, %vm980
  %v982 = vsel %vm981, %v973, %v978
  %v983 = vrsqrt.pop %v784
  %v984 = vmul.f32 %v983, %v784
  %v985 = vmul.f32 %v984, %v983
  %v986 = vmul.f32 0.5, %v985
  %v987 = vsub.f32 1.5, %v986
  %v988 = vmul.f32 %v983, %v987
  %vm989 = vweird.f32 %v784
  %vm990 = vweird.f32 %v983
  %vm991 = vmor %vm989, %vm990
  %v992 = vsel %vm991, %v983, %v988
  %v993 = vrsqrt.pop %v785
  %v994 = vmul.f32 %v993, %v785
  %v995 = vmul.f32 %v994, %v993
  %v996 = vmul.f32 0.5, %v995
  %v997 = vsub.f32 1.5, %v996
  %v998 = vmul.f32 %v993, %v997
  %vm999 = vweird.f32 %v785
  %vm1000 = vweird.f32 %v993
  %vm1001 = vmor %vm999, %vm1000
  %v1002 = vsel %vm1001, %v993, %v998
  %v1003 = vrsqrt.pop %v786
  %v1004 = vmul.f32 %v1003, %v786
  %v1005 = vmul.f32 %v1004, %v1003
  %v1006 = vmul.f32 0.5, %v1005
  %v1007 = vsub.f32 1.5, %v1006
  %v1008 = vmul.f32 %v1003, %v1007
  %vm1009 = vweird.f32 %v786
  %vm1010 = vweird.f32 %v1003
  %vm1011 = vmor %vm1009, %vm1010
  %v1012 = vsel %vm1011, %v1003, %v1008
  %v1013 = vrsqrt.pop %v787
  %v1014 = vmul.f32 %v1013, %v787
  %v1015 = vmul.f32 %v1014, %v1013
  %v1016 = vmul.f32 0.5, %v1015
  %v1017 = vsub.f32 1.5, %v1016
  %v1018 = vmul.f32 %v1013, %v1017
  %vm1019 = vweird.f32 %v787
  %vm1020 = vweird.f32 %v1013
  %vm1021 = vmor %vm1019, %vm1020
  %v1022 = vsel %vm1021, %v1013, %v1018
  %v1023 = vrsqrt.pop %v788
  %v1024 = vmul.f32 %v1023, %v788
  %v1025 = vmul.f32 %v1024, %v1023
  %v1026 = vmul.f32 0.5, %v1025
  %v1027 = vsub.f32 1.5, %v1026
  %v1028 = vmul.f32 %v1023, %v1027
  %vm1029 = vweird.f32 %v788
  %vm1030 = vweird.f32 %v1023
  %vm1031 = vmor %vm1029, %vm1030
  %v1032 = vsel %vm1031, %v1023, %v1028
  %v1033 = vrsqrt.pop %v789
  %v1034 = vmul.f32 %v1033, %v789
  %v1035 = vmul.f32 %v1034, %v1033
  %v1036 = vmul.f32 0.5, %v1035
  %v1037 = vsub.f32 1.5, %v1036
  %v1038 = vmul.f32 %v1033, %v1037
  %vm1039 = vweird.f32 %v789
  %vm1040 = vweird.f32 %v1033
  %vm1041 = vmor %vm1039, %vm1040
  %v1042 = vsel %vm1041, %v1033, %v1038
  %v1043 = vrsqrt.pop %v790
  %v1044 = vmul.f32 %v1043, %v790
  %v1045 = vmul.f32 %v1044, %v1043
  %v1046 = vmul.f32 0.5, %v1045
  %v1047 = vsub.f32 1.5, %v1046
  %v1048 = vmul.f32 %v1043, %v1047
  %vm1049 = vweird.f32 %v790
  %vm1050 = vweird.f32 %v1043
  %vm1051 = vmor %vm1049, %vm1050
  %v1052 = vsel %vm1051, %v1043, %v1048
  %v1053 = vrsqrt.pop %v791
  %v1054 = vmul.f32 %v1053, %v791
  %v1055 = vmul.f32 %v1054, %v1053
  %v1056 = vmul.f32 0.5, %v1055
  %v1057 = vsub.f32 1.5, %v1056
  %v1058 = vmul.f32 %v1053, %v1057
  %vm1059 = vweird.f32 %v791
  %vm1060 = vweird.f32 %v1053
  %vm1061 = vmor %vm1059, %vm1060
  %v1062 = vsel %vm1061, %v1053, %v1058
  %v1063 = vrsqrt.pop %v792
  %v1064 = vmul.f32 %v1063, %v792
  %v1065 = vmul.f32 %v1064, %v1063
  %v1066 = vmul.f32 0.5, %v1065
  %v1067 = vsub.f32 1.5, %v1066
  %v1068 = vmul.f32 %v1063, %v1067
  %vm1069 = vweird.f32 %v792
  %vm1070 = vweird.f32 %v1063
  %vm1071 = vmor %vm1069, %vm1070
  %v1072 = vsel %vm1071, %v1063, %v1068
  %v1073 = vrsqrt.pop %v793
  %v1074 = vmul.f32 %v1073, %v793
  %v1075 = vmul.f32 %v1074, %v1073
  %v1076 = vmul.f32 0.5, %v1075
  %v1077 = vsub.f32 1.5, %v1076
  %v1078 = vmul.f32 %v1073, %v1077
  %vm1079 = vweird.f32 %v793
  %vm1080 = vweird.f32 %v1073
  %vm1081 = vmor %vm1079, %vm1080
  %v1082 = vsel %vm1081, %v1073, %v1078
  %v1083 = vrsqrt.pop %v794
  %v1084 = vmul.f32 %v1083, %v794
  %v1085 = vmul.f32 %v1084, %v1083
  %v1086 = vmul.f32 0.5, %v1085
  %v1087 = vsub.f32 1.5, %v1086
  %v1088 = vmul.f32 %v1083, %v1087
  %vm1089 = vweird.f32 %v794
  %vm1090 = vweird.f32 %v1083
  %vm1091 = vmor %vm1089, %vm1090
  %v1092 = vsel %vm1091, %v1083, %v1088
  %v1093 = vrsqrt.pop %v795
  %v1094 = vmul.f32 %v1093, %v795
  %v1095 = vmul.f32 %v1094, %v1093
  %v1096 = vmul.f32 0.5, %v1095
  %v1097 = vsub.f32 1.5, %v1096
  %v1098 = vmul.f32 %v1093, %v1097
  %vm1099 = vweird.f32 %v795
  %vm1100 = vweird.f32 %v1093
  %vm1101 = vmor %vm1099, %vm1100
  %v1102 = vsel %vm1101, %v1093, %v1098
  %v1103 = vrsqrt.pop %v796
  %v1104 = vmul.f32 %v1103, %v796
  %v1105 = vmul.f32 %v1104, %v1103
  %v1106 = vmul.f32 0.5, %v1105
  %v1107 = vsub.f32 1.5, %v1106
  %v1108 = vmul.f32 %v1103, %v1107
  %vm1109 = vweird.f32 %v796
  %vm1110 = vweird.f32 %v1103
  %vm1111 = vmor %vm1109, %vm1110
  %v1112 = vsel %vm1111, %v1103, %v1108
  %v1113 = vrsqrt.pop %v797
  %v1114 = vmul.f32 %v1113, %v797
  %v1115 = vmul.f32 %v1114, %v1113
  %v1116 = vmul.f32 0.5, %v1115
  %v1117 = vsub.f32 1.5, %v1116
  %v1118 = vmul.f32 %v1113, %v1117
  %vm1119 = vweird.f32 %v797
  %vm1120 = vweird.f32 %v1113
  %vm1121 = vmor %vm1119, %vm1120
  %v1122 = vsel %vm1121, %v1113, %v1118
  %v1123 = vrsqrt.pop %v798
  %v1124 = vmul.f32 %v1123, %v798
  %v1125 = vmul.f32 %v1124, %v1123
  %v1126 = vmul.f32 0.5, %v1125
  %v1127 = vsub.f32 1.5, %v1126
  %v1128 = vmul.f32 %v1123, %v1127
  %vm1129 = vweird.f32 %v798
  %vm1130 = vweird.f32 %v1123
  %vm1131 = vmor %vm1129, %vm1130
  %v1132 = vsel %vm1131, %v1123, %v1128
  %v1133 = vrsqrt.pop %v799
  %v1134 = vmul.f32 %v1133, %v799
  %v1135 = vmul.f32 %v1134, %v1133
  %v1136 = vmul.f32 0.5, %v1135
  %v1137 = vsub.f32 1.5, %v1136
  %v1138 = vmul.f32 %v1133, %v1137
  %vm1139 = vweird.f32 %v799
  %vm1140 = vweird.f32 %v1133
  %vm1141 = vmor %vm1139, %vm1140
  %v1142 = vsel %vm1141, %v1133, %v1138
  %v1143 = vrsqrt.pop %v800
  %v1144 = vmul.f32 %v1143, %v800
  %v1145 = vmul.f32 %v1144, %v1143
  %v1146 = vmul.f32 0.5, %v1145
  %v1147 = vsub.f32 1.5, %v1146
  %v1148 = vmul.f32 %v1143, %v1147
  %vm1149 = vweird.f32 %v800
  %vm1150 = vweird.f32 %v1143
  %vm1151 = vmor %vm1149, %vm1150
  %v1152 = vsel %vm1151, %v1143, %v1148
  %v1153 = vrsqrt.pop %v801
  %v1154 = vmul.f32 %v1153, %v801
  %v1155 = vmul.f32 %v1154, %v1153
  %v1156 = vmul.f32 0.5, %v1155
  %v1157 = vsub.f32 1.5, %v1156
  %v1158 = vmul.f32 %v1153, %v1157
  %vm1159 = vweird.f32 %v801
  %vm1160 = vweird.f32 %v1153
  %vm1161 = vmor %vm1159, %vm1160
  %v1162 = vsel %vm1161, %v1153, %v1158
  %v1163 = vrsqrt.pop %v802
  %v1164 = vmul.f32 %v1163, %v802
  %v1165 = vmul.f32 %v1164, %v1163
  %v1166 = vmul.f32 0.5, %v1165
  %v1167 = vsub.f32 1.5, %v1166
  %v1168 = vmul.f32 %v1163, %v1167
  %vm1169 = vweird.f32 %v802
  %vm1170 = vweird.f32 %v1163
  %vm1171 = vmor %vm1169, %vm1170
  %v1172 = vsel %vm1171, %v1163, %v1168
  %v1173 = vrsqrt.pop %v803
  %v1174 = vmul.f32 %v1173, %v803
  %v1175 = vmul.f32 %v1174, %v1173
  %v1176 = vmul.f32 0.5, %v1175
  %v1177 = vsub.f32 1.5, %v1176
  %v1178 = vmul.f32 %v1173, %v1177
  %vm1179 = vweird.f32 %v803
  %vm1180 = vweird.f32 %v1173
  %vm1181 = vmor %vm1179, %vm1180
  %v1182 = vsel %vm1181, %v1173, %v1178
  %v1183 = vrsqrt.pop %v804
  %v1184 = vmul.f32 %v1183, %v804
  %v1185 = vmul.f32 %v1184, %v1183
  %v1186 = vmul.f32 0.5, %v1185
  %v1187 = vsub.f32 1.5, %v1186
  %v1188 = vmul.f32 %v1183, %v1187
  %vm1189 = vweird.f32 %v804
  %vm1190 = vweird.f32 %v1183
  %vm1191 = vmor %vm1189, %vm1190
  %v1192 = vsel %vm1191, %v1183, %v1188
  %v1193 = vrsqrt.pop %v805
  %v1194 = vmul.f32 %v1193, %v805
  %v1195 = vmul.f32 %v1194, %v1193
  %v1196 = vmul.f32 0.5, %v1195
  %v1197 = vsub.f32 1.5, %v1196
  %v1198 = vmul.f32 %v1193, %v1197
  %vm1199 = vweird.f32 %v805
  %vm1200 = vweird.f32 %v1193
  %vm1201 = vmor %vm1199, %vm1200
  %v1202 = vsel %vm1201, %v1193, %v1198
  %v1203 = vrsqrt.pop %v806
  %v1204 = vmul.f32 %v1203, %v806
  %v1205 = vmul.f32 %v1204, %v1203
  %v1206 = vmul.f32 0.5, %v1205
  %v1207 = vsub.f32 1.5, %v1206
  %v1208 = vmul.f32 %v1203, %v1207
  %vm1209 = vweird.f32 %v806
  %vm1210 = vweird.f32 %v1203
  %vm1211 = vmor %vm1209, %vm1210
  %v1212 = vsel %vm1211, %v1203, %v1208
  %v1213 = vrsqrt.pop %v807
  %v1214 = vmul.f32 %v1213, %v807
  %v1215 = vmul.f32 %v1214, %v1213
  %v1216 = vmul.f32 0.5, %v1215
  %v1217 = vsub.f32 1.5, %v1216
  %v1218 = vmul.f32 %v1213, %v1217
  %vm1219 = vweird.f32 %v807
  %vm1220 = vweird.f32 %v1213
  %vm1221 = vmor %vm1219, %vm1220
  %v1222 = vsel %vm1221, %v1213, %v1218
  %v1223 = vrsqrt.pop %v808
  %v1224 = vmul.f32 %v1223, %v808
  %v1225 = vmul.f32 %v1224, %v1223
  %v1226 = vmul.f32 0.5, %v1225
  %v1227 = vsub.f32 1.5, %v1226
  %v1228 = vmul.f32 %v1223, %v1227
  %vm1229 = vweird.f32 %v808
  %vm1230 = vweird.f32 %v1223
  %vm1231 = vmor %vm1229, %vm1230
  %v1232 = vsel %vm1231, %v1223, %v1228
  %v1233 = vrsqrt.pop %v809
  %v1234 = vmul.f32 %v1233, %v809
  %v1235 = vmul.f32 %v1234, %v1233
  %v1236 = vmul.f32 0.5, %v1235
  %v1237 = vsub.f32 1.5, %v1236
  %v1238 = vmul.f32 %v1233, %v1237
  %vm1239 = vweird.f32 %v809
  %vm1240 = vweird.f32 %v1233
  %vm1241 = vmor %vm1239, %vm1240
  %v1242 = vsel %vm1241, %v1233, %v1238
  %v1243 = vrsqrt.pop %v810
  %v1244 = vmul.f32 %v1243, %v810
  %v1245 = vmul.f32 %v1244, %v1243
  %v1246 = vmul.f32 0.5, %v1245
  %v1247 = vsub.f32 1.5, %v1246
  %v1248 = vmul.f32 %v1243, %v1247
  %vm1249 = vweird.f32 %v810
  %vm1250 = vweird.f32 %v1243
  %vm1251 = vmor %vm1249, %vm1250
  %v1252 = vsel %vm1251, %v1243, %v1248
  %v1253 = vrsqrt.pop %v811
  %v1254 = vmul.f32 %v1253, %v811
  %v1255 = vmul.f32 %v1254, %v1253
  %v1256 = vmul.f32 0.5, %v1255
  %v1257 = vsub.f32 1.5, %v1256
  %v1258 = vmul.f32 %v1253, %v1257
  %vm1259 = vweird.f32 %v811
  %vm1260 = vweird.f32 %v1253
  %vm1261 = vmor %vm1259, %vm1260
  %v1262 = vsel %vm1261, %v1253, %v1258
  %v1263 = vrsqrt.pop %v812
  %v1264 = vmul.f32 %v1263, %v812
  %v1265 = vmul.f32 %v1264, %v1263
  %v1266 = vmul.f32 0.5, %v1265
  %v1267 = vsub.f32 1.5, %v1266
  %v1268 = vmul.f32 %v1263, %v1267
  %vm1269 = vweird.f32 %v812
  %vm1270 = vweird.f32 %v1263
  %vm1271 = vmor %vm1269, %vm1270
  %v1272 = vsel %vm1271, %v1263, %v1268
  %v1273 = vrsqrt.pop %v813
  %v1274 = vmul.f32 %v1273, %v813
  %v1275 = vmul.f32 %v1274, %v1273
  %v1276 = vmul.f32 0.5, %v1275
  %v1277 = vsub.f32 1.5, %v1276
  %v1278 = vmul.f32 %v1273, %v1277
  %vm1279 = vweird.f32 %v813
  %vm1280 = vweird.f32 %v1273
  %vm1281 = vmor %vm1279, %vm1280
  %v1282 = vsel %vm1281, %v1273, %v1278
  %v1283 = vrsqrt.pop %v814
  %v1284 = vmul.f32 %v1283, %v814
  %v1285 = vmul.f32 %v1284, %v1283
  %v1286 = vmul.f32 0.5, %v1285
  %v1287 = vsub.f32 1.5, %v1286
  %v1288 = vmul.f32 %v1283, %v1287
  %vm1289 = vweird.f32 %v814
  %vm1290 = vweird.f32 %v1283
  %vm1291 = vmor %vm1289, %vm1290
  %v1292 = vsel %vm1291, %v1283, %v1288
  %v1293 = vrsqrt.pop %v815
  %v1294 = vmul.f32 %v1293, %v815
  %v1295 = vmul.f32 %v1294, %v1293
  %v1296 = vmul.f32 0.5, %v1295
  %v1297 = vsub.f32 1.5, %v1296
  %v1298 = vmul.f32 %v1293, %v1297
  %vm1299 = vweird.f32 %v815
  %vm1300 = vweird.f32 %v1293
  %vm1301 = vmor %vm1299, %vm1300
  %v1302 = vsel %vm1301, %v1293, %v1298
  %v1303 = vrsqrt.pop %v816
  %v1304 = vmul.f32 %v1303, %v816
  %v1305 = vmul.f32 %v1304, %v1303
  %v1306 = vmul.f32 0.5, %v1305
  %v1307 = vsub.f32 1.5, %v1306
  %v1308 = vmul.f32 %v1303, %v1307
  %vm1309 = vweird.f32 %v816
  %vm1310 = vweird.f32 %v1303
  %vm1311 = vmor %vm1309, %vm1310
  %v1312 = vsel %vm1311, %v1303, %v1308
  %v1313 = vrsqrt.pop %v817
  %v1314 = vmul.f32 %v1313, %v817
  %v1315 = vmul.f32 %v1314, %v1313
  %v1316 = vmul.f32 0.5, %v1315
  %v1317 = vsub.f32 1.5, %v1316
  %v1318 = vmul.f32 %v1313, %v1317
  %vm1319 = vweird.f32 %v817
  %vm1320 = vweird.f32 %v1313
  %vm1321 = vmor %vm1319, %vm1320
  %v1322 = vsel %vm1321, %v1313, %v1318
  %v1323 = vrsqrt.pop %v818
  %v1324 = vmul.f32 %v1323, %v818
  %v1325 = vmul.f32 %v1324, %v1323
  %v1326 = vmul.f32 0.5, %v1325
  %v1327 = vsub.f32 1.5, %v1326
  %v1328 = vmul.f32 %v1323, %v1327
  %vm1329 = vweird.f32 %v818
  %vm1330 = vweird.f32 %v1323
  %vm1331 = vmor %vm1329, %vm1330
  %v1332 = vsel %vm1331, %v1323, %v1328
  %v1333 = vrsqrt.pop %v819
  %v1334 = vmul.f32 %v1333, %v819
  %v1335 = vmul.f32 %v1334, %v1333
  %v1336 = vmul.f32 0.5, %v1335
  %v1337 = vsub.f32 1.5, %v1336
  %v1338 = vmul.f32 %v1333, %v1337
  %vm1339 = vweird.f32 %v819
  %vm1340 = vweird.f32 %v1333
  %vm1341 = vmor %vm1339, %vm1340
  %v1342 = vsel %vm1341, %v1333, %v1338
  %v1343 = vrsqrt.pop %v820
  %v1344 = vmul.f32 %v1343, %v820
  %v1345 = vmul.f32 %v1344, %v1343
  %v1346 = vmul.f32 0.5, %v1345
  %v1347 = vsub.f32 1.5, %v1346
  %v1348 = vmul.f32 %v1343, %v1347
  %vm1349 = vweird.f32 %v820
  %vm1350 = vweird.f32 %v1343
  %vm1351 = vmor %vm1349, %vm1350
  %v1352 = vsel %vm1351, %v1343, %v1348
  %v1353 = vrsqrt.pop %v821
  %v1354 = vmul.f32 %v1353, %v821
  %v1355 = vmul.f32 %v1354, %v1353
  %v1356 = vmul.f32 0.5, %v1355
  %v1357 = vsub.f32 1.5, %v1356
  %v1358 = vmul.f32 %v1353, %v1357
  %vm1359 = vweird.f32 %v821
  %vm1360 = vweird.f32 %v1353
  %vm1361 = vmor %vm1359, %vm1360
  %v1362 = vsel %vm1361, %v1353, %v1358
  %v1363 = vrsqrt.pop %v822
  %v1364 = vmul.f32 %v1363, %v822
  %v1365 = vmul.f32 %v1364, %v1363
  %v1366 = vmul.f32 0.5, %v1365
  %v1367 = vsub.f32 1.5, %v1366
  %v1368 = vmul.f32 %v1363, %v1367
  %vm1369 = vweird.f32 %v822
  %vm1370 = vweird.f32 %v1363
  %vm1371 = vmor %vm1369, %vm1370
  %v1372 = vsel %vm1371, %v1363, %v1368
  %v1373 = vrsqrt.pop %v823
  %v1374 = vmul.f32 %v1373, %v823
  %v1375 = vmul.f32 %v1374, %v1373
  %v1376 = vmul.f32 0.5, %v1375
  %v1377 = vsub.f32 1.5, %v1376
  %v1378 = vmul.f32 %v1373, %v1377
  %vm1379 = vweird.f32 %v823
  %vm1380 = vweird.f32 %v1373
  %vm1381 = vmor %vm1379, %vm1380
  %v1382 = vsel %vm1381, %v1373, %v1378
  %v1383 = vrsqrt.pop %v824
  %v1384 = vmul.f32 %v1383, %v824
  %v1385 = vmul.f32 %v1384, %v1383
  %v1386 = vmul.f32 0.5, %v1385
  %v1387 = vsub.f32 1.5, %v1386
  %v1388 = vmul.f32 %v1383, %v1387
  %vm1389 = vweird.f32 %v824
  %vm1390 = vweird.f32 %v1383
  %vm1391 = vmor %vm1389, %vm1390
  %v1392 = vsel %vm1391, %v1383, %v1388
  %v1393 = vrsqrt.pop %v825
  %v1394 = vmul.f32 %v1393, %v825
  %v1395 = vmul.f32 %v1394, %v1393
  %v1396 = vmul.f32 0.5, %v1395
  %v1397 = vsub.f32 1.5, %v1396
  %v1398 = vmul.f32 %v1393, %v1397
  %vm1399 = vweird.f32 %v825
  %vm1400 = vweird.f32 %v1393
  %vm1401 = vmor %vm1399, %vm1400
  %v1402 = vsel %vm1401, %v1393, %v1398
  %v1403 = vrsqrt.pop %v826
  %v1404 = vmul.f32 %v1403, %v826
  %v1405 = vmul.f32 %v1404, %v1403
  %v1406 = vmul.f32 0.5, %v1405
  %v1407 = vsub.f32 1.5, %v1406
  %v1408 = vmul.f32 %v1403, %v1407
  %vm1409 = vweird.f32 %v826
  %vm1410 = vweird.f32 %v1403
  %vm1411 = vmor %vm1409, %vm1410
  %v1412 = vsel %vm1411, %v1403, %v1408
  %v1413 = vrsqrt.pop %v827
  %v1414 = vmul.f32 %v1413, %v827
  %v1415 = vmul.f32 %v1414, %v1413
  %v1416 = vmul.f32 0.5, %v1415
  %v1417 = vsub.f32 1.5, %v1416
  %v1418 = vmul.f32 %v1413, %v1417
  %vm1419 = vweird.f32 %v827
  %vm1420 = vweird.f32 %v1413
  %vm1421 = vmor %vm1419, %vm1420
  %v1422 = vsel %vm1421, %v1413, %v1418
  %v1423 = vrsqrt.pop %v828
  %v1424 = vmul.f32 %v1423, %v828
  %v1425 = vmul.f32 %v1424, %v1423
  %v1426 = vmul.f32 0.5, %v1425
  %v1427 = vsub.f32 1.5, %v1426
  %v1428 = vmul.f32 %v1423, %v1427
  %vm1429 = vweird.f32 %v828
  %vm1430 = vweird.f32 %v1423
  %vm1431 = vmor %vm1429, %vm1430
  %v1432 = vsel %vm1431, %v1423, %v1428
  %v1433 = vrsqrt.pop %v829
  %v1434 = vmul.f32 %v1433, %v829
  %v1435 = vmul.f32 %v1434, %v1433
  %v1436 = vmul.f32 0.5, %v1435
  %v1437 = vsub.f32 1.5, %v1436
  %v1438 = vmul.f32 %v1433, %v1437
  %vm1439 = vweird.f32 %v829
  %vm1440 = vweird.f32 %v1433
  %vm1441 = vmor %vm1439, %vm1440
  %v1442 = vsel %vm1441, %v1433, %v1438
  %v1443 = vrsqrt.pop %v830
  %v1444 = vmul.f32 %v1443, %v830
  %v1445 = vmul.f32 %v1444, %v1443
  %v1446 = vmul.f32 0.5, %v1445
  %v1447 = vsub.f32 1.5, %v1446
  %v1448 = vmul.f32 %v1443, %v1447
  %vm1449 = vweird.f32 %v830
  %vm1450 = vweird.f32 %v1443
  %vm1451 = vmor %vm1449, %vm1450
  %v1452 = vsel %vm1451, %v1443, %v1448
  %v1453 = vrsqrt.pop %v831
  %v1454 = vmul.f32 %v1453, %v831
  %v1455 = vmul.f32 %v1454, %v1453
  %v1456 = vmul.f32 0.5, %v1455
  %v1457 = vsub.f32 1.5, %v1456
  %v1458 = vmul.f32 %v1453, %v1457
  %vm1459 = vweird.f32 %v831
  %vm1460 = vweird.f32 %v1453
  %vm1461 = vmor %vm1459, %vm1460
  %v1462 = vsel %vm1461, %v1453, %v1458
  %v1463 = vrsqrt.pop %v832
  %v1464 = vmul.f32 %v1463, %v832
  %v1465 = vmul.f32 %v1464, %v1463
  %v1466 = vmul.f32 0.5, %v1465
  %v1467 = vsub.f32 1.5, %v1466
  %v1468 = vmul.f32 %v1463, %v1467
  %vm1469 = vweird.f32 %v832
  %vm1470 = vweird.f32 %v1463
  %vm1471 = vmor %vm1469, %vm1470
  %v1472 = vsel %vm1471, %v1463, %v1468
  %v1473 = vmul.f32 %v385, %v842
  %v1474 = vmul.f32 %v386, %v852
  %v1475 = vmul.f32 %v387, %v862
  %v1476 = vmul.f32 %v388, %v872
  %v1477 = vmul.f32 %v389, %v882
  %v1478 = vmul.f32 %v390, %v892
  %v1479 = vmul.f32 %v391, %v902
  %v1480 = vmul.f32 %v392, %v912
  %v1481 = vmul.f32 %v393, %v922
  %v1482 = vmul.f32 %v394, %v932
  %v1483 = vmul.f32 %v395, %v942
  %v1484 = vmul.f32 %v396, %v952
  %v1485 = vmul.f32 %v397, %v962
  %v1486 = vmul.f32 %v398, %v972
  %v1487 = vmul.f32 %v399, %v982
  %v1488 = vmul.f32 %v400, %v992
  %v1489 = vmul.f32 %v401, %v1002
  %v1490 = vmul.f32 %v402, %v1012
  %v1491 = vmul.f32 %v403, %v1022
  %v1492 = vmul.f32 %v404, %v1032
  %v1493 = vmul.f32 %v405, %v1042
  %v1494 = vmul.f32 %v406, %v1052
  %v1495 = vmul.f32 %v407, %v1062
  %v1496 = vmul.f32 %v408, %v1072
  %v1497 = vmul.f32 %v409, %v1082
  %v1498 = vmul.f32 %v410, %v1092
  %v1499 = vmul.f32 %v411, %v1102
  %v1500 = vmul.f32 %v412, %v1112
  %v1501 = vmul.f32 %v413, %v1122
  %v1502 = vmul.f32 %v414, %v1132
  %v1503 = vmul.f32 %v415, %v1142
  %v1504 = vmul.f32 %v416, %v1152
  %v1505 = vmul.f32 %v417, %v1162
  %v1506 = vmul.f32 %v418, %v1172
  %v1507 = vmul.f32 %v419, %v1182
  %v1508 = vmul.f32 %v420, %v1192
  %v1509 = vmul.f32 %v421, %v1202
  %v1510 = vmul.f32 %v422, %v1212
  %v1511 = vmul.f32 %v423, %v1222
  %v1512 = vmul.f32 %v424, %v1232
  %v1513 = vmul.f32 %v425, %v1242
  %v1514 = vmul.f32 %v426, %v1252
  %v1515 = vmul.f32 %v427, %v1262
  %v1516 = vmul.f32 %v428, %v1272
  %v1517 = vmul.f32 %v429, %v1282
  %v1518 = vmul.f32 %v430, %v1292
  %v1519 = vmul.f32 %v431, %v1302
  %v1520 = vmul.f32 %v432, %v1312
  %v1521 = vmul.f32 %v433, %v1322
  %v1522 = vmul.f32 %v434, %v1332
  %v1523 = vmul.f32 %v435, %v1342
  %v1524 = vmul.f32 %v436, %v1352
  %v1525 = vmul.f32 %v437, %v1362
  %v1526 = vmul.f32 %v438, %v1372
  %v1527 = vmul.f32 %v439, %v1382
  %v1528 = vmul.f32 %v440, %v1392
  %v1529 = vmul.f32 %v441, %v1402
  %v1530 = vmul.f32 %v442, %v1412
  %v1531 = vmul.f32 %v443, %v1422
  %v1532 = vmul.f32 %v444, %v1432
  %v1533 = vmul.f32 %v445, %v1442
  %v1534 = vmul.f32 %v446, %v1452
  %v1535 = vmul.f32 %v447, %v1462
  %v1536 = vmul.f32 %v448, %v1472
  %v1537 = vld [vmem:[%s1] sm:$0x1]
  %v1539 = vperm.slane %v1537, 0
  %v1541 = vmul.f32 %v1473, %v1539
  %v1542 = vmul.f32 %v1474, %v1539
  %v1543 = vmul.f32 %v1475, %v1539
  %v1544 = vmul.f32 %v1476, %v1539
  %v1545 = vmul.f32 %v1477, %v1539
  %v1546 = vmul.f32 %v1478, %v1539
  %v1547 = vmul.f32 %v1479, %v1539
  %v1548 = vmul.f32 %v1480, %v1539
  %v1549 = vmul.f32 %v1481, %v1539
  %v1550 = vmul.f32 %v1482, %v1539
  %v1551 = vmul.f32 %v1483, %v1539
  %v1552 = vmul.f32 %v1484, %v1539
  %v1553 = vmul.f32 %v1485, %v1539
  %v1554 = vmul.f32 %v1486, %v1539
  %v1555 = vmul.f32 %v1487, %v1539
  %v1556 = vmul.f32 %v1488, %v1539
  %v1557 = vmul.f32 %v1489, %v1539
  %v1558 = vmul.f32 %v1490, %v1539
  %v1559 = vmul.f32 %v1491, %v1539
  %v1560 = vmul.f32 %v1492, %v1539
  %v1561 = vmul.f32 %v1493, %v1539
  %v1562 = vmul.f32 %v1494, %v1539
  %v1563 = vmul.f32 %v1495, %v1539
  %v1564 = vmul.f32 %v1496, %v1539
  %v1565 = vmul.f32 %v1497, %v1539
  %v1566 = vmul.f32 %v1498, %v1539
  %v1567 = vmul.f32 %v1499, %v1539
  %v1568 = vmul.f32 %v1500, %v1539
  %v1569 = vmul.f32 %v1501, %v1539
  %v1570 = vmul.f32 %v1502, %v1539
  %v1571 = vmul.f32 %v1503, %v1539
  %v1572 = vmul.f32 %v1504, %v1539
  %v1573 = vmul.f32 %v1505, %v1539
  %v1574 = vmul.f32 %v1506, %v1539
  %v1575 = vmul.f32 %v1507, %v1539
  %v1576 = vmul.f32 %v1508, %v1539
  %v1577 = vmul.f32 %v1509, %v1539
  %v1578 = vmul.f32 %v1510, %v1539
  %v1579 = vmul.f32 %v1511, %v1539
  %v1580 = vmul.f32 %v1512, %v1539
  %v1581 = vmul.f32 %v1513, %v1539
  %v1582 = vmul.f32 %v1514, %v1539
  %v1583 = vmul.f32 %v1515, %v1539
  %v1584 = vmul.f32 %v1516, %v1539
  %v1585 = vmul.f32 %v1517, %v1539
  %v1586 = vmul.f32 %v1518, %v1539
  %v1587 = vmul.f32 %v1519, %v1539
  %v1588 = vmul.f32 %v1520, %v1539
  %v1589 = vmul.f32 %v1521, %v1539
  %v1590 = vmul.f32 %v1522, %v1539
  %v1591 = vmul.f32 %v1523, %v1539
  %v1592 = vmul.f32 %v1524, %v1539
  %v1593 = vmul.f32 %v1525, %v1539
  %v1594 = vmul.f32 %v1526, %v1539
  %v1595 = vmul.f32 %v1527, %v1539
  %v1596 = vmul.f32 %v1528, %v1539
  %v1597 = vmul.f32 %v1529, %v1539
  %v1598 = vmul.f32 %v1530, %v1539
  %v1599 = vmul.f32 %v1531, %v1539
  %v1600 = vmul.f32 %v1532, %v1539
  %v1601 = vmul.f32 %v1533, %v1539
  %v1602 = vmul.f32 %v1534, %v1539
  %v1603 = vmul.f32 %v1535, %v1539
  %v1604 = vmul.f32 %v1536, %v1539
  %v1605 = vld [vmem:[%s2] sm:$0x1]
  %v1607 = vperm.slane %v1605, 0
  %v1609 = vadd.f32 %v1541, %v1607
  %v1610 = vadd.f32 %v1542, %v1607
  %v1611 = vadd.f32 %v1543, %v1607
  %v1612 = vadd.f32 %v1544, %v1607
  %v1613 = vadd.f32 %v1545, %v1607
  %v1614 = vadd.f32 %v1546, %v1607
  %v1615 = vadd.f32 %v1547, %v1607
  %v1616 = vadd.f32 %v1548, %v1607
  %v1617 = vadd.f32 %v1549, %v1607
  %v1618 = vadd.f32 %v1550, %v1607
  %v1619 = vadd.f32 %v1551, %v1607
  %v1620 = vadd.f32 %v1552, %v1607
  %v1621 = vadd.f32 %v1553, %v1607
  %v1622 = vadd.f32 %v1554, %v1607
  %v1623 = vadd.f32 %v1555, %v1607
  %v1624 = vadd.f32 %v1556, %v1607
  %v1625 = vadd.f32 %v1557, %v1607
  %v1626 = vadd.f32 %v1558, %v1607
  %v1627 = vadd.f32 %v1559, %v1607
  %v1628 = vadd.f32 %v1560, %v1607
  %v1629 = vadd.f32 %v1561, %v1607
  %v1630 = vadd.f32 %v1562, %v1607
  %v1631 = vadd.f32 %v1563, %v1607
  %v1632 = vadd.f32 %v1564, %v1607
  %v1633 = vadd.f32 %v1565, %v1607
  %v1634 = vadd.f32 %v1566, %v1607
  %v1635 = vadd.f32 %v1567, %v1607
  %v1636 = vadd.f32 %v1568, %v1607
  %v1637 = vadd.f32 %v1569, %v1607
  %v1638 = vadd.f32 %v1570, %v1607
  %v1639 = vadd.f32 %v1571, %v1607
  %v1640 = vadd.f32 %v1572, %v1607
  %v1641 = vadd.f32 %v1573, %v1607
  %v1642 = vadd.f32 %v1574, %v1607
  %v1643 = vadd.f32 %v1575, %v1607
  %v1644 = vadd.f32 %v1576, %v1607
  %v1645 = vadd.f32 %v1577, %v1607
  %v1646 = vadd.f32 %v1578, %v1607
  %v1647 = vadd.f32 %v1579, %v1607
  %v1648 = vadd.f32 %v1580, %v1607
  %v1649 = vadd.f32 %v1581, %v1607
  %v1650 = vadd.f32 %v1582, %v1607
  %v1651 = vadd.f32 %v1583, %v1607
  %v1652 = vadd.f32 %v1584, %v1607
  %v1653 = vadd.f32 %v1585, %v1607
  %v1654 = vadd.f32 %v1586, %v1607
  %v1655 = vadd.f32 %v1587, %v1607
  %v1656 = vadd.f32 %v1588, %v1607
  %v1657 = vadd.f32 %v1589, %v1607
  %v1658 = vadd.f32 %v1590, %v1607
  %v1659 = vadd.f32 %v1591, %v1607
  %v1660 = vadd.f32 %v1592, %v1607
  %v1661 = vadd.f32 %v1593, %v1607
  %v1662 = vadd.f32 %v1594, %v1607
  %v1663 = vadd.f32 %v1595, %v1607
  %v1664 = vadd.f32 %v1596, %v1607
  %v1665 = vadd.f32 %v1597, %v1607
  %v1666 = vadd.f32 %v1598, %v1607
  %v1667 = vadd.f32 %v1599, %v1607
  %v1668 = vadd.f32 %v1600, %v1607
  %v1669 = vadd.f32 %v1601, %v1607
  %v1670 = vadd.f32 %v1602, %v1607
  %v1671 = vadd.f32 %v1603, %v1607
  %v1672 = vadd.f32 %v1604, %v1607
  %v1673 = vld [vmem:[%s3] sm:$0xff]
  %v1675 = vsel %vm121, %v1609, 0
  %v1678 = vsel %vm121, %v1610, 0
  %v1681 = vsel %vm121, %v1611, 0
  %v1684 = vsel %vm121, %v1612, 0
  %v1687 = vsel %vm121, %v1613, 0
  %v1690 = vsel %vm121, %v1614, 0
  %v1693 = vsel %vm121, %v1615, 0
  %v1696 = vsel %vm121, %v1616, 0
  %v1699 = vsel %vm121, %v1617, 0
  %v1702 = vsel %vm121, %v1618, 0
  %v1705 = vsel %vm121, %v1619, 0
  %v1708 = vsel %vm121, %v1620, 0
  %v1711 = vsel %vm121, %v1621, 0
  %v1714 = vsel %vm121, %v1622, 0
  %v1717 = vsel %vm121, %v1623, 0
  %v1720 = vsel %vm121, %v1624, 0
  %v1723 = vsel %vm121, %v1625, 0
  %v1726 = vsel %vm121, %v1626, 0
  %v1729 = vsel %vm121, %v1627, 0
  %v1732 = vsel %vm121, %v1628, 0
  %v1735 = vsel %vm121, %v1629, 0
  %v1738 = vsel %vm121, %v1630, 0
  %v1741 = vsel %vm121, %v1631, 0
  %v1744 = vsel %vm121, %v1632, 0
  %v1747 = vsel %vm121, %v1633, 0
  %v1750 = vsel %vm121, %v1634, 0
  %v1753 = vsel %vm121, %v1635, 0
  %v1756 = vsel %vm121, %v1636, 0
  %v1759 = vsel %vm121, %v1637, 0
  %v1762 = vsel %vm121, %v1638, 0
  %v1765 = vsel %vm121, %v1639, 0
  %v1768 = vsel %vm121, %v1640, 0
  %v1771 = vsel %vm121, %v1641, 0
  %v1774 = vsel %vm121, %v1642, 0
  %v1777 = vsel %vm121, %v1643, 0
  %v1780 = vsel %vm121, %v1644, 0
  %v1783 = vsel %vm121, %v1645, 0
  %v1786 = vsel %vm121, %v1646, 0
  %v1789 = vsel %vm121, %v1647, 0
  %v1792 = vsel %vm121, %v1648, 0
  %v1795 = vsel %vm121, %v1649, 0
  %v1798 = vsel %vm121, %v1650, 0
  %v1801 = vsel %vm121, %v1651, 0
  %v1804 = vsel %vm121, %v1652, 0
  %v1807 = vsel %vm121, %v1653, 0
  %v1810 = vsel %vm121, %v1654, 0
  %v1813 = vsel %vm121, %v1655, 0
  %v1816 = vsel %vm121, %v1656, 0
  %v1819 = vsel %vm121, %v1657, 0
  %v1822 = vsel %vm121, %v1658, 0
  %v1825 = vsel %vm121, %v1659, 0
  %v1828 = vsel %vm121, %v1660, 0
  %v1831 = vsel %vm121, %v1661, 0
  %v1834 = vsel %vm121, %v1662, 0
  %v1837 = vsel %vm121, %v1663, 0
  %v1840 = vsel %vm121, %v1664, 0
  %v1843 = vsel %vm121, %v1665, 0
  %v1846 = vsel %vm121, %v1666, 0
  %v1849 = vsel %vm121, %v1667, 0
  %v1852 = vsel %vm121, %v1668, 0
  %v1855 = vsel %vm121, %v1669, 0
  %v1858 = vsel %vm121, %v1670, 0
  %v1861 = vsel %vm121, %v1671, 0
  %v1864 = vsel %vm121, %v1672, 0
  %1866 = vmatpush.msra.mxu0 0.0
  %1867 = vmatpush.msra.mxu0 0.0
  %1868 = vmatpush.msra.mxu0 0.0
  %1869 = vmatpush.msra.mxu0 0.0
  %1870 = vmatpush.msra.mxu0 0.0
  %1871 = vmatpush.msra.mxu0 0.0
  %1872 = vmatpush.msra.mxu0 0.0
  %1873 = vmatpush.msra.mxu0 0.0
  %1874 = vmatpush.msra.mxu0 0.0
  %1875 = vmatpush.msra.mxu0 0.0
  %1876 = vmatpush.msra.mxu0 0.0
  %1877 = vmatpush.msra.mxu0 0.0
  %1878 = vmatpush.msra.mxu0 0.0
  %1879 = vmatpush.msra.mxu0 0.0
  %1880 = vmatpush.msra.mxu0 0.0
  %1881 = vmatpush.msra.mxu0 %v1673
  %1882 = vmatmul.f32.gmra.mxu0 %v1675
  %v1883 = vpop.f32.mrf.mxu0
  %v1884 = vadd.f32 0.0, %v1883
  %1885 = vmatmul.f32.gmra.mxu0 %v1678
  %v1886 = vpop.f32.mrf.mxu0
  %v1887 = vadd.f32 0.0, %v1886
  %1888 = vmatmul.f32.gmra.mxu0 %v1681
  %v1889 = vpop.f32.mrf.mxu0
  %v1890 = vadd.f32 0.0, %v1889
  %1891 = vmatmul.f32.gmra.mxu0 %v1684
  %v1892 = vpop.f32.mrf.mxu0
  %v1893 = vadd.f32 0.0, %v1892
  %1894 = vmatmul.f32.gmra.mxu0 %v1687
  %v1895 = vpop.f32.mrf.mxu0
  %v1896 = vadd.f32 0.0, %v1895
  %1897 = vmatmul.f32.gmra.mxu0 %v1690
  %v1898 = vpop.f32.mrf.mxu0
  %v1899 = vadd.f32 0.0, %v1898
  %1900 = vmatmul.f32.gmra.mxu0 %v1693
  %v1901 = vpop.f32.mrf.mxu0
  %v1902 = vadd.f32 0.0, %v1901
  %1903 = vmatmul.f32.gmra.mxu0 %v1696
  %v1904 = vpop.f32.mrf.mxu0
  %v1905 = vadd.f32 0.0, %v1904
  %1906 = vmatmul.f32.gmra.mxu0 %v1699
  %v1907 = vpop.f32.mrf.mxu0
  %v1908 = vadd.f32 0.0, %v1907
  %1909 = vmatmul.f32.gmra.mxu0 %v1702
  %v1910 = vpop.f32.mrf.mxu0
  %v1911 = vadd.f32 0.0, %v1910
  %1912 = vmatmul.f32.gmra.mxu0 %v1705
  %v1913 = vpop.f32.mrf.mxu0
  %v1914 = vadd.f32 0.0, %v1913
  %1915 = vmatmul.f32.gmra.mxu0 %v1708
  %v1916 = vpop.f32.mrf.mxu0
  %v1917 = vadd.f32 0.0, %v1916
  %1918 = vmatmul.f32.gmra.mxu0 %v1711
  %v1919 = vpop.f32.mrf.mxu0
  %v1920 = vadd.f32 0.0, %v1919
  %1921 = vmatmul.f32.gmra.mxu0 %v1714
  %v1922 = vpop.f32.mrf.mxu0
  %v1923 = vadd.f32 0.0, %v1922
  %1924 = vmatmul.f32.gmra.mxu0 %v1717
  %v1925 = vpop.f32.mrf.mxu0
  %v1926 = vadd.f32 0.0, %v1925
  %1927 = vmatmul.f32.gmra.mxu0 %v1720
  %v1928 = vpop.f32.mrf.mxu0
  %v1929 = vadd.f32 0.0, %v1928
  %1930 = vmatmul.f32.gmra.mxu0 %v1723
  %v1931 = vpop.f32.mrf.mxu0
  %v1932 = vadd.f32 0.0, %v1931
  %1933 = vmatmul.f32.gmra.mxu0 %v1726
  %v1934 = vpop.f32.mrf.mxu0
  %v1935 = vadd.f32 0.0, %v1934
  %1936 = vmatmul.f32.gmra.mxu0 %v1729
  %v1937 = vpop.f32.mrf.mxu0
  %v1938 = vadd.f32 0.0, %v1937
  %1939 = vmatmul.f32.gmra.mxu0 %v1732
  %v1940 = vpop.f32.mrf.mxu0
  %v1941 = vadd.f32 0.0, %v1940
  %1942 = vmatmul.f32.gmra.mxu0 %v1735
  %v1943 = vpop.f32.mrf.mxu0
  %v1944 = vadd.f32 0.0, %v1943
  %1945 = vmatmul.f32.gmra.mxu0 %v1738
  %v1946 = vpop.f32.mrf.mxu0
  %v1947 = vadd.f32 0.0, %v1946
  %1948 = vmatmul.f32.gmra.mxu0 %v1741
  %v1949 = vpop.f32.mrf.mxu0
  %v1950 = vadd.f32 0.0, %v1949
  %1951 = vmatmul.f32.gmra.mxu0 %v1744
  %v1952 = vpop.f32.mrf.mxu0
  %v1953 = vadd.f32 0.0, %v1952
  %1954 = vmatmul.f32.gmra.mxu0 %v1747
  %v1955 = vpop.f32.mrf.mxu0
  %v1956 = vadd.f32 0.0, %v1955
  %1957 = vmatmul.f32.gmra.mxu0 %v1750
  %v1958 = vpop.f32.mrf.mxu0
  %v1959 = vadd.f32 0.0, %v1958
  %1960 = vmatmul.f32.gmra.mxu0 %v1753
  %v1961 = vpop.f32.mrf.mxu0
  %v1962 = vadd.f32 0.0, %v1961
  %1963 = vmatmul.f32.gmra.mxu0 %v1756
  %v1964 = vpop.f32.mrf.mxu0
  %v1965 = vadd.f32 0.0, %v1964
  %1966 = vmatmul.f32.gmra.mxu0 %v1759
  %v1967 = vpop.f32.mrf.mxu0
  %v1968 = vadd.f32 0.0, %v1967
  %1969 = vmatmul.f32.gmra.mxu0 %v1762
  %v1970 = vpop.f32.mrf.mxu0
  %v1971 = vadd.f32 0.0, %v1970
  %1972 = vmatmul.f32.gmra.mxu0 %v1765
  %v1973 = vpop.f32.mrf.mxu0
  %v1974 = vadd.f32 0.0, %v1973
  %1975 = vmatmul.f32.gmra.mxu0 %v1768
  %v1976 = vpop.f32.mrf.mxu0
  %v1977 = vadd.f32 0.0, %v1976
  %1978 = vmatmul.f32.gmra.mxu0 %v1771
  %v1979 = vpop.f32.mrf.mxu0
  %v1980 = vadd.f32 0.0, %v1979
  %1981 = vmatmul.f32.gmra.mxu0 %v1774
  %v1982 = vpop.f32.mrf.mxu0
  %v1983 = vadd.f32 0.0, %v1982
  %1984 = vmatmul.f32.gmra.mxu0 %v1777
  %v1985 = vpop.f32.mrf.mxu0
  %v1986 = vadd.f32 0.0, %v1985
  %1987 = vmatmul.f32.gmra.mxu0 %v1780
  %v1988 = vpop.f32.mrf.mxu0
  %v1989 = vadd.f32 0.0, %v1988
  %1990 = vmatmul.f32.gmra.mxu0 %v1783
  %v1991 = vpop.f32.mrf.mxu0
  %v1992 = vadd.f32 0.0, %v1991
  %1993 = vmatmul.f32.gmra.mxu0 %v1786
  %v1994 = vpop.f32.mrf.mxu0
  %v1995 = vadd.f32 0.0, %v1994
  %1996 = vmatmul.f32.gmra.mxu0 %v1789
  %v1997 = vpop.f32.mrf.mxu0
  %v1998 = vadd.f32 0.0, %v1997
  %1999 = vmatmul.f32.gmra.mxu0 %v1792
  %v2000 = vpop.f32.mrf.mxu0
  %v2001 = vadd.f32 0.0, %v2000
  %2002 = vmatmul.f32.gmra.mxu0 %v1795
  %v2003 = vpop.f32.mrf.mxu0
  %v2004 = vadd.f32 0.0, %v2003
  %2005 = vmatmul.f32.gmra.mxu0 %v1798
  %v2006 = vpop.f32.mrf.mxu0
  %v2007 = vadd.f32 0.0, %v2006
  %2008 = vmatmul.f32.gmra.mxu0 %v1801
  %v2009 = vpop.f32.mrf.mxu0
  %v2010 = vadd.f32 0.0, %v2009
  %2011 = vmatmul.f32.gmra.mxu0 %v1804
  %v2012 = vpop.f32.mrf.mxu0
  %v2013 = vadd.f32 0.0, %v2012
  %2014 = vmatmul.f32.gmra.mxu0 %v1807
  %v2015 = vpop.f32.mrf.mxu0
  %v2016 = vadd.f32 0.0, %v2015
  %2017 = vmatmul.f32.gmra.mxu0 %v1810
  %v2018 = vpop.f32.mrf.mxu0
  %v2019 = vadd.f32 0.0, %v2018
  %2020 = vmatmul.f32.gmra.mxu0 %v1813
  %v2021 = vpop.f32.mrf.mxu0
  %v2022 = vadd.f32 0.0, %v2021
  %2023 = vmatmul.f32.gmra.mxu0 %v1816
  %v2024 = vpop.f32.mrf.mxu0
  %v2025 = vadd.f32 0.0, %v2024
  %2026 = vmatmul.f32.gmra.mxu0 %v1819
  %v2027 = vpop.f32.mrf.mxu0
  %v2028 = vadd.f32 0.0, %v2027
  %2029 = vmatmul.f32.gmra.mxu0 %v1822
  %v2030 = vpop.f32.mrf.mxu0
  %v2031 = vadd.f32 0.0, %v2030
  %2032 = vmatmul.f32.gmra.mxu0 %v1825
  %v2033 = vpop.f32.mrf.mxu0
  %v2034 = vadd.f32 0.0, %v2033
  %2035 = vmatmul.f32.gmra.mxu0 %v1828
  %v2036 = vpop.f32.mrf.mxu0
  %v2037 = vadd.f32 0.0, %v2036
  %2038 = vmatmul.f32.gmra.mxu0 %v1831
  %v2039 = vpop.f32.mrf.mxu0
  %v2040 = vadd.f32 0.0, %v2039
  %2041 = vmatmul.f32.gmra.mxu0 %v1834
  %v2042 = vpop.f32.mrf.mxu0
  %v2043 = vadd.f32 0.0, %v2042
  %2044 = vmatmul.f32.gmra.mxu0 %v1837
  %v2045 = vpop.f32.mrf.mxu0
  %v2046 = vadd.f32 0.0, %v2045
  %2047 = vmatmul.f32.gmra.mxu0 %v1840
  %v2048 = vpop.f32.mrf.mxu0
  %v2049 = vadd.f32 0.0, %v2048
  %2050 = vmatmul.f32.gmra.mxu0 %v1843
  %v2051 = vpop.f32.mrf.mxu0
  %v2052 = vadd.f32 0.0, %v2051
  %2053 = vmatmul.f32.gmra.mxu0 %v1846
  %v2054 = vpop.f32.mrf.mxu0
  %v2055 = vadd.f32 0.0, %v2054
  %2056 = vmatmul.f32.gmra.mxu0 %v1849
  %v2057 = vpop.f32.mrf.mxu0
  %v2058 = vadd.f32 0.0, %v2057
  %2059 = vmatmul.f32.gmra.mxu0 %v1852
  %v2060 = vpop.f32.mrf.mxu0
  %v2061 = vadd.f32 0.0, %v2060
  %2062 = vmatmul.f32.gmra.mxu0 %v1855
  %v2063 = vpop.f32.mrf.mxu0
  %v2064 = vadd.f32 0.0, %v2063
  %2065 = vmatmul.f32.gmra.mxu0 %v1858
  %v2066 = vpop.f32.mrf.mxu0
  %v2067 = vadd.f32 0.0, %v2066
  %2068 = vmatmul.f32.gmra.mxu0 %v1861
  %v2069 = vpop.f32.mrf.mxu0
  %v2070 = vadd.f32 0.0, %v2069
  %2071 = vmatmul.f32.gmra.mxu0 %v1864
  %v2072 = vpop.f32.mrf.mxu0
  %v2073 = vadd.f32 0.0, %v2072
  %2074 = vdwg.mxu0
  %v2075 = vld [vmem:[#allocation3] sm:$0xff]
  %v2076 = vld [vmem:[#allocation3 + $0x8] sm:$0xff]
  %v2077 = vld [vmem:[#allocation3 + $0x10] sm:$0xff]
  %vm2078 = vcmask 130048
  %2079 = vst.msk [vmem:[#allocation7] sm:$0xff] %vm2078, %v2075
  %2080 = vst.msk [vmem:[#allocation7 + $0x8] sm:$0xff] %vm2078, %v2076
  %2081 = vst.msk [vmem:[#allocation7 + $0x10] sm:$0xff] %vm2078, %v2077
  %2082 = vst.msk [vmem:[#allocation7 + $0x18] sm:$0xff] %vm2078, %v1884
  %2083 = vst.msk [vmem:[#allocation7 + $0x20] sm:$0xff] %vm2078, %v1887
  %2084 = vst.msk [vmem:[#allocation7 + $0x28] sm:$0xff] %vm2078, %v1890
  %2085 = vst.msk [vmem:[#allocation7 + $0x30] sm:$0xff] %vm2078, %v1893
  %2086 = vst.msk [vmem:[#allocation7 + $0x38] sm:$0xff] %vm2078, %v1896
  %2087 = vst.msk [vmem:[#allocation7 + $0x40] sm:$0xff] %vm2078, %v1899
  %2088 = vst.msk [vmem:[#allocation7 + $0x48] sm:$0xff] %vm2078, %v1902
  %2089 = vst.msk [vmem:[#allocation7 + $0x50] sm:$0xff] %vm2078, %v1905
  %2090 = vst.msk [vmem:[#allocation7 + $0x58] sm:$0xff] %vm2078, %v1908
  %2091 = vst.msk [vmem:[#allocation7 + $0x60] sm:$0xff] %vm2078, %v1911
  %2092 = vst.msk [vmem:[#allocation7 + $0x68] sm:$0xff] %vm2078, %v1914
  %2093 = vst.msk [vmem:[#allocation7 + $0x70] sm:$0xff] %vm2078, %v1917
  %2094 = vst.msk [vmem:[#allocation7 + $0x78] sm:$0xff] %vm2078, %v1920
  %2095 = vst.msk [vmem:[#allocation7 + $0x80] sm:$0xff] %vm2078, %v1923
  %2096 = vst.msk [vmem:[#allocation7 + $0x88] sm:$0xff] %vm2078, %v1926
  %2097 = vst.msk [vmem:[#allocation7 + $0x90] sm:$0xff] %vm2078, %v1929
  %2098 = vst.msk [vmem:[#allocation7 + $0x98] sm:$0xff] %vm2078, %v1932
  %2099 = vst.msk [vmem:[#allocation7 + $0xa0] sm:$0xff] %vm2078, %v1935
  %2100 = vst.msk [vmem:[#allocation7 + $0xa8] sm:$0xff] %vm2078, %v1938
  %2101 = vst.msk [vmem:[#allocation7 + $0xb0] sm:$0xff] %vm2078, %v1941
  %2102 = vst.msk [vmem:[#allocation7 + $0xb8] sm:$0xff] %vm2078, %v1944
  %2103 = vst.msk [vmem:[#allocation7 + $0xc0] sm:$0xff] %vm2078, %v1947
  %2104 = vst.msk [vmem:[#allocation7 + $0xc8] sm:$0xff] %vm2078, %v1950
  %2105 = vst.msk [vmem:[#allocation7 + $0xd0] sm:$0xff] %vm2078, %v1953
  %2106 = vst.msk [vmem:[#allocation7 + $0xd8] sm:$0xff] %vm2078, %v1956
  %2107 = vst.msk [vmem:[#allocation7 + $0xe0] sm:$0xff] %vm2078, %v1959
  %2108 = vst.msk [vmem:[#allocation7 + $0xe8] sm:$0xff] %vm2078, %v1962
  %2109 = vst.msk [vmem:[#allocation7 + $0xf0] sm:$0xff] %vm2078, %v1965
  %2110 = vst.msk [vmem:[#allocation7 + $0xf8] sm:$0xff] %vm2078, %v1968
  %2111 = vst.msk [vmem:[#allocation7 + $0x100] sm:$0xff] %vm2078, %v1971
  %2112 = vst.msk [vmem:[#allocation7 + $0x108] sm:$0xff] %vm2078, %v1974
  %2113 = vst.msk [vmem:[#allocation7 + $0x110] sm:$0xff] %vm2078, %v1977
  %2114 = vst.msk [vmem:[#allocation7 + $0x118] sm:$0xff] %vm2078, %v1980
  %2115 = vst.msk [vmem:[#allocation7 + $0x120] sm:$0xff] %vm2078, %v1983
  %2116 = vst.msk [vmem:[#allocation7 + $0x128] sm:$0xff] %vm2078, %v1986
  %2117 = vst.msk [vmem:[#allocation7 + $0x130] sm:$0xff] %vm2078, %v1989
  %2118 = vst.msk [vmem:[#allocation7 + $0x138] sm:$0xff] %vm2078, %v1992
  %2119 = vst.msk [vmem:[#allocation7 + $0x140] sm:$0xff] %vm2078, %v1995
  %2120 = vst.msk [vmem:[#allocation7 + $0x148] sm:$0xff] %vm2078, %v1998
  %2121 = vst.msk [vmem:[#allocation7 + $0x150] sm:$0xff] %vm2078, %v2001
  %2122 = vst.msk [vmem:[#allocation7 + $0x158] sm:$0xff] %vm2078, %v2004
  %2123 = vst.msk [vmem:[#allocation7 + $0x160] sm:$0xff] %vm2078, %v2007
  %2124 = vst.msk [vmem:[#allocation7 + $0x168] sm:$0xff] %vm2078, %v2010
  %2125 = vst.msk [vmem:[#allocation7 + $0x170] sm:$0xff] %vm2078, %v2013
  %2126 = vst.msk [vmem:[#allocation7 + $0x178] sm:$0xff] %vm2078, %v2016
  %2127 = vst.msk [vmem:[#allocation7 + $0x180] sm:$0xff] %vm2078, %v2019
  %2128 = vst.msk [vmem:[#allocation7 + $0x188] sm:$0xff] %vm2078, %v2022
  %2129 = vst.msk [vmem:[#allocation7 + $0x190] sm:$0xff] %vm2078, %v2025
  %2130 = vst.msk [vmem:[#allocation7 + $0x198] sm:$0xff] %vm2078, %v2028
  %2131 = vst.msk [vmem:[#allocation7 + $0x1a0] sm:$0xff] %vm2078, %v2031
  %2132 = vst.msk [vmem:[#allocation7 + $0x1a8] sm:$0xff] %vm2078, %v2034
  %2133 = vst.msk [vmem:[#allocation7 + $0x1b0] sm:$0xff] %vm2078, %v2037
  %2134 = vst.msk [vmem:[#allocation7 + $0x1b8] sm:$0xff] %vm2078, %v2040
  %2135 = vst.msk [vmem:[#allocation7 + $0x1c0] sm:$0xff] %vm2078, %v2043
  %2136 = vst.msk [vmem:[#allocation7 + $0x1c8] sm:$0xff] %vm2078, %v2046
  %2137 = vst.msk [vmem:[#allocation7 + $0x1d0] sm:$0xff] %vm2078, %v2049
  %2138 = vst.msk [vmem:[#allocation7 + $0x1d8] sm:$0xff] %vm2078, %v2052
  %2139 = vst.msk [vmem:[#allocation7 + $0x1e0] sm:$0xff] %vm2078, %v2055
  %2140 = vst.msk [vmem:[#allocation7 + $0x1e8] sm:$0xff] %vm2078, %v2058
  %2141 = vst.msk [vmem:[#allocation7 + $0x1f0] sm:$0xff] %vm2078, %v2061
  %2142 = vst.msk [vmem:[#allocation7 + $0x1f8] sm:$0xff] %vm2078, %v2064
  %2143 = vst.msk [vmem:[#allocation7 + $0x200] sm:$0xff] %vm2078, %v2067
  %2144 = vst.msk [vmem:[#allocation7 + $0x208] sm:$0xff] %vm2078, %v2070
  %2145 = vst.msk [vmem:[#allocation7 + $0x210] sm:$0xff] %vm2078, %v2073
  %2146 = vst.msk [vmem:[#allocation3] sm:$0xff] %vm2078, %v2067
  %2147 = vst.msk [vmem:[#allocation3 + $0x8] sm:$0xff] %vm2078, %v2070
  %2148 = vst.msk [vmem:[#allocation3 + $0x10] sm:$0xff] %vm2078, %v2073
  %v2149 = vld [vmem:[%s5] sm:$0x1]
  %v2150 = vld [vmem:[%s4 + $0x3] sm:$0x1]
  %v2151 = vperm.slane %v2150, 0
  %v2152 = vmul.f32 %v1884, %v2151
  %v2153 = vmul.f32 %v1887, %v2151
  %v2154 = vmul.f32 %v1890, %v2151
  %v2155 = vmul.f32 %v1893, %v2151
  %v2156 = vmul.f32 %v1896, %v2151
  %v2157 = vmul.f32 %v1899, %v2151
  %v2158 = vmul.f32 %v1902, %v2151
  %v2159 = vmul.f32 %v1905, %v2151
  %v2160 = vmul.f32 %v1908, %v2151
  %v2161 = vmul.f32 %v1911, %v2151
  %v2162 = vmul.f32 %v1914, %v2151
  %v2163 = vmul.f32 %v1917, %v2151
  %v2164 = vmul.f32 %v1920, %v2151
  %v2165 = vmul.f32 %v1923, %v2151
  %v2166 = vmul.f32 %v1926, %v2151
  %v2167 = vmul.f32 %v1929, %v2151
  %v2168 = vmul.f32 %v1932, %v2151
  %v2169 = vmul.f32 %v1935, %v2151
  %v2170 = vmul.f32 %v1938, %v2151
  %v2171 = vmul.f32 %v1941, %v2151
  %v2172 = vmul.f32 %v1944, %v2151
  %v2173 = vmul.f32 %v1947, %v2151
  %v2174 = vmul.f32 %v1950, %v2151
  %v2175 = vmul.f32 %v1953, %v2151
  %v2176 = vmul.f32 %v1956, %v2151
  %v2177 = vmul.f32 %v1959, %v2151
  %v2178 = vmul.f32 %v1962, %v2151
  %v2179 = vmul.f32 %v1965, %v2151
  %v2180 = vmul.f32 %v1968, %v2151
  %v2181 = vmul.f32 %v1971, %v2151
  %v2182 = vmul.f32 %v1974, %v2151
  %v2183 = vmul.f32 %v1977, %v2151
  %v2184 = vmul.f32 %v1980, %v2151
  %v2185 = vmul.f32 %v1983, %v2151
  %v2186 = vmul.f32 %v1986, %v2151
  %v2187 = vmul.f32 %v1989, %v2151
  %v2188 = vmul.f32 %v1992, %v2151
  %v2189 = vmul.f32 %v1995, %v2151
  %v2190 = vmul.f32 %v1998, %v2151
  %v2191 = vmul.f32 %v2001, %v2151
  %v2192 = vmul.f32 %v2004, %v2151
  %v2193 = vmul.f32 %v2007, %v2151
  %v2194 = vmul.f32 %v2010, %v2151
  %v2195 = vmul.f32 %v2013, %v2151
  %v2196 = vmul.f32 %v2016, %v2151
  %v2197 = vmul.f32 %v2019, %v2151
  %v2198 = vmul.f32 %v2022, %v2151
  %v2199 = vmul.f32 %v2025, %v2151
  %v2200 = vmul.f32 %v2028, %v2151
  %v2201 = vmul.f32 %v2031, %v2151
  %v2202 = vmul.f32 %v2034, %v2151
  %v2203 = vmul.f32 %v2037, %v2151
  %v2204 = vmul.f32 %v2040, %v2151
  %v2205 = vmul.f32 %v2043, %v2151
  %v2206 = vmul.f32 %v2046, %v2151
  %v2207 = vmul.f32 %v2049, %v2151
  %v2208 = vmul.f32 %v2052, %v2151
  %v2209 = vmul.f32 %v2055, %v2151
  %v2210 = vmul.f32 %v2058, %v2151
  %v2211 = vmul.f32 %v2061, %v2151
  %v2212 = vmul.f32 %v2064, %v2151
  %v2213 = vmul.f32 %v2067, %v2151
  %v2214 = vmul.f32 %v2070, %v2151
  %v2215 = vmul.f32 %v2073, %v2151
  %v2217 = vperm.slane %v2149, 0
  %v2219 = vadd.f32 %v2217, %v2152
  %v2220 = vadd.f32 %v2217, %v2153
  %v2221 = vadd.f32 %v2217, %v2154
  %v2222 = vadd.f32 %v2217, %v2155
  %v2223 = vadd.f32 %v2217, %v2156
  %v2224 = vadd.f32 %v2217, %v2157
  %v2225 = vadd.f32 %v2217, %v2158
  %v2226 = vadd.f32 %v2217, %v2159
  %v2227 = vadd.f32 %v2217, %v2160
  %v2228 = vadd.f32 %v2217, %v2161
  %v2229 = vadd.f32 %v2217, %v2162
  %v2230 = vadd.f32 %v2217, %v2163
  %v2231 = vadd.f32 %v2217, %v2164
  %v2232 = vadd.f32 %v2217, %v2165
  %v2233 = vadd.f32 %v2217, %v2166
  %v2234 = vadd.f32 %v2217, %v2167
  %v2235 = vadd.f32 %v2217, %v2168
  %v2236 = vadd.f32 %v2217, %v2169
  %v2237 = vadd.f32 %v2217, %v2170
  %v2238 = vadd.f32 %v2217, %v2171
  %v2239 = vadd.f32 %v2217, %v2172
  %v2240 = vadd.f32 %v2217, %v2173
  %v2241 = vadd.f32 %v2217, %v2174
  %v2242 = vadd.f32 %v2217, %v2175
  %v2243 = vadd.f32 %v2217, %v2176
  %v2244 = vadd.f32 %v2217, %v2177
  %v2245 = vadd.f32 %v2217, %v2178
  %v2246 = vadd.f32 %v2217, %v2179
  %v2247 = vadd.f32 %v2217, %v2180
  %v2248 = vadd.f32 %v2217, %v2181
  %v2249 = vadd.f32 %v2217, %v2182
  %v2250 = vadd.f32 %v2217, %v2183
  %v2251 = vadd.f32 %v2217, %v2184
  %v2252 = vadd.f32 %v2217, %v2185
  %v2253 = vadd.f32 %v2217, %v2186
  %v2254 = vadd.f32 %v2217, %v2187
  %v2255 = vadd.f32 %v2217, %v2188
  %v2256 = vadd.f32 %v2217, %v2189
  %v2257 = vadd.f32 %v2217, %v2190
  %v2258 = vadd.f32 %v2217, %v2191
  %v2259 = vadd.f32 %v2217, %v2192
  %v2260 = vadd.f32 %v2217, %v2193
  %v2261 = vadd.f32 %v2217, %v2194
  %v2262 = vadd.f32 %v2217, %v2195
  %v2263 = vadd.f32 %v2217, %v2196
  %v2264 = vadd.f32 %v2217, %v2197
  %v2265 = vadd.f32 %v2217, %v2198
  %v2266 = vadd.f32 %v2217, %v2199
  %v2267 = vadd.f32 %v2217, %v2200
  %v2268 = vadd.f32 %v2217, %v2201
  %v2269 = vadd.f32 %v2217, %v2202
  %v2270 = vadd.f32 %v2217, %v2203
  %v2271 = vadd.f32 %v2217, %v2204
  %v2272 = vadd.f32 %v2217, %v2205
  %v2273 = vadd.f32 %v2217, %v2206
  %v2274 = vadd.f32 %v2217, %v2207
  %v2275 = vadd.f32 %v2217, %v2208
  %v2276 = vadd.f32 %v2217, %v2209
  %v2277 = vadd.f32 %v2217, %v2210
  %v2278 = vadd.f32 %v2217, %v2211
  %v2279 = vadd.f32 %v2217, %v2212
  %v2280 = vadd.f32 %v2217, %v2213
  %v2281 = vadd.f32 %v2217, %v2214
  %v2282 = vadd.f32 %v2217, %v2215
  %v2283 = vld [vmem:[#allocation7] sm:$0xff]
  %v2284 = vld [vmem:[#allocation7 + $0x8] sm:$0xff]
  %v2285 = vld [vmem:[#allocation7 + $0x10] sm:$0xff]
  %v2286 = vld [vmem:[#allocation7 + $0x18] sm:$0xff]
  %v2287 = vld [vmem:[#allocation7 + $0x20] sm:$0xff]
  %v2288 = vld [vmem:[#allocation7 + $0x28] sm:$0xff]
  %v2289 = vld [vmem:[#allocation7 + $0x30] sm:$0xff]
  %v2290 = vld [vmem:[#allocation7 + $0x38] sm:$0xff]
  %v2291 = vld [vmem:[#allocation7 + $0x40] sm:$0xff]
  %v2292 = vld [vmem:[#allocation7 + $0x48] sm:$0xff]
  %v2293 = vld [vmem:[#allocation7 + $0x50] sm:$0xff]
  %v2294 = vld [vmem:[#allocation7 + $0x58] sm:$0xff]
  %v2295 = vld [vmem:[#allocation7 + $0x60] sm:$0xff]
  %v2296 = vld [vmem:[#allocation7 + $0x68] sm:$0xff]
  %v2297 = vld [vmem:[#allocation7 + $0x70] sm:$0xff]
  %v2298 = vld [vmem:[#allocation7 + $0x78] sm:$0xff]
  %v2299 = vld [vmem:[#allocation7 + $0x80] sm:$0xff]
  %v2300 = vld [vmem:[#allocation7 + $0x88] sm:$0xff]
  %v2301 = vld [vmem:[#allocation7 + $0x90] sm:$0xff]
  %v2302 = vld [vmem:[#allocation7 + $0x98] sm:$0xff]
  %v2303 = vld [vmem:[#allocation7 + $0xa0] sm:$0xff]
  %v2304 = vld [vmem:[#allocation7 + $0xa8] sm:$0xff]
  %v2305 = vld [vmem:[#allocation7 + $0xb0] sm:$0xff]
  %v2306 = vld [vmem:[#allocation7 + $0xb8] sm:$0xff]
  %v2307 = vld [vmem:[#allocation7 + $0xc0] sm:$0xff]
  %v2308 = vld [vmem:[#allocation7 + $0xc8] sm:$0xff]
  %v2309 = vld [vmem:[#allocation7 + $0xd0] sm:$0xff]
  %v2310 = vld [vmem:[#allocation7 + $0xd8] sm:$0xff]
  %v2311 = vld [vmem:[#allocation7 + $0xe0] sm:$0xff]
  %v2312 = vld [vmem:[#allocation7 + $0xe8] sm:$0xff]
  %v2313 = vld [vmem:[#allocation7 + $0xf0] sm:$0xff]
  %v2314 = vld [vmem:[#allocation7 + $0xf8] sm:$0xff]
  %v2315 = vld [vmem:[#allocation7 + $0x100] sm:$0xff]
  %v2316 = vld [vmem:[#allocation7 + $0x108] sm:$0xff]
  %v2317 = vld [vmem:[#allocation7 + $0x110] sm:$0xff]
  %v2318 = vld [vmem:[#allocation7 + $0x118] sm:$0xff]
  %v2319 = vld [vmem:[#allocation7 + $0x120] sm:$0xff]
  %v2320 = vld [vmem:[#allocation7 + $0x128] sm:$0xff]
  %v2321 = vld [vmem:[#allocation7 + $0x130] sm:$0xff]
  %v2322 = vld [vmem:[#allocation7 + $0x138] sm:$0xff]
  %v2323 = vld [vmem:[#allocation7 + $0x140] sm:$0xff]
  %v2324 = vld [vmem:[#allocation7 + $0x148] sm:$0xff]
  %v2325 = vld [vmem:[#allocation7 + $0x150] sm:$0xff]
  %v2326 = vld [vmem:[#allocation7 + $0x158] sm:$0xff]
  %v2327 = vld [vmem:[#allocation7 + $0x160] sm:$0xff]
  %v2328 = vld [vmem:[#allocation7 + $0x168] sm:$0xff]
  %v2329 = vld [vmem:[#allocation7 + $0x170] sm:$0xff]
  %v2330 = vld [vmem:[#allocation7 + $0x178] sm:$0xff]
  %v2331 = vld [vmem:[#allocation7 + $0x180] sm:$0xff]
  %v2332 = vld [vmem:[#allocation7 + $0x188] sm:$0xff]
  %v2333 = vld [vmem:[#allocation7 + $0x190] sm:$0xff]
  %v2334 = vld [vmem:[#allocation7 + $0x198] sm:$0xff]
  %v2335 = vld [vmem:[#allocation7 + $0x1a0] sm:$0xff]
  %v2336 = vld [vmem:[#allocation7 + $0x1a8] sm:$0xff]
  %v2337 = vld [vmem:[#allocation7 + $0x1b0] sm:$0xff]
  %v2338 = vld [vmem:[#allocation7 + $0x1b8] sm:$0xff]
  %v2339 = vld [vmem:[#allocation7 + $0x1c0] sm:$0xff]
  %v2340 = vld [vmem:[#allocation7 + $0x1c8] sm:$0xff]
  %v2341 = vld [vmem:[#allocation7 + $0x1d0] sm:$0xff]
  %v2342 = vld [vmem:[#allocation7 + $0x1d8] sm:$0xff]
  %v2343 = vld [vmem:[#allocation7 + $0x1e0] sm:$0xff]
  %v2344 = vld [vmem:[#allocation7 + $0x1e8] sm:$0xff]
  %v2345 = vld [vmem:[#allocation7 + $0x1f0] sm:$0xff]
  %v2346 = vld [vmem:[#allocation7 + $0x1f8] sm:$0xff]
  %v2347 = vld [vmem:[%s4] sm:$0x1]
  %v2348 = vperm.slane %v2347, 0
  %v2349 = vmul.f32 %v2283, %v2348
  %v2350 = vmul.f32 %v2284, %v2348
  %v2351 = vmul.f32 %v2285, %v2348
  %v2352 = vmul.f32 %v2286, %v2348
  %v2353 = vmul.f32 %v2287, %v2348
  %v2354 = vmul.f32 %v2288, %v2348
  %v2355 = vmul.f32 %v2289, %v2348
  %v2356 = vmul.f32 %v2290, %v2348
  %v2357 = vmul.f32 %v2291, %v2348
  %v2358 = vmul.f32 %v2292, %v2348
  %v2359 = vmul.f32 %v2293, %v2348
  %v2360 = vmul.f32 %v2294, %v2348
  %v2361 = vmul.f32 %v2295, %v2348
  %v2362 = vmul.f32 %v2296, %v2348
  %v2363 = vmul.f32 %v2297, %v2348
  %v2364 = vmul.f32 %v2298, %v2348
  %v2365 = vmul.f32 %v2299, %v2348
  %v2366 = vmul.f32 %v2300, %v2348
  %v2367 = vmul.f32 %v2301, %v2348
  %v2368 = vmul.f32 %v2302, %v2348
  %v2369 = vmul.f32 %v2303, %v2348
  %v2370 = vmul.f32 %v2304, %v2348
  %v2371 = vmul.f32 %v2305, %v2348
  %v2372 = vmul.f32 %v2306, %v2348
  %v2373 = vmul.f32 %v2307, %v2348
  %v2374 = vmul.f32 %v2308, %v2348
  %v2375 = vmul.f32 %v2309, %v2348
  %v2376 = vmul.f32 %v2310, %v2348
  %v2377 = vmul.f32 %v2311, %v2348
  %v2378 = vmul.f32 %v2312, %v2348
  %v2379 = vmul.f32 %v2313, %v2348
  %v2380 = vmul.f32 %v2314, %v2348
  %v2381 = vmul.f32 %v2315, %v2348
  %v2382 = vmul.f32 %v2316, %v2348
  %v2383 = vmul.f32 %v2317, %v2348
  %v2384 = vmul.f32 %v2318, %v2348
  %v2385 = vmul.f32 %v2319, %v2348
  %v2386 = vmul.f32 %v2320, %v2348
  %v2387 = vmul.f32 %v2321, %v2348
  %v2388 = vmul.f32 %v2322, %v2348
  %v2389 = vmul.f32 %v2323, %v2348
  %v2390 = vmul.f32 %v2324, %v2348
  %v2391 = vmul.f32 %v2325, %v2348
  %v2392 = vmul.f32 %v2326, %v2348
  %v2393 = vmul.f32 %v2327, %v2348
  %v2394 = vmul.f32 %v2328, %v2348
  %v2395 = vmul.f32 %v2329, %v2348
  %v2396 = vmul.f32 %v2330, %v2348
  %v2397 = vmul.f32 %v2331, %v2348
  %v2398 = vmul.f32 %v2332, %v2348
  %v2399 = vmul.f32 %v2333, %v2348
  %v2400 = vmul.f32 %v2334, %v2348
  %v2401 = vmul.f32 %v2335, %v2348
  %v2402 = vmul.f32 %v2336, %v2348
  %v2403 = vmul.f32 %v2337, %v2348
  %v2404 = vmul.f32 %v2338, %v2348
  %v2405 = vmul.f32 %v2339, %v2348
  %v2406 = vmul.f32 %v2340, %v2348
  %v2407 = vmul.f32 %v2341, %v2348
  %v2408 = vmul.f32 %v2342, %v2348
  %v2409 = vmul.f32 %v2343, %v2348
  %v2410 = vmul.f32 %v2344, %v2348
  %v2411 = vmul.f32 %v2345, %v2348
  %v2412 = vmul.f32 %v2346, %v2348
  %v2413 = vadd.f32 %v2219, %v2349
  %v2414 = vadd.f32 %v2220, %v2350
  %v2415 = vadd.f32 %v2221, %v2351
  %v2416 = vadd.f32 %v2222, %v2352
  %v2417 = vadd.f32 %v2223, %v2353
  %v2418 = vadd.f32 %v2224, %v2354
  %v2419 = vadd.f32 %v2225, %v2355
  %v2420 = vadd.f32 %v2226, %v2356
  %v2421 = vadd.f32 %v2227, %v2357
  %v2422 = vadd.f32 %v2228, %v2358
  %v2423 = vadd.f32 %v2229, %v2359
  %v2424 = vadd.f32 %v2230, %v2360
  %v2425 = vadd.f32 %v2231, %v2361
  %v2426 = vadd.f32 %v2232, %v2362
  %v2427 = vadd.f32 %v2233, %v2363
  %v2428 = vadd.f32 %v2234, %v2364
  %v2429 = vadd.f32 %v2235, %v2365
  %v2430 = vadd.f32 %v2236, %v2366
  %v2431 = vadd.f32 %v2237, %v2367
  %v2432 = vadd.f32 %v2238, %v2368
  %v2433 = vadd.f32 %v2239, %v2369
  %v2434 = vadd.f32 %v2240, %v2370
  %v2435 = vadd.f32 %v2241, %v2371
  %v2436 = vadd.f32 %v2242, %v2372
  %v2437 = vadd.f32 %v2243, %v2373
  %v2438 = vadd.f32 %v2244, %v2374
  %v2439 = vadd.f32 %v2245, %v2375
  %v2440 = vadd.f32 %v2246, %v2376
  %v2441 = vadd.f32 %v2247, %v2377
  %v2442 = vadd.f32 %v2248, %v2378
  %v2443 = vadd.f32 %v2249, %v2379
  %v2444 = vadd.f32 %v2250, %v2380
  %v2445 = vadd.f32 %v2251, %v2381
  %v2446 = vadd.f32 %v2252, %v2382
  %v2447 = vadd.f32 %v2253, %v2383
  %v2448 = vadd.f32 %v2254, %v2384
  %v2449 = vadd.f32 %v2255, %v2385
  %v2450 = vadd.f32 %v2256, %v2386
  %v2451 = vadd.f32 %v2257, %v2387
  %v2452 = vadd.f32 %v2258, %v2388
  %v2453 = vadd.f32 %v2259, %v2389
  %v2454 = vadd.f32 %v2260, %v2390
  %v2455 = vadd.f32 %v2261, %v2391
  %v2456 = vadd.f32 %v2262, %v2392
  %v2457 = vadd.f32 %v2263, %v2393
  %v2458 = vadd.f32 %v2264, %v2394
  %v2459 = vadd.f32 %v2265, %v2395
  %v2460 = vadd.f32 %v2266, %v2396
  %v2461 = vadd.f32 %v2267, %v2397
  %v2462 = vadd.f32 %v2268, %v2398
  %v2463 = vadd.f32 %v2269, %v2399
  %v2464 = vadd.f32 %v2270, %v2400
  %v2465 = vadd.f32 %v2271, %v2401
  %v2466 = vadd.f32 %v2272, %v2402
  %v2467 = vadd.f32 %v2273, %v2403
  %v2468 = vadd.f32 %v2274, %v2404
  %v2469 = vadd.f32 %v2275, %v2405
  %v2470 = vadd.f32 %v2276, %v2406
  %v2471 = vadd.f32 %v2277, %v2407
  %v2472 = vadd.f32 %v2278, %v2408
  %v2473 = vadd.f32 %v2279, %v2409
  %v2474 = vadd.f32 %v2280, %v2410
  %v2475 = vadd.f32 %v2281, %v2411
  %v2476 = vadd.f32 %v2282, %v2412
  %v2477 = vld [vmem:[#allocation7 + $0x200] sm:$0xff]
  %v2478 = vld [vmem:[%s4 + $0x1] sm:$0x1]
  %v2479 = vperm.slane %v2478, 0
  %v2480 = vmul.f32 %v2284, %v2479
  %v2481 = vmul.f32 %v2285, %v2479
  %v2482 = vmul.f32 %v2286, %v2479
  %v2483 = vmul.f32 %v2287, %v2479
  %v2484 = vmul.f32 %v2288, %v2479
  %v2485 = vmul.f32 %v2289, %v2479
  %v2486 = vmul.f32 %v2290, %v2479
  %v2487 = vmul.f32 %v2291, %v2479
  %v2488 = vmul.f32 %v2292, %v2479
  %v2489 = vmul.f32 %v2293, %v2479
  %v2490 = vmul.f32 %v2294, %v2479
  %v2491 = vmul.f32 %v2295, %v2479
  %v2492 = vmul.f32 %v2296, %v2479
  %v2493 = vmul.f32 %v2297, %v2479
  %v2494 = vmul.f32 %v2298, %v2479
  %v2495 = vmul.f32 %v2299, %v2479
  %v2496 = vmul.f32 %v2300, %v2479
  %v2497 = vmul.f32 %v2301, %v2479
  %v2498 = vmul.f32 %v2302, %v2479
  %v2499 = vmul.f32 %v2303, %v2479
  %v2500 = vmul.f32 %v2304, %v2479
  %v2501 = vmul.f32 %v2305, %v2479
  %v2502 = vmul.f32 %v2306, %v2479
  %v2503 = vmul.f32 %v2307, %v2479
  %v2504 = vmul.f32 %v2308, %v2479
  %v2505 = vmul.f32 %v2309, %v2479
  %v2506 = vmul.f32 %v2310, %v2479
  %v2507 = vmul.f32 %v2311, %v2479
  %v2508 = vmul.f32 %v2312, %v2479
  %v2509 = vmul.f32 %v2313, %v2479
  %v2510 = vmul.f32 %v2314, %v2479
  %v2511 = vmul.f32 %v2315, %v2479
  %v2512 = vmul.f32 %v2316, %v2479
  %v2513 = vmul.f32 %v2317, %v2479
  %v2514 = vmul.f32 %v2318, %v2479
  %v2515 = vmul.f32 %v2319, %v2479
  %v2516 = vmul.f32 %v2320, %v2479
  %v2517 = vmul.f32 %v2321, %v2479
  %v2518 = vmul.f32 %v2322, %v2479
  %v2519 = vmul.f32 %v2323, %v2479
  %v2520 = vmul.f32 %v2324, %v2479
  %v2521 = vmul.f32 %v2325, %v2479
  %v2522 = vmul.f32 %v2326, %v2479
  %v2523 = vmul.f32 %v2327, %v2479
  %v2524 = vmul.f32 %v2328, %v2479
  %v2525 = vmul.f32 %v2329, %v2479
  %v2526 = vmul.f32 %v2330, %v2479
  %v2527 = vmul.f32 %v2331, %v2479
  %v2528 = vmul.f32 %v2332, %v2479
  %v2529 = vmul.f32 %v2333, %v2479
  %v2530 = vmul.f32 %v2334, %v2479
  %v2531 = vmul.f32 %v2335, %v2479
  %v2532 = vmul.f32 %v2336, %v2479
  %v2533 = vmul.f32 %v2337, %v2479
  %v2534 = vmul.f32 %v2338, %v2479
  %v2535 = vmul.f32 %v2339, %v2479
  %v2536 = vmul.f32 %v2340, %v2479
  %v2537 = vmul.f32 %v2341, %v2479
  %v2538 = vmul.f32 %v2342, %v2479
  %v2539 = vmul.f32 %v2343, %v2479
  %v2540 = vmul.f32 %v2344, %v2479
  %v2541 = vmul.f32 %v2345, %v2479
  %v2542 = vmul.f32 %v2346, %v2479
  %v2543 = vmul.f32 %v2477, %v2479
  %v2544 = vadd.f32 %v2413, %v2480
  %v2545 = vadd.f32 %v2414, %v2481
  %v2546 = vadd.f32 %v2415, %v2482
  %v2547 = vadd.f32 %v2416, %v2483
  %v2548 = vadd.f32 %v2417, %v2484
  %v2549 = vadd.f32 %v2418, %v2485
  %v2550 = vadd.f32 %v2419, %v2486
  %v2551 = vadd.f32 %v2420, %v2487
  %v2552 = vadd.f32 %v2421, %v2488
  %v2553 = vadd.f32 %v2422, %v2489
  %v2554 = vadd.f32 %v2423, %v2490
  %v2555 = vadd.f32 %v2424, %v2491
  %v2556 = vadd.f32 %v2425, %v2492
  %v2557 = vadd.f32 %v2426, %v2493
  %v2558 = vadd.f32 %v2427, %v2494
  %v2559 = vadd.f32 %v2428, %v2495
  %v2560 = vadd.f32 %v2429, %v2496
  %v2561 = vadd.f32 %v2430, %v2497
  %v2562 = vadd.f32 %v2431, %v2498
  %v2563 = vadd.f32 %v2432, %v2499
  %v2564 = vadd.f32 %v2433, %v2500
  %v2565 = vadd.f32 %v2434, %v2501
  %v2566 = vadd.f32 %v2435, %v2502
  %v2567 = vadd.f32 %v2436, %v2503
  %v2568 = vadd.f32 %v2437, %v2504
  %v2569 = vadd.f32 %v2438, %v2505
  %v2570 = vadd.f32 %v2439, %v2506
  %v2571 = vadd.f32 %v2440, %v2507
  %v2572 = vadd.f32 %v2441, %v2508
  %v2573 = vadd.f32 %v2442, %v2509
  %v2574 = vadd.f32 %v2443, %v2510
  %v2575 = vadd.f32 %v2444, %v2511
  %v2576 = vadd.f32 %v2445, %v2512
  %v2577 = vadd.f32 %v2446, %v2513
  %v2578 = vadd.f32 %v2447, %v2514
  %v2579 = vadd.f32 %v2448, %v2515
  %v2580 = vadd.f32 %v2449, %v2516
  %v2581 = vadd.f32 %v2450, %v2517
  %v2582 = vadd.f32 %v2451, %v2518
  %v2583 = vadd.f32 %v2452, %v2519
  %v2584 = vadd.f32 %v2453, %v2520
  %v2585 = vadd.f32 %v2454, %v2521
  %v2586 = vadd.f32 %v2455, %v2522
  %v2587 = vadd.f32 %v2456, %v2523
  %v2588 = vadd.f32 %v2457, %v2524
  %v2589 = vadd.f32 %v2458, %v2525
  %v2590 = vadd.f32 %v2459, %v2526
  %v2591 = vadd.f32 %v2460, %v2527
  %v2592 = vadd.f32 %v2461, %v2528
  %v2593 = vadd.f32 %v2462, %v2529
  %v2594 = vadd.f32 %v2463, %v2530
  %v2595 = vadd.f32 %v2464, %v2531
  %v2596 = vadd.f32 %v2465, %v2532
  %v2597 = vadd.f32 %v2466, %v2533
  %v2598 = vadd.f32 %v2467, %v2534
  %v2599 = vadd.f32 %v2468, %v2535
  %v2600 = vadd.f32 %v2469, %v2536
  %v2601 = vadd.f32 %v2470, %v2537
  %v2602 = vadd.f32 %v2471, %v2538
  %v2603 = vadd.f32 %v2472, %v2539
  %v2604 = vadd.f32 %v2473, %v2540
  %v2605 = vadd.f32 %v2474, %v2541
  %v2606 = vadd.f32 %v2475, %v2542
  %v2607 = vadd.f32 %v2476, %v2543
  %v2608 = vld [vmem:[#allocation7 + $0x208] sm:$0xff]
  %v2609 = vld [vmem:[%s4 + $0x2] sm:$0x1]
  %v2610 = vperm.slane %v2609, 0
  %v2611 = vmul.f32 %v2285, %v2610
  %v2612 = vmul.f32 %v2286, %v2610
  %v2613 = vmul.f32 %v2287, %v2610
  %v2614 = vmul.f32 %v2288, %v2610
  %v2615 = vmul.f32 %v2289, %v2610
  %v2616 = vmul.f32 %v2290, %v2610
  %v2617 = vmul.f32 %v2291, %v2610
  %v2618 = vmul.f32 %v2292, %v2610
  %v2619 = vmul.f32 %v2293, %v2610
  %v2620 = vmul.f32 %v2294, %v2610
  %v2621 = vmul.f32 %v2295, %v2610
  %v2622 = vmul.f32 %v2296, %v2610
  %v2623 = vmul.f32 %v2297, %v2610
  %v2624 = vmul.f32 %v2298, %v2610
  %v2625 = vmul.f32 %v2299, %v2610
  %v2626 = vmul.f32 %v2300, %v2610
  %v2627 = vmul.f32 %v2301, %v2610
  %v2628 = vmul.f32 %v2302, %v2610
  %v2629 = vmul.f32 %v2303, %v2610
  %v2630 = vmul.f32 %v2304, %v2610
  %v2631 = vmul.f32 %v2305, %v2610
  %v2632 = vmul.f32 %v2306, %v2610
  %v2633 = vmul.f32 %v2307, %v2610
  %v2634 = vmul.f32 %v2308, %v2610
  %v2635 = vmul.f32 %v2309, %v2610
  %v2636 = vmul.f32 %v2310, %v2610
  %v2637 = vmul.f32 %v2311, %v2610
  %v2638 = vmul.f32 %v2312, %v2610
  %v2639 = vmul.f32 %v2313, %v2610
  %v2640 = vmul.f32 %v2314, %v2610
  %v2641 = vmul.f32 %v2315, %v2610
  %v2642 = vmul.f32 %v2316, %v2610
  %v2643 = vmul.f32 %v2317, %v2610
  %v2644 = vmul.f32 %v2318, %v2610
  %v2645 = vmul.f32 %v2319, %v2610
  %v2646 = vmul.f32 %v2320, %v2610
  %v2647 = vmul.f32 %v2321, %v2610
  %v2648 = vmul.f32 %v2322, %v2610
  %v2649 = vmul.f32 %v2323, %v2610
  %v2650 = vmul.f32 %v2324, %v2610
  %v2651 = vmul.f32 %v2325, %v2610
  %v2652 = vmul.f32 %v2326, %v2610
  %v2653 = vmul.f32 %v2327, %v2610
  %v2654 = vmul.f32 %v2328, %v2610
  %v2655 = vmul.f32 %v2329, %v2610
  %v2656 = vmul.f32 %v2330, %v2610
  %v2657 = vmul.f32 %v2331, %v2610
  %v2658 = vmul.f32 %v2332, %v2610
  %v2659 = vmul.f32 %v2333, %v2610
  %v2660 = vmul.f32 %v2334, %v2610
  %v2661 = vmul.f32 %v2335, %v2610
  %v2662 = vmul.f32 %v2336, %v2610
  %v2663 = vmul.f32 %v2337, %v2610
  %v2664 = vmul.f32 %v2338, %v2610
  %v2665 = vmul.f32 %v2339, %v2610
  %v2666 = vmul.f32 %v2340, %v2610
  %v2667 = vmul.f32 %v2341, %v2610
  %v2668 = vmul.f32 %v2342, %v2610
  %v2669 = vmul.f32 %v2343, %v2610
  %v2670 = vmul.f32 %v2344, %v2610
  %v2671 = vmul.f32 %v2345, %v2610
  %v2672 = vmul.f32 %v2346, %v2610
  %v2673 = vmul.f32 %v2477, %v2610
  %v2674 = vmul.f32 %v2608, %v2610
  %v2675 = vadd.f32 %v2544, %v2611
  %v2676 = vadd.f32 %v2545, %v2612
  %v2677 = vadd.f32 %v2546, %v2613
  %v2678 = vadd.f32 %v2547, %v2614
  %v2679 = vadd.f32 %v2548, %v2615
  %v2680 = vadd.f32 %v2549, %v2616
  %v2681 = vadd.f32 %v2550, %v2617
  %v2682 = vadd.f32 %v2551, %v2618
  %v2683 = vadd.f32 %v2552, %v2619
  %v2684 = vadd.f32 %v2553, %v2620
  %v2685 = vadd.f32 %v2554, %v2621
  %v2686 = vadd.f32 %v2555, %v2622
  %v2687 = vadd.f32 %v2556, %v2623
  %v2688 = vadd.f32 %v2557, %v2624
  %v2689 = vadd.f32 %v2558, %v2625
  %v2690 = vadd.f32 %v2559, %v2626
  %v2691 = vadd.f32 %v2560, %v2627
  %v2692 = vadd.f32 %v2561, %v2628
  %v2693 = vadd.f32 %v2562, %v2629
  %v2694 = vadd.f32 %v2563, %v2630
  %v2695 = vadd.f32 %v2564, %v2631
  %v2696 = vadd.f32 %v2565, %v2632
  %v2697 = vadd.f32 %v2566, %v2633
  %v2698 = vadd.f32 %v2567, %v2634
  %v2699 = vadd.f32 %v2568, %v2635
  %v2700 = vadd.f32 %v2569, %v2636
  %v2701 = vadd.f32 %v2570, %v2637
  %v2702 = vadd.f32 %v2571, %v2638
  %v2703 = vadd.f32 %v2572, %v2639
  %v2704 = vadd.f32 %v2573, %v2640
  %v2705 = vadd.f32 %v2574, %v2641
  %v2706 = vadd.f32 %v2575, %v2642
  %v2707 = vadd.f32 %v2576, %v2643
  %v2708 = vadd.f32 %v2577, %v2644
  %v2709 = vadd.f32 %v2578, %v2645
  %v2710 = vadd.f32 %v2579, %v2646
  %v2711 = vadd.f32 %v2580, %v2647
  %v2712 = vadd.f32 %v2581, %v2648
  %v2713 = vadd.f32 %v2582, %v2649
  %v2714 = vadd.f32 %v2583, %v2650
  %v2715 = vadd.f32 %v2584, %v2651
  %v2716 = vadd.f32 %v2585, %v2652
  %v2717 = vadd.f32 %v2586, %v2653
  %v2718 = vadd.f32 %v2587, %v2654
  %v2719 = vadd.f32 %v2588, %v2655
  %v2720 = vadd.f32 %v2589, %v2656
  %v2721 = vadd.f32 %v2590, %v2657
  %v2722 = vadd.f32 %v2591, %v2658
  %v2723 = vadd.f32 %v2592, %v2659
  %v2724 = vadd.f32 %v2593, %v2660
  %v2725 = vadd.f32 %v2594, %v2661
  %v2726 = vadd.f32 %v2595, %v2662
  %v2727 = vadd.f32 %v2596, %v2663
  %v2728 = vadd.f32 %v2597, %v2664
  %v2729 = vadd.f32 %v2598, %v2665
  %v2730 = vadd.f32 %v2599, %v2666
  %v2731 = vadd.f32 %v2600, %v2667
  %v2732 = vadd.f32 %v2601, %v2668
  %v2733 = vadd.f32 %v2602, %v2669
  %v2734 = vadd.f32 %v2603, %v2670
  %v2735 = vadd.f32 %v2604, %v2671
  %v2736 = vadd.f32 %v2605, %v2672
  %v2737 = vadd.f32 %v2606, %v2673
  %v2738 = vadd.f32 %v2607, %v2674
  %v2739 = vand.u32 2147483647, %v2675
  %v2740 = vand.u32 2147483647, %v2676
  %v2741 = vand.u32 2147483647, %v2677
  %v2742 = vand.u32 2147483647, %v2678
  %v2743 = vand.u32 2147483647, %v2679
  %v2744 = vand.u32 2147483647, %v2680
  %v2745 = vand.u32 2147483647, %v2681
  %v2746 = vand.u32 2147483647, %v2682
  %v2747 = vand.u32 2147483647, %v2683
  %v2748 = vand.u32 2147483647, %v2684
  %v2749 = vand.u32 2147483647, %v2685
  %v2750 = vand.u32 2147483647, %v2686
  %v2751 = vand.u32 2147483647, %v2687
  %v2752 = vand.u32 2147483647, %v2688
  %v2753 = vand.u32 2147483647, %v2689
  %v2754 = vand.u32 2147483647, %v2690
  %v2755 = vand.u32 2147483647, %v2691
  %v2756 = vand.u32 2147483647, %v2692
  %v2757 = vand.u32 2147483647, %v2693
  %v2758 = vand.u32 2147483647, %v2694
  %v2759 = vand.u32 2147483647, %v2695
  %v2760 = vand.u32 2147483647, %v2696
  %v2761 = vand.u32 2147483647, %v2697
  %v2762 = vand.u32 2147483647, %v2698
  %v2763 = vand.u32 2147483647, %v2699
  %v2764 = vand.u32 2147483647, %v2700
  %v2765 = vand.u32 2147483647, %v2701
  %v2766 = vand.u32 2147483647, %v2702
  %v2767 = vand.u32 2147483647, %v2703
  %v2768 = vand.u32 2147483647, %v2704
  %v2769 = vand.u32 2147483647, %v2705
  %v2770 = vand.u32 2147483647, %v2706
  %v2771 = vand.u32 2147483647, %v2707
  %v2772 = vand.u32 2147483647, %v2708
  %v2773 = vand.u32 2147483647, %v2709
  %v2774 = vand.u32 2147483647, %v2710
  %v2775 = vand.u32 2147483647, %v2711
  %v2776 = vand.u32 2147483647, %v2712
  %v2777 = vand.u32 2147483647, %v2713
  %v2778 = vand.u32 2147483647, %v2714
  %v2779 = vand.u32 2147483647, %v2715
  %v2780 = vand.u32 2147483647, %v2716
  %v2781 = vand.u32 2147483647, %v2717
  %v2782 = vand.u32 2147483647, %v2718
  %v2783 = vand.u32 2147483647, %v2719
  %v2784 = vand.u32 2147483647, %v2720
  %v2785 = vand.u32 2147483647, %v2721
  %v2786 = vand.u32 2147483647, %v2722
  %v2787 = vand.u32 2147483647, %v2723
  %v2788 = vand.u32 2147483647, %v2724
  %v2789 = vand.u32 2147483647, %v2725
  %v2790 = vand.u32 2147483647, %v2726
  %v2791 = vand.u32 2147483647, %v2727
  %v2792 = vand.u32 2147483647, %v2728
  %v2793 = vand.u32 2147483647, %v2729
  %v2794 = vand.u32 2147483647, %v2730
  %v2795 = vand.u32 2147483647, %v2731
  %v2796 = vand.u32 2147483647, %v2732
  %v2797 = vand.u32 2147483647, %v2733
  %v2798 = vand.u32 2147483647, %v2734
  %v2799 = vand.u32 2147483647, %v2735
  %v2800 = vand.u32 2147483647, %v2736
  %v2801 = vand.u32 2147483647, %v2737
  %v2802 = vand.u32 2147483647, %v2738
  %v2803 = vsub.f32 0.0, %v2739
  %v2804 = vsub.f32 0.0, %v2740
  %v2805 = vsub.f32 0.0, %v2741
  %v2806 = vsub.f32 0.0, %v2742
  %v2807 = vsub.f32 0.0, %v2743
  %v2808 = vsub.f32 0.0, %v2744
  %v2809 = vsub.f32 0.0, %v2745
  %v2810 = vsub.f32 0.0, %v2746
  %v2811 = vsub.f32 0.0, %v2747
  %v2812 = vsub.f32 0.0, %v2748
  %v2813 = vsub.f32 0.0, %v2749
  %v2814 = vsub.f32 0.0, %v2750
  %v2815 = vsub.f32 0.0, %v2751
  %v2816 = vsub.f32 0.0, %v2752
  %v2817 = vsub.f32 0.0, %v2753
  %v2818 = vsub.f32 0.0, %v2754
  %v2819 = vsub.f32 0.0, %v2755
  %v2820 = vsub.f32 0.0, %v2756
  %v2821 = vsub.f32 0.0, %v2757
  %v2822 = vsub.f32 0.0, %v2758
  %v2823 = vsub.f32 0.0, %v2759
  %v2824 = vsub.f32 0.0, %v2760
  %v2825 = vsub.f32 0.0, %v2761
  %v2826 = vsub.f32 0.0, %v2762
  %v2827 = vsub.f32 0.0, %v2763
  %v2828 = vsub.f32 0.0, %v2764
  %v2829 = vsub.f32 0.0, %v2765
  %v2830 = vsub.f32 0.0, %v2766
  %v2831 = vsub.f32 0.0, %v2767
  %v2832 = vsub.f32 0.0, %v2768
  %v2833 = vsub.f32 0.0, %v2769
  %v2834 = vsub.f32 0.0, %v2770
  %v2835 = vsub.f32 0.0, %v2771
  %v2836 = vsub.f32 0.0, %v2772
  %v2837 = vsub.f32 0.0, %v2773
  %v2838 = vsub.f32 0.0, %v2774
  %v2839 = vsub.f32 0.0, %v2775
  %v2840 = vsub.f32 0.0, %v2776
  %v2841 = vsub.f32 0.0, %v2777
  %v2842 = vsub.f32 0.0, %v2778
  %v2843 = vsub.f32 0.0, %v2779
  %v2844 = vsub.f32 0.0, %v2780
  %v2845 = vsub.f32 0.0, %v2781
  %v2846 = vsub.f32 0.0, %v2782
  %v2847 = vsub.f32 0.0, %v2783
  %v2848 = vsub.f32 0.0, %v2784
  %v2849 = vsub.f32 0.0, %v2785
  %v2850 = vsub.f32 0.0, %v2786
  %v2851 = vsub.f32 0.0, %v2787
  %v2852 = vsub.f32 0.0, %v2788
  %v2853 = vsub.f32 0.0, %v2789
  %v2854 = vsub.f32 0.0, %v2790
  %v2855 = vsub.f32 0.0, %v2791
  %v2856 = vsub.f32 0.0, %v2792
  %v2857 = vsub.f32 0.0, %v2793
  %v2858 = vsub.f32 0.0, %v2794
  %v2859 = vsub.f32 0.0, %v2795
  %v2860 = vsub.f32 0.0, %v2796
  %v2861 = vsub.f32 0.0, %v2797
  %v2862 = vsub.f32 0.0, %v2798
  %v2863 = vsub.f32 0.0, %v2799
  %v2864 = vsub.f32 0.0, %v2800
  %v2865 = vsub.f32 0.0, %v2801
  %v2866 = vsub.f32 0.0, %v2802
  %v2867 = vmul.f32 %v2803, 1.442695
  %v2868 = vpow.pop %v2867
  %v2869 = vmul.f32 %v2804, 1.442695
  %v2870 = vpow.pop %v2869
  %v2871 = vmul.f32 %v2805, 1.442695
  %v2872 = vpow.pop %v2871
  %v2873 = vmul.f32 %v2806, 1.442695
  %v2874 = vpow.pop %v2873
  %v2875 = vmul.f32 %v2807, 1.442695
  %v2876 = vpow.pop %v2875
  %v2877 = vmul.f32 %v2808, 1.442695
  %v2878 = vpow.pop %v2877
  %v2879 = vmul.f32 %v2809, 1.442695
  %v2880 = vpow.pop %v2879
  %v2881 = vmul.f32 %v2810, 1.442695
  %v2882 = vpow.pop %v2881
  %v2883 = vmul.f32 %v2811, 1.442695
  %v2884 = vpow.pop %v2883
  %v2885 = vmul.f32 %v2812, 1.442695
  %v2886 = vpow.pop %v2885
  %v2887 = vmul.f32 %v2813, 1.442695
  %v2888 = vpow.pop %v2887
  %v2889 = vmul.f32 %v2814, 1.442695
  %v2890 = vpow.pop %v2889
  %v2891 = vmul.f32 %v2815, 1.442695
  %v2892 = vpow.pop %v2891
  %v2893 = vmul.f32 %v2816, 1.442695
  %v2894 = vpow.pop %v2893
  %v2895 = vmul.f32 %v2817, 1.442695
  %v2896 = vpow.pop %v2895
  %v2897 = vmul.f32 %v2818, 1.442695
  %v2898 = vpow.pop %v2897
  %v2899 = vmul.f32 %v2819, 1.442695
  %v2900 = vpow.pop %v2899
  %v2901 = vmul.f32 %v2820, 1.442695
  %v2902 = vpow.pop %v2901
  %v2903 = vmul.f32 %v2821, 1.442695
  %v2904 = vpow.pop %v2903
  %v2905 = vmul.f32 %v2822, 1.442695
  %v2906 = vpow.pop %v2905
  %v2907 = vmul.f32 %v2823, 1.442695
  %v2908 = vpow.pop %v2907
  %v2909 = vmul.f32 %v2824, 1.442695
  %v2910 = vpow.pop %v2909
  %v2911 = vmul.f32 %v2825, 1.442695
  %v2912 = vpow.pop %v2911
  %v2913 = vmul.f32 %v2826, 1.442695
  %v2914 = vpow.pop %v2913
  %v2915 = vmul.f32 %v2827, 1.442695
  %v2916 = vpow.pop %v2915
  %v2917 = vmul.f32 %v2828, 1.442695
  %v2918 = vpow.pop %v2917
  %v2919 = vmul.f32 %v2829, 1.442695
  %v2920 = vpow.pop %v2919
  %v2921 = vmul.f32 %v2830, 1.442695
  %v2922 = vpow.pop %v2921
  %v2923 = vmul.f32 %v2831, 1.442695
  %v2924 = vpow.pop %v2923
  %v2925 = vmul.f32 %v2832, 1.442695
  %v2926 = vpow.pop %v2925
  %v2927 = vmul.f32 %v2833, 1.442695
  %v2928 = vpow.pop %v2927
  %v2929 = vmul.f32 %v2834, 1.442695
  %v2930 = vpow.pop %v2929
  %v2931 = vmul.f32 %v2835, 1.442695
  %v2932 = vpow.pop %v2931
  %v2933 = vmul.f32 %v2836, 1.442695
  %v2934 = vpow.pop %v2933
  %v2935 = vmul.f32 %v2837, 1.442695
  %v2936 = vpow.pop %v2935
  %v2937 = vmul.f32 %v2838, 1.442695
  %v2938 = vpow.pop %v2937
  %v2939 = vmul.f32 %v2839, 1.442695
  %v2940 = vpow.pop %v2939
  %v2941 = vmul.f32 %v2840, 1.442695
  %v2942 = vpow.pop %v2941
  %v2943 = vmul.f32 %v2841, 1.442695
  %v2944 = vpow.pop %v2943
  %v2945 = vmul.f32 %v2842, 1.442695
  %v2946 = vpow.pop %v2945
  %v2947 = vmul.f32 %v2843, 1.442695
  %v2948 = vpow.pop %v2947
  %v2949 = vmul.f32 %v2844, 1.442695
  %v2950 = vpow.pop %v2949
  %v2951 = vmul.f32 %v2845, 1.442695
  %v2952 = vpow.pop %v2951
  %v2953 = vmul.f32 %v2846, 1.442695
  %v2954 = vpow.pop %v2953
  %v2955 = vmul.f32 %v2847, 1.442695
  %v2956 = vpow.pop %v2955
  %v2957 = vmul.f32 %v2848, 1.442695
  %v2958 = vpow.pop %v2957
  %v2959 = vmul.f32 %v2849, 1.442695
  %v2960 = vpow.pop %v2959
  %v2961 = vmul.f32 %v2850, 1.442695
  %v2962 = vpow.pop %v2961
  %v2963 = vmul.f32 %v2851, 1.442695
  %v2964 = vpow.pop %v2963
  %v2965 = vmul.f32 %v2852, 1.442695
  %v2966 = vpow.pop %v2965
  %v2967 = vmul.f32 %v2853, 1.442695
  %v2968 = vpow.pop %v2967
  %v2969 = vmul.f32 %v2854, 1.442695
  %v2970 = vpow.pop %v2969
  %v2971 = vmul.f32 %v2855, 1.442695
  %v2972 = vpow.pop %v2971
  %v2973 = vmul.f32 %v2856, 1.442695
  %v2974 = vpow.pop %v2973
  %v2975 = vmul.f32 %v2857, 1.442695
  %v2976 = vpow.pop %v2975
  %v2977 = vmul.f32 %v2858, 1.442695
  %v2978 = vpow.pop %v2977
  %v2979 = vmul.f32 %v2859, 1.442695
  %v2980 = vpow.pop %v2979
  %v2981 = vmul.f32 %v2860, 1.442695
  %v2982 = vpow.pop %v2981
  %v2983 = vmul.f32 %v2861, 1.442695
  %v2984 = vpow.pop %v2983
  %v2985 = vmul.f32 %v2862, 1.442695
  %v2986 = vpow.pop %v2985
  %v2987 = vmul.f32 %v2863, 1.442695
  %v2988 = vpow.pop %v2987
  %v2989 = vmul.f32 %v2864, 1.442695
  %v2990 = vpow.pop %v2989
  %v2991 = vmul.f32 %v2865, 1.442695
  %v2992 = vpow.pop %v2991
  %v2993 = vmul.f32 %v2866, 1.442695
  %v2994 = vpow.pop %v2993
  %v2995 = vadd.f32 %v2868, 1.0
  %v2996 = vadd.f32 %v2870, 1.0
  %v2997 = vadd.f32 %v2872, 1.0
  %v2998 = vadd.f32 %v2874, 1.0
  %v2999 = vadd.f32 %v2876, 1.0
  %v3000 = vadd.f32 %v2878, 1.0
  %v3001 = vadd.f32 %v2880, 1.0
  %v3002 = vadd.f32 %v2882, 1.0
  %v3003 = vadd.f32 %v2884, 1.0
  %v3004 = vadd.f32 %v2886, 1.0
  %v3005 = vadd.f32 %v2888, 1.0
  %v3006 = vadd.f32 %v2890, 1.0
  %v3007 = vadd.f32 %v2892, 1.0
  %v3008 = vadd.f32 %v2894, 1.0
  %v3009 = vadd.f32 %v2896, 1.0
  %v3010 = vadd.f32 %v2898, 1.0
  %v3011 = vadd.f32 %v2900, 1.0
  %v3012 = vadd.f32 %v2902, 1.0
  %v3013 = vadd.f32 %v2904, 1.0
  %v3014 = vadd.f32 %v2906, 1.0
  %v3015 = vadd.f32 %v2908, 1.0
  %v3016 = vadd.f32 %v2910, 1.0
  %v3017 = vadd.f32 %v2912, 1.0
  %v3018 = vadd.f32 %v2914, 1.0
  %v3019 = vadd.f32 %v2916, 1.0
  %v3020 = vadd.f32 %v2918, 1.0
  %v3021 = vadd.f32 %v2920, 1.0
  %v3022 = vadd.f32 %v2922, 1.0
  %v3023 = vadd.f32 %v2924, 1.0
  %v3024 = vadd.f32 %v2926, 1.0
  %v3025 = vadd.f32 %v2928, 1.0
  %v3026 = vadd.f32 %v2930, 1.0
  %v3027 = vadd.f32 %v2932, 1.0
  %v3028 = vadd.f32 %v2934, 1.0
  %v3029 = vadd.f32 %v2936, 1.0
  %v3030 = vadd.f32 %v2938, 1.0
  %v3031 = vadd.f32 %v2940, 1.0
  %v3032 = vadd.f32 %v2942, 1.0
  %v3033 = vadd.f32 %v2944, 1.0
  %v3034 = vadd.f32 %v2946, 1.0
  %v3035 = vadd.f32 %v2948, 1.0
  %v3036 = vadd.f32 %v2950, 1.0
  %v3037 = vadd.f32 %v2952, 1.0
  %v3038 = vadd.f32 %v2954, 1.0
  %v3039 = vadd.f32 %v2956, 1.0
  %v3040 = vadd.f32 %v2958, 1.0
  %v3041 = vadd.f32 %v2960, 1.0
  %v3042 = vadd.f32 %v2962, 1.0
  %v3043 = vadd.f32 %v2964, 1.0
  %v3044 = vadd.f32 %v2966, 1.0
  %v3045 = vadd.f32 %v2968, 1.0
  %v3046 = vadd.f32 %v2970, 1.0
  %v3047 = vadd.f32 %v2972, 1.0
  %v3048 = vadd.f32 %v2974, 1.0
  %v3049 = vadd.f32 %v2976, 1.0
  %v3050 = vadd.f32 %v2978, 1.0
  %v3051 = vadd.f32 %v2980, 1.0
  %v3052 = vadd.f32 %v2982, 1.0
  %v3053 = vadd.f32 %v2984, 1.0
  %v3054 = vadd.f32 %v2986, 1.0
  %v3055 = vadd.f32 %v2988, 1.0
  %v3056 = vadd.f32 %v2990, 1.0
  %v3057 = vadd.f32 %v2992, 1.0
  %v3058 = vadd.f32 %v2994, 1.0
  %v3059 = vrcp.pop %v2995
  %v3060 = vrcp.pop %v2996
  %v3061 = vrcp.pop %v2997
  %v3062 = vrcp.pop %v2998
  %v3063 = vrcp.pop %v2999
  %v3064 = vrcp.pop %v3000
  %v3065 = vrcp.pop %v3001
  %v3066 = vrcp.pop %v3002
  %v3067 = vrcp.pop %v3003
  %v3068 = vrcp.pop %v3004
  %v3069 = vrcp.pop %v3005
  %v3070 = vrcp.pop %v3006
  %v3071 = vrcp.pop %v3007
  %v3072 = vrcp.pop %v3008
  %v3073 = vrcp.pop %v3009
  %v3074 = vrcp.pop %v3010
  %v3075 = vrcp.pop %v3011
  %v3076 = vrcp.pop %v3012
  %v3077 = vrcp.pop %v3013
  %v3078 = vrcp.pop %v3014
  %v3079 = vrcp.pop %v3015
  %v3080 = vrcp.pop %v3016
  %v3081 = vrcp.pop %v3017
  %v3082 = vrcp.pop %v3018
  %v3083 = vrcp.pop %v3019
  %v3084 = vrcp.pop %v3020
  %v3085 = vrcp.pop %v3021
  %v3086 = vrcp.pop %v3022
  %v3087 = vrcp.pop %v3023
  %v3088 = vrcp.pop %v3024
  %v3089 = vrcp.pop %v3025
  %v3090 = vrcp.pop %v3026
  %v3091 = vrcp.pop %v3027
  %v3092 = vrcp.pop %v3028
  %v3093 = vrcp.pop %v3029
  %v3094 = vrcp.pop %v3030
  %v3095 = vrcp.pop %v3031
  %v3096 = vrcp.pop %v3032
  %v3097 = vrcp.pop %v3033
  %v3098 = vrcp.pop %v3034
  %v3099 = vrcp.pop %v3035
  %v3100 = vrcp.pop %v3036
  %v3101 = vrcp.pop %v3037
  %v3102 = vrcp.pop %v3038
  %v3103 = vrcp.pop %v3039
  %v3104 = vrcp.pop %v3040
  %v3105 = vrcp.pop %v3041
  %v3106 = vrcp.pop %v3042
  %v3107 = vrcp.pop %v3043
  %v3108 = vrcp.pop %v3044
  %v3109 = vrcp.pop %v3045
  %v3110 = vrcp.pop %v3046
  %v3111 = vrcp.pop %v3047
  %v3112 = vrcp.pop %v3048
  %v3113 = vrcp.pop %v3049
  %v3114 = vrcp.pop %v3050
  %v3115 = vrcp.pop %v3051
  %v3116 = vrcp.pop %v3052
  %v3117 = vrcp.pop %v3053
  %v3118 = vrcp.pop %v3054
  %v3119 = vrcp.pop %v3055
  %v3120 = vrcp.pop %v3056
  %v3121 = vrcp.pop %v3057
  %v3122 = vrcp.pop %v3058
  %vm3123 = vcmp.ge.f32.partialorder %v2675, 0.0
  %vm3124 = vcmp.ge.f32.partialorder %v2676, 0.0
  %vm3125 = vcmp.ge.f32.partialorder %v2677, 0.0
  %vm3126 = vcmp.ge.f32.partialorder %v2678, 0.0
  %vm3127 = vcmp.ge.f32.partialorder %v2679, 0.0
  %vm3128 = vcmp.ge.f32.partialorder %v2680, 0.0
  %vm3129 = vcmp.ge.f32.partialorder %v2681, 0.0
  %vm3130 = vcmp.ge.f32.partialorder %v2682, 0.0
  %vm3131 = vcmp.ge.f32.partialorder %v2683, 0.0
  %vm3132 = vcmp.ge.f32.partialorder %v2684, 0.0
  %vm3133 = vcmp.ge.f32.partialorder %v2685, 0.0
  %vm3134 = vcmp.ge.f32.partialorder %v2686, 0.0
  %vm3135 = vcmp.ge.f32.partialorder %v2687, 0.0
  %vm3136 = vcmp.ge.f32.partialorder %v2688, 0.0
  %vm3137 = vcmp.ge.f32.partialorder %v2689, 0.0
  %vm3138 = vcmp.ge.f32.partialorder %v2690, 0.0
  %vm3139 = vcmp.ge.f32.partialorder %v2691, 0.0
  %vm3140 = vcmp.ge.f32.partialorder %v2692, 0.0
  %vm3141 = vcmp.ge.f32.partialorder %v2693, 0.0
  %vm3142 = vcmp.ge.f32.partialorder %v2694, 0.0
  %vm3143 = vcmp.ge.f32.partialorder %v2695, 0.0
  %vm3144 = vcmp.ge.f32.partialorder %v2696, 0.0
  %vm3145 = vcmp.ge.f32.partialorder %v2697, 0.0
  %vm3146 = vcmp.ge.f32.partialorder %v2698, 0.0
  %vm3147 = vcmp.ge.f32.partialorder %v2699, 0.0
  %vm3148 = vcmp.ge.f32.partialorder %v2700, 0.0
  %vm3149 = vcmp.ge.f32.partialorder %v2701, 0.0
  %vm3150 = vcmp.ge.f32.partialorder %v2702, 0.0
  %vm3151 = vcmp.ge.f32.partialorder %v2703, 0.0
  %vm3152 = vcmp.ge.f32.partialorder %v2704, 0.0
  %vm3153 = vcmp.ge.f32.partialorder %v2705, 0.0
  %vm3154 = vcmp.ge.f32.partialorder %v2706, 0.0
  %vm3155 = vcmp.ge.f32.partialorder %v2707, 0.0
  %vm3156 = vcmp.ge.f32.partialorder %v2708, 0.0
  %vm3157 = vcmp.ge.f32.partialorder %v2709, 0.0
  %vm3158 = vcmp.ge.f32.partialorder %v2710, 0.0
  %vm3159 = vcmp.ge.f32.partialorder %v2711, 0.0
  %vm3160 = vcmp.ge.f32.partialorder %v2712, 0.0
  %vm3161 = vcmp.ge.f32.partialorder %v2713, 0.0
  %vm3162 = vcmp.ge.f32.partialorder %v2714, 0.0
  %vm3163 = vcmp.ge.f32.partialorder %v2715, 0.0
  %vm3164 = vcmp.ge.f32.partialorder %v2716, 0.0
  %vm3165 = vcmp.ge.f32.partialorder %v2717, 0.0
  %vm3166 = vcmp.ge.f32.partialorder %v2718, 0.0
  %vm3167 = vcmp.ge.f32.partialorder %v2719, 0.0
  %vm3168 = vcmp.ge.f32.partialorder %v2720, 0.0
  %vm3169 = vcmp.ge.f32.partialorder %v2721, 0.0
  %vm3170 = vcmp.ge.f32.partialorder %v2722, 0.0
  %vm3171 = vcmp.ge.f32.partialorder %v2723, 0.0
  %vm3172 = vcmp.ge.f32.partialorder %v2724, 0.0
  %vm3173 = vcmp.ge.f32.partialorder %v2725, 0.0
  %vm3174 = vcmp.ge.f32.partialorder %v2726, 0.0
  %vm3175 = vcmp.ge.f32.partialorder %v2727, 0.0
  %vm3176 = vcmp.ge.f32.partialorder %v2728, 0.0
  %vm3177 = vcmp.ge.f32.partialorder %v2729, 0.0
  %vm3178 = vcmp.ge.f32.partialorder %v2730, 0.0
  %vm3179 = vcmp.ge.f32.partialorder %v2731, 0.0
  %vm3180 = vcmp.ge.f32.partialorder %v2732, 0.0
  %vm3181 = vcmp.ge.f32.partialorder %v2733, 0.0
  %vm3182 = vcmp.ge.f32.partialorder %v2734, 0.0
  %vm3183 = vcmp.ge.f32.partialorder %v2735, 0.0
  %vm3184 = vcmp.ge.f32.partialorder %v2736, 0.0
  %vm3185 = vcmp.ge.f32.partialorder %v2737, 0.0
  %vm3186 = vcmp.ge.f32.partialorder %v2738, 0.0
  %v3187 = vmul.f32 %v2868, %v3059
  %v3188 = vmul.f32 %v2870, %v3060
  %v3189 = vmul.f32 %v2872, %v3061
  %v3190 = vmul.f32 %v2874, %v3062
  %v3191 = vmul.f32 %v2876, %v3063
  %v3192 = vmul.f32 %v2878, %v3064
  %v3193 = vmul.f32 %v2880, %v3065
  %v3194 = vmul.f32 %v2882, %v3066
  %v3195 = vmul.f32 %v2884, %v3067
  %v3196 = vmul.f32 %v2886, %v3068
  %v3197 = vmul.f32 %v2888, %v3069
  %v3198 = vmul.f32 %v2890, %v3070
  %v3199 = vmul.f32 %v2892, %v3071
  %v3200 = vmul.f32 %v2894, %v3072
  %v3201 = vmul.f32 %v2896, %v3073
  %v3202 = vmul.f32 %v2898, %v3074
  %v3203 = vmul.f32 %v2900, %v3075
  %v3204 = vmul.f32 %v2902, %v3076
  %v3205 = vmul.f32 %v2904, %v3077
  %v3206 = vmul.f32 %v2906, %v3078
  %v3207 = vmul.f32 %v2908, %v3079
  %v3208 = vmul.f32 %v2910, %v3080
  %v3209 = vmul.f32 %v2912, %v3081
  %v3210 = vmul.f32 %v2914, %v3082
  %v3211 = vmul.f32 %v2916, %v3083
  %v3212 = vmul.f32 %v2918, %v3084
  %v3213 = vmul.f32 %v2920, %v3085
  %v3214 = vmul.f32 %v2922, %v3086
  %v3215 = vmul.f32 %v2924, %v3087
  %v3216 = vmul.f32 %v2926, %v3088
  %v3217 = vmul.f32 %v2928, %v3089
  %v3218 = vmul.f32 %v2930, %v3090
  %v3219 = vmul.f32 %v2932, %v3091
  %v3220 = vmul.f32 %v2934, %v3092
  %v3221 = vmul.f32 %v2936, %v3093
  %v3222 = vmul.f32 %v2938, %v3094
  %v3223 = vmul.f32 %v2940, %v3095
  %v3224 = vmul.f32 %v2942, %v3096
  %v3225 = vmul.f32 %v2944, %v3097
  %v3226 = vmul.f32 %v2946, %v3098
  %v3227 = vmul.f32 %v2948, %v3099
  %v3228 = vmul.f32 %v2950, %v3100
  %v3229 = vmul.f32 %v2952, %v3101
  %v3230 = vmul.f32 %v2954, %v3102
  %v3231 = vmul.f32 %v2956, %v3103
  %v3232 = vmul.f32 %v2958, %v3104
  %v3233 = vmul.f32 %v2960, %v3105
  %v3234 = vmul.f32 %v2962, %v3106
  %v3235 = vmul.f32 %v2964, %v3107
  %v3236 = vmul.f32 %v2966, %v3108
  %v3237 = vmul.f32 %v2968, %v3109
  %v3238 = vmul.f32 %v2970, %v3110
  %v3239 = vmul.f32 %v2972, %v3111
  %v3240 = vmul.f32 %v2974, %v3112
  %v3241 = vmul.f32 %v2976, %v3113
  %v3242 = vmul.f32 %v2978, %v3114
  %v3243 = vmul.f32 %v2980, %v3115
  %v3244 = vmul.f32 %v2982, %v3116
  %v3245 = vmul.f32 %v2984, %v3117
  %v3246 = vmul.f32 %v2986, %v3118
  %v3247 = vmul.f32 %v2988, %v3119
  %v3248 = vmul.f32 %v2990, %v3120
  %v3249 = vmul.f32 %v2992, %v3121
  %v3250 = vmul.f32 %v2994, %v3122
  %v3251 = vsel %vm3123, %v3059, %v3187
  %v3252 = vsel %vm3124, %v3060, %v3188
  %v3253 = vsel %vm3125, %v3061, %v3189
  %v3254 = vsel %vm3126, %v3062, %v3190
  %v3255 = vsel %vm3127, %v3063, %v3191
  %v3256 = vsel %vm3128, %v3064, %v3192
  %v3257 = vsel %vm3129, %v3065, %v3193
  %v3258 = vsel %vm3130, %v3066, %v3194
  %v3259 = vsel %vm3131, %v3067, %v3195
  %v3260 = vsel %vm3132, %v3068, %v3196
  %v3261 = vsel %vm3133, %v3069, %v3197
  %v3262 = vsel %vm3134, %v3070, %v3198
  %v3263 = vsel %vm3135, %v3071, %v3199
  %v3264 = vsel %vm3136, %v3072, %v3200
  %v3265 = vsel %vm3137, %v3073, %v3201
  %v3266 = vsel %vm3138, %v3074, %v3202
  %v3267 = vsel %vm3139, %v3075, %v3203
  %v3268 = vsel %vm3140, %v3076, %v3204
  %v3269 = vsel %vm3141, %v3077, %v3205
  %v3270 = vsel %vm3142, %v3078, %v3206
  %v3271 = vsel %vm3143, %v3079, %v3207
  %v3272 = vsel %vm3144, %v3080, %v3208
  %v3273 = vsel %vm3145, %v3081, %v3209
  %v3274 = vsel %vm3146, %v3082, %v3210
  %v3275 = vsel %vm3147, %v3083, %v3211
  %v3276 = vsel %vm3148, %v3084, %v3212
  %v3277 = vsel %vm3149, %v3085, %v3213
  %v3278 = vsel %vm3150, %v3086, %v3214
  %v3279 = vsel %vm3151, %v3087, %v3215
  %v3280 = vsel %vm3152, %v3088, %v3216
  %v3281 = vsel %vm3153, %v3089, %v3217
  %v3282 = vsel %vm3154, %v3090, %v3218
  %v3283 = vsel %vm3155, %v3091, %v3219
  %v3284 = vsel %vm3156, %v3092, %v3220
  %v3285 = vsel %vm3157, %v3093, %v3221
  %v3286 = vsel %vm3158, %v3094, %v3222
  %v3287 = vsel %vm3159, %v3095, %v3223
  %v3288 = vsel %vm3160, %v3096, %v3224
  %v3289 = vsel %vm3161, %v3097, %v3225
  %v3290 = vsel %vm3162, %v3098, %v3226
  %v3291 = vsel %vm3163, %v3099, %v3227
  %v3292 = vsel %vm3164, %v3100, %v3228
  %v3293 = vsel %vm3165, %v3101, %v3229
  %v3294 = vsel %vm3166, %v3102, %v3230
  %v3295 = vsel %vm3167, %v3103, %v3231
  %v3296 = vsel %vm3168, %v3104, %v3232
  %v3297 = vsel %vm3169, %v3105, %v3233
  %v3298 = vsel %vm3170, %v3106, %v3234
  %v3299 = vsel %vm3171, %v3107, %v3235
  %v3300 = vsel %vm3172, %v3108, %v3236
  %v3301 = vsel %vm3173, %v3109, %v3237
  %v3302 = vsel %vm3174, %v3110, %v3238
  %v3303 = vsel %vm3175, %v3111, %v3239
  %v3304 = vsel %vm3176, %v3112, %v3240
  %v3305 = vsel %vm3177, %v3113, %v3241
  %v3306 = vsel %vm3178, %v3114, %v3242
  %v3307 = vsel %vm3179, %v3115, %v3243
  %v3308 = vsel %vm3180, %v3116, %v3244
  %v3309 = vsel %vm3181, %v3117, %v3245
  %v3310 = vsel %vm3182, %v3118, %v3246
  %v3311 = vsel %vm3183, %v3119, %v3247
  %v3312 = vsel %vm3184, %v3120, %v3248
  %v3313 = vsel %vm3185, %v3121, %v3249
  %v3314 = vsel %vm3186, %v3122, %v3250
  %v3315 = vmul.f32 %v2675, %v3251
  %v3316 = vmul.f32 %v2676, %v3252
  %v3317 = vmul.f32 %v2677, %v3253
  %v3318 = vmul.f32 %v2678, %v3254
  %v3319 = vmul.f32 %v2679, %v3255
  %v3320 = vmul.f32 %v2680, %v3256
  %v3321 = vmul.f32 %v2681, %v3257
  %v3322 = vmul.f32 %v2682, %v3258
  %v3323 = vmul.f32 %v2683, %v3259
  %v3324 = vmul.f32 %v2684, %v3260
  %v3325 = vmul.f32 %v2685, %v3261
  %v3326 = vmul.f32 %v2686, %v3262
  %v3327 = vmul.f32 %v2687, %v3263
  %v3328 = vmul.f32 %v2688, %v3264
  %v3329 = vmul.f32 %v2689, %v3265
  %v3330 = vmul.f32 %v2690, %v3266
  %v3331 = vmul.f32 %v2691, %v3267
  %v3332 = vmul.f32 %v2692, %v3268
  %v3333 = vmul.f32 %v2693, %v3269
  %v3334 = vmul.f32 %v2694, %v3270
  %v3335 = vmul.f32 %v2695, %v3271
  %v3336 = vmul.f32 %v2696, %v3272
  %v3337 = vmul.f32 %v2697, %v3273
  %v3338 = vmul.f32 %v2698, %v3274
  %v3339 = vmul.f32 %v2699, %v3275
  %v3340 = vmul.f32 %v2700, %v3276
  %v3341 = vmul.f32 %v2701, %v3277
  %v3342 = vmul.f32 %v2702, %v3278
  %v3343 = vmul.f32 %v2703, %v3279
  %v3344 = vmul.f32 %v2704, %v3280
  %v3345 = vmul.f32 %v2705, %v3281
  %v3346 = vmul.f32 %v2706, %v3282
  %v3347 = vmul.f32 %v2707, %v3283
  %v3348 = vmul.f32 %v2708, %v3284
  %v3349 = vmul.f32 %v2709, %v3285
  %v3350 = vmul.f32 %v2710, %v3286
  %v3351 = vmul.f32 %v2711, %v3287
  %v3352 = vmul.f32 %v2712, %v3288
  %v3353 = vmul.f32 %v2713, %v3289
  %v3354 = vmul.f32 %v2714, %v3290
  %v3355 = vmul.f32 %v2715, %v3291
  %v3356 = vmul.f32 %v2716, %v3292
  %v3357 = vmul.f32 %v2717, %v3293
  %v3358 = vmul.f32 %v2718, %v3294
  %v3359 = vmul.f32 %v2719, %v3295
  %v3360 = vmul.f32 %v2720, %v3296
  %v3361 = vmul.f32 %v2721, %v3297
  %v3362 = vmul.f32 %v2722, %v3298
  %v3363 = vmul.f32 %v2723, %v3299
  %v3364 = vmul.f32 %v2724, %v3300
  %v3365 = vmul.f32 %v2725, %v3301
  %v3366 = vmul.f32 %v2726, %v3302
  %v3367 = vmul.f32 %v2727, %v3303
  %v3368 = vmul.f32 %v2728, %v3304
  %v3369 = vmul.f32 %v2729, %v3305
  %v3370 = vmul.f32 %v2730, %v3306
  %v3371 = vmul.f32 %v2731, %v3307
  %v3372 = vmul.f32 %v2732, %v3308
  %v3373 = vmul.f32 %v2733, %v3309
  %v3374 = vmul.f32 %v2734, %v3310
  %v3375 = vmul.f32 %v2735, %v3311
  %v3376 = vmul.f32 %v2736, %v3312
  %v3377 = vmul.f32 %v2737, %v3313
  %v3378 = vmul.f32 %v2738, %v3314
  %v3379 = vld [vmem:[%s6] sm:$0xff]
  %v3380 = vld [vmem:[%s6 + $0x8] sm:$0xff]
  %v3381 = vld [vmem:[%s7] sm:$0x1]
  %v3383 = vperm.slane %v3381, 0
  %v3386 = vsel %vm2078, %v3315, 0
  %v3389 = vsel %vm2078, %v3316, 0
  %v3392 = vsel %vm2078, %v3317, 0
  %v3395 = vsel %vm2078, %v3318, 0
  %v3398 = vsel %vm2078, %v3319, 0
  %v3401 = vsel %vm2078, %v3320, 0
  %v3404 = vsel %vm2078, %v3321, 0
  %v3407 = vsel %vm2078, %v3322, 0
  %v3410 = vsel %vm2078, %v3323, 0
  %v3413 = vsel %vm2078, %v3324, 0
  %v3416 = vsel %vm2078, %v3325, 0
  %v3419 = vsel %vm2078, %v3326, 0
  %v3422 = vsel %vm2078, %v3327, 0
  %v3425 = vsel %vm2078, %v3328, 0
  %v3428 = vsel %vm2078, %v3329, 0
  %v3431 = vsel %vm2078, %v3330, 0
  %v3434 = vsel %vm2078, %v3331, 0
  %v3437 = vsel %vm2078, %v3332, 0
  %v3440 = vsel %vm2078, %v3333, 0
  %v3443 = vsel %vm2078, %v3334, 0
  %v3446 = vsel %vm2078, %v3335, 0
  %v3449 = vsel %vm2078, %v3336, 0
  %v3452 = vsel %vm2078, %v3337, 0
  %v3455 = vsel %vm2078, %v3338, 0
  %v3458 = vsel %vm2078, %v3339, 0
  %v3461 = vsel %vm2078, %v3340, 0
  %v3464 = vsel %vm2078, %v3341, 0
  %v3467 = vsel %vm2078, %v3342, 0
  %v3470 = vsel %vm2078, %v3343, 0
  %v3473 = vsel %vm2078, %v3344, 0
  %v3476 = vsel %vm2078, %v3345, 0
  %v3479 = vsel %vm2078, %v3346, 0
  %v3482 = vsel %vm2078, %v3347, 0
  %v3485 = vsel %vm2078, %v3348, 0
  %v3488 = vsel %vm2078, %v3349, 0
  %v3491 = vsel %vm2078, %v3350, 0
  %v3494 = vsel %vm2078, %v3351, 0
  %v3497 = vsel %vm2078, %v3352, 0
  %v3500 = vsel %vm2078, %v3353, 0
  %v3503 = vsel %vm2078, %v3354, 0
  %v3506 = vsel %vm2078, %v3355, 0
  %v3509 = vsel %vm2078, %v3356, 0
  %v3512 = vsel %vm2078, %v3357, 0
  %v3515 = vsel %vm2078, %v3358, 0
  %v3518 = vsel %vm2078, %v3359, 0
  %v3521 = vsel %vm2078, %v3360, 0
  %v3524 = vsel %vm2078, %v3361, 0
  %v3527 = vsel %vm2078, %v3362, 0
  %v3530 = vsel %vm2078, %v3363, 0
  %v3533 = vsel %vm2078, %v3364, 0
  %v3536 = vsel %vm2078, %v3365, 0
  %v3539 = vsel %vm2078, %v3366, 0
  %v3542 = vsel %vm2078, %v3367, 0
  %v3545 = vsel %vm2078, %v3368, 0
  %v3548 = vsel %vm2078, %v3369, 0
  %v3551 = vsel %vm2078, %v3370, 0
  %v3554 = vsel %vm2078, %v3371, 0
  %v3557 = vsel %vm2078, %v3372, 0
  %v3560 = vsel %vm2078, %v3373, 0
  %v3563 = vsel %vm2078, %v3374, 0
  %v3566 = vsel %vm2078, %v3375, 0
  %v3569 = vsel %vm2078, %v3376, 0
  %v3572 = vsel %vm2078, %v3377, 0
  %v3575 = vsel %vm2078, %v3378, 0
  %3577 = vmatpush.msra.mxu0 0.0
  %3578 = vmatpush.msra.mxu0 0.0
  %3579 = vmatpush.msra.mxu0 0.0
  %3580 = vmatpush.msra.mxu0 0.0
  %3581 = vmatpush.msra.mxu0 0.0
  %3582 = vmatpush.msra.mxu0 0.0
  %3583 = vmatpush.msra.mxu0 0.0
  %3584 = vmatpush.msra.mxu0 0.0
  %3585 = vmatpush.msra.mxu0 0.0
  %3586 = vmatpush.msra.mxu0 0.0
  %3587 = vmatpush.msra.mxu0 0.0
  %3588 = vmatpush.msra.mxu0 0.0
  %3589 = vmatpush.msra.mxu0 0.0
  %3590 = vmatpush.msra.mxu0 0.0
  %3591 = vmatpush.msra.mxu0 %v3380
  %3592 = vmatpush.msra.mxu0 %v3379
  %3593 = vmatmul.f32.gmra.mxu0 %v3386
  %v3594 = vpop.f32.mrf.mxu0
  %v3595 = vadd.f32 %v3383, %v3594
  %3596 = vmatmul.f32.gmra.mxu0 %v3389
  %v3597 = vpop.f32.mrf.mxu0
  %v3598 = vadd.f32 %v3383, %v3597
  %3599 = vmatmul.f32.gmra.mxu0 %v3392
  %v3600 = vpop.f32.mrf.mxu0
  %v3601 = vadd.f32 %v3383, %v3600
  %3602 = vmatmul.f32.gmra.mxu0 %v3395
  %v3603 = vpop.f32.mrf.mxu0
  %v3604 = vadd.f32 %v3383, %v3603
  %3605 = vmatmul.f32.gmra.mxu0 %v3398
  %v3606 = vpop.f32.mrf.mxu0
  %v3607 = vadd.f32 %v3383, %v3606
  %3608 = vmatmul.f32.gmra.mxu0 %v3401
  %v3609 = vpop.f32.mrf.mxu0
  %v3610 = vadd.f32 %v3383, %v3609
  %3611 = vmatmul.f32.gmra.mxu0 %v3404
  %v3612 = vpop.f32.mrf.mxu0
  %v3613 = vadd.f32 %v3383, %v3612
  %3614 = vmatmul.f32.gmra.mxu0 %v3407
  %v3615 = vpop.f32.mrf.mxu0
  %v3616 = vadd.f32 %v3383, %v3615
  %3617 = vmatmul.f32.gmra.mxu0 %v3410
  %v3618 = vpop.f32.mrf.mxu0
  %v3619 = vadd.f32 %v3383, %v3618
  %3620 = vmatmul.f32.gmra.mxu0 %v3413
  %v3621 = vpop.f32.mrf.mxu0
  %v3622 = vadd.f32 %v3383, %v3621
  %3623 = vmatmul.f32.gmra.mxu0 %v3416
  %v3624 = vpop.f32.mrf.mxu0
  %v3625 = vadd.f32 %v3383, %v3624
  %3626 = vmatmul.f32.gmra.mxu0 %v3419
  %v3627 = vpop.f32.mrf.mxu0
  %v3628 = vadd.f32 %v3383, %v3627
  %3629 = vmatmul.f32.gmra.mxu0 %v3422
  %v3630 = vpop.f32.mrf.mxu0
  %v3631 = vadd.f32 %v3383, %v3630
  %3632 = vmatmul.f32.gmra.mxu0 %v3425
  %v3633 = vpop.f32.mrf.mxu0
  %v3634 = vadd.f32 %v3383, %v3633
  %3635 = vmatmul.f32.gmra.mxu0 %v3428
  %v3636 = vpop.f32.mrf.mxu0
  %v3637 = vadd.f32 %v3383, %v3636
  %3638 = vmatmul.f32.gmra.mxu0 %v3431
  %v3639 = vpop.f32.mrf.mxu0
  %v3640 = vadd.f32 %v3383, %v3639
  %3641 = vmatmul.f32.gmra.mxu0 %v3434
  %v3642 = vpop.f32.mrf.mxu0
  %v3643 = vadd.f32 %v3383, %v3642
  %3644 = vmatmul.f32.gmra.mxu0 %v3437
  %v3645 = vpop.f32.mrf.mxu0
  %v3646 = vadd.f32 %v3383, %v3645
  %3647 = vmatmul.f32.gmra.mxu0 %v3440
  %v3648 = vpop.f32.mrf.mxu0
  %v3649 = vadd.f32 %v3383, %v3648
  %3650 = vmatmul.f32.gmra.mxu0 %v3443
  %v3651 = vpop.f32.mrf.mxu0
  %v3652 = vadd.f32 %v3383, %v3651
  %3653 = vmatmul.f32.gmra.mxu0 %v3446
  %v3654 = vpop.f32.mrf.mxu0
  %v3655 = vadd.f32 %v3383, %v3654
  %3656 = vmatmul.f32.gmra.mxu0 %v3449
  %v3657 = vpop.f32.mrf.mxu0
  %v3658 = vadd.f32 %v3383, %v3657
  %3659 = vmatmul.f32.gmra.mxu0 %v3452
  %v3660 = vpop.f32.mrf.mxu0
  %v3661 = vadd.f32 %v3383, %v3660
  %3662 = vmatmul.f32.gmra.mxu0 %v3455
  %v3663 = vpop.f32.mrf.mxu0
  %v3664 = vadd.f32 %v3383, %v3663
  %3665 = vmatmul.f32.gmra.mxu0 %v3458
  %v3666 = vpop.f32.mrf.mxu0
  %v3667 = vadd.f32 %v3383, %v3666
  %3668 = vmatmul.f32.gmra.mxu0 %v3461
  %v3669 = vpop.f32.mrf.mxu0
  %v3670 = vadd.f32 %v3383, %v3669
  %3671 = vmatmul.f32.gmra.mxu0 %v3464
  %v3672 = vpop.f32.mrf.mxu0
  %v3673 = vadd.f32 %v3383, %v3672
  %3674 = vmatmul.f32.gmra.mxu0 %v3467
  %v3675 = vpop.f32.mrf.mxu0
  %v3676 = vadd.f32 %v3383, %v3675
  %3677 = vmatmul.f32.gmra.mxu0 %v3470
  %v3678 = vpop.f32.mrf.mxu0
  %v3679 = vadd.f32 %v3383, %v3678
  %3680 = vmatmul.f32.gmra.mxu0 %v3473
  %v3681 = vpop.f32.mrf.mxu0
  %v3682 = vadd.f32 %v3383, %v3681
  %3683 = vmatmul.f32.gmra.mxu0 %v3476
  %v3684 = vpop.f32.mrf.mxu0
  %v3685 = vadd.f32 %v3383, %v3684
  %3686 = vmatmul.f32.gmra.mxu0 %v3479
  %v3687 = vpop.f32.mrf.mxu0
  %v3688 = vadd.f32 %v3383, %v3687
  %3689 = vmatmul.f32.gmra.mxu0 %v3482
  %v3690 = vpop.f32.mrf.mxu0
  %v3691 = vadd.f32 %v3383, %v3690
  %3692 = vmatmul.f32.gmra.mxu0 %v3485
  %v3693 = vpop.f32.mrf.mxu0
  %v3694 = vadd.f32 %v3383, %v3693
  %3695 = vmatmul.f32.gmra.mxu0 %v3488
  %v3696 = vpop.f32.mrf.mxu0
  %v3697 = vadd.f32 %v3383, %v3696
  %3698 = vmatmul.f32.gmra.mxu0 %v3491
  %v3699 = vpop.f32.mrf.mxu0
  %v3700 = vadd.f32 %v3383, %v3699
  %3701 = vmatmul.f32.gmra.mxu0 %v3494
  %v3702 = vpop.f32.mrf.mxu0
  %v3703 = vadd.f32 %v3383, %v3702
  %3704 = vmatmul.f32.gmra.mxu0 %v3497
  %v3705 = vpop.f32.mrf.mxu0
  %v3706 = vadd.f32 %v3383, %v3705
  %3707 = vmatmul.f32.gmra.mxu0 %v3500
  %v3708 = vpop.f32.mrf.mxu0
  %v3709 = vadd.f32 %v3383, %v3708
  %3710 = vmatmul.f32.gmra.mxu0 %v3503
  %v3711 = vpop.f32.mrf.mxu0
  %v3712 = vadd.f32 %v3383, %v3711
  %3713 = vmatmul.f32.gmra.mxu0 %v3506
  %v3714 = vpop.f32.mrf.mxu0
  %v3715 = vadd.f32 %v3383, %v3714
  %3716 = vmatmul.f32.gmra.mxu0 %v3509
  %v3717 = vpop.f32.mrf.mxu0
  %v3718 = vadd.f32 %v3383, %v3717
  %3719 = vmatmul.f32.gmra.mxu0 %v3512
  %v3720 = vpop.f32.mrf.mxu0
  %v3721 = vadd.f32 %v3383, %v3720
  %3722 = vmatmul.f32.gmra.mxu0 %v3515
  %v3723 = vpop.f32.mrf.mxu0
  %v3724 = vadd.f32 %v3383, %v3723
  %3725 = vmatmul.f32.gmra.mxu0 %v3518
  %v3726 = vpop.f32.mrf.mxu0
  %v3727 = vadd.f32 %v3383, %v3726
  %3728 = vmatmul.f32.gmra.mxu0 %v3521
  %v3729 = vpop.f32.mrf.mxu0
  %v3730 = vadd.f32 %v3383, %v3729
  %3731 = vmatmul.f32.gmra.mxu0 %v3524
  %v3732 = vpop.f32.mrf.mxu0
  %v3733 = vadd.f32 %v3383, %v3732
  %3734 = vmatmul.f32.gmra.mxu0 %v3527
  %v3735 = vpop.f32.mrf.mxu0
  %v3736 = vadd.f32 %v3383, %v3735
  %3737 = vmatmul.f32.gmra.mxu0 %v3530
  %v3738 = vpop.f32.mrf.mxu0
  %v3739 = vadd.f32 %v3383, %v3738
  %3740 = vmatmul.f32.gmra.mxu0 %v3533
  %v3741 = vpop.f32.mrf.mxu0
  %v3742 = vadd.f32 %v3383, %v3741
  %3743 = vmatmul.f32.gmra.mxu0 %v3536
  %v3744 = vpop.f32.mrf.mxu0
  %v3745 = vadd.f32 %v3383, %v3744
  %3746 = vmatmul.f32.gmra.mxu0 %v3539
  %v3747 = vpop.f32.mrf.mxu0
  %v3748 = vadd.f32 %v3383, %v3747
  %3749 = vmatmul.f32.gmra.mxu0 %v3542
  %v3750 = vpop.f32.mrf.mxu0
  %v3751 = vadd.f32 %v3383, %v3750
  %3752 = vmatmul.f32.gmra.mxu0 %v3545
  %v3753 = vpop.f32.mrf.mxu0
  %v3754 = vadd.f32 %v3383, %v3753
  %3755 = vmatmul.f32.gmra.mxu0 %v3548
  %v3756 = vpop.f32.mrf.mxu0
  %v3757 = vadd.f32 %v3383, %v3756
  %3758 = vmatmul.f32.gmra.mxu0 %v3551
  %v3759 = vpop.f32.mrf.mxu0
  %v3760 = vadd.f32 %v3383, %v3759
  %3761 = vmatmul.f32.gmra.mxu0 %v3554
  %v3762 = vpop.f32.mrf.mxu0
  %v3763 = vadd.f32 %v3383, %v3762
  %3764 = vmatmul.f32.gmra.mxu0 %v3557
  %v3765 = vpop.f32.mrf.mxu0
  %v3766 = vadd.f32 %v3383, %v3765
  %3767 = vmatmul.f32.gmra.mxu0 %v3560
  %v3768 = vpop.f32.mrf.mxu0
  %v3769 = vadd.f32 %v3383, %v3768
  %3770 = vmatmul.f32.gmra.mxu0 %v3563
  %v3771 = vpop.f32.mrf.mxu0
  %v3772 = vadd.f32 %v3383, %v3771
  %3773 = vmatmul.f32.gmra.mxu0 %v3566
  %v3774 = vpop.f32.mrf.mxu0
  %v3775 = vadd.f32 %v3383, %v3774
  %3776 = vmatmul.f32.gmra.mxu0 %v3569
  %v3777 = vpop.f32.mrf.mxu0
  %v3778 = vadd.f32 %v3383, %v3777
  %3779 = vmatmul.f32.gmra.mxu0 %v3572
  %v3780 = vpop.f32.mrf.mxu0
  %v3781 = vadd.f32 %v3383, %v3780
  %3782 = vmatmul.f32.gmra.mxu0 %v3575
  %v3783 = vpop.f32.mrf.mxu0
  %v3784 = vadd.f32 %v3383, %v3783
  %3785 = vdwg.mxu0
  %v3786 = vmax.f32 %v3595, 0.0
  %v3787 = vmax.f32 %v3598, 0.0
  %v3788 = vmax.f32 %v3601, 0.0
  %v3789 = vmax.f32 %v3604, 0.0
  %v3790 = vmax.f32 %v3607, 0.0
  %v3791 = vmax.f32 %v3610, 0.0
  %v3792 = vmax.f32 %v3613, 0.0
  %v3793 = vmax.f32 %v3616, 0.0
  %v3794 = vmax.f32 %v3619, 0.0
  %v3795 = vmax.f32 %v3622, 0.0
  %v3796 = vmax.f32 %v3625, 0.0
  %v3797 = vmax.f32 %v3628, 0.0
  %v3798 = vmax.f32 %v3631, 0.0
  %v3799 = vmax.f32 %v3634, 0.0
  %v3800 = vmax.f32 %v3637, 0.0
  %v3801 = vmax.f32 %v3640, 0.0
  %v3802 = vmax.f32 %v3643, 0.0
  %v3803 = vmax.f32 %v3646, 0.0
  %v3804 = vmax.f32 %v3649, 0.0
  %v3805 = vmax.f32 %v3652, 0.0
  %v3806 = vmax.f32 %v3655, 0.0
  %v3807 = vmax.f32 %v3658, 0.0
  %v3808 = vmax.f32 %v3661, 0.0
  %v3809 = vmax.f32 %v3664, 0.0
  %v3810 = vmax.f32 %v3667, 0.0
  %v3811 = vmax.f32 %v3670, 0.0
  %v3812 = vmax.f32 %v3673, 0.0
  %v3813 = vmax.f32 %v3676, 0.0
  %v3814 = vmax.f32 %v3679, 0.0
  %v3815 = vmax.f32 %v3682, 0.0
  %v3816 = vmax.f32 %v3685, 0.0
  %v3817 = vmax.f32 %v3688, 0.0
  %v3818 = vmax.f32 %v3691, 0.0
  %v3819 = vmax.f32 %v3694, 0.0
  %v3820 = vmax.f32 %v3697, 0.0
  %v3821 = vmax.f32 %v3700, 0.0
  %v3822 = vmax.f32 %v3703, 0.0
  %v3823 = vmax.f32 %v3706, 0.0
  %v3824 = vmax.f32 %v3709, 0.0
  %v3825 = vmax.f32 %v3712, 0.0
  %v3826 = vmax.f32 %v3715, 0.0
  %v3827 = vmax.f32 %v3718, 0.0
  %v3828 = vmax.f32 %v3721, 0.0
  %v3829 = vmax.f32 %v3724, 0.0
  %v3830 = vmax.f32 %v3727, 0.0
  %v3831 = vmax.f32 %v3730, 0.0
  %v3832 = vmax.f32 %v3733, 0.0
  %v3833 = vmax.f32 %v3736, 0.0
  %v3834 = vmax.f32 %v3739, 0.0
  %v3835 = vmax.f32 %v3742, 0.0
  %v3836 = vmax.f32 %v3745, 0.0
  %v3837 = vmax.f32 %v3748, 0.0
  %v3838 = vmax.f32 %v3751, 0.0
  %v3839 = vmax.f32 %v3754, 0.0
  %v3840 = vmax.f32 %v3757, 0.0
  %v3841 = vmax.f32 %v3760, 0.0
  %v3842 = vmax.f32 %v3763, 0.0
  %v3843 = vmax.f32 %v3766, 0.0
  %v3844 = vmax.f32 %v3769, 0.0
  %v3845 = vmax.f32 %v3772, 0.0
  %v3846 = vmax.f32 %v3775, 0.0
  %v3847 = vmax.f32 %v3778, 0.0
  %v3848 = vmax.f32 %v3781, 0.0
  %v3849 = vmax.f32 %v3784, 0.0
  %v3850 = vand.u32 2147483647, %v3595
  %v3851 = vand.u32 2147483647, %v3598
  %v3852 = vand.u32 2147483647, %v3601
  %v3853 = vand.u32 2147483647, %v3604
  %v3854 = vand.u32 2147483647, %v3607
  %v3855 = vand.u32 2147483647, %v3610
  %v3856 = vand.u32 2147483647, %v3613
  %v3857 = vand.u32 2147483647, %v3616
  %v3858 = vand.u32 2147483647, %v3619
  %v3859 = vand.u32 2147483647, %v3622
  %v3860 = vand.u32 2147483647, %v3625
  %v3861 = vand.u32 2147483647, %v3628
  %v3862 = vand.u32 2147483647, %v3631
  %v3863 = vand.u32 2147483647, %v3634
  %v3864 = vand.u32 2147483647, %v3637
  %v3865 = vand.u32 2147483647, %v3640
  %v3866 = vand.u32 2147483647, %v3643
  %v3867 = vand.u32 2147483647, %v3646
  %v3868 = vand.u32 2147483647, %v3649
  %v3869 = vand.u32 2147483647, %v3652
  %v3870 = vand.u32 2147483647, %v3655
  %v3871 = vand.u32 2147483647, %v3658
  %v3872 = vand.u32 2147483647, %v3661
  %v3873 = vand.u32 2147483647, %v3664
  %v3874 = vand.u32 2147483647, %v3667
  %v3875 = vand.u32 2147483647, %v3670
  %v3876 = vand.u32 2147483647, %v3673
  %v3877 = vand.u32 2147483647, %v3676
  %v3878 = vand.u32 2147483647, %v3679
  %v3879 = vand.u32 2147483647, %v3682
  %v3880 = vand.u32 2147483647, %v3685
  %v3881 = vand.u32 2147483647, %v3688
  %v3882 = vand.u32 2147483647, %v3691
  %v3883 = vand.u32 2147483647, %v3694
  %v3884 = vand.u32 2147483647, %v3697
  %v3885 = vand.u32 2147483647, %v3700
  %v3886 = vand.u32 2147483647, %v3703
  %v3887 = vand.u32 2147483647, %v3706
  %v3888 = vand.u32 2147483647, %v3709
  %v3889 = vand.u32 2147483647, %v3712
  %v3890 = vand.u32 2147483647, %v3715
  %v3891 = vand.u32 2147483647, %v3718
  %v3892 = vand.u32 2147483647, %v3721
  %v3893 = vand.u32 2147483647, %v3724
  %v3894 = vand.u32 2147483647, %v3727
  %v3895 = vand.u32 2147483647, %v3730
  %v3896 = vand.u32 2147483647, %v3733
  %v3897 = vand.u32 2147483647, %v3736
  %v3898 = vand.u32 2147483647, %v3739
  %v3899 = vand.u32 2147483647, %v3742
  %v3900 = vand.u32 2147483647, %v3745
  %v3901 = vand.u32 2147483647, %v3748
  %v3902 = vand.u32 2147483647, %v3751
  %v3903 = vand.u32 2147483647, %v3754
  %v3904 = vand.u32 2147483647, %v3757
  %v3905 = vand.u32 2147483647, %v3760
  %v3906 = vand.u32 2147483647, %v3763
  %v3907 = vand.u32 2147483647, %v3766
  %v3908 = vand.u32 2147483647, %v3769
  %v3909 = vand.u32 2147483647, %v3772
  %v3910 = vand.u32 2147483647, %v3775
  %v3911 = vand.u32 2147483647, %v3778
  %v3912 = vand.u32 2147483647, %v3781
  %v3913 = vand.u32 2147483647, %v3784
  %v3914 = vsub.f32 0.0, %v3850
  %v3915 = vsub.f32 0.0, %v3851
  %v3916 = vsub.f32 0.0, %v3852
  %v3917 = vsub.f32 0.0, %v3853
  %v3918 = vsub.f32 0.0, %v3854
  %v3919 = vsub.f32 0.0, %v3855
  %v3920 = vsub.f32 0.0, %v3856
  %v3921 = vsub.f32 0.0, %v3857
  %v3922 = vsub.f32 0.0, %v3858
  %v3923 = vsub.f32 0.0, %v3859
  %v3924 = vsub.f32 0.0, %v3860
  %v3925 = vsub.f32 0.0, %v3861
  %v3926 = vsub.f32 0.0, %v3862
  %v3927 = vsub.f32 0.0, %v3863
  %v3928 = vsub.f32 0.0, %v3864
  %v3929 = vsub.f32 0.0, %v3865
  %v3930 = vsub.f32 0.0, %v3866
  %v3931 = vsub.f32 0.0, %v3867
  %v3932 = vsub.f32 0.0, %v3868
  %v3933 = vsub.f32 0.0, %v3869
  %v3934 = vsub.f32 0.0, %v3870
  %v3935 = vsub.f32 0.0, %v3871
  %v3936 = vsub.f32 0.0, %v3872
  %v3937 = vsub.f32 0.0, %v3873
  %v3938 = vsub.f32 0.0, %v3874
  %v3939 = vsub.f32 0.0, %v3875
  %v3940 = vsub.f32 0.0, %v3876
  %v3941 = vsub.f32 0.0, %v3877
  %v3942 = vsub.f32 0.0, %v3878
  %v3943 = vsub.f32 0.0, %v3879
  %v3944 = vsub.f32 0.0, %v3880
  %v3945 = vsub.f32 0.0, %v3881
  %v3946 = vsub.f32 0.0, %v3882
  %v3947 = vsub.f32 0.0, %v3883
  %v3948 = vsub.f32 0.0, %v3884
  %v3949 = vsub.f32 0.0, %v3885
  %v3950 = vsub.f32 0.0, %v3886
  %v3951 = vsub.f32 0.0, %v3887
  %v3952 = vsub.f32 0.0, %v3888
  %v3953 = vsub.f32 0.0, %v3889
  %v3954 = vsub.f32 0.0, %v3890
  %v3955 = vsub.f32 0.0, %v3891
  %v3956 = vsub.f32 0.0, %v3892
  %v3957 = vsub.f32 0.0, %v3893
  %v3958 = vsub.f32 0.0, %v3894
  %v3959 = vsub.f32 0.0, %v3895
  %v3960 = vsub.f32 0.0, %v3896
  %v3961 = vsub.f32 0.0, %v3897
  %v3962 = vsub.f32 0.0, %v3898
  %v3963 = vsub.f32 0.0, %v3899
  %v3964 = vsub.f32 0.0, %v3900
  %v3965 = vsub.f32 0.0, %v3901
  %v3966 = vsub.f32 0.0, %v3902
  %v3967 = vsub.f32 0.0, %v3903
  %v3968 = vsub.f32 0.0, %v3904
  %v3969 = vsub.f32 0.0, %v3905
  %v3970 = vsub.f32 0.0, %v3906
  %v3971 = vsub.f32 0.0, %v3907
  %v3972 = vsub.f32 0.0, %v3908
  %v3973 = vsub.f32 0.0, %v3909
  %v3974 = vsub.f32 0.0, %v3910
  %v3975 = vsub.f32 0.0, %v3911
  %v3976 = vsub.f32 0.0, %v3912
  %v3977 = vsub.f32 0.0, %v3913
  %v3978 = vmul.f32 %v3914, 1.442695
  %v3979 = vpow.pop %v3978
  %v3980 = vmul.f32 %v3915, 1.442695
  %v3981 = vpow.pop %v3980
  %v3982 = vmul.f32 %v3916, 1.442695
  %v3983 = vpow.pop %v3982
  %v3984 = vmul.f32 %v3917, 1.442695
  %v3985 = vpow.pop %v3984
  %v3986 = vmul.f32 %v3918, 1.442695
  %v3987 = vpow.pop %v3986
  %v3988 = vmul.f32 %v3919, 1.442695
  %v3989 = vpow.pop %v3988
  %v3990 = vmul.f32 %v3920, 1.442695
  %v3991 = vpow.pop %v3990
  %v3992 = vmul.f32 %v3921, 1.442695
  %v3993 = vpow.pop %v3992
  %v3994 = vmul.f32 %v3922, 1.442695
  %v3995 = vpow.pop %v3994
  %v3996 = vmul.f32 %v3923, 1.442695
  %v3997 = vpow.pop %v3996
  %v3998 = vmul.f32 %v3924, 1.442695
  %v3999 = vpow.pop %v3998
  %v4000 = vmul.f32 %v3925, 1.442695
  %v4001 = vpow.pop %v4000
  %v4002 = vmul.f32 %v3926, 1.442695
  %v4003 = vpow.pop %v4002
  %v4004 = vmul.f32 %v3927, 1.442695
  %v4005 = vpow.pop %v4004
  %v4006 = vmul.f32 %v3928, 1.442695
  %v4007 = vpow.pop %v4006
  %v4008 = vmul.f32 %v3929, 1.442695
  %v4009 = vpow.pop %v4008
  %v4010 = vmul.f32 %v3930, 1.442695
  %v4011 = vpow.pop %v4010
  %v4012 = vmul.f32 %v3931, 1.442695
  %v4013 = vpow.pop %v4012
  %v4014 = vmul.f32 %v3932, 1.442695
  %v4015 = vpow.pop %v4014
  %v4016 = vmul.f32 %v3933, 1.442695
  %v4017 = vpow.pop %v4016
  %v4018 = vmul.f32 %v3934, 1.442695
  %v4019 = vpow.pop %v4018
  %v4020 = vmul.f32 %v3935, 1.442695
  %v4021 = vpow.pop %v4020
  %v4022 = vmul.f32 %v3936, 1.442695
  %v4023 = vpow.pop %v4022
  %v4024 = vmul.f32 %v3937, 1.442695
  %v4025 = vpow.pop %v4024
  %v4026 = vmul.f32 %v3938, 1.442695
  %v4027 = vpow.pop %v4026
  %v4028 = vmul.f32 %v3939, 1.442695
  %v4029 = vpow.pop %v4028
  %v4030 = vmul.f32 %v3940, 1.442695
  %v4031 = vpow.pop %v4030
  %v4032 = vmul.f32 %v3941, 1.442695
  %v4033 = vpow.pop %v4032
  %v4034 = vmul.f32 %v3942, 1.442695
  %v4035 = vpow.pop %v4034
  %v4036 = vmul.f32 %v3943, 1.442695
  %v4037 = vpow.pop %v4036
  %v4038 = vmul.f32 %v3944, 1.442695
  %v4039 = vpow.pop %v4038
  %v4040 = vmul.f32 %v3945, 1.442695
  %v4041 = vpow.pop %v4040
  %v4042 = vmul.f32 %v3946, 1.442695
  %v4043 = vpow.pop %v4042
  %v4044 = vmul.f32 %v3947, 1.442695
  %v4045 = vpow.pop %v4044
  %v4046 = vmul.f32 %v3948, 1.442695
  %v4047 = vpow.pop %v4046
  %v4048 = vmul.f32 %v3949, 1.442695
  %v4049 = vpow.pop %v4048
  %v4050 = vmul.f32 %v3950, 1.442695
  %v4051 = vpow.pop %v4050
  %v4052 = vmul.f32 %v3951, 1.442695
  %v4053 = vpow.pop %v4052
  %v4054 = vmul.f32 %v3952, 1.442695
  %v4055 = vpow.pop %v4054
  %v4056 = vmul.f32 %v3953, 1.442695
  %v4057 = vpow.pop %v4056
  %v4058 = vmul.f32 %v3954, 1.442695
  %v4059 = vpow.pop %v4058
  %v4060 = vmul.f32 %v3955, 1.442695
  %v4061 = vpow.pop %v4060
  %v4062 = vmul.f32 %v3956, 1.442695
  %v4063 = vpow.pop %v4062
  %v4064 = vmul.f32 %v3957, 1.442695
  %v4065 = vpow.pop %v4064
  %v4066 = vmul.f32 %v3958, 1.442695
  %v4067 = vpow.pop %v4066
  %v4068 = vmul.f32 %v3959, 1.442695
  %v4069 = vpow.pop %v4068
  %v4070 = vmul.f32 %v3960, 1.442695
  %v4071 = vpow.pop %v4070
  %v4072 = vmul.f32 %v3961, 1.442695
  %v4073 = vpow.pop %v4072
  %v4074 = vmul.f32 %v3962, 1.442695
  %v4075 = vpow.pop %v4074
  %v4076 = vmul.f32 %v3963, 1.442695
  %v4077 = vpow.pop %v4076
  %v4078 = vmul.f32 %v3964, 1.442695
  %v4079 = vpow.pop %v4078
  %v4080 = vmul.f32 %v3965, 1.442695
  %v4081 = vpow.pop %v4080
  %v4082 = vmul.f32 %v3966, 1.442695
  %v4083 = vpow.pop %v4082
  %v4084 = vmul.f32 %v3967, 1.442695
  %v4085 = vpow.pop %v4084
  %v4086 = vmul.f32 %v3968, 1.442695
  %v4087 = vpow.pop %v4086
  %v4088 = vmul.f32 %v3969, 1.442695
  %v4089 = vpow.pop %v4088
  %v4090 = vmul.f32 %v3970, 1.442695
  %v4091 = vpow.pop %v4090
  %v4092 = vmul.f32 %v3971, 1.442695
  %v4093 = vpow.pop %v4092
  %v4094 = vmul.f32 %v3972, 1.442695
  %v4095 = vpow.pop %v4094
  %v4096 = vmul.f32 %v3973, 1.442695
  %v4097 = vpow.pop %v4096
  %v4098 = vmul.f32 %v3974, 1.442695
  %v4099 = vpow.pop %v4098
  %v4100 = vmul.f32 %v3975, 1.442695
  %v4101 = vpow.pop %v4100
  %v4102 = vmul.f32 %v3976, 1.442695
  %v4103 = vpow.pop %v4102
  %v4104 = vmul.f32 %v3977, 1.442695
  %v4105 = vpow.pop %v4104
  %v4106 = vadd.f32 %v3979, 1.0
  %v4107 = vadd.f32 %v3981, 1.0
  %v4108 = vadd.f32 %v3983, 1.0
  %v4109 = vadd.f32 %v3985, 1.0
  %v4110 = vadd.f32 %v3987, 1.0
  %v4111 = vadd.f32 %v3989, 1.0
  %v4112 = vadd.f32 %v3991, 1.0
  %v4113 = vadd.f32 %v3993, 1.0
  %v4114 = vadd.f32 %v3995, 1.0
  %v4115 = vadd.f32 %v3997, 1.0
  %v4116 = vadd.f32 %v3999, 1.0
  %v4117 = vadd.f32 %v4001, 1.0
  %v4118 = vadd.f32 %v4003, 1.0
  %v4119 = vadd.f32 %v4005, 1.0
  %v4120 = vadd.f32 %v4007, 1.0
  %v4121 = vadd.f32 %v4009, 1.0
  %v4122 = vadd.f32 %v4011, 1.0
  %v4123 = vadd.f32 %v4013, 1.0
  %v4124 = vadd.f32 %v4015, 1.0
  %v4125 = vadd.f32 %v4017, 1.0
  %v4126 = vadd.f32 %v4019, 1.0
  %v4127 = vadd.f32 %v4021, 1.0
  %v4128 = vadd.f32 %v4023, 1.0
  %v4129 = vadd.f32 %v4025, 1.0
  %v4130 = vadd.f32 %v4027, 1.0
  %v4131 = vadd.f32 %v4029, 1.0
  %v4132 = vadd.f32 %v4031, 1.0
  %v4133 = vadd.f32 %v4033, 1.0
  %v4134 = vadd.f32 %v4035, 1.0
  %v4135 = vadd.f32 %v4037, 1.0
  %v4136 = vadd.f32 %v4039, 1.0
  %v4137 = vadd.f32 %v4041, 1.0
  %v4138 = vadd.f32 %v4043, 1.0
  %v4139 = vadd.f32 %v4045, 1.0
  %v4140 = vadd.f32 %v4047, 1.0
  %v4141 = vadd.f32 %v4049, 1.0
  %v4142 = vadd.f32 %v4051, 1.0
  %v4143 = vadd.f32 %v4053, 1.0
  %v4144 = vadd.f32 %v4055, 1.0
  %v4145 = vadd.f32 %v4057, 1.0
  %v4146 = vadd.f32 %v4059, 1.0
  %v4147 = vadd.f32 %v4061, 1.0
  %v4148 = vadd.f32 %v4063, 1.0
  %v4149 = vadd.f32 %v4065, 1.0
  %v4150 = vadd.f32 %v4067, 1.0
  %v4151 = vadd.f32 %v4069, 1.0
  %v4152 = vadd.f32 %v4071, 1.0
  %v4153 = vadd.f32 %v4073, 1.0
  %v4154 = vadd.f32 %v4075, 1.0
  %v4155 = vadd.f32 %v4077, 1.0
  %v4156 = vadd.f32 %v4079, 1.0
  %v4157 = vadd.f32 %v4081, 1.0
  %v4158 = vadd.f32 %v4083, 1.0
  %v4159 = vadd.f32 %v4085, 1.0
  %v4160 = vadd.f32 %v4087, 1.0
  %v4161 = vadd.f32 %v4089, 1.0
  %v4162 = vadd.f32 %v4091, 1.0
  %v4163 = vadd.f32 %v4093, 1.0
  %v4164 = vadd.f32 %v4095, 1.0
  %v4165 = vadd.f32 %v4097, 1.0
  %v4166 = vadd.f32 %v4099, 1.0
  %v4167 = vadd.f32 %v4101, 1.0
  %v4168 = vadd.f32 %v4103, 1.0
  %v4169 = vadd.f32 %v4105, 1.0
  %v4170 = vlog2.pop %v4106
  %v4171 = vmul.f32 %v4170, 0.6931472
  %v4172 = vlog2.pop %v4107
  %v4173 = vmul.f32 %v4172, 0.6931472
  %v4174 = vlog2.pop %v4108
  %v4175 = vmul.f32 %v4174, 0.6931472
  %v4176 = vlog2.pop %v4109
  %v4177 = vmul.f32 %v4176, 0.6931472
  %v4178 = vlog2.pop %v4110
  %v4179 = vmul.f32 %v4178, 0.6931472
  %v4180 = vlog2.pop %v4111
  %v4181 = vmul.f32 %v4180, 0.6931472
  %v4182 = vlog2.pop %v4112
  %v4183 = vmul.f32 %v4182, 0.6931472
  %v4184 = vlog2.pop %v4113
  %v4185 = vmul.f32 %v4184, 0.6931472
  %v4186 = vlog2.pop %v4114
  %v4187 = vmul.f32 %v4186, 0.6931472
  %v4188 = vlog2.pop %v4115
  %v4189 = vmul.f32 %v4188, 0.6931472
  %v4190 = vlog2.pop %v4116
  %v4191 = vmul.f32 %v4190, 0.6931472
  %v4192 = vlog2.pop %v4117
  %v4193 = vmul.f32 %v4192, 0.6931472
  %v4194 = vlog2.pop %v4118
  %v4195 = vmul.f32 %v4194, 0.6931472
  %v4196 = vlog2.pop %v4119
  %v4197 = vmul.f32 %v4196, 0.6931472
  %v4198 = vlog2.pop %v4120
  %v4199 = vmul.f32 %v4198, 0.6931472
  %v4200 = vlog2.pop %v4121
  %v4201 = vmul.f32 %v4200, 0.6931472
  %v4202 = vlog2.pop %v4122
  %v4203 = vmul.f32 %v4202, 0.6931472
  %v4204 = vlog2.pop %v4123
  %v4205 = vmul.f32 %v4204, 0.6931472
  %v4206 = vlog2.pop %v4124
  %v4207 = vmul.f32 %v4206, 0.6931472
  %v4208 = vlog2.pop %v4125
  %v4209 = vmul.f32 %v4208, 0.6931472
  %v4210 = vlog2.pop %v4126
  %v4211 = vmul.f32 %v4210, 0.6931472
  %v4212 = vlog2.pop %v4127
  %v4213 = vmul.f32 %v4212, 0.6931472
  %v4214 = vlog2.pop %v4128
  %v4215 = vmul.f32 %v4214, 0.6931472
  %v4216 = vlog2.pop %v4129
  %v4217 = vmul.f32 %v4216, 0.6931472
  %v4218 = vlog2.pop %v4130
  %v4219 = vmul.f32 %v4218, 0.6931472
  %v4220 = vlog2.pop %v4131
  %v4221 = vmul.f32 %v4220, 0.6931472
  %v4222 = vlog2.pop %v4132
  %v4223 = vmul.f32 %v4222, 0.6931472
  %v4224 = vlog2.pop %v4133
  %v4225 = vmul.f32 %v4224, 0.6931472
  %v4226 = vlog2.pop %v4134
  %v4227 = vmul.f32 %v4226, 0.6931472
  %v4228 = vlog2.pop %v4135
  %v4229 = vmul.f32 %v4228, 0.6931472
  %v4230 = vlog2.pop %v4136
  %v4231 = vmul.f32 %v4230, 0.6931472
  %v4232 = vlog2.pop %v4137
  %v4233 = vmul.f32 %v4232, 0.6931472
  %v4234 = vlog2.pop %v4138
  %v4235 = vmul.f32 %v4234, 0.6931472
  %v4236 = vlog2.pop %v4139
  %v4237 = vmul.f32 %v4236, 0.6931472
  %v4238 = vlog2.pop %v4140
  %v4239 = vmul.f32 %v4238, 0.6931472
  %v4240 = vlog2.pop %v4141
  %v4241 = vmul.f32 %v4240, 0.6931472
  %v4242 = vlog2.pop %v4142
  %v4243 = vmul.f32 %v4242, 0.6931472
  %v4244 = vlog2.pop %v4143
  %v4245 = vmul.f32 %v4244, 0.6931472
  %v4246 = vlog2.pop %v4144
  %v4247 = vmul.f32 %v4246, 0.6931472
  %v4248 = vlog2.pop %v4145
  %v4249 = vmul.f32 %v4248, 0.6931472
  %v4250 = vlog2.pop %v4146
  %v4251 = vmul.f32 %v4250, 0.6931472
  %v4252 = vlog2.pop %v4147
  %v4253 = vmul.f32 %v4252, 0.6931472
  %v4254 = vlog2.pop %v4148
  %v4255 = vmul.f32 %v4254, 0.6931472
  %v4256 = vlog2.pop %v4149
  %v4257 = vmul.f32 %v4256, 0.6931472
  %v4258 = vlog2.pop %v4150
  %v4259 = vmul.f32 %v4258, 0.6931472
  %v4260 = vlog2.pop %v4151
  %v4261 = vmul.f32 %v4260, 0.6931472
  %v4262 = vlog2.pop %v4152
  %v4263 = vmul.f32 %v4262, 0.6931472
  %v4264 = vlog2.pop %v4153
  %v4265 = vmul.f32 %v4264, 0.6931472
  %v4266 = vlog2.pop %v4154
  %v4267 = vmul.f32 %v4266, 0.6931472
  %v4268 = vlog2.pop %v4155
  %v4269 = vmul.f32 %v4268, 0.6931472
  %v4270 = vlog2.pop %v4156
  %v4271 = vmul.f32 %v4270, 0.6931472
  %v4272 = vlog2.pop %v4157
  %v4273 = vmul.f32 %v4272, 0.6931472
  %v4274 = vlog2.pop %v4158
  %v4275 = vmul.f32 %v4274, 0.6931472
  %v4276 = vlog2.pop %v4159
  %v4277 = vmul.f32 %v4276, 0.6931472
  %v4278 = vlog2.pop %v4160
  %v4279 = vmul.f32 %v4278, 0.6931472
  %v4280 = vlog2.pop %v4161
  %v4281 = vmul.f32 %v4280, 0.6931472
  %v4282 = vlog2.pop %v4162
  %v4283 = vmul.f32 %v4282, 0.6931472
  %v4284 = vlog2.pop %v4163
  %v4285 = vmul.f32 %v4284, 0.6931472
  %v4286 = vlog2.pop %v4164
  %v4287 = vmul.f32 %v4286, 0.6931472
  %v4288 = vlog2.pop %v4165
  %v4289 = vmul.f32 %v4288, 0.6931472
  %v4290 = vlog2.pop %v4166
  %v4291 = vmul.f32 %v4290, 0.6931472
  %v4292 = vlog2.pop %v4167
  %v4293 = vmul.f32 %v4292, 0.6931472
  %v4294 = vlog2.pop %v4168
  %v4295 = vmul.f32 %v4294, 0.6931472
  %v4296 = vlog2.pop %v4169
  %v4297 = vmul.f32 %v4296, 0.6931472
  %v4298 = vadd.f32 %v3786, %v4171
  %v4299 = vadd.f32 %v3787, %v4173
  %v4300 = vadd.f32 %v3788, %v4175
  %v4301 = vadd.f32 %v3789, %v4177
  %v4302 = vadd.f32 %v3790, %v4179
  %v4303 = vadd.f32 %v3791, %v4181
  %v4304 = vadd.f32 %v3792, %v4183
  %v4305 = vadd.f32 %v3793, %v4185
  %v4306 = vadd.f32 %v3794, %v4187
  %v4307 = vadd.f32 %v3795, %v4189
  %v4308 = vadd.f32 %v3796, %v4191
  %v4309 = vadd.f32 %v3797, %v4193
  %v4310 = vadd.f32 %v3798, %v4195
  %v4311 = vadd.f32 %v3799, %v4197
  %v4312 = vadd.f32 %v3800, %v4199
  %v4313 = vadd.f32 %v3801, %v4201
  %v4314 = vadd.f32 %v3802, %v4203
  %v4315 = vadd.f32 %v3803, %v4205
  %v4316 = vadd.f32 %v3804, %v4207
  %v4317 = vadd.f32 %v3805, %v4209
  %v4318 = vadd.f32 %v3806, %v4211
  %v4319 = vadd.f32 %v3807, %v4213
  %v4320 = vadd.f32 %v3808, %v4215
  %v4321 = vadd.f32 %v3809, %v4217
  %v4322 = vadd.f32 %v3810, %v4219
  %v4323 = vadd.f32 %v3811, %v4221
  %v4324 = vadd.f32 %v3812, %v4223
  %v4325 = vadd.f32 %v3813, %v4225
  %v4326 = vadd.f32 %v3814, %v4227
  %v4327 = vadd.f32 %v3815, %v4229
  %v4328 = vadd.f32 %v3816, %v4231
  %v4329 = vadd.f32 %v3817, %v4233
  %v4330 = vadd.f32 %v3818, %v4235
  %v4331 = vadd.f32 %v3819, %v4237
  %v4332 = vadd.f32 %v3820, %v4239
  %v4333 = vadd.f32 %v3821, %v4241
  %v4334 = vadd.f32 %v3822, %v4243
  %v4335 = vadd.f32 %v3823, %v4245
  %v4336 = vadd.f32 %v3824, %v4247
  %v4337 = vadd.f32 %v3825, %v4249
  %v4338 = vadd.f32 %v3826, %v4251
  %v4339 = vadd.f32 %v3827, %v4253
  %v4340 = vadd.f32 %v3828, %v4255
  %v4341 = vadd.f32 %v3829, %v4257
  %v4342 = vadd.f32 %v3830, %v4259
  %v4343 = vadd.f32 %v3831, %v4261
  %v4344 = vadd.f32 %v3832, %v4263
  %v4345 = vadd.f32 %v3833, %v4265
  %v4346 = vadd.f32 %v3834, %v4267
  %v4347 = vadd.f32 %v3835, %v4269
  %v4348 = vadd.f32 %v3836, %v4271
  %v4349 = vadd.f32 %v3837, %v4273
  %v4350 = vadd.f32 %v3838, %v4275
  %v4351 = vadd.f32 %v3839, %v4277
  %v4352 = vadd.f32 %v3840, %v4279
  %v4353 = vadd.f32 %v3841, %v4281
  %v4354 = vadd.f32 %v3842, %v4283
  %v4355 = vadd.f32 %v3843, %v4285
  %v4356 = vadd.f32 %v3844, %v4287
  %v4357 = vadd.f32 %v3845, %v4289
  %v4358 = vadd.f32 %v3846, %v4291
  %v4359 = vadd.f32 %v3847, %v4293
  %v4360 = vadd.f32 %v3848, %v4295
  %v4361 = vadd.f32 %v3849, %v4297
  %vm4362 = vcmp.gt.f32.partialorder %v3595, 20.0
  %vm4363 = vcmp.gt.f32.partialorder %v3598, 20.0
  %vm4364 = vcmp.gt.f32.partialorder %v3601, 20.0
  %vm4365 = vcmp.gt.f32.partialorder %v3604, 20.0
  %vm4366 = vcmp.gt.f32.partialorder %v3607, 20.0
  %vm4367 = vcmp.gt.f32.partialorder %v3610, 20.0
  %vm4368 = vcmp.gt.f32.partialorder %v3613, 20.0
  %vm4369 = vcmp.gt.f32.partialorder %v3616, 20.0
  %vm4370 = vcmp.gt.f32.partialorder %v3619, 20.0
  %vm4371 = vcmp.gt.f32.partialorder %v3622, 20.0
  %vm4372 = vcmp.gt.f32.partialorder %v3625, 20.0
  %vm4373 = vcmp.gt.f32.partialorder %v3628, 20.0
  %vm4374 = vcmp.gt.f32.partialorder %v3631, 20.0
  %vm4375 = vcmp.gt.f32.partialorder %v3634, 20.0
  %vm4376 = vcmp.gt.f32.partialorder %v3637, 20.0
  %vm4377 = vcmp.gt.f32.partialorder %v3640, 20.0
  %vm4378 = vcmp.gt.f32.partialorder %v3643, 20.0
  %vm4379 = vcmp.gt.f32.partialorder %v3646, 20.0
  %vm4380 = vcmp.gt.f32.partialorder %v3649, 20.0
  %vm4381 = vcmp.gt.f32.partialorder %v3652, 20.0
  %vm4382 = vcmp.gt.f32.partialorder %v3655, 20.0
  %vm4383 = vcmp.gt.f32.partialorder %v3658, 20.0
  %vm4384 = vcmp.gt.f32.partialorder %v3661, 20.0
  %vm4385 = vcmp.gt.f32.partialorder %v3664, 20.0
  %vm4386 = vcmp.gt.f32.partialorder %v3667, 20.0
  %vm4387 = vcmp.gt.f32.partialorder %v3670, 20.0
  %vm4388 = vcmp.gt.f32.partialorder %v3673, 20.0
  %vm4389 = vcmp.gt.f32.partialorder %v3676, 20.0
  %vm4390 = vcmp.gt.f32.partialorder %v3679, 20.0
  %vm4391 = vcmp.gt.f32.partialorder %v3682, 20.0
  %vm4392 = vcmp.gt.f32.partialorder %v3685, 20.0
  %vm4393 = vcmp.gt.f32.partialorder %v3688, 20.0
  %vm4394 = vcmp.gt.f32.partialorder %v3691, 20.0
  %vm4395 = vcmp.gt.f32.partialorder %v3694, 20.0
  %vm4396 = vcmp.gt.f32.partialorder %v3697, 20.0
  %vm4397 = vcmp.gt.f32.partialorder %v3700, 20.0
  %vm4398 = vcmp.gt.f32.partialorder %v3703, 20.0
  %vm4399 = vcmp.gt.f32.partialorder %v3706, 20.0
  %vm4400 = vcmp.gt.f32.partialorder %v3709, 20.0
  %vm4401 = vcmp.gt.f32.partialorder %v3712, 20.0
  %vm4402 = vcmp.gt.f32.partialorder %v3715, 20.0
  %vm4403 = vcmp.gt.f32.partialorder %v3718, 20.0
  %vm4404 = vcmp.gt.f32.partialorder %v3721, 20.0
  %vm4405 = vcmp.gt.f32.partialorder %v3724, 20.0
  %vm4406 = vcmp.gt.f32.partialorder %v3727, 20.0
  %vm4407 = vcmp.gt.f32.partialorder %v3730, 20.0
  %vm4408 = vcmp.gt.f32.partialorder %v3733, 20.0
  %vm4409 = vcmp.gt.f32.partialorder %v3736, 20.0
  %vm4410 = vcmp.gt.f32.partialorder %v3739, 20.0
  %vm4411 = vcmp.gt.f32.partialorder %v3742, 20.0
  %vm4412 = vcmp.gt.f32.partialorder %v3745, 20.0
  %vm4413 = vcmp.gt.f32.partialorder %v3748, 20.0
  %vm4414 = vcmp.gt.f32.partialorder %v3751, 20.0
  %vm4415 = vcmp.gt.f32.partialorder %v3754, 20.0
  %vm4416 = vcmp.gt.f32.partialorder %v3757, 20.0
  %vm4417 = vcmp.gt.f32.partialorder %v3760, 20.0
  %vm4418 = vcmp.gt.f32.partialorder %v3763, 20.0
  %vm4419 = vcmp.gt.f32.partialorder %v3766, 20.0
  %vm4420 = vcmp.gt.f32.partialorder %v3769, 20.0
  %vm4421 = vcmp.gt.f32.partialorder %v3772, 20.0
  %vm4422 = vcmp.gt.f32.partialorder %v3775, 20.0
  %vm4423 = vcmp.gt.f32.partialorder %v3778, 20.0
  %vm4424 = vcmp.gt.f32.partialorder %v3781, 20.0
  %vm4425 = vcmp.gt.f32.partialorder %v3784, 20.0
  %v4426 = vsel %vm4362, %v3595, %v4298
  %v4427 = vsel %vm4363, %v3598, %v4299
  %v4428 = vsel %vm4364, %v3601, %v4300
  %v4429 = vsel %vm4365, %v3604, %v4301
  %v4430 = vsel %vm4366, %v3607, %v4302
  %v4431 = vsel %vm4367, %v3610, %v4303
  %v4432 = vsel %vm4368, %v3613, %v4304
  %v4433 = vsel %vm4369, %v3616, %v4305
  %v4434 = vsel %vm4370, %v3619, %v4306
  %v4435 = vsel %vm4371, %v3622, %v4307
  %v4436 = vsel %vm4372, %v3625, %v4308
  %v4437 = vsel %vm4373, %v3628, %v4309
  %v4438 = vsel %vm4374, %v3631, %v4310
  %v4439 = vsel %vm4375, %v3634, %v4311
  %v4440 = vsel %vm4376, %v3637, %v4312
  %v4441 = vsel %vm4377, %v3640, %v4313
  %v4442 = vsel %vm4378, %v3643, %v4314
  %v4443 = vsel %vm4379, %v3646, %v4315
  %v4444 = vsel %vm4380, %v3649, %v4316
  %v4445 = vsel %vm4381, %v3652, %v4317
  %v4446 = vsel %vm4382, %v3655, %v4318
  %v4447 = vsel %vm4383, %v3658, %v4319
  %v4448 = vsel %vm4384, %v3661, %v4320
  %v4449 = vsel %vm4385, %v3664, %v4321
  %v4450 = vsel %vm4386, %v3667, %v4322
  %v4451 = vsel %vm4387, %v3670, %v4323
  %v4452 = vsel %vm4388, %v3673, %v4324
  %v4453 = vsel %vm4389, %v3676, %v4325
  %v4454 = vsel %vm4390, %v3679, %v4326
  %v4455 = vsel %vm4391, %v3682, %v4327
  %v4456 = vsel %vm4392, %v3685, %v4328
  %v4457 = vsel %vm4393, %v3688, %v4329
  %v4458 = vsel %vm4394, %v3691, %v4330
  %v4459 = vsel %vm4395, %v3694, %v4331
  %v4460 = vsel %vm4396, %v3697, %v4332
  %v4461 = vsel %vm4397, %v3700, %v4333
  %v4462 = vsel %vm4398, %v3703, %v4334
  %v4463 = vsel %vm4399, %v3706, %v4335
  %v4464 = vsel %vm4400, %v3709, %v4336
  %v4465 = vsel %vm4401, %v3712, %v4337
  %v4466 = vsel %vm4402, %v3715, %v4338
  %v4467 = vsel %vm4403, %v3718, %v4339
  %v4468 = vsel %vm4404, %v3721, %v4340
  %v4469 = vsel %vm4405, %v3724, %v4341
  %v4470 = vsel %vm4406, %v3727, %v4342
  %v4471 = vsel %vm4407, %v3730, %v4343
  %v4472 = vsel %vm4408, %v3733, %v4344
  %v4473 = vsel %vm4409, %v3736, %v4345
  %v4474 = vsel %vm4410, %v3739, %v4346
  %v4475 = vsel %vm4411, %v3742, %v4347
  %v4476 = vsel %vm4412, %v3745, %v4348
  %v4477 = vsel %vm4413, %v3748, %v4349
  %v4478 = vsel %vm4414, %v3751, %v4350
  %v4479 = vsel %vm4415, %v3754, %v4351
  %v4480 = vsel %vm4416, %v3757, %v4352
  %v4481 = vsel %vm4417, %v3760, %v4353
  %v4482 = vsel %vm4418, %v3763, %v4354
  %v4483 = vsel %vm4419, %v3766, %v4355
  %v4484 = vsel %vm4420, %v3769, %v4356
  %v4485 = vsel %vm4421, %v3772, %v4357
  %v4486 = vsel %vm4422, %v3775, %v4358
  %v4487 = vsel %vm4423, %v3778, %v4359
  %v4488 = vsel %vm4424, %v3781, %v4360
  %v4489 = vsel %vm4425, %v3784, %v4361
  %v4490 = vld [vmem:[%s8] sm:$0xff]
  %v4491 = vld [vmem:[%s8 + $0x8] sm:$0xff]
  %v4492 = vld [vmem:[%s8 + $0x10] sm:$0xff]
  %v4493 = vld [vmem:[%s8 + $0x18] sm:$0xff]
  %v4494 = vld [vmem:[%s8 + $0x20] sm:$0xff]
  %v4495 = vld [vmem:[%s8 + $0x28] sm:$0xff]
  %v4496 = vld [vmem:[%s8 + $0x30] sm:$0xff]
  %v4497 = vld [vmem:[%s8 + $0x38] sm:$0xff]
  %4498 = vmatpush.msra.mxu0 0.0
  %4499 = vmatpush.msra.mxu0 0.0
  %4500 = vmatpush.msra.mxu0 0.0
  %4501 = vmatpush.msra.mxu0 0.0
  %4502 = vmatpush.msra.mxu0 0.0
  %4503 = vmatpush.msra.mxu0 0.0
  %4504 = vmatpush.msra.mxu0 0.0
  %4505 = vmatpush.msra.mxu0 0.0
  %4506 = vmatpush.msra.mxu0 0.0
  %4507 = vmatpush.msra.mxu0 0.0
  %4508 = vmatpush.msra.mxu0 0.0
  %4509 = vmatpush.msra.mxu0 0.0
  %4510 = vmatpush.msra.mxu0 0.0
  %4511 = vmatpush.msra.mxu0 0.0
  %4512 = vmatpush.msra.mxu0 %v4494
  %4513 = vmatpush.msra.mxu0 %v4490
  %4514 = vmatmul.f32.gmra.mxu0 %v3386
  %v4515 = vpop.f32.mrf.mxu0
  %v4516 = vadd.f32 0.0, %v4515
  %4517 = vmatmul.f32.gmra.mxu0 %v3389
  %v4518 = vpop.f32.mrf.mxu0
  %v4519 = vadd.f32 0.0, %v4518
  %4520 = vmatmul.f32.gmra.mxu0 %v3392
  %v4521 = vpop.f32.mrf.mxu0
  %v4522 = vadd.f32 0.0, %v4521
  %4523 = vmatmul.f32.gmra.mxu0 %v3395
  %v4524 = vpop.f32.mrf.mxu0
  %v4525 = vadd.f32 0.0, %v4524
  %4526 = vmatmul.f32.gmra.mxu0 %v3398
  %v4527 = vpop.f32.mrf.mxu0
  %v4528 = vadd.f32 0.0, %v4527
  %4529 = vmatmul.f32.gmra.mxu0 %v3401
  %v4530 = vpop.f32.mrf.mxu0
  %v4531 = vadd.f32 0.0, %v4530
  %4532 = vmatmul.f32.gmra.mxu0 %v3404
  %v4533 = vpop.f32.mrf.mxu0
  %v4534 = vadd.f32 0.0, %v4533
  %4535 = vmatmul.f32.gmra.mxu0 %v3407
  %v4536 = vpop.f32.mrf.mxu0
  %v4537 = vadd.f32 0.0, %v4536
  %4538 = vmatmul.f32.gmra.mxu0 %v3410
  %v4539 = vpop.f32.mrf.mxu0
  %v4540 = vadd.f32 0.0, %v4539
  %4541 = vmatmul.f32.gmra.mxu0 %v3413
  %v4542 = vpop.f32.mrf.mxu0
  %v4543 = vadd.f32 0.0, %v4542
  %4544 = vmatmul.f32.gmra.mxu0 %v3416
  %v4545 = vpop.f32.mrf.mxu0
  %v4546 = vadd.f32 0.0, %v4545
  %4547 = vmatmul.f32.gmra.mxu0 %v3419
  %v4548 = vpop.f32.mrf.mxu0
  %v4549 = vadd.f32 0.0, %v4548
  %4550 = vmatmul.f32.gmra.mxu0 %v3422
  %v4551 = vpop.f32.mrf.mxu0
  %v4552 = vadd.f32 0.0, %v4551
  %4553 = vmatmul.f32.gmra.mxu0 %v3425
  %v4554 = vpop.f32.mrf.mxu0
  %v4555 = vadd.f32 0.0, %v4554
  %4556 = vmatmul.f32.gmra.mxu0 %v3428
  %v4557 = vpop.f32.mrf.mxu0
  %v4558 = vadd.f32 0.0, %v4557
  %4559 = vmatmul.f32.gmra.mxu0 %v3431
  %v4560 = vpop.f32.mrf.mxu0
  %v4561 = vadd.f32 0.0, %v4560
  %4562 = vmatmul.f32.gmra.mxu0 %v3434
  %v4563 = vpop.f32.mrf.mxu0
  %v4564 = vadd.f32 0.0, %v4563
  %4565 = vmatmul.f32.gmra.mxu0 %v3437
  %v4566 = vpop.f32.mrf.mxu0
  %v4567 = vadd.f32 0.0, %v4566
  %4568 = vmatmul.f32.gmra.mxu0 %v3440
  %v4569 = vpop.f32.mrf.mxu0
  %v4570 = vadd.f32 0.0, %v4569
  %4571 = vmatmul.f32.gmra.mxu0 %v3443
  %v4572 = vpop.f32.mrf.mxu0
  %v4573 = vadd.f32 0.0, %v4572
  %4574 = vmatmul.f32.gmra.mxu0 %v3446
  %v4575 = vpop.f32.mrf.mxu0
  %v4576 = vadd.f32 0.0, %v4575
  %4577 = vmatmul.f32.gmra.mxu0 %v3449
  %v4578 = vpop.f32.mrf.mxu0
  %v4579 = vadd.f32 0.0, %v4578
  %4580 = vmatmul.f32.gmra.mxu0 %v3452
  %v4581 = vpop.f32.mrf.mxu0
  %v4582 = vadd.f32 0.0, %v4581
  %4583 = vmatmul.f32.gmra.mxu0 %v3455
  %v4584 = vpop.f32.mrf.mxu0
  %v4585 = vadd.f32 0.0, %v4584
  %4586 = vmatmul.f32.gmra.mxu0 %v3458
  %v4587 = vpop.f32.mrf.mxu0
  %v4588 = vadd.f32 0.0, %v4587
  %4589 = vmatmul.f32.gmra.mxu0 %v3461
  %v4590 = vpop.f32.mrf.mxu0
  %v4591 = vadd.f32 0.0, %v4590
  %4592 = vmatmul.f32.gmra.mxu0 %v3464
  %v4593 = vpop.f32.mrf.mxu0
  %v4594 = vadd.f32 0.0, %v4593
  %4595 = vmatmul.f32.gmra.mxu0 %v3467
  %v4596 = vpop.f32.mrf.mxu0
  %v4597 = vadd.f32 0.0, %v4596
  %4598 = vmatmul.f32.gmra.mxu0 %v3470
  %v4599 = vpop.f32.mrf.mxu0
  %v4600 = vadd.f32 0.0, %v4599
  %4601 = vmatmul.f32.gmra.mxu0 %v3473
  %v4602 = vpop.f32.mrf.mxu0
  %v4603 = vadd.f32 0.0, %v4602
  %4604 = vmatmul.f32.gmra.mxu0 %v3476
  %v4605 = vpop.f32.mrf.mxu0
  %v4606 = vadd.f32 0.0, %v4605
  %4607 = vmatmul.f32.gmra.mxu0 %v3479
  %v4608 = vpop.f32.mrf.mxu0
  %v4609 = vadd.f32 0.0, %v4608
  %4610 = vmatmul.f32.gmra.mxu0 %v3482
  %v4611 = vpop.f32.mrf.mxu0
  %v4612 = vadd.f32 0.0, %v4611
  %4613 = vmatmul.f32.gmra.mxu0 %v3485
  %v4614 = vpop.f32.mrf.mxu0
  %v4615 = vadd.f32 0.0, %v4614
  %4616 = vmatmul.f32.gmra.mxu0 %v3488
  %v4617 = vpop.f32.mrf.mxu0
  %v4618 = vadd.f32 0.0, %v4617
  %4619 = vmatmul.f32.gmra.mxu0 %v3491
  %v4620 = vpop.f32.mrf.mxu0
  %v4621 = vadd.f32 0.0, %v4620
  %4622 = vmatmul.f32.gmra.mxu0 %v3494
  %v4623 = vpop.f32.mrf.mxu0
  %v4624 = vadd.f32 0.0, %v4623
  %4625 = vmatmul.f32.gmra.mxu0 %v3497
  %v4626 = vpop.f32.mrf.mxu0
  %v4627 = vadd.f32 0.0, %v4626
  %4628 = vmatmul.f32.gmra.mxu0 %v3500
  %v4629 = vpop.f32.mrf.mxu0
  %v4630 = vadd.f32 0.0, %v4629
  %4631 = vmatmul.f32.gmra.mxu0 %v3503
  %v4632 = vpop.f32.mrf.mxu0
  %v4633 = vadd.f32 0.0, %v4632
  %4634 = vmatmul.f32.gmra.mxu0 %v3506
  %v4635 = vpop.f32.mrf.mxu0
  %v4636 = vadd.f32 0.0, %v4635
  %4637 = vmatmul.f32.gmra.mxu0 %v3509
  %v4638 = vpop.f32.mrf.mxu0
  %v4639 = vadd.f32 0.0, %v4638
  %4640 = vmatmul.f32.gmra.mxu0 %v3512
  %v4641 = vpop.f32.mrf.mxu0
  %v4642 = vadd.f32 0.0, %v4641
  %4643 = vmatmul.f32.gmra.mxu0 %v3515
  %v4644 = vpop.f32.mrf.mxu0
  %v4645 = vadd.f32 0.0, %v4644
  %4646 = vmatmul.f32.gmra.mxu0 %v3518
  %v4647 = vpop.f32.mrf.mxu0
  %v4648 = vadd.f32 0.0, %v4647
  %4649 = vmatmul.f32.gmra.mxu0 %v3521
  %v4650 = vpop.f32.mrf.mxu0
  %v4651 = vadd.f32 0.0, %v4650
  %4652 = vmatmul.f32.gmra.mxu0 %v3524
  %v4653 = vpop.f32.mrf.mxu0
  %v4654 = vadd.f32 0.0, %v4653
  %4655 = vmatmul.f32.gmra.mxu0 %v3527
  %v4656 = vpop.f32.mrf.mxu0
  %v4657 = vadd.f32 0.0, %v4656
  %4658 = vmatmul.f32.gmra.mxu0 %v3530
  %v4659 = vpop.f32.mrf.mxu0
  %v4660 = vadd.f32 0.0, %v4659
  %4661 = vmatmul.f32.gmra.mxu0 %v3533
  %v4662 = vpop.f32.mrf.mxu0
  %v4663 = vadd.f32 0.0, %v4662
  %4664 = vmatmul.f32.gmra.mxu0 %v3536
  %v4665 = vpop.f32.mrf.mxu0
  %v4666 = vadd.f32 0.0, %v4665
  %4667 = vmatmul.f32.gmra.mxu0 %v3539
  %v4668 = vpop.f32.mrf.mxu0
  %v4669 = vadd.f32 0.0, %v4668
  %4670 = vmatmul.f32.gmra.mxu0 %v3542
  %v4671 = vpop.f32.mrf.mxu0
  %v4672 = vadd.f32 0.0, %v4671
  %4673 = vmatmul.f32.gmra.mxu0 %v3545
  %v4674 = vpop.f32.mrf.mxu0
  %v4675 = vadd.f32 0.0, %v4674
  %4676 = vmatmul.f32.gmra.mxu0 %v3548
  %v4677 = vpop.f32.mrf.mxu0
  %v4678 = vadd.f32 0.0, %v4677
  %4679 = vmatmul.f32.gmra.mxu0 %v3551
  %v4680 = vpop.f32.mrf.mxu0
  %v4681 = vadd.f32 0.0, %v4680
  %4682 = vmatmul.f32.gmra.mxu0 %v3554
  %v4683 = vpop.f32.mrf.mxu0
  %v4684 = vadd.f32 0.0, %v4683
  %4685 = vmatmul.f32.gmra.mxu0 %v3557
  %v4686 = vpop.f32.mrf.mxu0
  %v4687 = vadd.f32 0.0, %v4686
  %4688 = vmatmul.f32.gmra.mxu0 %v3560
  %v4689 = vpop.f32.mrf.mxu0
  %v4690 = vadd.f32 0.0, %v4689
  %4691 = vmatmul.f32.gmra.mxu0 %v3563
  %v4692 = vpop.f32.mrf.mxu0
  %v4693 = vadd.f32 0.0, %v4692
  %4694 = vmatmul.f32.gmra.mxu0 %v3566
  %v4695 = vpop.f32.mrf.mxu0
  %v4696 = vadd.f32 0.0, %v4695
  %4697 = vmatmul.f32.gmra.mxu0 %v3569
  %v4698 = vpop.f32.mrf.mxu0
  %v4699 = vadd.f32 0.0, %v4698
  %4700 = vmatmul.f32.gmra.mxu0 %v3572
  %v4701 = vpop.f32.mrf.mxu0
  %v4702 = vadd.f32 0.0, %v4701
  %4703 = vmatmul.f32.gmra.mxu0 %v3575
  %v4704 = vpop.f32.mrf.mxu0
  %v4705 = vadd.f32 0.0, %v4704
  %4706 = vdwg.mxu0
  %4707 = vmatpush.msra.mxu0 0.0
  %4708 = vmatpush.msra.mxu0 0.0
  %4709 = vmatpush.msra.mxu0 0.0
  %4710 = vmatpush.msra.mxu0 0.0
  %4711 = vmatpush.msra.mxu0 0.0
  %4712 = vmatpush.msra.mxu0 0.0
  %4713 = vmatpush.msra.mxu0 0.0
  %4714 = vmatpush.msra.mxu0 0.0
  %4715 = vmatpush.msra.mxu0 0.0
  %4716 = vmatpush.msra.mxu0 0.0
  %4717 = vmatpush.msra.mxu0 0.0
  %4718 = vmatpush.msra.mxu0 0.0
  %4719 = vmatpush.msra.mxu0 0.0
  %4720 = vmatpush.msra.mxu0 0.0
  %4721 = vmatpush.msra.mxu0 %v4495
  %4722 = vmatpush.msra.mxu0 %v4491
  %4723 = vmatmul.f32.gmra.mxu0 %v3386
  %v4724 = vpop.f32.mrf.mxu0
  %v4725 = vadd.f32 0.0, %v4724
  %4726 = vmatmul.f32.gmra.mxu0 %v3389
  %v4727 = vpop.f32.mrf.mxu0
  %v4728 = vadd.f32 0.0, %v4727
  %4729 = vmatmul.f32.gmra.mxu0 %v3392
  %v4730 = vpop.f32.mrf.mxu0
  %v4731 = vadd.f32 0.0, %v4730
  %4732 = vmatmul.f32.gmra.mxu0 %v3395
  %v4733 = vpop.f32.mrf.mxu0
  %v4734 = vadd.f32 0.0, %v4733
  %4735 = vmatmul.f32.gmra.mxu0 %v3398
  %v4736 = vpop.f32.mrf.mxu0
  %v4737 = vadd.f32 0.0, %v4736
  %4738 = vmatmul.f32.gmra.mxu0 %v3401
  %v4739 = vpop.f32.mrf.mxu0
  %v4740 = vadd.f32 0.0, %v4739
  %4741 = vmatmul.f32.gmra.mxu0 %v3404
  %v4742 = vpop.f32.mrf.mxu0
  %v4743 = vadd.f32 0.0, %v4742
  %4744 = vmatmul.f32.gmra.mxu0 %v3407
  %v4745 = vpop.f32.mrf.mxu0
  %v4746 = vadd.f32 0.0, %v4745
  %4747 = vmatmul.f32.gmra.mxu0 %v3410
  %v4748 = vpop.f32.mrf.mxu0
  %v4749 = vadd.f32 0.0, %v4748
  %4750 = vmatmul.f32.gmra.mxu0 %v3413
  %v4751 = vpop.f32.mrf.mxu0
  %v4752 = vadd.f32 0.0, %v4751
  %4753 = vmatmul.f32.gmra.mxu0 %v3416
  %v4754 = vpop.f32.mrf.mxu0
  %v4755 = vadd.f32 0.0, %v4754
  %4756 = vmatmul.f32.gmra.mxu0 %v3419
  %v4757 = vpop.f32.mrf.mxu0
  %v4758 = vadd.f32 0.0, %v4757
  %4759 = vmatmul.f32.gmra.mxu0 %v3422
  %v4760 = vpop.f32.mrf.mxu0
  %v4761 = vadd.f32 0.0, %v4760
  %4762 = vmatmul.f32.gmra.mxu0 %v3425
  %v4763 = vpop.f32.mrf.mxu0
  %v4764 = vadd.f32 0.0, %v4763
  %4765 = vmatmul.f32.gmra.mxu0 %v3428
  %v4766 = vpop.f32.mrf.mxu0
  %v4767 = vadd.f32 0.0, %v4766
  %4768 = vmatmul.f32.gmra.mxu0 %v3431
  %v4769 = vpop.f32.mrf.mxu0
  %v4770 = vadd.f32 0.0, %v4769
  %4771 = vmatmul.f32.gmra.mxu0 %v3434
  %v4772 = vpop.f32.mrf.mxu0
  %v4773 = vadd.f32 0.0, %v4772
  %4774 = vmatmul.f32.gmra.mxu0 %v3437
  %v4775 = vpop.f32.mrf.mxu0
  %v4776 = vadd.f32 0.0, %v4775
  %4777 = vmatmul.f32.gmra.mxu0 %v3440
  %v4778 = vpop.f32.mrf.mxu0
  %v4779 = vadd.f32 0.0, %v4778
  %4780 = vmatmul.f32.gmra.mxu0 %v3443
  %v4781 = vpop.f32.mrf.mxu0
  %v4782 = vadd.f32 0.0, %v4781
  %4783 = vmatmul.f32.gmra.mxu0 %v3446
  %v4784 = vpop.f32.mrf.mxu0
  %v4785 = vadd.f32 0.0, %v4784
  %4786 = vmatmul.f32.gmra.mxu0 %v3449
  %v4787 = vpop.f32.mrf.mxu0
  %v4788 = vadd.f32 0.0, %v4787
  %4789 = vmatmul.f32.gmra.mxu0 %v3452
  %v4790 = vpop.f32.mrf.mxu0
  %v4791 = vadd.f32 0.0, %v4790
  %4792 = vmatmul.f32.gmra.mxu0 %v3455
  %v4793 = vpop.f32.mrf.mxu0
  %v4794 = vadd.f32 0.0, %v4793
  %4795 = vmatmul.f32.gmra.mxu0 %v3458
  %v4796 = vpop.f32.mrf.mxu0
  %v4797 = vadd.f32 0.0, %v4796
  %4798 = vmatmul.f32.gmra.mxu0 %v3461
  %v4799 = vpop.f32.mrf.mxu0
  %v4800 = vadd.f32 0.0, %v4799
  %4801 = vmatmul.f32.gmra.mxu0 %v3464
  %v4802 = vpop.f32.mrf.mxu0
  %v4803 = vadd.f32 0.0, %v4802
  %4804 = vmatmul.f32.gmra.mxu0 %v3467
  %v4805 = vpop.f32.mrf.mxu0
  %v4806 = vadd.f32 0.0, %v4805
  %4807 = vmatmul.f32.gmra.mxu0 %v3470
  %v4808 = vpop.f32.mrf.mxu0
  %v4809 = vadd.f32 0.0, %v4808
  %4810 = vmatmul.f32.gmra.mxu0 %v3473
  %v4811 = vpop.f32.mrf.mxu0
  %v4812 = vadd.f32 0.0, %v4811
  %4813 = vmatmul.f32.gmra.mxu0 %v3476
  %v4814 = vpop.f32.mrf.mxu0
  %v4815 = vadd.f32 0.0, %v4814
  %4816 = vmatmul.f32.gmra.mxu0 %v3479
  %v4817 = vpop.f32.mrf.mxu0
  %v4818 = vadd.f32 0.0, %v4817
  %4819 = vmatmul.f32.gmra.mxu0 %v3482
  %v4820 = vpop.f32.mrf.mxu0
  %v4821 = vadd.f32 0.0, %v4820
  %4822 = vmatmul.f32.gmra.mxu0 %v3485
  %v4823 = vpop.f32.mrf.mxu0
  %v4824 = vadd.f32 0.0, %v4823
  %4825 = vmatmul.f32.gmra.mxu0 %v3488
  %v4826 = vpop.f32.mrf.mxu0
  %v4827 = vadd.f32 0.0, %v4826
  %4828 = vmatmul.f32.gmra.mxu0 %v3491
  %v4829 = vpop.f32.mrf.mxu0
  %v4830 = vadd.f32 0.0, %v4829
  %4831 = vmatmul.f32.gmra.mxu0 %v3494
  %v4832 = vpop.f32.mrf.mxu0
  %v4833 = vadd.f32 0.0, %v4832
  %4834 = vmatmul.f32.gmra.mxu0 %v3497
  %v4835 = vpop.f32.mrf.mxu0
  %v4836 = vadd.f32 0.0, %v4835
  %4837 = vmatmul.f32.gmra.mxu0 %v3500
  %v4838 = vpop.f32.mrf.mxu0
  %v4839 = vadd.f32 0.0, %v4838
  %4840 = vmatmul.f32.gmra.mxu0 %v3503
  %v4841 = vpop.f32.mrf.mxu0
  %v4842 = vadd.f32 0.0, %v4841
  %4843 = vmatmul.f32.gmra.mxu0 %v3506
  %v4844 = vpop.f32.mrf.mxu0
  %v4845 = vadd.f32 0.0, %v4844
  %4846 = vmatmul.f32.gmra.mxu0 %v3509
  %v4847 = vpop.f32.mrf.mxu0
  %v4848 = vadd.f32 0.0, %v4847
  %4849 = vmatmul.f32.gmra.mxu0 %v3512
  %v4850 = vpop.f32.mrf.mxu0
  %v4851 = vadd.f32 0.0, %v4850
  %4852 = vmatmul.f32.gmra.mxu0 %v3515
  %v4853 = vpop.f32.mrf.mxu0
  %v4854 = vadd.f32 0.0, %v4853
  %4855 = vmatmul.f32.gmra.mxu0 %v3518
  %v4856 = vpop.f32.mrf.mxu0
  %v4857 = vadd.f32 0.0, %v4856
  %4858 = vmatmul.f32.gmra.mxu0 %v3521
  %v4859 = vpop.f32.mrf.mxu0
  %v4860 = vadd.f32 0.0, %v4859
  %4861 = vmatmul.f32.gmra.mxu0 %v3524
  %v4862 = vpop.f32.mrf.mxu0
  %v4863 = vadd.f32 0.0, %v4862
  %4864 = vmatmul.f32.gmra.mxu0 %v3527
  %v4865 = vpop.f32.mrf.mxu0
  %v4866 = vadd.f32 0.0, %v4865
  %4867 = vmatmul.f32.gmra.mxu0 %v3530
  %v4868 = vpop.f32.mrf.mxu0
  %v4869 = vadd.f32 0.0, %v4868
  %4870 = vmatmul.f32.gmra.mxu0 %v3533
  %v4871 = vpop.f32.mrf.mxu0
  %v4872 = vadd.f32 0.0, %v4871
  %4873 = vmatmul.f32.gmra.mxu0 %v3536
  %v4874 = vpop.f32.mrf.mxu0
  %v4875 = vadd.f32 0.0, %v4874
  %4876 = vmatmul.f32.gmra.mxu0 %v3539
  %v4877 = vpop.f32.mrf.mxu0
  %v4878 = vadd.f32 0.0, %v4877
  %4879 = vmatmul.f32.gmra.mxu0 %v3542
  %v4880 = vpop.f32.mrf.mxu0
  %v4881 = vadd.f32 0.0, %v4880
  %4882 = vmatmul.f32.gmra.mxu0 %v3545
  %v4883 = vpop.f32.mrf.mxu0
  %v4884 = vadd.f32 0.0, %v4883
  %4885 = vmatmul.f32.gmra.mxu0 %v3548
  %v4886 = vpop.f32.mrf.mxu0
  %v4887 = vadd.f32 0.0, %v4886
  %4888 = vmatmul.f32.gmra.mxu0 %v3551
  %v4889 = vpop.f32.mrf.mxu0
  %v4890 = vadd.f32 0.0, %v4889
  %4891 = vmatmul.f32.gmra.mxu0 %v3554
  %v4892 = vpop.f32.mrf.mxu0
  %v4893 = vadd.f32 0.0, %v4892
  %4894 = vmatmul.f32.gmra.mxu0 %v3557
  %v4895 = vpop.f32.mrf.mxu0
  %v4896 = vadd.f32 0.0, %v4895
  %4897 = vmatmul.f32.gmra.mxu0 %v3560
  %v4898 = vpop.f32.mrf.mxu0
  %v4899 = vadd.f32 0.0, %v4898
  %4900 = vmatmul.f32.gmra.mxu0 %v3563
  %v4901 = vpop.f32.mrf.mxu0
  %v4902 = vadd.f32 0.0, %v4901
  %4903 = vmatmul.f32.gmra.mxu0 %v3566
  %v4904 = vpop.f32.mrf.mxu0
  %v4905 = vadd.f32 0.0, %v4904
  %4906 = vmatmul.f32.gmra.mxu0 %v3569
  %v4907 = vpop.f32.mrf.mxu0
  %v4908 = vadd.f32 0.0, %v4907
  %4909 = vmatmul.f32.gmra.mxu0 %v3572
  %v4910 = vpop.f32.mrf.mxu0
  %v4911 = vadd.f32 0.0, %v4910
  %4912 = vmatmul.f32.gmra.mxu0 %v3575
  %v4913 = vpop.f32.mrf.mxu0
  %v4914 = vadd.f32 0.0, %v4913
  %4915 = vdwg.mxu0
  %4916 = vmatpush.msra.mxu0 0.0
  %4917 = vmatpush.msra.mxu0 0.0
  %4918 = vmatpush.msra.mxu0 0.0
  %4919 = vmatpush.msra.mxu0 0.0
  %4920 = vmatpush.msra.mxu0 0.0
  %4921 = vmatpush.msra.mxu0 0.0
  %4922 = vmatpush.msra.mxu0 0.0
  %4923 = vmatpush.msra.mxu0 0.0
  %4924 = vmatpush.msra.mxu0 0.0
  %4925 = vmatpush.msra.mxu0 0.0
  %4926 = vmatpush.msra.mxu0 0.0
  %4927 = vmatpush.msra.mxu0 0.0
  %4928 = vmatpush.msra.mxu0 0.0
  %4929 = vmatpush.msra.mxu0 0.0
  %4930 = vmatpush.msra.mxu0 %v4496
  %4931 = vmatpush.msra.mxu0 %v4492
  %4932 = vmatmul.f32.gmra.mxu0 %v3386
  %v4933 = vpop.f32.mrf.mxu0
  %v4934 = vadd.f32 0.0, %v4933
  %4935 = vmatmul.f32.gmra.mxu0 %v3389
  %v4936 = vpop.f32.mrf.mxu0
  %v4937 = vadd.f32 0.0, %v4936
  %4938 = vmatmul.f32.gmra.mxu0 %v3392
  %v4939 = vpop.f32.mrf.mxu0
  %v4940 = vadd.f32 0.0, %v4939
  %4941 = vmatmul.f32.gmra.mxu0 %v3395
  %v4942 = vpop.f32.mrf.mxu0
  %v4943 = vadd.f32 0.0, %v4942
  %4944 = vmatmul.f32.gmra.mxu0 %v3398
  %v4945 = vpop.f32.mrf.mxu0
  %v4946 = vadd.f32 0.0, %v4945
  %4947 = vmatmul.f32.gmra.mxu0 %v3401
  %v4948 = vpop.f32.mrf.mxu0
  %v4949 = vadd.f32 0.0, %v4948
  %4950 = vmatmul.f32.gmra.mxu0 %v3404
  %v4951 = vpop.f32.mrf.mxu0
  %v4952 = vadd.f32 0.0, %v4951
  %4953 = vmatmul.f32.gmra.mxu0 %v3407
  %v4954 = vpop.f32.mrf.mxu0
  %v4955 = vadd.f32 0.0, %v4954
  %4956 = vmatmul.f32.gmra.mxu0 %v3410
  %v4957 = vpop.f32.mrf.mxu0
  %v4958 = vadd.f32 0.0, %v4957
  %4959 = vmatmul.f32.gmra.mxu0 %v3413
  %v4960 = vpop.f32.mrf.mxu0
  %v4961 = vadd.f32 0.0, %v4960
  %4962 = vmatmul.f32.gmra.mxu0 %v3416
  %v4963 = vpop.f32.mrf.mxu0
  %v4964 = vadd.f32 0.0, %v4963
  %4965 = vmatmul.f32.gmra.mxu0 %v3419
  %v4966 = vpop.f32.mrf.mxu0
  %v4967 = vadd.f32 0.0, %v4966
  %4968 = vmatmul.f32.gmra.mxu0 %v3422
  %v4969 = vpop.f32.mrf.mxu0
  %v4970 = vadd.f32 0.0, %v4969
  %4971 = vmatmul.f32.gmra.mxu0 %v3425
  %v4972 = vpop.f32.mrf.mxu0
  %v4973 = vadd.f32 0.0, %v4972
  %4974 = vmatmul.f32.gmra.mxu0 %v3428
  %v4975 = vpop.f32.mrf.mxu0
  %v4976 = vadd.f32 0.0, %v4975
  %4977 = vmatmul.f32.gmra.mxu0 %v3431
  %v4978 = vpop.f32.mrf.mxu0
  %v4979 = vadd.f32 0.0, %v4978
  %4980 = vmatmul.f32.gmra.mxu0 %v3434
  %v4981 = vpop.f32.mrf.mxu0
  %v4982 = vadd.f32 0.0, %v4981
  %4983 = vmatmul.f32.gmra.mxu0 %v3437
  %v4984 = vpop.f32.mrf.mxu0
  %v4985 = vadd.f32 0.0, %v4984
  %4986 = vmatmul.f32.gmra.mxu0 %v3440
  %v4987 = vpop.f32.mrf.mxu0
  %v4988 = vadd.f32 0.0, %v4987
  %4989 = vmatmul.f32.gmra.mxu0 %v3443
  %v4990 = vpop.f32.mrf.mxu0
  %v4991 = vadd.f32 0.0, %v4990
  %4992 = vmatmul.f32.gmra.mxu0 %v3446
  %v4993 = vpop.f32.mrf.mxu0
  %v4994 = vadd.f32 0.0, %v4993
  %4995 = vmatmul.f32.gmra.mxu0 %v3449
  %v4996 = vpop.f32.mrf.mxu0
  %v4997 = vadd.f32 0.0, %v4996
  %4998 = vmatmul.f32.gmra.mxu0 %v3452
  %v4999 = vpop.f32.mrf.mxu0
  %v5000 = vadd.f32 0.0, %v4999
  %5001 = vmatmul.f32.gmra.mxu0 %v3455
  %v5002 = vpop.f32.mrf.mxu0
  %v5003 = vadd.f32 0.0, %v5002
  %5004 = vmatmul.f32.gmra.mxu0 %v3458
  %v5005 = vpop.f32.mrf.mxu0
  %v5006 = vadd.f32 0.0, %v5005
  %5007 = vmatmul.f32.gmra.mxu0 %v3461
  %v5008 = vpop.f32.mrf.mxu0
  %v5009 = vadd.f32 0.0, %v5008
  %5010 = vmatmul.f32.gmra.mxu0 %v3464
  %v5011 = vpop.f32.mrf.mxu0
  %v5012 = vadd.f32 0.0, %v5011
  %5013 = vmatmul.f32.gmra.mxu0 %v3467
  %v5014 = vpop.f32.mrf.mxu0
  %v5015 = vadd.f32 0.0, %v5014
  %5016 = vmatmul.f32.gmra.mxu0 %v3470
  %v5017 = vpop.f32.mrf.mxu0
  %v5018 = vadd.f32 0.0, %v5017
  %5019 = vmatmul.f32.gmra.mxu0 %v3473
  %v5020 = vpop.f32.mrf.mxu0
  %v5021 = vadd.f32 0.0, %v5020
  %5022 = vmatmul.f32.gmra.mxu0 %v3476
  %v5023 = vpop.f32.mrf.mxu0
  %v5024 = vadd.f32 0.0, %v5023
  %5025 = vmatmul.f32.gmra.mxu0 %v3479
  %v5026 = vpop.f32.mrf.mxu0
  %v5027 = vadd.f32 0.0, %v5026
  %5028 = vmatmul.f32.gmra.mxu0 %v3482
  %v5029 = vpop.f32.mrf.mxu0
  %v5030 = vadd.f32 0.0, %v5029
  %5031 = vmatmul.f32.gmra.mxu0 %v3485
  %v5032 = vpop.f32.mrf.mxu0
  %v5033 = vadd.f32 0.0, %v5032
  %5034 = vmatmul.f32.gmra.mxu0 %v3488
  %v5035 = vpop.f32.mrf.mxu0
  %v5036 = vadd.f32 0.0, %v5035
  %5037 = vmatmul.f32.gmra.mxu0 %v3491
  %v5038 = vpop.f32.mrf.mxu0
  %v5039 = vadd.f32 0.0, %v5038
  %5040 = vmatmul.f32.gmra.mxu0 %v3494
  %v5041 = vpop.f32.mrf.mxu0
  %v5042 = vadd.f32 0.0, %v5041
  %5043 = vmatmul.f32.gmra.mxu0 %v3497
  %v5044 = vpop.f32.mrf.mxu0
  %v5045 = vadd.f32 0.0, %v5044
  %5046 = vmatmul.f32.gmra.mxu0 %v3500
  %v5047 = vpop.f32.mrf.mxu0
  %v5048 = vadd.f32 0.0, %v5047
  %5049 = vmatmul.f32.gmra.mxu0 %v3503
  %v5050 = vpop.f32.mrf.mxu0
  %v5051 = vadd.f32 0.0, %v5050
  %5052 = vmatmul.f32.gmra.mxu0 %v3506
  %v5053 = vpop.f32.mrf.mxu0
  %v5054 = vadd.f32 0.0, %v5053
  %5055 = vmatmul.f32.gmra.mxu0 %v3509
  %v5056 = vpop.f32.mrf.mxu0
  %v5057 = vadd.f32 0.0, %v5056
  %5058 = vmatmul.f32.gmra.mxu0 %v3512
  %v5059 = vpop.f32.mrf.mxu0
  %v5060 = vadd.f32 0.0, %v5059
  %5061 = vmatmul.f32.gmra.mxu0 %v3515
  %v5062 = vpop.f32.mrf.mxu0
  %v5063 = vadd.f32 0.0, %v5062
  %5064 = vmatmul.f32.gmra.mxu0 %v3518
  %v5065 = vpop.f32.mrf.mxu0
  %v5066 = vadd.f32 0.0, %v5065
  %5067 = vmatmul.f32.gmra.mxu0 %v3521
  %v5068 = vpop.f32.mrf.mxu0
  %v5069 = vadd.f32 0.0, %v5068
  %5070 = vmatmul.f32.gmra.mxu0 %v3524
  %v5071 = vpop.f32.mrf.mxu0
  %v5072 = vadd.f32 0.0, %v5071
  %5073 = vmatmul.f32.gmra.mxu0 %v3527
  %v5074 = vpop.f32.mrf.mxu0
  %v5075 = vadd.f32 0.0, %v5074
  %5076 = vmatmul.f32.gmra.mxu0 %v3530
  %v5077 = vpop.f32.mrf.mxu0
  %v5078 = vadd.f32 0.0, %v5077
  %5079 = vmatmul.f32.gmra.mxu0 %v3533
  %v5080 = vpop.f32.mrf.mxu0
  %v5081 = vadd.f32 0.0, %v5080
  %5082 = vmatmul.f32.gmra.mxu0 %v3536
  %v5083 = vpop.f32.mrf.mxu0
  %v5084 = vadd.f32 0.0, %v5083
  %5085 = vmatmul.f32.gmra.mxu0 %v3539
  %v5086 = vpop.f32.mrf.mxu0
  %v5087 = vadd.f32 0.0, %v5086
  %5088 = vmatmul.f32.gmra.mxu0 %v3542
  %v5089 = vpop.f32.mrf.mxu0
  %v5090 = vadd.f32 0.0, %v5089
  %5091 = vmatmul.f32.gmra.mxu0 %v3545
  %v5092 = vpop.f32.mrf.mxu0
  %v5093 = vadd.f32 0.0, %v5092
  %5094 = vmatmul.f32.gmra.mxu0 %v3548
  %v5095 = vpop.f32.mrf.mxu0
  %v5096 = vadd.f32 0.0, %v5095
  %5097 = vmatmul.f32.gmra.mxu0 %v3551
  %v5098 = vpop.f32.mrf.mxu0
  %v5099 = vadd.f32 0.0, %v5098
  %5100 = vmatmul.f32.gmra.mxu0 %v3554
  %v5101 = vpop.f32.mrf.mxu0
  %v5102 = vadd.f32 0.0, %v5101
  %5103 = vmatmul.f32.gmra.mxu0 %v3557
  %v5104 = vpop.f32.mrf.mxu0
  %v5105 = vadd.f32 0.0, %v5104
  %5106 = vmatmul.f32.gmra.mxu0 %v3560
  %v5107 = vpop.f32.mrf.mxu0
  %v5108 = vadd.f32 0.0, %v5107
  %5109 = vmatmul.f32.gmra.mxu0 %v3563
  %v5110 = vpop.f32.mrf.mxu0
  %v5111 = vadd.f32 0.0, %v5110
  %5112 = vmatmul.f32.gmra.mxu0 %v3566
  %v5113 = vpop.f32.mrf.mxu0
  %v5114 = vadd.f32 0.0, %v5113
  %5115 = vmatmul.f32.gmra.mxu0 %v3569
  %v5116 = vpop.f32.mrf.mxu0
  %v5117 = vadd.f32 0.0, %v5116
  %5118 = vmatmul.f32.gmra.mxu0 %v3572
  %v5119 = vpop.f32.mrf.mxu0
  %v5120 = vadd.f32 0.0, %v5119
  %5121 = vmatmul.f32.gmra.mxu0 %v3575
  %v5122 = vpop.f32.mrf.mxu0
  %v5123 = vadd.f32 0.0, %v5122
  %5124 = vdwg.mxu0
  %5125 = vmatpush.msra.mxu0 0.0
  %5126 = vmatpush.msra.mxu0 0.0
  %5127 = vmatpush.msra.mxu0 0.0
  %5128 = vmatpush.msra.mxu0 0.0
  %5129 = vmatpush.msra.mxu0 0.0
  %5130 = vmatpush.msra.mxu0 0.0
  %5131 = vmatpush.msra.mxu0 0.0
  %5132 = vmatpush.msra.mxu0 0.0
  %5133 = vmatpush.msra.mxu0 0.0
  %5134 = vmatpush.msra.mxu0 0.0
  %5135 = vmatpush.msra.mxu0 0.0
  %5136 = vmatpush.msra.mxu0 0.0
  %5137 = vmatpush.msra.mxu0 0.0
  %5138 = vmatpush.msra.mxu0 0.0
  %5139 = vmatpush.msra.mxu0 %v4497
  %5140 = vmatpush.msra.mxu0 %v4493
  %5141 = vmatmul.f32.gmra.mxu0 %v3386
  %v5142 = vpop.f32.mrf.mxu0
  %v5143 = vadd.f32 0.0, %v5142
  %5144 = vmatmul.f32.gmra.mxu0 %v3389
  %v5145 = vpop.f32.mrf.mxu0
  %v5146 = vadd.f32 0.0, %v5145
  %5147 = vmatmul.f32.gmra.mxu0 %v3392
  %v5148 = vpop.f32.mrf.mxu0
  %v5149 = vadd.f32 0.0, %v5148
  %5150 = vmatmul.f32.gmra.mxu0 %v3395
  %v5151 = vpop.f32.mrf.mxu0
  %v5152 = vadd.f32 0.0, %v5151
  %5153 = vmatmul.f32.gmra.mxu0 %v3398
  %v5154 = vpop.f32.mrf.mxu0
  %v5155 = vadd.f32 0.0, %v5154
  %5156 = vmatmul.f32.gmra.mxu0 %v3401
  %v5157 = vpop.f32.mrf.mxu0
  %v5158 = vadd.f32 0.0, %v5157
  %5159 = vmatmul.f32.gmra.mxu0 %v3404
  %v5160 = vpop.f32.mrf.mxu0
  %v5161 = vadd.f32 0.0, %v5160
  %5162 = vmatmul.f32.gmra.mxu0 %v3407
  %v5163 = vpop.f32.mrf.mxu0
  %v5164 = vadd.f32 0.0, %v5163
  %5165 = vmatmul.f32.gmra.mxu0 %v3410
  %v5166 = vpop.f32.mrf.mxu0
  %v5167 = vadd.f32 0.0, %v5166
  %5168 = vmatmul.f32.gmra.mxu0 %v3413
  %v5169 = vpop.f32.mrf.mxu0
  %v5170 = vadd.f32 0.0, %v5169
  %5171 = vmatmul.f32.gmra.mxu0 %v3416
  %v5172 = vpop.f32.mrf.mxu0
  %v5173 = vadd.f32 0.0, %v5172
  %5174 = vmatmul.f32.gmra.mxu0 %v3419
  %v5175 = vpop.f32.mrf.mxu0
  %v5176 = vadd.f32 0.0, %v5175
  %5177 = vmatmul.f32.gmra.mxu0 %v3422
  %v5178 = vpop.f32.mrf.mxu0
  %v5179 = vadd.f32 0.0, %v5178
  %5180 = vmatmul.f32.gmra.mxu0 %v3425
  %v5181 = vpop.f32.mrf.mxu0
  %v5182 = vadd.f32 0.0, %v5181
  %5183 = vmatmul.f32.gmra.mxu0 %v3428
  %v5184 = vpop.f32.mrf.mxu0
  %v5185 = vadd.f32 0.0, %v5184
  %5186 = vmatmul.f32.gmra.mxu0 %v3431
  %v5187 = vpop.f32.mrf.mxu0
  %v5188 = vadd.f32 0.0, %v5187
  %5189 = vmatmul.f32.gmra.mxu0 %v3434
  %v5190 = vpop.f32.mrf.mxu0
  %v5191 = vadd.f32 0.0, %v5190
  %5192 = vmatmul.f32.gmra.mxu0 %v3437
  %v5193 = vpop.f32.mrf.mxu0
  %v5194 = vadd.f32 0.0, %v5193
  %5195 = vmatmul.f32.gmra.mxu0 %v3440
  %v5196 = vpop.f32.mrf.mxu0
  %v5197 = vadd.f32 0.0, %v5196
  %5198 = vmatmul.f32.gmra.mxu0 %v3443
  %v5199 = vpop.f32.mrf.mxu0
  %v5200 = vadd.f32 0.0, %v5199
  %5201 = vmatmul.f32.gmra.mxu0 %v3446
  %v5202 = vpop.f32.mrf.mxu0
  %v5203 = vadd.f32 0.0, %v5202
  %5204 = vmatmul.f32.gmra.mxu0 %v3449
  %v5205 = vpop.f32.mrf.mxu0
  %v5206 = vadd.f32 0.0, %v5205
  %5207 = vmatmul.f32.gmra.mxu0 %v3452
  %v5208 = vpop.f32.mrf.mxu0
  %v5209 = vadd.f32 0.0, %v5208
  %5210 = vmatmul.f32.gmra.mxu0 %v3455
  %v5211 = vpop.f32.mrf.mxu0
  %v5212 = vadd.f32 0.0, %v5211
  %5213 = vmatmul.f32.gmra.mxu0 %v3458
  %v5214 = vpop.f32.mrf.mxu0
  %v5215 = vadd.f32 0.0, %v5214
  %5216 = vmatmul.f32.gmra.mxu0 %v3461
  %v5217 = vpop.f32.mrf.mxu0
  %v5218 = vadd.f32 0.0, %v5217
  %5219 = vmatmul.f32.gmra.mxu0 %v3464
  %v5220 = vpop.f32.mrf.mxu0
  %v5221 = vadd.f32 0.0, %v5220
  %5222 = vmatmul.f32.gmra.mxu0 %v3467
  %v5223 = vpop.f32.mrf.mxu0
  %v5224 = vadd.f32 0.0, %v5223
  %5225 = vmatmul.f32.gmra.mxu0 %v3470
  %v5226 = vpop.f32.mrf.mxu0
  %v5227 = vadd.f32 0.0, %v5226
  %5228 = vmatmul.f32.gmra.mxu0 %v3473
  %v5229 = vpop.f32.mrf.mxu0
  %v5230 = vadd.f32 0.0, %v5229
  %5231 = vmatmul.f32.gmra.mxu0 %v3476
  %v5232 = vpop.f32.mrf.mxu0
  %v5233 = vadd.f32 0.0, %v5232
  %5234 = vmatmul.f32.gmra.mxu0 %v3479
  %v5235 = vpop.f32.mrf.mxu0
  %v5236 = vadd.f32 0.0, %v5235
  %5237 = vmatmul.f32.gmra.mxu0 %v3482
  %v5238 = vpop.f32.mrf.mxu0
  %v5239 = vadd.f32 0.0, %v5238
  %5240 = vmatmul.f32.gmra.mxu0 %v3485
  %v5241 = vpop.f32.mrf.mxu0
  %v5242 = vadd.f32 0.0, %v5241
  %5243 = vmatmul.f32.gmra.mxu0 %v3488
  %v5244 = vpop.f32.mrf.mxu0
  %v5245 = vadd.f32 0.0, %v5244
  %5246 = vmatmul.f32.gmra.mxu0 %v3491
  %v5247 = vpop.f32.mrf.mxu0
  %v5248 = vadd.f32 0.0, %v5247
  %5249 = vmatmul.f32.gmra.mxu0 %v3494
  %v5250 = vpop.f32.mrf.mxu0
  %v5251 = vadd.f32 0.0, %v5250
  %5252 = vmatmul.f32.gmra.mxu0 %v3497
  %v5253 = vpop.f32.mrf.mxu0
  %v5254 = vadd.f32 0.0, %v5253
  %5255 = vmatmul.f32.gmra.mxu0 %v3500
  %v5256 = vpop.f32.mrf.mxu0
  %v5257 = vadd.f32 0.0, %v5256
  %5258 = vmatmul.f32.gmra.mxu0 %v3503
  %v5259 = vpop.f32.mrf.mxu0
  %v5260 = vadd.f32 0.0, %v5259
  %5261 = vmatmul.f32.gmra.mxu0 %v3506
  %v5262 = vpop.f32.mrf.mxu0
  %v5263 = vadd.f32 0.0, %v5262
  %5264 = vmatmul.f32.gmra.mxu0 %v3509
  %v5265 = vpop.f32.mrf.mxu0
  %v5266 = vadd.f32 0.0, %v5265
  %5267 = vmatmul.f32.gmra.mxu0 %v3512
  %v5268 = vpop.f32.mrf.mxu0
  %v5269 = vadd.f32 0.0, %v5268
  %5270 = vmatmul.f32.gmra.mxu0 %v3515
  %v5271 = vpop.f32.mrf.mxu0
  %v5272 = vadd.f32 0.0, %v5271
  %5273 = vmatmul.f32.gmra.mxu0 %v3518
  %v5274 = vpop.f32.mrf.mxu0
  %v5275 = vadd.f32 0.0, %v5274
  %5276 = vmatmul.f32.gmra.mxu0 %v3521
  %v5277 = vpop.f32.mrf.mxu0
  %v5278 = vadd.f32 0.0, %v5277
  %5279 = vmatmul.f32.gmra.mxu0 %v3524
  %v5280 = vpop.f32.mrf.mxu0
  %v5281 = vadd.f32 0.0, %v5280
  %5282 = vmatmul.f32.gmra.mxu0 %v3527
  %v5283 = vpop.f32.mrf.mxu0
  %v5284 = vadd.f32 0.0, %v5283
  %5285 = vmatmul.f32.gmra.mxu0 %v3530
  %v5286 = vpop.f32.mrf.mxu0
  %v5287 = vadd.f32 0.0, %v5286
  %5288 = vmatmul.f32.gmra.mxu0 %v3533
  %v5289 = vpop.f32.mrf.mxu0
  %v5290 = vadd.f32 0.0, %v5289
  %5291 = vmatmul.f32.gmra.mxu0 %v3536
  %v5292 = vpop.f32.mrf.mxu0
  %v5293 = vadd.f32 0.0, %v5292
  %5294 = vmatmul.f32.gmra.mxu0 %v3539
  %v5295 = vpop.f32.mrf.mxu0
  %v5296 = vadd.f32 0.0, %v5295
  %5297 = vmatmul.f32.gmra.mxu0 %v3542
  %v5298 = vpop.f32.mrf.mxu0
  %v5299 = vadd.f32 0.0, %v5298
  %5300 = vmatmul.f32.gmra.mxu0 %v3545
  %v5301 = vpop.f32.mrf.mxu0
  %v5302 = vadd.f32 0.0, %v5301
  %5303 = vmatmul.f32.gmra.mxu0 %v3548
  %v5304 = vpop.f32.mrf.mxu0
  %v5305 = vadd.f32 0.0, %v5304
  %5306 = vmatmul.f32.gmra.mxu0 %v3551
  %v5307 = vpop.f32.mrf.mxu0
  %v5308 = vadd.f32 0.0, %v5307
  %5309 = vmatmul.f32.gmra.mxu0 %v3554
  %v5310 = vpop.f32.mrf.mxu0
  %v5311 = vadd.f32 0.0, %v5310
  %5312 = vmatmul.f32.gmra.mxu0 %v3557
  %v5313 = vpop.f32.mrf.mxu0
  %v5314 = vadd.f32 0.0, %v5313
  %5315 = vmatmul.f32.gmra.mxu0 %v3560
  %v5316 = vpop.f32.mrf.mxu0
  %v5317 = vadd.f32 0.0, %v5316
  %5318 = vmatmul.f32.gmra.mxu0 %v3563
  %v5319 = vpop.f32.mrf.mxu0
  %v5320 = vadd.f32 0.0, %v5319
  %5321 = vmatmul.f32.gmra.mxu0 %v3566
  %v5322 = vpop.f32.mrf.mxu0
  %v5323 = vadd.f32 0.0, %v5322
  %5324 = vmatmul.f32.gmra.mxu0 %v3569
  %v5325 = vpop.f32.mrf.mxu0
  %v5326 = vadd.f32 0.0, %v5325
  %5327 = vmatmul.f32.gmra.mxu0 %v3572
  %v5328 = vpop.f32.mrf.mxu0
  %v5329 = vadd.f32 0.0, %v5328
  %5330 = vmatmul.f32.gmra.mxu0 %v3575
  %v5331 = vpop.f32.mrf.mxu0
  %v5332 = vadd.f32 0.0, %v5331
  %5333 = vdwg.mxu0
  %5334 = vst [vmem:[#allocation6] sm:$0xff] %v4934
  %5335 = vst [vmem:[#allocation6 + $0x8] sm:$0xff] %v5143
  %5336 = vst [vmem:[#allocation6 + $0x10] sm:$0xff] %v4937
  %5337 = vst [vmem:[#allocation6 + $0x18] sm:$0xff] %v5146
  %5338 = vst [vmem:[#allocation6 + $0x20] sm:$0xff] %v4940
  %5339 = vst [vmem:[#allocation6 + $0x28] sm:$0xff] %v5149
  %5340 = vst [vmem:[#allocation6 + $0x30] sm:$0xff] %v4943
  %5341 = vst [vmem:[#allocation6 + $0x38] sm:$0xff] %v5152
  %5342 = vst [vmem:[#allocation6 + $0x40] sm:$0xff] %v4946
  %5343 = vst [vmem:[#allocation6 + $0x48] sm:$0xff] %v5155
  %5344 = vst [vmem:[#allocation6 + $0x50] sm:$0xff] %v4949
  %5345 = vst [vmem:[#allocation6 + $0x58] sm:$0xff] %v5158
  %5346 = vst [vmem:[#allocation6 + $0x60] sm:$0xff] %v4952
  %5347 = vst [vmem:[#allocation6 + $0x68] sm:$0xff] %v5161
  %5348 = vst [vmem:[#allocation6 + $0x70] sm:$0xff] %v4955
  %5349 = vst [vmem:[#allocation6 + $0x78] sm:$0xff] %v5164
  %5350 = vst [vmem:[#allocation6 + $0x80] sm:$0xff] %v4958
  %5351 = vst [vmem:[#allocation6 + $0x88] sm:$0xff] %v5167
  %5352 = vst [vmem:[#allocation6 + $0x90] sm:$0xff] %v4961
  %5353 = vst [vmem:[#allocation6 + $0x98] sm:$0xff] %v5170
  %5354 = vst [vmem:[#allocation6 + $0xa0] sm:$0xff] %v4964
  %5355 = vst [vmem:[#allocation6 + $0xa8] sm:$0xff] %v5173
  %5356 = vst [vmem:[#allocation6 + $0xb0] sm:$0xff] %v4967
  %5357 = vst [vmem:[#allocation6 + $0xb8] sm:$0xff] %v5176
  %5358 = vst [vmem:[#allocation6 + $0xc0] sm:$0xff] %v4970
  %5359 = vst [vmem:[#allocation6 + $0xc8] sm:$0xff] %v5179
  %5360 = vst [vmem:[#allocation6 + $0xd0] sm:$0xff] %v4973
  %5361 = vst [vmem:[#allocation6 + $0xd8] sm:$0xff] %v5182
  %5362 = vst [vmem:[#allocation6 + $0xe0] sm:$0xff] %v4976
  %5363 = vst [vmem:[#allocation6 + $0xe8] sm:$0xff] %v5185
  %5364 = vst [vmem:[#allocation6 + $0xf0] sm:$0xff] %v4979
  %5365 = vst [vmem:[#allocation6 + $0xf8] sm:$0xff] %v5188
  %5366 = vst [vmem:[#allocation6 + $0x100] sm:$0xff] %v4982
  %5367 = vst [vmem:[#allocation6 + $0x108] sm:$0xff] %v5191
  %5368 = vst [vmem:[#allocation6 + $0x110] sm:$0xff] %v4985
  %5369 = vst [vmem:[#allocation6 + $0x118] sm:$0xff] %v5194
  %5370 = vst [vmem:[#allocation6 + $0x120] sm:$0xff] %v4988
  %5371 = vst [vmem:[#allocation6 + $0x128] sm:$0xff] %v5197
  %5372 = vst [vmem:[#allocation6 + $0x130] sm:$0xff] %v4991
  %5373 = vst [vmem:[#allocation6 + $0x138] sm:$0xff] %v5200
  %5374 = vst [vmem:[#allocation6 + $0x140] sm:$0xff] %v4994
  %5375 = vst [vmem:[#allocation6 + $0x148] sm:$0xff] %v5203
  %5376 = vst [vmem:[#allocation6 + $0x150] sm:$0xff] %v4997
  %5377 = vst [vmem:[#allocation6 + $0x158] sm:$0xff] %v5206
  %5378 = vst [vmem:[#allocation6 + $0x160] sm:$0xff] %v5000
  %5379 = vst [vmem:[#allocation6 + $0x168] sm:$0xff] %v5209
  %5380 = vst [vmem:[#allocation6 + $0x170] sm:$0xff] %v5003
  %5381 = vst [vmem:[#allocation6 + $0x178] sm:$0xff] %v5212
  %5382 = vst [vmem:[#allocation6 + $0x180] sm:$0xff] %v5006
  %5383 = vst [vmem:[#allocation6 + $0x188] sm:$0xff] %v5215
  %5384 = vst [vmem:[#allocation6 + $0x190] sm:$0xff] %v5009
  %5385 = vst [vmem:[#allocation6 + $0x198] sm:$0xff] %v5218
  %5386 = vst [vmem:[#allocation6 + $0x1a0] sm:$0xff] %v5012
  %5387 = vst [vmem:[#allocation6 + $0x1a8] sm:$0xff] %v5221
  %5388 = vst [vmem:[#allocation6 + $0x1b0] sm:$0xff] %v5015
  %5389 = vst [vmem:[#allocation6 + $0x1b8] sm:$0xff] %v5224
  %5390 = vst [vmem:[#allocation6 + $0x1c0] sm:$0xff] %v5018
  %5391 = vst [vmem:[#allocation6 + $0x1c8] sm:$0xff] %v5227
  %5392 = vst [vmem:[#allocation6 + $0x1d0] sm:$0xff] %v5021
  %5393 = vst [vmem:[#allocation6 + $0x1d8] sm:$0xff] %v5230
  %5394 = vst [vmem:[#allocation6 + $0x1e0] sm:$0xff] %v5024
  %5395 = vst [vmem:[#allocation6 + $0x1e8] sm:$0xff] %v5233
  %5396 = vst [vmem:[#allocation6 + $0x1f0] sm:$0xff] %v5027
  %5397 = vst [vmem:[#allocation6 + $0x1f8] sm:$0xff] %v5236
  %5398 = vst [vmem:[#allocation6 + $0x200] sm:$0xff] %v5030
  %5399 = vst [vmem:[#allocation6 + $0x208] sm:$0xff] %v5239
  %5400 = vst [vmem:[#allocation6 + $0x210] sm:$0xff] %v5033
  %5401 = vst [vmem:[#allocation6 + $0x218] sm:$0xff] %v5242
  %5402 = vst [vmem:[#allocation6 + $0x220] sm:$0xff] %v5036
  %5403 = vst [vmem:[#allocation6 + $0x228] sm:$0xff] %v5245
  %5404 = vst [vmem:[#allocation6 + $0x230] sm:$0xff] %v5039
  %5405 = vst [vmem:[#allocation6 + $0x238] sm:$0xff] %v5248
  %5406 = vst [vmem:[#allocation6 + $0x240] sm:$0xff] %v5042
  %5407 = vst [vmem:[#allocation6 + $0x248] sm:$0xff] %v5251
  %5408 = vst [vmem:[#allocation6 + $0x250] sm:$0xff] %v5045
  %5409 = vst [vmem:[#allocation6 + $0x258] sm:$0xff] %v5254
  %5410 = vst [vmem:[#allocation6 + $0x260] sm:$0xff] %v5048
  %5411 = vst [vmem:[#allocation6 + $0x268] sm:$0xff] %v5257
  %5412 = vst [vmem:[#allocation6 + $0x270] sm:$0xff] %v5051
  %5413 = vst [vmem:[#allocation6 + $0x278] sm:$0xff] %v5260
  %5414 = vst [vmem:[#allocation6 + $0x280] sm:$0xff] %v5054
  %5415 = vst [vmem:[#allocation6 + $0x288] sm:$0xff] %v5263
  %5416 = vst [vmem:[#allocation6 + $0x290] sm:$0xff] %v5057
  %5417 = vst [vmem:[#allocation6 + $0x298] sm:$0xff] %v5266
  %5418 = vst [vmem:[#allocation6 + $0x2a0] sm:$0xff] %v5060
  %5419 = vst [vmem:[#allocation6 + $0x2a8] sm:$0xff] %v5269
  %5420 = vst [vmem:[#allocation6 + $0x2b0] sm:$0xff] %v5063
  %5421 = vst [vmem:[#allocation6 + $0x2b8] sm:$0xff] %v5272
  %5422 = vst [vmem:[#allocation6 + $0x2c0] sm:$0xff] %v5066
  %5423 = vst [vmem:[#allocation6 + $0x2c8] sm:$0xff] %v5275
  %5424 = vst [vmem:[#allocation6 + $0x2d0] sm:$0xff] %v5069
  %5425 = vst [vmem:[#allocation6 + $0x2d8] sm:$0xff] %v5278
  %5426 = vst [vmem:[#allocation6 + $0x2e0] sm:$0xff] %v5072
  %5427 = vst [vmem:[#allocation6 + $0x2e8] sm:$0xff] %v5281
  %5428 = vst [vmem:[#allocation6 + $0x2f0] sm:$0xff] %v5075
  %5429 = vst [vmem:[#allocation6 + $0x2f8] sm:$0xff] %v5284
  %5430 = vst [vmem:[#allocation6 + $0x300] sm:$0xff] %v5078
  %5431 = vst [vmem:[#allocation6 + $0x308] sm:$0xff] %v5287
  %5432 = vst [vmem:[#allocation6 + $0x310] sm:$0xff] %v5081
  %5433 = vst [vmem:[#allocation6 + $0x318] sm:$0xff] %v5290
  %5434 = vst [vmem:[#allocation6 + $0x320] sm:$0xff] %v5084
  %5435 = vst [vmem:[#allocation6 + $0x328] sm:$0xff] %v5293
  %5436 = vst [vmem:[#allocation6 + $0x330] sm:$0xff] %v5087
  %5437 = vst [vmem:[#allocation6 + $0x338] sm:$0xff] %v5296
  %5438 = vst [vmem:[#allocation6 + $0x340] sm:$0xff] %v5090
  %5439 = vst [vmem:[#allocation6 + $0x348] sm:$0xff] %v5299
  %5440 = vst [vmem:[#allocation6 + $0x350] sm:$0xff] %v5093
  %5441 = vst [vmem:[#allocation6 + $0x358] sm:$0xff] %v5302
  %5442 = vst [vmem:[#allocation6 + $0x360] sm:$0xff] %v5096
  %5443 = vst [vmem:[#allocation6 + $0x368] sm:$0xff] %v5305
  %5444 = vst [vmem:[#allocation6 + $0x370] sm:$0xff] %v5099
  %5445 = vst [vmem:[#allocation6 + $0x378] sm:$0xff] %v5308
  %5446 = vst [vmem:[#allocation6 + $0x380] sm:$0xff] %v5102
  %5447 = vst [vmem:[#allocation6 + $0x388] sm:$0xff] %v5311
  %5448 = vst [vmem:[#allocation6 + $0x390] sm:$0xff] %v5105
  %5449 = vst [vmem:[#allocation6 + $0x398] sm:$0xff] %v5314
  %5450 = vst [vmem:[#allocation6 + $0x3a0] sm:$0xff] %v5108
  %5451 = vst [vmem:[#allocation6 + $0x3a8] sm:$0xff] %v5317
  %5452 = vst [vmem:[#allocation6 + $0x3b0] sm:$0xff] %v5111
  %5453 = vst [vmem:[#allocation6 + $0x3b8] sm:$0xff] %v5320
  %5454 = vst [vmem:[#allocation6 + $0x3c0] sm:$0xff] %v5114
  %5455 = vst [vmem:[#allocation6 + $0x3c8] sm:$0xff] %v5323
  %5456 = vst [vmem:[#allocation6 + $0x3d0] sm:$0xff] %v5117
  %5457 = vst [vmem:[#allocation6 + $0x3d8] sm:$0xff] %v5326
  %5458 = vst [vmem:[#allocation6 + $0x3e0] sm:$0xff] %v5120
  %5459 = vst [vmem:[#allocation6 + $0x3e8] sm:$0xff] %v5329
  %5460 = vst [vmem:[#allocation6 + $0x3f0] sm:$0xff] %v5123
  %5461 = vst [vmem:[#allocation6 + $0x3f8] sm:$0xff] %v5332
  %v5462 = vld [vmem:[%s9] sm:$0xff]
  %v5463 = vld [vmem:[%s9 + $0x8] sm:$0xff]
  %v5464 = vld [vmem:[%s9 + $0x10] sm:$0xff]
  %v5465 = vld [vmem:[%s9 + $0x18] sm:$0xff]
  %v5467 = vsel %vm2078, %v4426, 0
  %v5470 = vsel %vm2078, %v4427, 0
  %v5473 = vsel %vm2078, %v4428, 0
  %v5476 = vsel %vm2078, %v4429, 0
  %v5479 = vsel %vm2078, %v4430, 0
  %v5482 = vsel %vm2078, %v4431, 0
  %v5485 = vsel %vm2078, %v4432, 0
  %v5488 = vsel %vm2078, %v4433, 0
  %v5491 = vsel %vm2078, %v4434, 0
  %v5494 = vsel %vm2078, %v4435, 0
  %v5497 = vsel %vm2078, %v4436, 0
  %v5500 = vsel %vm2078, %v4437, 0
  %v5503 = vsel %vm2078, %v4438, 0
  %v5506 = vsel %vm2078, %v4439, 0
  %v5509 = vsel %vm2078, %v4440, 0
  %v5512 = vsel %vm2078, %v4441, 0
  %v5515 = vsel %vm2078, %v4442, 0
  %v5518 = vsel %vm2078, %v4443, 0
  %v5521 = vsel %vm2078, %v4444, 0
  %v5524 = vsel %vm2078, %v4445, 0
  %v5527 = vsel %vm2078, %v4446, 0
  %v5530 = vsel %vm2078, %v4447, 0
  %v5533 = vsel %vm2078, %v4448, 0
  %v5536 = vsel %vm2078, %v4449, 0
  %v5539 = vsel %vm2078, %v4450, 0
  %v5542 = vsel %vm2078, %v4451, 0
  %v5545 = vsel %vm2078, %v4452, 0
  %v5548 = vsel %vm2078, %v4453, 0
  %v5551 = vsel %vm2078, %v4454, 0
  %v5554 = vsel %vm2078, %v4455, 0
  %v5557 = vsel %vm2078, %v4456, 0
  %v5560 = vsel %vm2078, %v4457, 0
  %v5563 = vsel %vm2078, %v4458, 0
  %v5566 = vsel %vm2078, %v4459, 0
  %v5569 = vsel %vm2078, %v4460, 0
  %v5572 = vsel %vm2078, %v4461, 0
  %v5575 = vsel %vm2078, %v4462, 0
  %v5578 = vsel %vm2078, %v4463, 0
  %v5581 = vsel %vm2078, %v4464, 0
  %v5584 = vsel %vm2078, %v4465, 0
  %v5587 = vsel %vm2078, %v4466, 0
  %v5590 = vsel %vm2078, %v4467, 0
  %v5593 = vsel %vm2078, %v4468, 0
  %v5596 = vsel %vm2078, %v4469, 0
  %v5599 = vsel %vm2078, %v4470, 0
  %v5602 = vsel %vm2078, %v4471, 0
  %v5605 = vsel %vm2078, %v4472, 0
  %v5608 = vsel %vm2078, %v4473, 0
  %v5611 = vsel %vm2078, %v4474, 0
  %v5614 = vsel %vm2078, %v4475, 0
  %v5617 = vsel %vm2078, %v4476, 0
  %v5620 = vsel %vm2078, %v4477, 0
  %v5623 = vsel %vm2078, %v4478, 0
  %v5626 = vsel %vm2078, %v4479, 0
  %v5629 = vsel %vm2078, %v4480, 0
  %v5632 = vsel %vm2078, %v4481, 0
  %v5635 = vsel %vm2078, %v4482, 0
  %v5638 = vsel %vm2078, %v4483, 0
  %v5641 = vsel %vm2078, %v4484, 0
  %v5644 = vsel %vm2078, %v4485, 0
  %v5647 = vsel %vm2078, %v4486, 0
  %v5650 = vsel %vm2078, %v4487, 0
  %v5653 = vsel %vm2078, %v4488, 0
  %v5656 = vsel %vm2078, %v4489, 0
  %5658 = vmatpush.msra.mxu0 0.0
  %5659 = vmatpush.msra.mxu0 0.0
  %5660 = vmatpush.msra.mxu0 0.0
  %5661 = vmatpush.msra.mxu0 0.0
  %5662 = vmatpush.msra.mxu0 0.0
  %5663 = vmatpush.msra.mxu0 0.0
  %5664 = vmatpush.msra.mxu0 0.0
  %5665 = vmatpush.msra.mxu0 0.0
  %5666 = vmatpush.msra.mxu0 0.0
  %5667 = vmatpush.msra.mxu0 0.0
  %5668 = vmatpush.msra.mxu0 0.0
  %5669 = vmatpush.msra.mxu0 0.0
  %5670 = vmatpush.msra.mxu0 0.0
  %5671 = vmatpush.msra.mxu0 0.0
  %5672 = vmatpush.msra.mxu0 %v5464
  %5673 = vmatpush.msra.mxu0 %v5462
  %5674 = vmatmul.f32.gmra.mxu0 %v5467
  %v5675 = vpop.f32.mrf.mxu0
  %v5676 = vadd.f32 0.0, %v5675
  %5677 = vmatmul.f32.gmra.mxu0 %v5470
  %v5678 = vpop.f32.mrf.mxu0
  %v5679 = vadd.f32 0.0, %v5678
  %5680 = vmatmul.f32.gmra.mxu0 %v5473
  %v5681 = vpop.f32.mrf.mxu0
  %v5682 = vadd.f32 0.0, %v5681
  %5683 = vmatmul.f32.gmra.mxu0 %v5476
  %v5684 = vpop.f32.mrf.mxu0
  %v5685 = vadd.f32 0.0, %v5684
  %5686 = vmatmul.f32.gmra.mxu0 %v5479
  %v5687 = vpop.f32.mrf.mxu0
  %v5688 = vadd.f32 0.0, %v5687
  %5689 = vmatmul.f32.gmra.mxu0 %v5482
  %v5690 = vpop.f32.mrf.mxu0
  %v5691 = vadd.f32 0.0, %v5690
  %5692 = vmatmul.f32.gmra.mxu0 %v5485
  %v5693 = vpop.f32.mrf.mxu0
  %v5694 = vadd.f32 0.0, %v5693
  %5695 = vmatmul.f32.gmra.mxu0 %v5488
  %v5696 = vpop.f32.mrf.mxu0
  %v5697 = vadd.f32 0.0, %v5696
  %5698 = vmatmul.f32.gmra.mxu0 %v5491
  %v5699 = vpop.f32.mrf.mxu0
  %v5700 = vadd.f32 0.0, %v5699
  %5701 = vmatmul.f32.gmra.mxu0 %v5494
  %v5702 = vpop.f32.mrf.mxu0
  %v5703 = vadd.f32 0.0, %v5702
  %5704 = vmatmul.f32.gmra.mxu0 %v5497
  %v5705 = vpop.f32.mrf.mxu0
  %v5706 = vadd.f32 0.0, %v5705
  %5707 = vmatmul.f32.gmra.mxu0 %v5500
  %v5708 = vpop.f32.mrf.mxu0
  %v5709 = vadd.f32 0.0, %v5708
  %5710 = vmatmul.f32.gmra.mxu0 %v5503
  %v5711 = vpop.f32.mrf.mxu0
  %v5712 = vadd.f32 0.0, %v5711
  %5713 = vmatmul.f32.gmra.mxu0 %v5506
  %v5714 = vpop.f32.mrf.mxu0
  %v5715 = vadd.f32 0.0, %v5714
  %5716 = vmatmul.f32.gmra.mxu0 %v5509
  %v5717 = vpop.f32.mrf.mxu0
  %v5718 = vadd.f32 0.0, %v5717
  %5719 = vmatmul.f32.gmra.mxu0 %v5512
  %v5720 = vpop.f32.mrf.mxu0
  %v5721 = vadd.f32 0.0, %v5720
  %5722 = vmatmul.f32.gmra.mxu0 %v5515
  %v5723 = vpop.f32.mrf.mxu0
  %v5724 = vadd.f32 0.0, %v5723
  %5725 = vmatmul.f32.gmra.mxu0 %v5518
  %v5726 = vpop.f32.mrf.mxu0
  %v5727 = vadd.f32 0.0, %v5726
  %5728 = vmatmul.f32.gmra.mxu0 %v5521
  %v5729 = vpop.f32.mrf.mxu0
  %v5730 = vadd.f32 0.0, %v5729
  %5731 = vmatmul.f32.gmra.mxu0 %v5524
  %v5732 = vpop.f32.mrf.mxu0
  %v5733 = vadd.f32 0.0, %v5732
  %5734 = vmatmul.f32.gmra.mxu0 %v5527
  %v5735 = vpop.f32.mrf.mxu0
  %v5736 = vadd.f32 0.0, %v5735
  %5737 = vmatmul.f32.gmra.mxu0 %v5530
  %v5738 = vpop.f32.mrf.mxu0
  %v5739 = vadd.f32 0.0, %v5738
  %5740 = vmatmul.f32.gmra.mxu0 %v5533
  %v5741 = vpop.f32.mrf.mxu0
  %v5742 = vadd.f32 0.0, %v5741
  %5743 = vmatmul.f32.gmra.mxu0 %v5536
  %v5744 = vpop.f32.mrf.mxu0
  %v5745 = vadd.f32 0.0, %v5744
  %5746 = vmatmul.f32.gmra.mxu0 %v5539
  %v5747 = vpop.f32.mrf.mxu0
  %v5748 = vadd.f32 0.0, %v5747
  %5749 = vmatmul.f32.gmra.mxu0 %v5542
  %v5750 = vpop.f32.mrf.mxu0
  %v5751 = vadd.f32 0.0, %v5750
  %5752 = vmatmul.f32.gmra.mxu0 %v5545
  %v5753 = vpop.f32.mrf.mxu0
  %v5754 = vadd.f32 0.0, %v5753
  %5755 = vmatmul.f32.gmra.mxu0 %v5548
  %v5756 = vpop.f32.mrf.mxu0
  %v5757 = vadd.f32 0.0, %v5756
  %5758 = vmatmul.f32.gmra.mxu0 %v5551
  %v5759 = vpop.f32.mrf.mxu0
  %v5760 = vadd.f32 0.0, %v5759
  %5761 = vmatmul.f32.gmra.mxu0 %v5554
  %v5762 = vpop.f32.mrf.mxu0
  %v5763 = vadd.f32 0.0, %v5762
  %5764 = vmatmul.f32.gmra.mxu0 %v5557
  %v5765 = vpop.f32.mrf.mxu0
  %v5766 = vadd.f32 0.0, %v5765
  %5767 = vmatmul.f32.gmra.mxu0 %v5560
  %v5768 = vpop.f32.mrf.mxu0
  %v5769 = vadd.f32 0.0, %v5768
  %5770 = vmatmul.f32.gmra.mxu0 %v5563
  %v5771 = vpop.f32.mrf.mxu0
  %v5772 = vadd.f32 0.0, %v5771
  %5773 = vmatmul.f32.gmra.mxu0 %v5566
  %v5774 = vpop.f32.mrf.mxu0
  %v5775 = vadd.f32 0.0, %v5774
  %5776 = vmatmul.f32.gmra.mxu0 %v5569
  %v5777 = vpop.f32.mrf.mxu0
  %v5778 = vadd.f32 0.0, %v5777
  %5779 = vmatmul.f32.gmra.mxu0 %v5572
  %v5780 = vpop.f32.mrf.mxu0
  %v5781 = vadd.f32 0.0, %v5780
  %5782 = vmatmul.f32.gmra.mxu0 %v5575
  %v5783 = vpop.f32.mrf.mxu0
  %v5784 = vadd.f32 0.0, %v5783
  %5785 = vmatmul.f32.gmra.mxu0 %v5578
  %v5786 = vpop.f32.mrf.mxu0
  %v5787 = vadd.f32 0.0, %v5786
  %5788 = vmatmul.f32.gmra.mxu0 %v5581
  %v5789 = vpop.f32.mrf.mxu0
  %v5790 = vadd.f32 0.0, %v5789
  %5791 = vmatmul.f32.gmra.mxu0 %v5584
  %v5792 = vpop.f32.mrf.mxu0
  %v5793 = vadd.f32 0.0, %v5792
  %5794 = vmatmul.f32.gmra.mxu0 %v5587
  %v5795 = vpop.f32.mrf.mxu0
  %v5796 = vadd.f32 0.0, %v5795
  %5797 = vmatmul.f32.gmra.mxu0 %v5590
  %v5798 = vpop.f32.mrf.mxu0
  %v5799 = vadd.f32 0.0, %v5798
  %5800 = vmatmul.f32.gmra.mxu0 %v5593
  %v5801 = vpop.f32.mrf.mxu0
  %v5802 = vadd.f32 0.0, %v5801
  %5803 = vmatmul.f32.gmra.mxu0 %v5596
  %v5804 = vpop.f32.mrf.mxu0
  %v5805 = vadd.f32 0.0, %v5804
  %5806 = vmatmul.f32.gmra.mxu0 %v5599
  %v5807 = vpop.f32.mrf.mxu0
  %v5808 = vadd.f32 0.0, %v5807
  %5809 = vmatmul.f32.gmra.mxu0 %v5602
  %v5810 = vpop.f32.mrf.mxu0
  %v5811 = vadd.f32 0.0, %v5810
  %5812 = vmatmul.f32.gmra.mxu0 %v5605
  %v5813 = vpop.f32.mrf.mxu0
  %v5814 = vadd.f32 0.0, %v5813
  %5815 = vmatmul.f32.gmra.mxu0 %v5608
  %v5816 = vpop.f32.mrf.mxu0
  %v5817 = vadd.f32 0.0, %v5816
  %5818 = vmatmul.f32.gmra.mxu0 %v5611
  %v5819 = vpop.f32.mrf.mxu0
  %v5820 = vadd.f32 0.0, %v5819
  %5821 = vmatmul.f32.gmra.mxu0 %v5614
  %v5822 = vpop.f32.mrf.mxu0
  %v5823 = vadd.f32 0.0, %v5822
  %5824 = vmatmul.f32.gmra.mxu0 %v5617
  %v5825 = vpop.f32.mrf.mxu0
  %v5826 = vadd.f32 0.0, %v5825
  %5827 = vmatmul.f32.gmra.mxu0 %v5620
  %v5828 = vpop.f32.mrf.mxu0
  %v5829 = vadd.f32 0.0, %v5828
  %5830 = vmatmul.f32.gmra.mxu0 %v5623
  %v5831 = vpop.f32.mrf.mxu0
  %v5832 = vadd.f32 0.0, %v5831
  %5833 = vmatmul.f32.gmra.mxu0 %v5626
  %v5834 = vpop.f32.mrf.mxu0
  %v5835 = vadd.f32 0.0, %v5834
  %5836 = vmatmul.f32.gmra.mxu0 %v5629
  %v5837 = vpop.f32.mrf.mxu0
  %v5838 = vadd.f32 0.0, %v5837
  %5839 = vmatmul.f32.gmra.mxu0 %v5632
  %v5840 = vpop.f32.mrf.mxu0
  %v5841 = vadd.f32 0.0, %v5840
  %5842 = vmatmul.f32.gmra.mxu0 %v5635
  %v5843 = vpop.f32.mrf.mxu0
  %v5844 = vadd.f32 0.0, %v5843
  %5845 = vmatmul.f32.gmra.mxu0 %v5638
  %v5846 = vpop.f32.mrf.mxu0
  %v5847 = vadd.f32 0.0, %v5846
  %5848 = vmatmul.f32.gmra.mxu0 %v5641
  %v5849 = vpop.f32.mrf.mxu0
  %v5850 = vadd.f32 0.0, %v5849
  %5851 = vmatmul.f32.gmra.mxu0 %v5644
  %v5852 = vpop.f32.mrf.mxu0
  %v5853 = vadd.f32 0.0, %v5852
  %5854 = vmatmul.f32.gmra.mxu0 %v5647
  %v5855 = vpop.f32.mrf.mxu0
  %v5856 = vadd.f32 0.0, %v5855
  %5857 = vmatmul.f32.gmra.mxu0 %v5650
  %v5858 = vpop.f32.mrf.mxu0
  %v5859 = vadd.f32 0.0, %v5858
  %5860 = vmatmul.f32.gmra.mxu0 %v5653
  %v5861 = vpop.f32.mrf.mxu0
  %v5862 = vadd.f32 0.0, %v5861
  %5863 = vmatmul.f32.gmra.mxu0 %v5656
  %v5864 = vpop.f32.mrf.mxu0
  %v5865 = vadd.f32 0.0, %v5864
  %5866 = vdwg.mxu0
  %5867 = vmatpush.msra.mxu0 0.0
  %5868 = vmatpush.msra.mxu0 0.0
  %5869 = vmatpush.msra.mxu0 0.0
  %5870 = vmatpush.msra.mxu0 0.0
  %5871 = vmatpush.msra.mxu0 0.0
  %5872 = vmatpush.msra.mxu0 0.0
  %5873 = vmatpush.msra.mxu0 0.0
  %5874 = vmatpush.msra.mxu0 0.0
  %5875 = vmatpush.msra.mxu0 0.0
  %5876 = vmatpush.msra.mxu0 0.0
  %5877 = vmatpush.msra.mxu0 0.0
  %5878 = vmatpush.msra.mxu0 0.0
  %5879 = vmatpush.msra.mxu0 0.0
  %5880 = vmatpush.msra.mxu0 0.0
  %5881 = vmatpush.msra.mxu0 %v5465
  %5882 = vmatpush.msra.mxu0 %v5463
  %5883 = vmatmul.f32.gmra.mxu0 %v5467
  %v5884 = vpop.f32.mrf.mxu0
  %v5885 = vadd.f32 0.0, %v5884
  %5886 = vmatmul.f32.gmra.mxu0 %v5470
  %v5887 = vpop.f32.mrf.mxu0
  %v5888 = vadd.f32 0.0, %v5887
  %5889 = vmatmul.f32.gmra.mxu0 %v5473
  %v5890 = vpop.f32.mrf.mxu0
  %v5891 = vadd.f32 0.0, %v5890
  %5892 = vmatmul.f32.gmra.mxu0 %v5476
  %v5893 = vpop.f32.mrf.mxu0
  %v5894 = vadd.f32 0.0, %v5893
  %5895 = vmatmul.f32.gmra.mxu0 %v5479
  %v5896 = vpop.f32.mrf.mxu0
  %v5897 = vadd.f32 0.0, %v5896
  %5898 = vmatmul.f32.gmra.mxu0 %v5482
  %v5899 = vpop.f32.mrf.mxu0
  %v5900 = vadd.f32 0.0, %v5899
  %5901 = vmatmul.f32.gmra.mxu0 %v5485
  %v5902 = vpop.f32.mrf.mxu0
  %v5903 = vadd.f32 0.0, %v5902
  %5904 = vmatmul.f32.gmra.mxu0 %v5488
  %v5905 = vpop.f32.mrf.mxu0
  %v5906 = vadd.f32 0.0, %v5905
  %5907 = vmatmul.f32.gmra.mxu0 %v5491
  %v5908 = vpop.f32.mrf.mxu0
  %v5909 = vadd.f32 0.0, %v5908
  %5910 = vmatmul.f32.gmra.mxu0 %v5494
  %v5911 = vpop.f32.mrf.mxu0
  %v5912 = vadd.f32 0.0, %v5911
  %5913 = vmatmul.f32.gmra.mxu0 %v5497
  %v5914 = vpop.f32.mrf.mxu0
  %v5915 = vadd.f32 0.0, %v5914
  %5916 = vmatmul.f32.gmra.mxu0 %v5500
  %v5917 = vpop.f32.mrf.mxu0
  %v5918 = vadd.f32 0.0, %v5917
  %5919 = vmatmul.f32.gmra.mxu0 %v5503
  %v5920 = vpop.f32.mrf.mxu0
  %v5921 = vadd.f32 0.0, %v5920
  %5922 = vmatmul.f32.gmra.mxu0 %v5506
  %v5923 = vpop.f32.mrf.mxu0
  %v5924 = vadd.f32 0.0, %v5923
  %5925 = vmatmul.f32.gmra.mxu0 %v5509
  %v5926 = vpop.f32.mrf.mxu0
  %v5927 = vadd.f32 0.0, %v5926
  %5928 = vmatmul.f32.gmra.mxu0 %v5512
  %v5929 = vpop.f32.mrf.mxu0
  %v5930 = vadd.f32 0.0, %v5929
  %5931 = vmatmul.f32.gmra.mxu0 %v5515
  %v5932 = vpop.f32.mrf.mxu0
  %v5933 = vadd.f32 0.0, %v5932
  %5934 = vmatmul.f32.gmra.mxu0 %v5518
  %v5935 = vpop.f32.mrf.mxu0
  %v5936 = vadd.f32 0.0, %v5935
  %5937 = vmatmul.f32.gmra.mxu0 %v5521
  %v5938 = vpop.f32.mrf.mxu0
  %v5939 = vadd.f32 0.0, %v5938
  %5940 = vmatmul.f32.gmra.mxu0 %v5524
  %v5941 = vpop.f32.mrf.mxu0
  %v5942 = vadd.f32 0.0, %v5941
  %5943 = vmatmul.f32.gmra.mxu0 %v5527
  %v5944 = vpop.f32.mrf.mxu0
  %v5945 = vadd.f32 0.0, %v5944
  %5946 = vmatmul.f32.gmra.mxu0 %v5530
  %v5947 = vpop.f32.mrf.mxu0
  %v5948 = vadd.f32 0.0, %v5947
  %5949 = vmatmul.f32.gmra.mxu0 %v5533
  %v5950 = vpop.f32.mrf.mxu0
  %v5951 = vadd.f32 0.0, %v5950
  %5952 = vmatmul.f32.gmra.mxu0 %v5536
  %v5953 = vpop.f32.mrf.mxu0
  %v5954 = vadd.f32 0.0, %v5953
  %5955 = vmatmul.f32.gmra.mxu0 %v5539
  %v5956 = vpop.f32.mrf.mxu0
  %v5957 = vadd.f32 0.0, %v5956
  %5958 = vmatmul.f32.gmra.mxu0 %v5542
  %v5959 = vpop.f32.mrf.mxu0
  %v5960 = vadd.f32 0.0, %v5959
  %5961 = vmatmul.f32.gmra.mxu0 %v5545
  %v5962 = vpop.f32.mrf.mxu0
  %v5963 = vadd.f32 0.0, %v5962
  %5964 = vmatmul.f32.gmra.mxu0 %v5548
  %v5965 = vpop.f32.mrf.mxu0
  %v5966 = vadd.f32 0.0, %v5965
  %5967 = vmatmul.f32.gmra.mxu0 %v5551
  %v5968 = vpop.f32.mrf.mxu0
  %v5969 = vadd.f32 0.0, %v5968
  %5970 = vmatmul.f32.gmra.mxu0 %v5554
  %v5971 = vpop.f32.mrf.mxu0
  %v5972 = vadd.f32 0.0, %v5971
  %5973 = vmatmul.f32.gmra.mxu0 %v5557
  %v5974 = vpop.f32.mrf.mxu0
  %v5975 = vadd.f32 0.0, %v5974
  %5976 = vmatmul.f32.gmra.mxu0 %v5560
  %v5977 = vpop.f32.mrf.mxu0
  %v5978 = vadd.f32 0.0, %v5977
  %5979 = vmatmul.f32.gmra.mxu0 %v5563
  %v5980 = vpop.f32.mrf.mxu0
  %v5981 = vadd.f32 0.0, %v5980
  %5982 = vmatmul.f32.gmra.mxu0 %v5566
  %v5983 = vpop.f32.mrf.mxu0
  %v5984 = vadd.f32 0.0, %v5983
  %5985 = vmatmul.f32.gmra.mxu0 %v5569
  %v5986 = vpop.f32.mrf.mxu0
  %v5987 = vadd.f32 0.0, %v5986
  %5988 = vmatmul.f32.gmra.mxu0 %v5572
  %v5989 = vpop.f32.mrf.mxu0
  %v5990 = vadd.f32 0.0, %v5989
  %5991 = vmatmul.f32.gmra.mxu0 %v5575
  %v5992 = vpop.f32.mrf.mxu0
  %v5993 = vadd.f32 0.0, %v5992
  %5994 = vmatmul.f32.gmra.mxu0 %v5578
  %v5995 = vpop.f32.mrf.mxu0
  %v5996 = vadd.f32 0.0, %v5995
  %5997 = vmatmul.f32.gmra.mxu0 %v5581
  %v5998 = vpop.f32.mrf.mxu0
  %v5999 = vadd.f32 0.0, %v5998
  %6000 = vmatmul.f32.gmra.mxu0 %v5584
  %v6001 = vpop.f32.mrf.mxu0
  %v6002 = vadd.f32 0.0, %v6001
  %6003 = vmatmul.f32.gmra.mxu0 %v5587
  %v6004 = vpop.f32.mrf.mxu0
  %v6005 = vadd.f32 0.0, %v6004
  %6006 = vmatmul.f32.gmra.mxu0 %v5590
  %v6007 = vpop.f32.mrf.mxu0
  %v6008 = vadd.f32 0.0, %v6007
  %6009 = vmatmul.f32.gmra.mxu0 %v5593
  %v6010 = vpop.f32.mrf.mxu0
  %v6011 = vadd.f32 0.0, %v6010
  %6012 = vmatmul.f32.gmra.mxu0 %v5596
  %v6013 = vpop.f32.mrf.mxu0
  %v6014 = vadd.f32 0.0, %v6013
  %6015 = vmatmul.f32.gmra.mxu0 %v5599
  %v6016 = vpop.f32.mrf.mxu0
  %v6017 = vadd.f32 0.0, %v6016
  %6018 = vmatmul.f32.gmra.mxu0 %v5602
  %v6019 = vpop.f32.mrf.mxu0
  %v6020 = vadd.f32 0.0, %v6019
  %6021 = vmatmul.f32.gmra.mxu0 %v5605
  %v6022 = vpop.f32.mrf.mxu0
  %v6023 = vadd.f32 0.0, %v6022
  %6024 = vmatmul.f32.gmra.mxu0 %v5608
  %v6025 = vpop.f32.mrf.mxu0
  %v6026 = vadd.f32 0.0, %v6025
  %6027 = vmatmul.f32.gmra.mxu0 %v5611
  %v6028 = vpop.f32.mrf.mxu0
  %v6029 = vadd.f32 0.0, %v6028
  %6030 = vmatmul.f32.gmra.mxu0 %v5614
  %v6031 = vpop.f32.mrf.mxu0
  %v6032 = vadd.f32 0.0, %v6031
  %6033 = vmatmul.f32.gmra.mxu0 %v5617
  %v6034 = vpop.f32.mrf.mxu0
  %v6035 = vadd.f32 0.0, %v6034
  %6036 = vmatmul.f32.gmra.mxu0 %v5620
  %v6037 = vpop.f32.mrf.mxu0
  %v6038 = vadd.f32 0.0, %v6037
  %6039 = vmatmul.f32.gmra.mxu0 %v5623
  %v6040 = vpop.f32.mrf.mxu0
  %v6041 = vadd.f32 0.0, %v6040
  %6042 = vmatmul.f32.gmra.mxu0 %v5626
  %v6043 = vpop.f32.mrf.mxu0
  %v6044 = vadd.f32 0.0, %v6043
  %6045 = vmatmul.f32.gmra.mxu0 %v5629
  %v6046 = vpop.f32.mrf.mxu0
  %v6047 = vadd.f32 0.0, %v6046
  %6048 = vmatmul.f32.gmra.mxu0 %v5632
  %v6049 = vpop.f32.mrf.mxu0
  %v6050 = vadd.f32 0.0, %v6049
  %6051 = vmatmul.f32.gmra.mxu0 %v5635
  %v6052 = vpop.f32.mrf.mxu0
  %v6053 = vadd.f32 0.0, %v6052
  %6054 = vmatmul.f32.gmra.mxu0 %v5638
  %v6055 = vpop.f32.mrf.mxu0
  %v6056 = vadd.f32 0.0, %v6055
  %6057 = vmatmul.f32.gmra.mxu0 %v5641
  %v6058 = vpop.f32.mrf.mxu0
  %v6059 = vadd.f32 0.0, %v6058
  %6060 = vmatmul.f32.gmra.mxu0 %v5644
  %v6061 = vpop.f32.mrf.mxu0
  %v6062 = vadd.f32 0.0, %v6061
  %6063 = vmatmul.f32.gmra.mxu0 %v5647
  %v6064 = vpop.f32.mrf.mxu0
  %v6065 = vadd.f32 0.0, %v6064
  %6066 = vmatmul.f32.gmra.mxu0 %v5650
  %v6067 = vpop.f32.mrf.mxu0
  %v6068 = vadd.f32 0.0, %v6067
  %6069 = vmatmul.f32.gmra.mxu0 %v5653
  %v6070 = vpop.f32.mrf.mxu0
  %v6071 = vadd.f32 0.0, %v6070
  %6072 = vmatmul.f32.gmra.mxu0 %v5656
  %v6073 = vpop.f32.mrf.mxu0
  %v6074 = vadd.f32 0.0, %v6073
  %6075 = vdwg.mxu0
  %v6076 = vmul.f32 %v5676, 1.442695
  %v6077 = vpow.pop %v6076
  %v6078 = vmul.f32 %v5885, 1.442695
  %v6079 = vpow.pop %v6078
  %v6080 = vmul.f32 %v5679, 1.442695
  %v6081 = vpow.pop %v6080
  %v6082 = vmul.f32 %v5888, 1.442695
  %v6083 = vpow.pop %v6082
  %v6084 = vmul.f32 %v5682, 1.442695
  %v6085 = vpow.pop %v6084
  %v6086 = vmul.f32 %v5891, 1.442695
  %v6087 = vpow.pop %v6086
  %v6088 = vmul.f32 %v5685, 1.442695
  %v6089 = vpow.pop %v6088
  %v6090 = vmul.f32 %v5894, 1.442695
  %v6091 = vpow.pop %v6090
  %v6092 = vmul.f32 %v5688, 1.442695
  %v6093 = vpow.pop %v6092
  %v6094 = vmul.f32 %v5897, 1.442695
  %v6095 = vpow.pop %v6094
  %v6096 = vmul.f32 %v5691, 1.442695
  %v6097 = vpow.pop %v6096
  %v6098 = vmul.f32 %v5900, 1.442695
  %v6099 = vpow.pop %v6098
  %v6100 = vmul.f32 %v5694, 1.442695
  %v6101 = vpow.pop %v6100
  %v6102 = vmul.f32 %v5903, 1.442695
  %v6103 = vpow.pop %v6102
  %v6104 = vmul.f32 %v5697, 1.442695
  %v6105 = vpow.pop %v6104
  %v6106 = vmul.f32 %v5906, 1.442695
  %v6107 = vpow.pop %v6106
  %v6108 = vmul.f32 %v5700, 1.442695
  %v6109 = vpow.pop %v6108
  %v6110 = vmul.f32 %v5909, 1.442695
  %v6111 = vpow.pop %v6110
  %v6112 = vmul.f32 %v5703, 1.442695
  %v6113 = vpow.pop %v6112
  %v6114 = vmul.f32 %v5912, 1.442695
  %v6115 = vpow.pop %v6114
  %v6116 = vmul.f32 %v5706, 1.442695
  %v6117 = vpow.pop %v6116
  %v6118 = vmul.f32 %v5915, 1.442695
  %v6119 = vpow.pop %v6118
  %v6120 = vmul.f32 %v5709, 1.442695
  %v6121 = vpow.pop %v6120
  %v6122 = vmul.f32 %v5918, 1.442695
  %v6123 = vpow.pop %v6122
  %v6124 = vmul.f32 %v5712, 1.442695
  %v6125 = vpow.pop %v6124
  %v6126 = vmul.f32 %v5921, 1.442695
  %v6127 = vpow.pop %v6126
  %v6128 = vmul.f32 %v5715, 1.442695
  %v6129 = vpow.pop %v6128
  %v6130 = vmul.f32 %v5924, 1.442695
  %v6131 = vpow.pop %v6130
  %v6132 = vmul.f32 %v5718, 1.442695
  %v6133 = vpow.pop %v6132
  %v6134 = vmul.f32 %v5927, 1.442695
  %v6135 = vpow.pop %v6134
  %v6136 = vmul.f32 %v5721, 1.442695
  %v6137 = vpow.pop %v6136
  %v6138 = vmul.f32 %v5930, 1.442695
  %v6139 = vpow.pop %v6138
  %v6140 = vmul.f32 %v5724, 1.442695
  %v6141 = vpow.pop %v6140
  %v6142 = vmul.f32 %v5933, 1.442695
  %v6143 = vpow.pop %v6142
  %v6144 = vmul.f32 %v5727, 1.442695
  %v6145 = vpow.pop %v6144
  %v6146 = vmul.f32 %v5936, 1.442695
  %v6147 = vpow.pop %v6146
  %v6148 = vmul.f32 %v5730, 1.442695
  %v6149 = vpow.pop %v6148
  %v6150 = vmul.f32 %v5939, 1.442695
  %v6151 = vpow.pop %v6150
  %v6152 = vmul.f32 %v5733, 1.442695
  %v6153 = vpow.pop %v6152
  %v6154 = vmul.f32 %v5942, 1.442695
  %v6155 = vpow.pop %v6154
  %v6156 = vmul.f32 %v5736, 1.442695
  %v6157 = vpow.pop %v6156
  %v6158 = vmul.f32 %v5945, 1.442695
  %v6159 = vpow.pop %v6158
  %v6160 = vmul.f32 %v5739, 1.442695
  %v6161 = vpow.pop %v6160
  %v6162 = vmul.f32 %v5948, 1.442695
  %v6163 = vpow.pop %v6162
  %v6164 = vmul.f32 %v5742, 1.442695
  %v6165 = vpow.pop %v6164
  %v6166 = vmul.f32 %v5951, 1.442695
  %v6167 = vpow.pop %v6166
  %v6168 = vmul.f32 %v5745, 1.442695
  %v6169 = vpow.pop %v6168
  %v6170 = vmul.f32 %v5954, 1.442695
  %v6171 = vpow.pop %v6170
  %v6172 = vmul.f32 %v5748, 1.442695
  %v6173 = vpow.pop %v6172
  %v6174 = vmul.f32 %v5957, 1.442695
  %v6175 = vpow.pop %v6174
  %v6176 = vmul.f32 %v5751, 1.442695
  %v6177 = vpow.pop %v6176
  %v6178 = vmul.f32 %v5960, 1.442695
  %v6179 = vpow.pop %v6178
  %v6180 = vmul.f32 %v5754, 1.442695
  %v6181 = vpow.pop %v6180
  %v6182 = vmul.f32 %v5963, 1.442695
  %v6183 = vpow.pop %v6182
  %v6184 = vmul.f32 %v5757, 1.442695
  %v6185 = vpow.pop %v6184
  %v6186 = vmul.f32 %v5966, 1.442695
  %v6187 = vpow.pop %v6186
  %v6188 = vmul.f32 %v5760, 1.442695
  %v6189 = vpow.pop %v6188
  %v6190 = vmul.f32 %v5969, 1.442695
  %v6191 = vpow.pop %v6190
  %v6192 = vmul.f32 %v5763, 1.442695
  %v6193 = vpow.pop %v6192
  %v6194 = vmul.f32 %v5972, 1.442695
  %v6195 = vpow.pop %v6194
  %v6196 = vmul.f32 %v5766, 1.442695
  %v6197 = vpow.pop %v6196
  %v6198 = vmul.f32 %v5975, 1.442695
  %v6199 = vpow.pop %v6198
  %v6200 = vmul.f32 %v5769, 1.442695
  %v6201 = vpow.pop %v6200
  %v6202 = vmul.f32 %v5978, 1.442695
  %v6203 = vpow.pop %v6202
  %v6204 = vmul.f32 %v5772, 1.442695
  %v6205 = vpow.pop %v6204
  %v6206 = vmul.f32 %v5981, 1.442695
  %v6207 = vpow.pop %v6206
  %v6208 = vmul.f32 %v5775, 1.442695
  %v6209 = vpow.pop %v6208
  %v6210 = vmul.f32 %v5984, 1.442695
  %v6211 = vpow.pop %v6210
  %v6212 = vmul.f32 %v5778, 1.442695
  %v6213 = vpow.pop %v6212
  %v6214 = vmul.f32 %v5987, 1.442695
  %v6215 = vpow.pop %v6214
  %v6216 = vmul.f32 %v5781, 1.442695
  %v6217 = vpow.pop %v6216
  %v6218 = vmul.f32 %v5990, 1.442695
  %v6219 = vpow.pop %v6218
  %v6220 = vmul.f32 %v5784, 1.442695
  %v6221 = vpow.pop %v6220
  %v6222 = vmul.f32 %v5993, 1.442695
  %v6223 = vpow.pop %v6222
  %v6224 = vmul.f32 %v5787, 1.442695
  %v6225 = vpow.pop %v6224
  %v6226 = vmul.f32 %v5996, 1.442695
  %v6227 = vpow.pop %v6226
  %v6228 = vmul.f32 %v5790, 1.442695
  %v6229 = vpow.pop %v6228
  %v6230 = vmul.f32 %v5999, 1.442695
  %v6231 = vpow.pop %v6230
  %v6232 = vmul.f32 %v5793, 1.442695
  %v6233 = vpow.pop %v6232
  %v6234 = vmul.f32 %v6002, 1.442695
  %v6235 = vpow.pop %v6234
  %v6236 = vmul.f32 %v5796, 1.442695
  %v6237 = vpow.pop %v6236
  %v6238 = vmul.f32 %v6005, 1.442695
  %v6239 = vpow.pop %v6238
  %v6240 = vmul.f32 %v5799, 1.442695
  %v6241 = vpow.pop %v6240
  %v6242 = vmul.f32 %v6008, 1.442695
  %v6243 = vpow.pop %v6242
  %v6244 = vmul.f32 %v5802, 1.442695
  %v6245 = vpow.pop %v6244
  %v6246 = vmul.f32 %v6011, 1.442695
  %v6247 = vpow.pop %v6246
  %v6248 = vmul.f32 %v5805, 1.442695
  %v6249 = vpow.pop %v6248
  %v6250 = vmul.f32 %v6014, 1.442695
  %v6251 = vpow.pop %v6250
  %v6252 = vmul.f32 %v5808, 1.442695
  %v6253 = vpow.pop %v6252
  %v6254 = vmul.f32 %v6017, 1.442695
  %v6255 = vpow.pop %v6254
  %v6256 = vmul.f32 %v5811, 1.442695
  %v6257 = vpow.pop %v6256
  %v6258 = vmul.f32 %v6020, 1.442695
  %v6259 = vpow.pop %v6258
  %v6260 = vmul.f32 %v5814, 1.442695
  %v6261 = vpow.pop %v6260
  %v6262 = vmul.f32 %v6023, 1.442695
  %v6263 = vpow.pop %v6262
  %v6264 = vmul.f32 %v5817, 1.442695
  %v6265 = vpow.pop %v6264
  %v6266 = vmul.f32 %v6026, 1.442695
  %v6267 = vpow.pop %v6266
  %v6268 = vmul.f32 %v5820, 1.442695
  %v6269 = vpow.pop %v6268
  %v6270 = vmul.f32 %v6029, 1.442695
  %v6271 = vpow.pop %v6270
  %v6272 = vmul.f32 %v5823, 1.442695
  %v6273 = vpow.pop %v6272
  %v6274 = vmul.f32 %v6032, 1.442695
  %v6275 = vpow.pop %v6274
  %v6276 = vmul.f32 %v5826, 1.442695
  %v6277 = vpow.pop %v6276
  %v6278 = vmul.f32 %v6035, 1.442695
  %v6279 = vpow.pop %v6278
  %v6280 = vmul.f32 %v5829, 1.442695
  %v6281 = vpow.pop %v6280
  %v6282 = vmul.f32 %v6038, 1.442695
  %v6283 = vpow.pop %v6282
  %v6284 = vmul.f32 %v5832, 1.442695
  %v6285 = vpow.pop %v6284
  %v6286 = vmul.f32 %v6041, 1.442695
  %v6287 = vpow.pop %v6286
  %v6288 = vmul.f32 %v5835, 1.442695
  %v6289 = vpow.pop %v6288
  %v6290 = vmul.f32 %v6044, 1.442695
  %v6291 = vpow.pop %v6290
  %v6292 = vmul.f32 %v5838, 1.442695
  %v6293 = vpow.pop %v6292
  %v6294 = vmul.f32 %v6047, 1.442695
  %v6295 = vpow.pop %v6294
  %v6296 = vmul.f32 %v5841, 1.442695
  %v6297 = vpow.pop %v6296
  %v6298 = vmul.f32 %v6050, 1.442695
  %v6299 = vpow.pop %v6298
  %v6300 = vmul.f32 %v5844, 1.442695
  %v6301 = vpow.pop %v6300
  %v6302 = vmul.f32 %v6053, 1.442695
  %v6303 = vpow.pop %v6302
  %v6304 = vmul.f32 %v5847, 1.442695
  %v6305 = vpow.pop %v6304
  %v6306 = vmul.f32 %v6056, 1.442695
  %v6307 = vpow.pop %v6306
  %v6308 = vmul.f32 %v5850, 1.442695
  %v6309 = vpow.pop %v6308
  %v6310 = vmul.f32 %v6059, 1.442695
  %v6311 = vpow.pop %v6310
  %v6312 = vmul.f32 %v5853, 1.442695
  %v6313 = vpow.pop %v6312
  %v6314 = vmul.f32 %v6062, 1.442695
  %v6315 = vpow.pop %v6314
  %v6316 = vmul.f32 %v5856, 1.442695
  %v6317 = vpow.pop %v6316
  %v6318 = vmul.f32 %v6065, 1.442695
  %v6319 = vpow.pop %v6318
  %v6320 = vmul.f32 %v5859, 1.442695
  %v6321 = vpow.pop %v6320
  %v6322 = vmul.f32 %v6068, 1.442695
  %v6323 = vpow.pop %v6322
  %v6324 = vmul.f32 %v5862, 1.442695
  %v6325 = vpow.pop %v6324
  %v6326 = vmul.f32 %v6071, 1.442695
  %v6327 = vpow.pop %v6326
  %v6328 = vmul.f32 %v5865, 1.442695
  %v6329 = vpow.pop %v6328
  %v6330 = vmul.f32 %v6074, 1.442695
  %v6331 = vpow.pop %v6330
  %6332 = vst [vmem:[#allocation4] sm:$0xff] %v6077
  %6333 = vst [vmem:[#allocation4 + $0x8] sm:$0xff] %v6079
  %6334 = vst [vmem:[#allocation4 + $0x10] sm:$0xff] %v6081
  %6335 = vst [vmem:[#allocation4 + $0x18] sm:$0xff] %v6083
  %6336 = vst [vmem:[#allocation4 + $0x20] sm:$0xff] %v6085
  %6337 = vst [vmem:[#allocation4 + $0x28] sm:$0xff] %v6087
  %6338 = vst [vmem:[#allocation4 + $0x30] sm:$0xff] %v6089
  %6339 = vst [vmem:[#allocation4 + $0x38] sm:$0xff] %v6091
  %6340 = vst [vmem:[#allocation4 + $0x40] sm:$0xff] %v6093
  %6341 = vst [vmem:[#allocation4 + $0x48] sm:$0xff] %v6095
  %6342 = vst [vmem:[#allocation4 + $0x50] sm:$0xff] %v6097
  %6343 = vst [vmem:[#allocation4 + $0x58] sm:$0xff] %v6099
  %6344 = vst [vmem:[#allocation4 + $0x60] sm:$0xff] %v6101
  %6345 = vst [vmem:[#allocation4 + $0x68] sm:$0xff] %v6103
  %6346 = vst [vmem:[#allocation4 + $0x70] sm:$0xff] %v6105
  %6347 = vst [vmem:[#allocation4 + $0x78] sm:$0xff] %v6107
  %6348 = vst [vmem:[#allocation4 + $0x80] sm:$0xff] %v6109
  %6349 = vst [vmem:[#allocation4 + $0x88] sm:$0xff] %v6111
  %6350 = vst [vmem:[#allocation4 + $0x90] sm:$0xff] %v6113
  %6351 = vst [vmem:[#allocation4 + $0x98] sm:$0xff] %v6115
  %6352 = vst [vmem:[#allocation4 + $0xa0] sm:$0xff] %v6117
  %6353 = vst [vmem:[#allocation4 + $0xa8] sm:$0xff] %v6119
  %6354 = vst [vmem:[#allocation4 + $0xb0] sm:$0xff] %v6121
  %6355 = vst [vmem:[#allocation4 + $0xb8] sm:$0xff] %v6123
  %6356 = vst [vmem:[#allocation4 + $0xc0] sm:$0xff] %v6125
  %6357 = vst [vmem:[#allocation4 + $0xc8] sm:$0xff] %v6127
  %6358 = vst [vmem:[#allocation4 + $0xd0] sm:$0xff] %v6129
  %6359 = vst [vmem:[#allocation4 + $0xd8] sm:$0xff] %v6131
  %6360 = vst [vmem:[#allocation4 + $0xe0] sm:$0xff] %v6133
  %6361 = vst [vmem:[#allocation4 + $0xe8] sm:$0xff] %v6135
  %6362 = vst [vmem:[#allocation4 + $0xf0] sm:$0xff] %v6137
  %6363 = vst [vmem:[#allocation4 + $0xf8] sm:$0xff] %v6139
  %6364 = vst [vmem:[#allocation4 + $0x100] sm:$0xff] %v6141
  %6365 = vst [vmem:[#allocation4 + $0x108] sm:$0xff] %v6143
  %6366 = vst [vmem:[#allocation4 + $0x110] sm:$0xff] %v6145
  %6367 = vst [vmem:[#allocation4 + $0x118] sm:$0xff] %v6147
  %6368 = vst [vmem:[#allocation4 + $0x120] sm:$0xff] %v6149
  %6369 = vst [vmem:[#allocation4 + $0x128] sm:$0xff] %v6151
  %6370 = vst [vmem:[#allocation4 + $0x130] sm:$0xff] %v6153
  %6371 = vst [vmem:[#allocation4 + $0x138] sm:$0xff] %v6155
  %6372 = vst [vmem:[#allocation4 + $0x140] sm:$0xff] %v6157
  %6373 = vst [vmem:[#allocation4 + $0x148] sm:$0xff] %v6159
  %6374 = vst [vmem:[#allocation4 + $0x150] sm:$0xff] %v6161
  %6375 = vst [vmem:[#allocation4 + $0x158] sm:$0xff] %v6163
  %6376 = vst [vmem:[#allocation4 + $0x160] sm:$0xff] %v6165
  %6377 = vst [vmem:[#allocation4 + $0x168] sm:$0xff] %v6167
  %6378 = vst [vmem:[#allocation4 + $0x170] sm:$0xff] %v6169
  %6379 = vst [vmem:[#allocation4 + $0x178] sm:$0xff] %v6171
  %6380 = vst [vmem:[#allocation4 + $0x180] sm:$0xff] %v6173
  %6381 = vst [vmem:[#allocation4 + $0x188] sm:$0xff] %v6175
  %6382 = vst [vmem:[#allocation4 + $0x190] sm:$0xff] %v6177
  %6383 = vst [vmem:[#allocation4 + $0x198] sm:$0xff] %v6179
  %6384 = vst [vmem:[#allocation4 + $0x1a0] sm:$0xff] %v6181
  %6385 = vst [vmem:[#allocation4 + $0x1a8] sm:$0xff] %v6183
  %6386 = vst [vmem:[#allocation4 + $0x1b0] sm:$0xff] %v6185
  %6387 = vst [vmem:[#allocation4 + $0x1b8] sm:$0xff] %v6187
  %6388 = vst [vmem:[#allocation4 + $0x1c0] sm:$0xff] %v6189
  %6389 = vst [vmem:[#allocation4 + $0x1c8] sm:$0xff] %v6191
  %6390 = vst [vmem:[#allocation4 + $0x1d0] sm:$0xff] %v6193
  %6391 = vst [vmem:[#allocation4 + $0x1d8] sm:$0xff] %v6195
  %6392 = vst [vmem:[#allocation4 + $0x1e0] sm:$0xff] %v6197
  %6393 = vst [vmem:[#allocation4 + $0x1e8] sm:$0xff] %v6199
  %6394 = vst [vmem:[#allocation4 + $0x1f0] sm:$0xff] %v6201
  %6395 = vst [vmem:[#allocation4 + $0x1f8] sm:$0xff] %v6203
  %6396 = vst [vmem:[#allocation4 + $0x200] sm:$0xff] %v6205
  %6397 = vst [vmem:[#allocation4 + $0x208] sm:$0xff] %v6207
  %6398 = vst [vmem:[#allocation4 + $0x210] sm:$0xff] %v6209
  %6399 = vst [vmem:[#allocation4 + $0x218] sm:$0xff] %v6211
  %6400 = vst [vmem:[#allocation4 + $0x220] sm:$0xff] %v6213
  %6401 = vst [vmem:[#allocation4 + $0x228] sm:$0xff] %v6215
  %6402 = vst [vmem:[#allocation4 + $0x230] sm:$0xff] %v6217
  %6403 = vst [vmem:[#allocation4 + $0x238] sm:$0xff] %v6219
  %6404 = vst [vmem:[#allocation4 + $0x240] sm:$0xff] %v6221
  %6405 = vst [vmem:[#allocation4 + $0x248] sm:$0xff] %v6223
  %6406 = vst [vmem:[#allocation4 + $0x250] sm:$0xff] %v6225
  %6407 = vst [vmem:[#allocation4 + $0x258] sm:$0xff] %v6227
  %6408 = vst [vmem:[#allocation4 + $0x260] sm:$0xff] %v6229
  %6409 = vst [vmem:[#allocation4 + $0x268] sm:$0xff] %v6231
  %6410 = vst [vmem:[#allocation4 + $0x270] sm:$0xff] %v6233
  %6411 = vst [vmem:[#allocation4 + $0x278] sm:$0xff] %v6235
  %6412 = vst [vmem:[#allocation4 + $0x280] sm:$0xff] %v6237
  %6413 = vst [vmem:[#allocation4 + $0x288] sm:$0xff] %v6239
  %6414 = vst [vmem:[#allocation4 + $0x290] sm:$0xff] %v6241
  %6415 = vst [vmem:[#allocation4 + $0x298] sm:$0xff] %v6243
  %6416 = vst [vmem:[#allocation4 + $0x2a0] sm:$0xff] %v6245
  %6417 = vst [vmem:[#allocation4 + $0x2a8] sm:$0xff] %v6247
  %6418 = vst [vmem:[#allocation4 + $0x2b0] sm:$0xff] %v6249
  %6419 = vst [vmem:[#allocation4 + $0x2b8] sm:$0xff] %v6251
  %6420 = vst [vmem:[#allocation4 + $0x2c0] sm:$0xff] %v6253
  %6421 = vst [vmem:[#allocation4 + $0x2c8] sm:$0xff] %v6255
  %6422 = vst [vmem:[#allocation4 + $0x2d0] sm:$0xff] %v6257
  %6423 = vst [vmem:[#allocation4 + $0x2d8] sm:$0xff] %v6259
  %6424 = vst [vmem:[#allocation4 + $0x2e0] sm:$0xff] %v6261
  %6425 = vst [vmem:[#allocation4 + $0x2e8] sm:$0xff] %v6263
  %6426 = vst [vmem:[#allocation4 + $0x2f0] sm:$0xff] %v6265
  %6427 = vst [vmem:[#allocation4 + $0x2f8] sm:$0xff] %v6267
  %6428 = vst [vmem:[#allocation4 + $0x300] sm:$0xff] %v6269
  %6429 = vst [vmem:[#allocation4 + $0x308] sm:$0xff] %v6271
  %6430 = vst [vmem:[#allocation4 + $0x310] sm:$0xff] %v6273
  %6431 = vst [vmem:[#allocation4 + $0x318] sm:$0xff] %v6275
  %6432 = vst [vmem:[#allocation4 + $0x320] sm:$0xff] %v6277
  %6433 = vst [vmem:[#allocation4 + $0x328] sm:$0xff] %v6279
  %6434 = vst [vmem:[#allocation4 + $0x330] sm:$0xff] %v6281
  %6435 = vst [vmem:[#allocation4 + $0x338] sm:$0xff] %v6283
  %6436 = vst [vmem:[#allocation4 + $0x340] sm:$0xff] %v6285
  %6437 = vst [vmem:[#allocation4 + $0x348] sm:$0xff] %v6287
  %6438 = vst [vmem:[#allocation4 + $0x350] sm:$0xff] %v6289
  %6439 = vst [vmem:[#allocation4 + $0x358] sm:$0xff] %v6291
  %6440 = vst [vmem:[#allocation4 + $0x360] sm:$0xff] %v6293
  %6441 = vst [vmem:[#allocation4 + $0x368] sm:$0xff] %v6295
  %6442 = vst [vmem:[#allocation4 + $0x370] sm:$0xff] %v6297
  %6443 = vst [vmem:[#allocation4 + $0x378] sm:$0xff] %v6299
  %6444 = vst [vmem:[#allocation4 + $0x380] sm:$0xff] %v6301
  %6445 = vst [vmem:[#allocation4 + $0x388] sm:$0xff] %v6303
  %6446 = vst [vmem:[#allocation4 + $0x390] sm:$0xff] %v6305
  %6447 = vst [vmem:[#allocation4 + $0x398] sm:$0xff] %v6307
  %6448 = vst [vmem:[#allocation4 + $0x3a0] sm:$0xff] %v6309
  %6449 = vst [vmem:[#allocation4 + $0x3a8] sm:$0xff] %v6311
  %6450 = vst [vmem:[#allocation4 + $0x3b0] sm:$0xff] %v6313
  %6451 = vst [vmem:[#allocation4 + $0x3b8] sm:$0xff] %v6315
  %6452 = vst [vmem:[#allocation4 + $0x3c0] sm:$0xff] %v6317
  %6453 = vst [vmem:[#allocation4 + $0x3c8] sm:$0xff] %v6319
  %6454 = vst [vmem:[#allocation4 + $0x3d0] sm:$0xff] %v6321
  %6455 = vst [vmem:[#allocation4 + $0x3d8] sm:$0xff] %v6323
  %6456 = vst [vmem:[#allocation4 + $0x3e0] sm:$0xff] %v6325
  %6457 = vst [vmem:[#allocation4 + $0x3e8] sm:$0xff] %v6327
  %6458 = vst [vmem:[#allocation4 + $0x3f0] sm:$0xff] %v6329
  %6459 = vst [vmem:[#allocation4 + $0x3f8] sm:$0xff] %v6331
  %v6460 = vmul.f32 %v4426, %v3315
  %v6461 = vmul.f32 %v4427, %v3316
  %v6462 = vmul.f32 %v4428, %v3317
  %v6463 = vmul.f32 %v4429, %v3318
  %v6464 = vmul.f32 %v4430, %v3319
  %v6465 = vmul.f32 %v4431, %v3320
  %v6466 = vmul.f32 %v4432, %v3321
  %v6467 = vmul.f32 %v4433, %v3322
  %v6468 = vmul.f32 %v4434, %v3323
  %v6469 = vmul.f32 %v4435, %v3324
  %v6470 = vmul.f32 %v4436, %v3325
  %v6471 = vmul.f32 %v4437, %v3326
  %v6472 = vmul.f32 %v4438, %v3327
  %v6473 = vmul.f32 %v4439, %v3328
  %v6474 = vmul.f32 %v4440, %v3329
  %v6475 = vmul.f32 %v4441, %v3330
  %v6476 = vmul.f32 %v4442, %v3331
  %v6477 = vmul.f32 %v4443, %v3332
  %v6478 = vmul.f32 %v4444, %v3333
  %v6479 = vmul.f32 %v4445, %v3334
  %v6480 = vmul.f32 %v4446, %v3335
  %v6481 = vmul.f32 %v4447, %v3336
  %v6482 = vmul.f32 %v4448, %v3337
  %v6483 = vmul.f32 %v4449, %v3338
  %v6484 = vmul.f32 %v4450, %v3339
  %v6485 = vmul.f32 %v4451, %v3340
  %v6486 = vmul.f32 %v4452, %v3341
  %v6487 = vmul.f32 %v4453, %v3342
  %v6488 = vmul.f32 %v4454, %v3343
  %v6489 = vmul.f32 %v4455, %v3344
  %v6490 = vmul.f32 %v4456, %v3345
  %v6491 = vmul.f32 %v4457, %v3346
  %v6492 = vmul.f32 %v4458, %v3347
  %v6493 = vmul.f32 %v4459, %v3348
  %v6494 = vmul.f32 %v4460, %v3349
  %v6495 = vmul.f32 %v4461, %v3350
  %v6496 = vmul.f32 %v4462, %v3351
  %v6497 = vmul.f32 %v4463, %v3352
  %v6498 = vmul.f32 %v4464, %v3353
  %v6499 = vmul.f32 %v4465, %v3354
  %v6500 = vmul.f32 %v4466, %v3355
  %v6501 = vmul.f32 %v4467, %v3356
  %v6502 = vmul.f32 %v4468, %v3357
  %v6503 = vmul.f32 %v4469, %v3358
  %v6504 = vmul.f32 %v4470, %v3359
  %v6505 = vmul.f32 %v4471, %v3360
  %v6506 = vmul.f32 %v4472, %v3361
  %v6507 = vmul.f32 %v4473, %v3362
  %v6508 = vmul.f32 %v4474, %v3363
  %v6509 = vmul.f32 %v4475, %v3364
  %v6510 = vmul.f32 %v4476, %v3365
  %v6511 = vmul.f32 %v4477, %v3366
  %v6512 = vmul.f32 %v4478, %v3367
  %v6513 = vmul.f32 %v4479, %v3368
  %v6514 = vmul.f32 %v4480, %v3369
  %v6515 = vmul.f32 %v4481, %v3370
  %v6516 = vmul.f32 %v4482, %v3371
  %v6517 = vmul.f32 %v4483, %v3372
  %v6518 = vmul.f32 %v4484, %v3373
  %v6519 = vmul.f32 %v4485, %v3374
  %v6520 = vmul.f32 %v4486, %v3375
  %v6521 = vmul.f32 %v4487, %v3376
  %v6522 = vmul.f32 %v4488, %v3377
  %v6523 = vmul.f32 %v4489, %v3378
  %v6524 = vld [vmem:[%s10] sm:$0xff]
  %v6525 = vld [vmem:[%s10 + $0x8] sm:$0xff]
  %v6526 = vld [vmem:[%s10 + $0x10] sm:$0xff]
  %v6527 = vld [vmem:[%s10 + $0x18] sm:$0xff]
  %v6529 = vsel %vm2078, %v6460, 0
  %v6532 = vsel %vm2078, %v6461, 0
  %v6535 = vsel %vm2078, %v6462, 0
  %v6538 = vsel %vm2078, %v6463, 0
  %v6541 = vsel %vm2078, %v6464, 0
  %v6544 = vsel %vm2078, %v6465, 0
  %v6547 = vsel %vm2078, %v6466, 0
  %v6550 = vsel %vm2078, %v6467, 0
  %v6553 = vsel %vm2078, %v6468, 0
  %v6556 = vsel %vm2078, %v6469, 0
  %v6559 = vsel %vm2078, %v6470, 0
  %v6562 = vsel %vm2078, %v6471, 0
  %v6565 = vsel %vm2078, %v6472, 0
  %v6568 = vsel %vm2078, %v6473, 0
  %v6571 = vsel %vm2078, %v6474, 0
  %v6574 = vsel %vm2078, %v6475, 0
  %v6577 = vsel %vm2078, %v6476, 0
  %v6580 = vsel %vm2078, %v6477, 0
  %v6583 = vsel %vm2078, %v6478, 0
  %v6586 = vsel %vm2078, %v6479, 0
  %v6589 = vsel %vm2078, %v6480, 0
  %v6592 = vsel %vm2078, %v6481, 0
  %v6595 = vsel %vm2078, %v6482, 0
  %v6598 = vsel %vm2078, %v6483, 0
  %v6601 = vsel %vm2078, %v6484, 0
  %v6604 = vsel %vm2078, %v6485, 0
  %v6607 = vsel %vm2078, %v6486, 0
  %v6610 = vsel %vm2078, %v6487, 0
  %v6613 = vsel %vm2078, %v6488, 0
  %v6616 = vsel %vm2078, %v6489, 0
  %v6619 = vsel %vm2078, %v6490, 0
  %v6622 = vsel %vm2078, %v6491, 0
  %v6625 = vsel %vm2078, %v6492, 0
  %v6628 = vsel %vm2078, %v6493, 0
  %v6631 = vsel %vm2078, %v6494, 0
  %v6634 = vsel %vm2078, %v6495, 0
  %v6637 = vsel %vm2078, %v6496, 0
  %v6640 = vsel %vm2078, %v6497, 0
  %v6643 = vsel %vm2078, %v6498, 0
  %v6646 = vsel %vm2078, %v6499, 0
  %v6649 = vsel %vm2078, %v6500, 0
  %v6652 = vsel %vm2078, %v6501, 0
  %v6655 = vsel %vm2078, %v6502, 0
  %v6658 = vsel %vm2078, %v6503, 0
  %v6661 = vsel %vm2078, %v6504, 0
  %v6664 = vsel %vm2078, %v6505, 0
  %v6667 = vsel %vm2078, %v6506, 0
  %v6670 = vsel %vm2078, %v6507, 0
  %v6673 = vsel %vm2078, %v6508, 0
  %v6676 = vsel %vm2078, %v6509, 0
  %v6679 = vsel %vm2078, %v6510, 0
  %v6682 = vsel %vm2078, %v6511, 0
  %v6685 = vsel %vm2078, %v6512, 0
  %v6688 = vsel %vm2078, %v6513, 0
  %v6691 = vsel %vm2078, %v6514, 0
  %v6694 = vsel %vm2078, %v6515, 0
  %v6697 = vsel %vm2078, %v6516, 0
  %v6700 = vsel %vm2078, %v6517, 0
  %v6703 = vsel %vm2078, %v6518, 0
  %v6706 = vsel %vm2078, %v6519, 0
  %v6709 = vsel %vm2078, %v6520, 0
  %v6712 = vsel %vm2078, %v6521, 0
  %v6715 = vsel %vm2078, %v6522, 0
  %v6718 = vsel %vm2078, %v6523, 0
  %6720 = vmatpush.msra.mxu0 0.0
  %6721 = vmatpush.msra.mxu0 0.0
  %6722 = vmatpush.msra.mxu0 0.0
  %6723 = vmatpush.msra.mxu0 0.0
  %6724 = vmatpush.msra.mxu0 0.0
  %6725 = vmatpush.msra.mxu0 0.0
  %6726 = vmatpush.msra.mxu0 0.0
  %6727 = vmatpush.msra.mxu0 0.0
  %6728 = vmatpush.msra.mxu0 0.0
  %6729 = vmatpush.msra.mxu0 0.0
  %6730 = vmatpush.msra.mxu0 0.0
  %6731 = vmatpush.msra.mxu0 0.0
  %6732 = vmatpush.msra.mxu0 0.0
  %6733 = vmatpush.msra.mxu0 0.0
  %6734 = vmatpush.msra.mxu0 %v6526
  %6735 = vmatpush.msra.mxu0 %v6524
  %6736 = vmatmul.f32.gmra.mxu0 %v6529
  %v6737 = vpop.f32.mrf.mxu0
  %v6738 = vadd.f32 0.0, %v6737
  %6739 = vmatmul.f32.gmra.mxu0 %v6532
  %v6740 = vpop.f32.mrf.mxu0
  %v6741 = vadd.f32 0.0, %v6740
  %6742 = vmatmul.f32.gmra.mxu0 %v6535
  %v6743 = vpop.f32.mrf.mxu0
  %v6744 = vadd.f32 0.0, %v6743
  %6745 = vmatmul.f32.gmra.mxu0 %v6538
  %v6746 = vpop.f32.mrf.mxu0
  %v6747 = vadd.f32 0.0, %v6746
  %6748 = vmatmul.f32.gmra.mxu0 %v6541
  %v6749 = vpop.f32.mrf.mxu0
  %v6750 = vadd.f32 0.0, %v6749
  %6751 = vmatmul.f32.gmra.mxu0 %v6544
  %v6752 = vpop.f32.mrf.mxu0
  %v6753 = vadd.f32 0.0, %v6752
  %6754 = vmatmul.f32.gmra.mxu0 %v6547
  %v6755 = vpop.f32.mrf.mxu0
  %v6756 = vadd.f32 0.0, %v6755
  %6757 = vmatmul.f32.gmra.mxu0 %v6550
  %v6758 = vpop.f32.mrf.mxu0
  %v6759 = vadd.f32 0.0, %v6758
  %6760 = vmatmul.f32.gmra.mxu0 %v6553
  %v6761 = vpop.f32.mrf.mxu0
  %v6762 = vadd.f32 0.0, %v6761
  %6763 = vmatmul.f32.gmra.mxu0 %v6556
  %v6764 = vpop.f32.mrf.mxu0
  %v6765 = vadd.f32 0.0, %v6764
  %6766 = vmatmul.f32.gmra.mxu0 %v6559
  %v6767 = vpop.f32.mrf.mxu0
  %v6768 = vadd.f32 0.0, %v6767
  %6769 = vmatmul.f32.gmra.mxu0 %v6562
  %v6770 = vpop.f32.mrf.mxu0
  %v6771 = vadd.f32 0.0, %v6770
  %6772 = vmatmul.f32.gmra.mxu0 %v6565
  %v6773 = vpop.f32.mrf.mxu0
  %v6774 = vadd.f32 0.0, %v6773
  %6775 = vmatmul.f32.gmra.mxu0 %v6568
  %v6776 = vpop.f32.mrf.mxu0
  %v6777 = vadd.f32 0.0, %v6776
  %6778 = vmatmul.f32.gmra.mxu0 %v6571
  %v6779 = vpop.f32.mrf.mxu0
  %v6780 = vadd.f32 0.0, %v6779
  %6781 = vmatmul.f32.gmra.mxu0 %v6574
  %v6782 = vpop.f32.mrf.mxu0
  %v6783 = vadd.f32 0.0, %v6782
  %6784 = vmatmul.f32.gmra.mxu0 %v6577
  %v6785 = vpop.f32.mrf.mxu0
  %v6786 = vadd.f32 0.0, %v6785
  %6787 = vmatmul.f32.gmra.mxu0 %v6580
  %v6788 = vpop.f32.mrf.mxu0
  %v6789 = vadd.f32 0.0, %v6788
  %6790 = vmatmul.f32.gmra.mxu0 %v6583
  %v6791 = vpop.f32.mrf.mxu0
  %v6792 = vadd.f32 0.0, %v6791
  %6793 = vmatmul.f32.gmra.mxu0 %v6586
  %v6794 = vpop.f32.mrf.mxu0
  %v6795 = vadd.f32 0.0, %v6794
  %6796 = vmatmul.f32.gmra.mxu0 %v6589
  %v6797 = vpop.f32.mrf.mxu0
  %v6798 = vadd.f32 0.0, %v6797
  %6799 = vmatmul.f32.gmra.mxu0 %v6592
  %v6800 = vpop.f32.mrf.mxu0
  %v6801 = vadd.f32 0.0, %v6800
  %6802 = vmatmul.f32.gmra.mxu0 %v6595
  %v6803 = vpop.f32.mrf.mxu0
  %v6804 = vadd.f32 0.0, %v6803
  %6805 = vmatmul.f32.gmra.mxu0 %v6598
  %v6806 = vpop.f32.mrf.mxu0
  %v6807 = vadd.f32 0.0, %v6806
  %6808 = vmatmul.f32.gmra.mxu0 %v6601
  %v6809 = vpop.f32.mrf.mxu0
  %v6810 = vadd.f32 0.0, %v6809
  %6811 = vmatmul.f32.gmra.mxu0 %v6604
  %v6812 = vpop.f32.mrf.mxu0
  %v6813 = vadd.f32 0.0, %v6812
  %6814 = vmatmul.f32.gmra.mxu0 %v6607
  %v6815 = vpop.f32.mrf.mxu0
  %v6816 = vadd.f32 0.0, %v6815
  %6817 = vmatmul.f32.gmra.mxu0 %v6610
  %v6818 = vpop.f32.mrf.mxu0
  %v6819 = vadd.f32 0.0, %v6818
  %6820 = vmatmul.f32.gmra.mxu0 %v6613
  %v6821 = vpop.f32.mrf.mxu0
  %v6822 = vadd.f32 0.0, %v6821
  %6823 = vmatmul.f32.gmra.mxu0 %v6616
  %v6824 = vpop.f32.mrf.mxu0
  %v6825 = vadd.f32 0.0, %v6824
  %6826 = vmatmul.f32.gmra.mxu0 %v6619
  %v6827 = vpop.f32.mrf.mxu0
  %v6828 = vadd.f32 0.0, %v6827
  %6829 = vmatmul.f32.gmra.mxu0 %v6622
  %v6830 = vpop.f32.mrf.mxu0
  %v6831 = vadd.f32 0.0, %v6830
  %6832 = vmatmul.f32.gmra.mxu0 %v6625
  %v6833 = vpop.f32.mrf.mxu0
  %v6834 = vadd.f32 0.0, %v6833
  %6835 = vmatmul.f32.gmra.mxu0 %v6628
  %v6836 = vpop.f32.mrf.mxu0
  %v6837 = vadd.f32 0.0, %v6836
  %6838 = vmatmul.f32.gmra.mxu0 %v6631
  %v6839 = vpop.f32.mrf.mxu0
  %v6840 = vadd.f32 0.0, %v6839
  %6841 = vmatmul.f32.gmra.mxu0 %v6634
  %v6842 = vpop.f32.mrf.mxu0
  %v6843 = vadd.f32 0.0, %v6842
  %6844 = vmatmul.f32.gmra.mxu0 %v6637
  %v6845 = vpop.f32.mrf.mxu0
  %v6846 = vadd.f32 0.0, %v6845
  %6847 = vmatmul.f32.gmra.mxu0 %v6640
  %v6848 = vpop.f32.mrf.mxu0
  %v6849 = vadd.f32 0.0, %v6848
  %6850 = vmatmul.f32.gmra.mxu0 %v6643
  %v6851 = vpop.f32.mrf.mxu0
  %v6852 = vadd.f32 0.0, %v6851
  %6853 = vmatmul.f32.gmra.mxu0 %v6646
  %v6854 = vpop.f32.mrf.mxu0
  %v6855 = vadd.f32 0.0, %v6854
  %6856 = vmatmul.f32.gmra.mxu0 %v6649
  %v6857 = vpop.f32.mrf.mxu0
  %v6858 = vadd.f32 0.0, %v6857
  %6859 = vmatmul.f32.gmra.mxu0 %v6652
  %v6860 = vpop.f32.mrf.mxu0
  %v6861 = vadd.f32 0.0, %v6860
  %6862 = vmatmul.f32.gmra.mxu0 %v6655
  %v6863 = vpop.f32.mrf.mxu0
  %v6864 = vadd.f32 0.0, %v6863
  %6865 = vmatmul.f32.gmra.mxu0 %v6658
  %v6866 = vpop.f32.mrf.mxu0
  %v6867 = vadd.f32 0.0, %v6866
  %6868 = vmatmul.f32.gmra.mxu0 %v6661
  %v6869 = vpop.f32.mrf.mxu0
  %v6870 = vadd.f32 0.0, %v6869
  %6871 = vmatmul.f32.gmra.mxu0 %v6664
  %v6872 = vpop.f32.mrf.mxu0
  %v6873 = vadd.f32 0.0, %v6872
  %6874 = vmatmul.f32.gmra.mxu0 %v6667
  %v6875 = vpop.f32.mrf.mxu0
  %v6876 = vadd.f32 0.0, %v6875
  %6877 = vmatmul.f32.gmra.mxu0 %v6670
  %v6878 = vpop.f32.mrf.mxu0
  %v6879 = vadd.f32 0.0, %v6878
  %6880 = vmatmul.f32.gmra.mxu0 %v6673
  %v6881 = vpop.f32.mrf.mxu0
  %v6882 = vadd.f32 0.0, %v6881
  %6883 = vmatmul.f32.gmra.mxu0 %v6676
  %v6884 = vpop.f32.mrf.mxu0
  %v6885 = vadd.f32 0.0, %v6884
  %6886 = vmatmul.f32.gmra.mxu0 %v6679
  %v6887 = vpop.f32.mrf.mxu0
  %v6888 = vadd.f32 0.0, %v6887
  %6889 = vmatmul.f32.gmra.mxu0 %v6682
  %v6890 = vpop.f32.mrf.mxu0
  %v6891 = vadd.f32 0.0, %v6890
  %6892 = vmatmul.f32.gmra.mxu0 %v6685
  %v6893 = vpop.f32.mrf.mxu0
  %v6894 = vadd.f32 0.0, %v6893
  %6895 = vmatmul.f32.gmra.mxu0 %v6688
  %v6896 = vpop.f32.mrf.mxu0
  %v6897 = vadd.f32 0.0, %v6896
  %6898 = vmatmul.f32.gmra.mxu0 %v6691
  %v6899 = vpop.f32.mrf.mxu0
  %v6900 = vadd.f32 0.0, %v6899
  %6901 = vmatmul.f32.gmra.mxu0 %v6694
  %v6902 = vpop.f32.mrf.mxu0
  %v6903 = vadd.f32 0.0, %v6902
  %6904 = vmatmul.f32.gmra.mxu0 %v6697
  %v6905 = vpop.f32.mrf.mxu0
  %v6906 = vadd.f32 0.0, %v6905
  %6907 = vmatmul.f32.gmra.mxu0 %v6700
  %v6908 = vpop.f32.mrf.mxu0
  %v6909 = vadd.f32 0.0, %v6908
  %6910 = vmatmul.f32.gmra.mxu0 %v6703
  %v6911 = vpop.f32.mrf.mxu0
  %v6912 = vadd.f32 0.0, %v6911
  %6913 = vmatmul.f32.gmra.mxu0 %v6706
  %v6914 = vpop.f32.mrf.mxu0
  %v6915 = vadd.f32 0.0, %v6914
  %6916 = vmatmul.f32.gmra.mxu0 %v6709
  %v6917 = vpop.f32.mrf.mxu0
  %v6918 = vadd.f32 0.0, %v6917
  %6919 = vmatmul.f32.gmra.mxu0 %v6712
  %v6920 = vpop.f32.mrf.mxu0
  %v6921 = vadd.f32 0.0, %v6920
  %6922 = vmatmul.f32.gmra.mxu0 %v6715
  %v6923 = vpop.f32.mrf.mxu0
  %v6924 = vadd.f32 0.0, %v6923
  %6925 = vmatmul.f32.gmra.mxu0 %v6718
  %v6926 = vpop.f32.mrf.mxu0
  %v6927 = vadd.f32 0.0, %v6926
  %6928 = vdwg.mxu0
  %6929 = vmatpush.msra.mxu0 0.0
  %6930 = vmatpush.msra.mxu0 0.0
  %6931 = vmatpush.msra.mxu0 0.0
  %6932 = vmatpush.msra.mxu0 0.0
  %6933 = vmatpush.msra.mxu0 0.0
  %6934 = vmatpush.msra.mxu0 0.0
  %6935 = vmatpush.msra.mxu0 0.0
  %6936 = vmatpush.msra.mxu0 0.0
  %6937 = vmatpush.msra.mxu0 0.0
  %6938 = vmatpush.msra.mxu0 0.0
  %6939 = vmatpush.msra.mxu0 0.0
  %6940 = vmatpush.msra.mxu0 0.0
  %6941 = vmatpush.msra.mxu0 0.0
  %6942 = vmatpush.msra.mxu0 0.0
  %6943 = vmatpush.msra.mxu0 %v6527
  %6944 = vmatpush.msra.mxu0 %v6525
  %6945 = vmatmul.f32.gmra.mxu0 %v6529
  %v6946 = vpop.f32.mrf.mxu0
  %v6947 = vadd.f32 0.0, %v6946
  %6948 = vmatmul.f32.gmra.mxu0 %v6532
  %v6949 = vpop.f32.mrf.mxu0
  %v6950 = vadd.f32 0.0, %v6949
  %6951 = vmatmul.f32.gmra.mxu0 %v6535
  %v6952 = vpop.f32.mrf.mxu0
  %v6953 = vadd.f32 0.0, %v6952
  %6954 = vmatmul.f32.gmra.mxu0 %v6538
  %v6955 = vpop.f32.mrf.mxu0
  %v6956 = vadd.f32 0.0, %v6955
  %6957 = vmatmul.f32.gmra.mxu0 %v6541
  %v6958 = vpop.f32.mrf.mxu0
  %v6959 = vadd.f32 0.0, %v6958
  %6960 = vmatmul.f32.gmra.mxu0 %v6544
  %v6961 = vpop.f32.mrf.mxu0
  %v6962 = vadd.f32 0.0, %v6961
  %6963 = vmatmul.f32.gmra.mxu0 %v6547
  %v6964 = vpop.f32.mrf.mxu0
  %v6965 = vadd.f32 0.0, %v6964
  %6966 = vmatmul.f32.gmra.mxu0 %v6550
  %v6967 = vpop.f32.mrf.mxu0
  %v6968 = vadd.f32 0.0, %v6967
  %6969 = vmatmul.f32.gmra.mxu0 %v6553
  %v6970 = vpop.f32.mrf.mxu0
  %v6971 = vadd.f32 0.0, %v6970
  %6972 = vmatmul.f32.gmra.mxu0 %v6556
  %v6973 = vpop.f32.mrf.mxu0
  %v6974 = vadd.f32 0.0, %v6973
  %6975 = vmatmul.f32.gmra.mxu0 %v6559
  %v6976 = vpop.f32.mrf.mxu0
  %v6977 = vadd.f32 0.0, %v6976
  %6978 = vmatmul.f32.gmra.mxu0 %v6562
  %v6979 = vpop.f32.mrf.mxu0
  %v6980 = vadd.f32 0.0, %v6979
  %6981 = vmatmul.f32.gmra.mxu0 %v6565
  %v6982 = vpop.f32.mrf.mxu0
  %v6983 = vadd.f32 0.0, %v6982
  %6984 = vmatmul.f32.gmra.mxu0 %v6568
  %v6985 = vpop.f32.mrf.mxu0
  %v6986 = vadd.f32 0.0, %v6985
  %6987 = vmatmul.f32.gmra.mxu0 %v6571
  %v6988 = vpop.f32.mrf.mxu0
  %v6989 = vadd.f32 0.0, %v6988
  %6990 = vmatmul.f32.gmra.mxu0 %v6574
  %v6991 = vpop.f32.mrf.mxu0
  %v6992 = vadd.f32 0.0, %v6991
  %6993 = vmatmul.f32.gmra.mxu0 %v6577
  %v6994 = vpop.f32.mrf.mxu0
  %v6995 = vadd.f32 0.0, %v6994
  %6996 = vmatmul.f32.gmra.mxu0 %v6580
  %v6997 = vpop.f32.mrf.mxu0
  %v6998 = vadd.f32 0.0, %v6997
  %6999 = vmatmul.f32.gmra.mxu0 %v6583
  %v7000 = vpop.f32.mrf.mxu0
  %v7001 = vadd.f32 0.0, %v7000
  %7002 = vmatmul.f32.gmra.mxu0 %v6586
  %v7003 = vpop.f32.mrf.mxu0
  %v7004 = vadd.f32 0.0, %v7003
  %7005 = vmatmul.f32.gmra.mxu0 %v6589
  %v7006 = vpop.f32.mrf.mxu0
  %v7007 = vadd.f32 0.0, %v7006
  %7008 = vmatmul.f32.gmra.mxu0 %v6592
  %v7009 = vpop.f32.mrf.mxu0
  %v7010 = vadd.f32 0.0, %v7009
  %7011 = vmatmul.f32.gmra.mxu0 %v6595
  %v7012 = vpop.f32.mrf.mxu0
  %v7013 = vadd.f32 0.0, %v7012
  %7014 = vmatmul.f32.gmra.mxu0 %v6598
  %v7015 = vpop.f32.mrf.mxu0
  %v7016 = vadd.f32 0.0, %v7015
  %7017 = vmatmul.f32.gmra.mxu0 %v6601
  %v7018 = vpop.f32.mrf.mxu0
  %v7019 = vadd.f32 0.0, %v7018
  %7020 = vmatmul.f32.gmra.mxu0 %v6604
  %v7021 = vpop.f32.mrf.mxu0
  %v7022 = vadd.f32 0.0, %v7021
  %7023 = vmatmul.f32.gmra.mxu0 %v6607
  %v7024 = vpop.f32.mrf.mxu0
  %v7025 = vadd.f32 0.0, %v7024
  %7026 = vmatmul.f32.gmra.mxu0 %v6610
  %v7027 = vpop.f32.mrf.mxu0
  %v7028 = vadd.f32 0.0, %v7027
  %7029 = vmatmul.f32.gmra.mxu0 %v6613
  %v7030 = vpop.f32.mrf.mxu0
  %v7031 = vadd.f32 0.0, %v7030
  %7032 = vmatmul.f32.gmra.mxu0 %v6616
  %v7033 = vpop.f32.mrf.mxu0
  %v7034 = vadd.f32 0.0, %v7033
  %7035 = vmatmul.f32.gmra.mxu0 %v6619
  %v7036 = vpop.f32.mrf.mxu0
  %v7037 = vadd.f32 0.0, %v7036
  %7038 = vmatmul.f32.gmra.mxu0 %v6622
  %v7039 = vpop.f32.mrf.mxu0
  %v7040 = vadd.f32 0.0, %v7039
  %7041 = vmatmul.f32.gmra.mxu0 %v6625
  %v7042 = vpop.f32.mrf.mxu0
  %v7043 = vadd.f32 0.0, %v7042
  %7044 = vmatmul.f32.gmra.mxu0 %v6628
  %v7045 = vpop.f32.mrf.mxu0
  %v7046 = vadd.f32 0.0, %v7045
  %7047 = vmatmul.f32.gmra.mxu0 %v6631
  %v7048 = vpop.f32.mrf.mxu0
  %v7049 = vadd.f32 0.0, %v7048
  %7050 = vmatmul.f32.gmra.mxu0 %v6634
  %v7051 = vpop.f32.mrf.mxu0
  %v7052 = vadd.f32 0.0, %v7051
  %7053 = vmatmul.f32.gmra.mxu0 %v6637
  %v7054 = vpop.f32.mrf.mxu0
  %v7055 = vadd.f32 0.0, %v7054
  %7056 = vmatmul.f32.gmra.mxu0 %v6640
  %v7057 = vpop.f32.mrf.mxu0
  %v7058 = vadd.f32 0.0, %v7057
  %7059 = vmatmul.f32.gmra.mxu0 %v6643
  %v7060 = vpop.f32.mrf.mxu0
  %v7061 = vadd.f32 0.0, %v7060
  %7062 = vmatmul.f32.gmra.mxu0 %v6646
  %v7063 = vpop.f32.mrf.mxu0
  %v7064 = vadd.f32 0.0, %v7063
  %7065 = vmatmul.f32.gmra.mxu0 %v6649
  %v7066 = vpop.f32.mrf.mxu0
  %v7067 = vadd.f32 0.0, %v7066
  %7068 = vmatmul.f32.gmra.mxu0 %v6652
  %v7069 = vpop.f32.mrf.mxu0
  %v7070 = vadd.f32 0.0, %v7069
  %7071 = vmatmul.f32.gmra.mxu0 %v6655
  %v7072 = vpop.f32.mrf.mxu0
  %v7073 = vadd.f32 0.0, %v7072
  %7074 = vmatmul.f32.gmra.mxu0 %v6658
  %v7075 = vpop.f32.mrf.mxu0
  %v7076 = vadd.f32 0.0, %v7075
  %7077 = vmatmul.f32.gmra.mxu0 %v6661
  %v7078 = vpop.f32.mrf.mxu0
  %v7079 = vadd.f32 0.0, %v7078
  %7080 = vmatmul.f32.gmra.mxu0 %v6664
  %v7081 = vpop.f32.mrf.mxu0
  %v7082 = vadd.f32 0.0, %v7081
  %7083 = vmatmul.f32.gmra.mxu0 %v6667
  %v7084 = vpop.f32.mrf.mxu0
  %v7085 = vadd.f32 0.0, %v7084
  %7086 = vmatmul.f32.gmra.mxu0 %v6670
  %v7087 = vpop.f32.mrf.mxu0
  %v7088 = vadd.f32 0.0, %v7087
  %7089 = vmatmul.f32.gmra.mxu0 %v6673
  %v7090 = vpop.f32.mrf.mxu0
  %v7091 = vadd.f32 0.0, %v7090
  %7092 = vmatmul.f32.gmra.mxu0 %v6676
  %v7093 = vpop.f32.mrf.mxu0
  %v7094 = vadd.f32 0.0, %v7093
  %7095 = vmatmul.f32.gmra.mxu0 %v6679
  %v7096 = vpop.f32.mrf.mxu0
  %v7097 = vadd.f32 0.0, %v7096
  %7098 = vmatmul.f32.gmra.mxu0 %v6682
  %v7099 = vpop.f32.mrf.mxu0
  %v7100 = vadd.f32 0.0, %v7099
  %7101 = vmatmul.f32.gmra.mxu0 %v6685
  %v7102 = vpop.f32.mrf.mxu0
  %v7103 = vadd.f32 0.0, %v7102
  %7104 = vmatmul.f32.gmra.mxu0 %v6688
  %v7105 = vpop.f32.mrf.mxu0
  %v7106 = vadd.f32 0.0, %v7105
  %7107 = vmatmul.f32.gmra.mxu0 %v6691
  %v7108 = vpop.f32.mrf.mxu0
  %v7109 = vadd.f32 0.0, %v7108
  %7110 = vmatmul.f32.gmra.mxu0 %v6694
  %v7111 = vpop.f32.mrf.mxu0
  %v7112 = vadd.f32 0.0, %v7111
  %7113 = vmatmul.f32.gmra.mxu0 %v6697
  %v7114 = vpop.f32.mrf.mxu0
  %v7115 = vadd.f32 0.0, %v7114
  %7116 = vmatmul.f32.gmra.mxu0 %v6700
  %v7117 = vpop.f32.mrf.mxu0
  %v7118 = vadd.f32 0.0, %v7117
  %7119 = vmatmul.f32.gmra.mxu0 %v6703
  %v7120 = vpop.f32.mrf.mxu0
  %v7121 = vadd.f32 0.0, %v7120
  %7122 = vmatmul.f32.gmra.mxu0 %v6706
  %v7123 = vpop.f32.mrf.mxu0
  %v7124 = vadd.f32 0.0, %v7123
  %7125 = vmatmul.f32.gmra.mxu0 %v6709
  %v7126 = vpop.f32.mrf.mxu0
  %v7127 = vadd.f32 0.0, %v7126
  %7128 = vmatmul.f32.gmra.mxu0 %v6712
  %v7129 = vpop.f32.mrf.mxu0
  %v7130 = vadd.f32 0.0, %v7129
  %7131 = vmatmul.f32.gmra.mxu0 %v6715
  %v7132 = vpop.f32.mrf.mxu0
  %v7133 = vadd.f32 0.0, %v7132
  %7134 = vmatmul.f32.gmra.mxu0 %v6718
  %v7135 = vpop.f32.mrf.mxu0
  %v7136 = vadd.f32 0.0, %v7135
  %7137 = vdwg.mxu0
  %v7138 = vmul.f32 %v6738, %v4516
  %v7139 = vmul.f32 %v6947, %v4725
  %v7140 = vmul.f32 %v6741, %v4519
  %v7141 = vmul.f32 %v6950, %v4728
  %v7142 = vmul.f32 %v6744, %v4522
  %v7143 = vmul.f32 %v6953, %v4731
  %v7144 = vmul.f32 %v6747, %v4525
  %v7145 = vmul.f32 %v6956, %v4734
  %v7146 = vmul.f32 %v6750, %v4528
  %v7147 = vmul.f32 %v6959, %v4737
  %v7148 = vmul.f32 %v6753, %v4531
  %v7149 = vmul.f32 %v6962, %v4740
  %v7150 = vmul.f32 %v6756, %v4534
  %v7151 = vmul.f32 %v6965, %v4743
  %v7152 = vmul.f32 %v6759, %v4537
  %v7153 = vmul.f32 %v6968, %v4746
  %v7154 = vmul.f32 %v6762, %v4540
  %v7155 = vmul.f32 %v6971, %v4749
  %v7156 = vmul.f32 %v6765, %v4543
  %v7157 = vmul.f32 %v6974, %v4752
  %v7158 = vmul.f32 %v6768, %v4546
  %v7159 = vmul.f32 %v6977, %v4755
  %v7160 = vmul.f32 %v6771, %v4549
  %v7161 = vmul.f32 %v6980, %v4758
  %v7162 = vmul.f32 %v6774, %v4552
  %v7163 = vmul.f32 %v6983, %v4761
  %v7164 = vmul.f32 %v6777, %v4555
  %v7165 = vmul.f32 %v6986, %v4764
  %v7166 = vmul.f32 %v6780, %v4558
  %v7167 = vmul.f32 %v6989, %v4767
  %v7168 = vmul.f32 %v6783, %v4561
  %v7169 = vmul.f32 %v6992, %v4770
  %v7170 = vmul.f32 %v6786, %v4564
  %v7171 = vmul.f32 %v6995, %v4773
  %v7172 = vmul.f32 %v6789, %v4567
  %v7173 = vmul.f32 %v6998, %v4776
  %v7174 = vmul.f32 %v6792, %v4570
  %v7175 = vmul.f32 %v7001, %v4779
  %v7176 = vmul.f32 %v6795, %v4573
  %v7177 = vmul.f32 %v7004, %v4782
  %v7178 = vmul.f32 %v6798, %v4576
  %v7179 = vmul.f32 %v7007, %v4785
  %v7180 = vmul.f32 %v6801, %v4579
  %v7181 = vmul.f32 %v7010, %v4788
  %v7182 = vmul.f32 %v6804, %v4582
  %v7183 = vmul.f32 %v7013, %v4791
  %v7184 = vmul.f32 %v6807, %v4585
  %v7185 = vmul.f32 %v7016, %v4794
  %v7186 = vmul.f32 %v6810, %v4588
  %v7187 = vmul.f32 %v7019, %v4797
  %v7188 = vmul.f32 %v6813, %v4591
  %v7189 = vmul.f32 %v7022, %v4800
  %v7190 = vmul.f32 %v6816, %v4594
  %v7191 = vmul.f32 %v7025, %v4803
  %v7192 = vmul.f32 %v6819, %v4597
  %v7193 = vmul.f32 %v7028, %v4806
  %v7194 = vmul.f32 %v6822, %v4600
  %v7195 = vmul.f32 %v7031, %v4809
  %v7196 = vmul.f32 %v6825, %v4603
  %v7197 = vmul.f32 %v7034, %v4812
  %v7198 = vmul.f32 %v6828, %v4606
  %v7199 = vmul.f32 %v7037, %v4815
  %v7200 = vmul.f32 %v6831, %v4609
  %v7201 = vmul.f32 %v7040, %v4818
  %v7202 = vmul.f32 %v6834, %v4612
  %v7203 = vmul.f32 %v7043, %v4821
  %v7204 = vmul.f32 %v6837, %v4615
  %v7205 = vmul.f32 %v7046, %v4824
  %v7206 = vmul.f32 %v6840, %v4618
  %v7207 = vmul.f32 %v7049, %v4827
  %v7208 = vmul.f32 %v6843, %v4621
  %v7209 = vmul.f32 %v7052, %v4830
  %v7210 = vmul.f32 %v6846, %v4624
  %v7211 = vmul.f32 %v7055, %v4833
  %v7212 = vmul.f32 %v6849, %v4627
  %v7213 = vmul.f32 %v7058, %v4836
  %v7214 = vmul.f32 %v6852, %v4630
  %v7215 = vmul.f32 %v7061, %v4839
  %v7216 = vmul.f32 %v6855, %v4633
  %v7217 = vmul.f32 %v7064, %v4842
  %v7218 = vmul.f32 %v6858, %v4636
  %v7219 = vmul.f32 %v7067, %v4845
  %v7220 = vmul.f32 %v6861, %v4639
  %v7221 = vmul.f32 %v7070, %v4848
  %v7222 = vmul.f32 %v6864, %v4642
  %v7223 = vmul.f32 %v7073, %v4851
  %v7224 = vmul.f32 %v6867, %v4645
  %v7225 = vmul.f32 %v7076, %v4854
  %v7226 = vmul.f32 %v6870, %v4648
  %v7227 = vmul.f32 %v7079, %v4857
  %v7228 = vmul.f32 %v6873, %v4651
  %v7229 = vmul.f32 %v7082, %v4860
  %v7230 = vmul.f32 %v6876, %v4654
  %v7231 = vmul.f32 %v7085, %v4863
  %v7232 = vmul.f32 %v6879, %v4657
  %v7233 = vmul.f32 %v7088, %v4866
  %v7234 = vmul.f32 %v6882, %v4660
  %v7235 = vmul.f32 %v7091, %v4869
  %v7236 = vmul.f32 %v6885, %v4663
  %v7237 = vmul.f32 %v7094, %v4872
  %v7238 = vmul.f32 %v6888, %v4666
  %v7239 = vmul.f32 %v7097, %v4875
  %v7240 = vmul.f32 %v6891, %v4669
  %v7241 = vmul.f32 %v7100, %v4878
  %v7242 = vmul.f32 %v6894, %v4672
  %v7243 = vmul.f32 %v7103, %v4881
  %v7244 = vmul.f32 %v6897, %v4675
  %v7245 = vmul.f32 %v7106, %v4884
  %v7246 = vmul.f32 %v6900, %v4678
  %v7247 = vmul.f32 %v7109, %v4887
  %v7248 = vmul.f32 %v6903, %v4681
  %v7249 = vmul.f32 %v7112, %v4890
  %v7250 = vmul.f32 %v6906, %v4684
  %v7251 = vmul.f32 %v7115, %v4893
  %v7252 = vmul.f32 %v6909, %v4687
  %v7253 = vmul.f32 %v7118, %v4896
  %v7254 = vmul.f32 %v6912, %v4690
  %v7255 = vmul.f32 %v7121, %v4899
  %v7256 = vmul.f32 %v6915, %v4693
  %v7257 = vmul.f32 %v7124, %v4902
  %v7258 = vmul.f32 %v6918, %v4696
  %v7259 = vmul.f32 %v7127, %v4905
  %v7260 = vmul.f32 %v6921, %v4699
  %v7261 = vmul.f32 %v7130, %v4908
  %v7262 = vmul.f32 %v6924, %v4702
  %v7263 = vmul.f32 %v7133, %v4911
  %v7264 = vmul.f32 %v6927, %v4705
  %v7265 = vmul.f32 %v7136, %v4914
  %7266 = vst [vmem:[#allocation5] sm:$0xff] %v7138
  %7267 = vst [vmem:[#allocation5 + $0x8] sm:$0xff] %v7139
  %7268 = vst [vmem:[#allocation5 + $0x10] sm:$0xff] %v7140
  %7269 = vst [vmem:[#allocation5 + $0x18] sm:$0xff] %v7141
  %7270 = vst [vmem:[#allocation5 + $0x20] sm:$0xff] %v7142
  %7271 = vst [vmem:[#allocation5 + $0x28] sm:$0xff] %v7143
  %7272 = vst [vmem:[#allocation5 + $0x30] sm:$0xff] %v7144
  %7273 = vst [vmem:[#allocation5 + $0x38] sm:$0xff] %v7145
  %7274 = vst [vmem:[#allocation5 + $0x40] sm:$0xff] %v7146
  %7275 = vst [vmem:[#allocation5 + $0x48] sm:$0xff] %v7147
  %7276 = vst [vmem:[#allocation5 + $0x50] sm:$0xff] %v7148
  %7277 = vst [vmem:[#allocation5 + $0x58] sm:$0xff] %v7149
  %7278 = vst [vmem:[#allocation5 + $0x60] sm:$0xff] %v7150
  %7279 = vst [vmem:[#allocation5 + $0x68] sm:$0xff] %v7151
  %7280 = vst [vmem:[#allocation5 + $0x70] sm:$0xff] %v7152
  %7281 = vst [vmem:[#allocation5 + $0x78] sm:$0xff] %v7153
  %7282 = vst [vmem:[#allocation5 + $0x80] sm:$0xff] %v7154
  %7283 = vst [vmem:[#allocation5 + $0x88] sm:$0xff] %v7155
  %7284 = vst [vmem:[#allocation5 + $0x90] sm:$0xff] %v7156
  %7285 = vst [vmem:[#allocation5 + $0x98] sm:$0xff] %v7157
  %7286 = vst [vmem:[#allocation5 + $0xa0] sm:$0xff] %v7158
  %7287 = vst [vmem:[#allocation5 + $0xa8] sm:$0xff] %v7159
  %7288 = vst [vmem:[#allocation5 + $0xb0] sm:$0xff] %v7160
  %7289 = vst [vmem:[#allocation5 + $0xb8] sm:$0xff] %v7161
  %7290 = vst [vmem:[#allocation5 + $0xc0] sm:$0xff] %v7162
  %7291 = vst [vmem:[#allocation5 + $0xc8] sm:$0xff] %v7163
  %7292 = vst [vmem:[#allocation5 + $0xd0] sm:$0xff] %v7164
  %7293 = vst [vmem:[#allocation5 + $0xd8] sm:$0xff] %v7165
  %7294 = vst [vmem:[#allocation5 + $0xe0] sm:$0xff] %v7166
  %7295 = vst [vmem:[#allocation5 + $0xe8] sm:$0xff] %v7167
  %7296 = vst [vmem:[#allocation5 + $0xf0] sm:$0xff] %v7168
  %7297 = vst [vmem:[#allocation5 + $0xf8] sm:$0xff] %v7169
  %7298 = vst [vmem:[#allocation5 + $0x100] sm:$0xff] %v7170
  %7299 = vst [vmem:[#allocation5 + $0x108] sm:$0xff] %v7171
  %7300 = vst [vmem:[#allocation5 + $0x110] sm:$0xff] %v7172
  %7301 = vst [vmem:[#allocation5 + $0x118] sm:$0xff] %v7173
  %7302 = vst [vmem:[#allocation5 + $0x120] sm:$0xff] %v7174
  %7303 = vst [vmem:[#allocation5 + $0x128] sm:$0xff] %v7175
  %7304 = vst [vmem:[#allocation5 + $0x130] sm:$0xff] %v7176
  %7305 = vst [vmem:[#allocation5 + $0x138] sm:$0xff] %v7177
  %7306 = vst [vmem:[#allocation5 + $0x140] sm:$0xff] %v7178
  %7307 = vst [vmem:[#allocation5 + $0x148] sm:$0xff] %v7179
  %7308 = vst [vmem:[#allocation5 + $0x150] sm:$0xff] %v7180
  %7309 = vst [vmem:[#allocation5 + $0x158] sm:$0xff] %v7181
  %7310 = vst [vmem:[#allocation5 + $0x160] sm:$0xff] %v7182
  %7311 = vst [vmem:[#allocation5 + $0x168] sm:$0xff] %v7183
  %7312 = vst [vmem:[#allocation5 + $0x170] sm:$0xff] %v7184
  %7313 = vst [vmem:[#allocation5 + $0x178] sm:$0xff] %v7185
  %7314 = vst [vmem:[#allocation5 + $0x180] sm:$0xff] %v7186
  %7315 = vst [vmem:[#allocation5 + $0x188] sm:$0xff] %v7187
  %7316 = vst [vmem:[#allocation5 + $0x190] sm:$0xff] %v7188
  %7317 = vst [vmem:[#allocation5 + $0x198] sm:$0xff] %v7189
  %7318 = vst [vmem:[#allocation5 + $0x1a0] sm:$0xff] %v7190
  %7319 = vst [vmem:[#allocation5 + $0x1a8] sm:$0xff] %v7191
  %7320 = vst [vmem:[#allocation5 + $0x1b0] sm:$0xff] %v7192
  %7321 = vst [vmem:[#allocation5 + $0x1b8] sm:$0xff] %v7193
  %7322 = vst [vmem:[#allocation5 + $0x1c0] sm:$0xff] %v7194
  %7323 = vst [vmem:[#allocation5 + $0x1c8] sm:$0xff] %v7195
  %7324 = vst [vmem:[#allocation5 + $0x1d0] sm:$0xff] %v7196
  %7325 = vst [vmem:[#allocation5 + $0x1d8] sm:$0xff] %v7197
  %7326 = vst [vmem:[#allocation5 + $0x1e0] sm:$0xff] %v7198
  %7327 = vst [vmem:[#allocation5 + $0x1e8] sm:$0xff] %v7199
  %7328 = vst [vmem:[#allocation5 + $0x1f0] sm:$0xff] %v7200
  %7329 = vst [vmem:[#allocation5 + $0x1f8] sm:$0xff] %v7201
  %7330 = vst [vmem:[#allocation5 + $0x200] sm:$0xff] %v7202
  %7331 = vst [vmem:[#allocation5 + $0x208] sm:$0xff] %v7203
  %7332 = vst [vmem:[#allocation5 + $0x210] sm:$0xff] %v7204
  %7333 = vst [vmem:[#allocation5 + $0x218] sm:$0xff] %v7205
  %7334 = vst [vmem:[#allocation5 + $0x220] sm:$0xff] %v7206
  %7335 = vst [vmem:[#allocation5 + $0x228] sm:$0xff] %v7207
  %7336 = vst [vmem:[#allocation5 + $0x230] sm:$0xff] %v7208
  %7337 = vst [vmem:[#allocation5 + $0x238] sm:$0xff] %v7209
  %7338 = vst [vmem:[#allocation5 + $0x240] sm:$0xff] %v7210
  %7339 = vst [vmem:[#allocation5 + $0x248] sm:$0xff] %v7211
  %7340 = vst [vmem:[#allocation5 + $0x250] sm:$0xff] %v7212
  %7341 = vst [vmem:[#allocation5 + $0x258] sm:$0xff] %v7213
  %7342 = vst [vmem:[#allocation5 + $0x260] sm:$0xff] %v7214
  %7343 = vst [vmem:[#allocation5 + $0x268] sm:$0xff] %v7215
  %7344 = vst [vmem:[#allocation5 + $0x270] sm:$0xff] %v7216
  %7345 = vst [vmem:[#allocation5 + $0x278] sm:$0xff] %v7217
  %7346 = vst [vmem:[#allocation5 + $0x280] sm:$0xff] %v7218
  %7347 = vst [vmem:[#allocation5 + $0x288] sm:$0xff] %v7219
  %7348 = vst [vmem:[#allocation5 + $0x290] sm:$0xff] %v7220
  %7349 = vst [vmem:[#allocation5 + $0x298] sm:$0xff] %v7221
  %7350 = vst [vmem:[#allocation5 + $0x2a0] sm:$0xff] %v7222
  %7351 = vst [vmem:[#allocation5 + $0x2a8] sm:$0xff] %v7223
  %7352 = vst [vmem:[#allocation5 + $0x2b0] sm:$0xff] %v7224
  %7353 = vst [vmem:[#allocation5 + $0x2b8] sm:$0xff] %v7225
  %7354 = vst [vmem:[#allocation5 + $0x2c0] sm:$0xff] %v7226
  %7355 = vst [vmem:[#allocation5 + $0x2c8] sm:$0xff] %v7227
  %7356 = vst [vmem:[#allocation5 + $0x2d0] sm:$0xff] %v7228
  %7357 = vst [vmem:[#allocation5 + $0x2d8] sm:$0xff] %v7229
  %7358 = vst [vmem:[#allocation5 + $0x2e0] sm:$0xff] %v7230
  %7359 = vst [vmem:[#allocation5 + $0x2e8] sm:$0xff] %v7231
  %7360 = vst [vmem:[#allocation5 + $0x2f0] sm:$0xff] %v7232
  %7361 = vst [vmem:[#allocation5 + $0x2f8] sm:$0xff] %v7233
  %7362 = vst [vmem:[#allocation5 + $0x300] sm:$0xff] %v7234
  %7363 = vst [vmem:[#allocation5 + $0x308] sm:$0xff] %v7235
  %7364 = vst [vmem:[#allocation5 + $0x310] sm:$0xff] %v7236
  %7365 = vst [vmem:[#allocation5 + $0x318] sm:$0xff] %v7237
  %7366 = vst [vmem:[#allocation5 + $0x320] sm:$0xff] %v7238
  %7367 = vst [vmem:[#allocation5 + $0x328] sm:$0xff] %v7239
  %7368 = vst [vmem:[#allocation5 + $0x330] sm:$0xff] %v7240
  %7369 = vst [vmem:[#allocation5 + $0x338] sm:$0xff] %v7241
  %7370 = vst [vmem:[#allocation5 + $0x340] sm:$0xff] %v7242
  %7371 = vst [vmem:[#allocation5 + $0x348] sm:$0xff] %v7243
  %7372 = vst [vmem:[#allocation5 + $0x350] sm:$0xff] %v7244
  %7373 = vst [vmem:[#allocation5 + $0x358] sm:$0xff] %v7245
  %7374 = vst [vmem:[#allocation5 + $0x360] sm:$0xff] %v7246
  %7375 = vst [vmem:[#allocation5 + $0x368] sm:$0xff] %v7247
  %7376 = vst [vmem:[#allocation5 + $0x370] sm:$0xff] %v7248
  %7377 = vst [vmem:[#allocation5 + $0x378] sm:$0xff] %v7249
  %7378 = vst [vmem:[#allocation5 + $0x380] sm:$0xff] %v7250
  %7379 = vst [vmem:[#allocation5 + $0x388] sm:$0xff] %v7251
  %7380 = vst [vmem:[#allocation5 + $0x390] sm:$0xff] %v7252
  %7381 = vst [vmem:[#allocation5 + $0x398] sm:$0xff] %v7253
  %7382 = vst [vmem:[#allocation5 + $0x3a0] sm:$0xff] %v7254
  %7383 = vst [vmem:[#allocation5 + $0x3a8] sm:$0xff] %v7255
  %7384 = vst [vmem:[#allocation5 + $0x3b0] sm:$0xff] %v7256
  %7385 = vst [vmem:[#allocation5 + $0x3b8] sm:$0xff] %v7257
  %7386 = vst [vmem:[#allocation5 + $0x3c0] sm:$0xff] %v7258
  %7387 = vst [vmem:[#allocation5 + $0x3c8] sm:$0xff] %v7259
  %7388 = vst [vmem:[#allocation5 + $0x3d0] sm:$0xff] %v7260
  %7389 = vst [vmem:[#allocation5 + $0x3d8] sm:$0xff] %v7261
  %7390 = vst [vmem:[#allocation5 + $0x3e0] sm:$0xff] %v7262
  %7391 = vst [vmem:[#allocation5 + $0x3e8] sm:$0xff] %v7263
  %7392 = vst [vmem:[#allocation5 + $0x3f0] sm:$0xff] %v7264
  %7393 = vst [vmem:[#allocation5 + $0x3f8] sm:$0xff] %v7265
  %v7394 = vld [vmem:[#allocation2] sm:$0xff]
  %v7395 = vld [vmem:[#allocation2 + $0x8] sm:$0xff]
  loop: start=0, step=1, limit=8
  $region62: #{tpu_custom_call.1} parent=0 // loop_pre_header
    _
  $region63: #{tpu_custom_call.1} parent=0 // loop_header
    %s7397 = sphi 0, %s7401
    %p7398 = scmp.ge.s32.totalorder %s7397, 8
    %v7402 = vphi %v7394, %v7544
    %v7403 = vphi %v7395, %v7545
  $region64: #{tpu_custom_call.1} parent=0 // loop_header_branch
    %7400 = sbr.rel (%p7398) target = $region68
  $region65: #{tpu_custom_call.1} parent=0 // loop_body
    %s7404 = smul.u32 %s7397, 64
    %s7405 = sshra.s32 %s7404, 3
    %s7406 = sand.u32 %s7404, 7
    %s7407 = smul.u32 %s7405, 2
    %s7408 = smul.addr %s7407, 8
    %s7409 = scalar_lea.vmem [#allocation4], %s7408
    %v7410 = vld [vmem:[%s7409] sm:$0xff]
    %v7411 = vld [vmem:[%s7409 + $0x8] sm:$0xff]
    %v7412 = vmul.f32 %v7410, %v7402
    %v7413 = vmul.f32 %v7411, %v7403
    %s7414 = smul.addr %s7407, 8
    %s7415 = scalar_lea.vmem [#allocation5], %s7414
    %v7416 = vld [vmem:[%s7415] sm:$0xff]
    %v7417 = vld [vmem:[%s7415 + $0x8] sm:$0xff]
    %v7418 = vadd.f32 %v7412, %v7416
    %v7419 = vadd.f32 %v7413, %v7417
    %7420 = vst [vmem:[%s7415] sm:$0xff] %v7418
    %7421 = vst [vmem:[%s7415 + $0x8] sm:$0xff] %v7419
    %s7422 = sadd.s32 %s7404, 8
    %s7423 = sshra.s32 %s7422, 3
    %s7424 = sand.u32 %s7422, 7
    %s7425 = smul.u32 %s7423, 2
    %s7426 = smul.addr %s7425, 8
    %s7427 = scalar_lea.vmem [#allocation4], %s7426
    %v7428 = vld [vmem:[%s7427] sm:$0xff]
    %v7429 = vld [vmem:[%s7427 + $0x8] sm:$0xff]
    %v7430 = vmul.f32 %v7428, %v7418
    %v7431 = vmul.f32 %v7429, %v7419
    %s7432 = smul.addr %s7425, 8
    %s7433 = scalar_lea.vmem [#allocation5], %s7432
    %v7434 = vld [vmem:[%s7433] sm:$0xff]
    %v7435 = vld [vmem:[%s7433 + $0x8] sm:$0xff]
    %v7436 = vadd.f32 %v7430, %v7434
    %v7437 = vadd.f32 %v7431, %v7435
    %7438 = vst [vmem:[%s7433] sm:$0xff] %v7436
    %7439 = vst [vmem:[%s7433 + $0x8] sm:$0xff] %v7437
    %s7440 = sadd.s32 %s7404, 16
    %s7441 = sshra.s32 %s7440, 3
    %s7442 = sand.u32 %s7440, 7
    %s7443 = smul.u32 %s7441, 2
    %s7444 = smul.addr %s7443, 8
    %s7445 = scalar_lea.vmem [#allocation4], %s7444
    %v7446 = vld [vmem:[%s7445] sm:$0xff]
    %v7447 = vld [vmem:[%s7445 + $0x8] sm:$0xff]
    %v7448 = vmul.f32 %v7446, %v7436
    %v7449 = vmul.f32 %v7447, %v7437
    %s7450 = smul.addr %s7443, 8
    %s7451 = scalar_lea.vmem [#allocation5], %s7450
    %v7452 = vld [vmem:[%s7451] sm:$0xff]
    %v7453 = vld [vmem:[%s7451 + $0x8] sm:$0xff]
    %v7454 = vadd.f32 %v7448, %v7452
    %v7455 = vadd.f32 %v7449, %v7453
    %7456 = vst [vmem:[%s7451] sm:$0xff] %v7454
    %7457 = vst [vmem:[%s7451 + $0x8] sm:$0xff] %v7455
    %s7458 = sadd.s32 %s7404, 24
    %s7459 = sshra.s32 %s7458, 3
    %s7460 = sand.u32 %s7458, 7
    %s7461 = smul.u32 %s7459, 2
    %s7462 = smul.addr %s7461, 8
    %s7463 = scalar_lea.vmem [#allocation4], %s7462
    %v7464 = vld [vmem:[%s7463] sm:$0xff]
    %v7465 = vld [vmem:[%s7463 + $0x8] sm:$0xff]
    %v7466 = vmul.f32 %v7464, %v7454
    %v7467 = vmul.f32 %v7465, %v7455
    %s7468 = smul.addr %s7461, 8
    %s7469 = scalar_lea.vmem [#allocation5], %s7468
    %v7470 = vld [vmem:[%s7469] sm:$0xff]
    %v7471 = vld [vmem:[%s7469 + $0x8] sm:$0xff]
    %v7472 = vadd.f32 %v7466, %v7470
    %v7473 = vadd.f32 %v7467, %v7471
    %7474 = vst [vmem:[%s7469] sm:$0xff] %v7472
    %7475 = vst [vmem:[%s7469 + $0x8] sm:$0xff] %v7473
    %s7476 = sadd.s32 %s7404, 32
    %s7477 = sshra.s32 %s7476, 3
    %s7478 = sand.u32 %s7476, 7
    %s7479 = smul.u32 %s7477, 2
    %s7480 = smul.addr %s7479, 8
    %s7481 = scalar_lea.vmem [#allocation4], %s7480
    %v7482 = vld [vmem:[%s7481] sm:$0xff]
    %v7483 = vld [vmem:[%s7481 + $0x8] sm:$0xff]
    %v7484 = vmul.f32 %v7482, %v7472
    %v7485 = vmul.f32 %v7483, %v7473
    %s7486 = smul.addr %s7479, 8
    %s7487 = scalar_lea.vmem [#allocation5], %s7486
    %v7488 = vld [vmem:[%s7487] sm:$0xff]
    %v7489 = vld [vmem:[%s7487 + $0x8] sm:$0xff]
    %v7490 = vadd.f32 %v7484, %v7488
    %v7491 = vadd.f32 %v7485, %v7489
    %7492 = vst [vmem:[%s7487] sm:$0xff] %v7490
    %7493 = vst [vmem:[%s7487 + $0x8] sm:$0xff] %v7491
    %s7494 = sadd.s32 %s7404, 40
    %s7495 = sshra.s32 %s7494, 3
    %s7496 = sand.u32 %s7494, 7
    %s7497 = smul.u32 %s7495, 2
    %s7498 = smul.addr %s7497, 8
    %s7499 = scalar_lea.vmem [#allocation4], %s7498
    %v7500 = vld [vmem:[%s7499] sm:$0xff]
    %v7501 = vld [vmem:[%s7499 + $0x8] sm:$0xff]
    %v7502 = vmul.f32 %v7500, %v7490
    %v7503 = vmul.f32 %v7501, %v7491
    %s7504 = smul.addr %s7497, 8
    %s7505 = scalar_lea.vmem [#allocation5], %s7504
    %v7506 = vld [vmem:[%s7505] sm:$0xff]
    %v7507 = vld [vmem:[%s7505 + $0x8] sm:$0xff]
    %v7508 = vadd.f32 %v7502, %v7506
    %v7509 = vadd.f32 %v7503, %v7507
    %7510 = vst [vmem:[%s7505] sm:$0xff] %v7508
    %7511 = vst [vmem:[%s7505 + $0x8] sm:$0xff] %v7509
    %s7512 = sadd.s32 %s7404, 48
    %s7513 = sshra.s32 %s7512, 3
    %s7514 = sand.u32 %s7512, 7
    %s7515 = smul.u32 %s7513, 2
    %s7516 = smul.addr %s7515, 8
    %s7517 = scalar_lea.vmem [#allocation4], %s7516
    %v7518 = vld [vmem:[%s7517] sm:$0xff]
    %v7519 = vld [vmem:[%s7517 + $0x8] sm:$0xff]
    %v7520 = vmul.f32 %v7518, %v7508
    %v7521 = vmul.f32 %v7519, %v7509
    %s7522 = smul.addr %s7515, 8
    %s7523 = scalar_lea.vmem [#allocation5], %s7522
    %v7524 = vld [vmem:[%s7523] sm:$0xff]
    %v7525 = vld [vmem:[%s7523 + $0x8] sm:$0xff]
    %v7526 = vadd.f32 %v7520, %v7524
    %v7527 = vadd.f32 %v7521, %v7525
    %7528 = vst [vmem:[%s7523] sm:$0xff] %v7526
    %7529 = vst [vmem:[%s7523 + $0x8] sm:$0xff] %v7527
    %s7530 = sadd.s32 %s7404, 56
    %s7531 = sshra.s32 %s7530, 3
    %s7532 = sand.u32 %s7530, 7
    %s7533 = smul.u32 %s7531, 2
    %s7534 = smul.addr %s7533, 8
    %s7535 = scalar_lea.vmem [#allocation4], %s7534
    %v7536 = vld [vmem:[%s7535] sm:$0xff]
    %v7537 = vld [vmem:[%s7535 + $0x8] sm:$0xff]
    %v7538 = vmul.f32 %v7536, %v7526
    %v7539 = vmul.f32 %v7537, %v7527
    %s7540 = smul.addr %s7533, 8
    %s7541 = scalar_lea.vmem [#allocation5], %s7540
    %v7542 = vld [vmem:[%s7541] sm:$0xff]
    %v7543 = vld [vmem:[%s7541 + $0x8] sm:$0xff]
    %v7544 = vadd.f32 %v7538, %v7542
    %v7545 = vadd.f32 %v7539, %v7543
    %7546 = vst [vmem:[%s7541] sm:$0xff] %v7544
    %7547 = vst [vmem:[%s7541 + $0x8] sm:$0xff] %v7545
  $region66: #{tpu_custom_call.1} parent=0 // loop_footer
    %s7401 = sadd.s32 1, %s7397
  $region67: #{tpu_custom_call.1} parent=0 // loop_footer_branch
    %7396 = sbr.rel target = $region63
  $region68: #{tpu_custom_call.1} parent=0 // loop_exit
    _
  %7548 = vst [vmem:[#allocation2] sm:$0xff] %v7402
  %7549 = vst [vmem:[#allocation2 + $0x8] sm:$0xff] %v7403
  %v7550 = vld [vmem:[#allocation5] sm:$0xff]
  %v7551 = vld [vmem:[#allocation5 + $0x8] sm:$0xff]
  %v7552 = vld [vmem:[#allocation5 + $0x10] sm:$0xff]
  %v7553 = vld [vmem:[#allocation5 + $0x18] sm:$0xff]
  %v7554 = vld [vmem:[#allocation5 + $0x20] sm:$0xff]
  %v7555 = vld [vmem:[#allocation5 + $0x28] sm:$0xff]
  %v7556 = vld [vmem:[#allocation5 + $0x30] sm:$0xff]
  %v7557 = vld [vmem:[#allocation5 + $0x38] sm:$0xff]
  %v7558 = vld [vmem:[#allocation5 + $0x40] sm:$0xff]
  %v7559 = vld [vmem:[#allocation5 + $0x48] sm:$0xff]
  %v7560 = vld [vmem:[#allocation5 + $0x50] sm:$0xff]
  %v7561 = vld [vmem:[#allocation5 + $0x58] sm:$0xff]
  %v7562 = vld [vmem:[#allocation5 + $0x60] sm:$0xff]
  %v7563 = vld [vmem:[#allocation5 + $0x68] sm:$0xff]
  %v7564 = vld [vmem:[#allocation5 + $0x70] sm:$0xff]
  %v7565 = vld [vmem:[#allocation5 + $0x78] sm:$0xff]
  %v7566 = vld [vmem:[#allocation5 + $0x80] sm:$0xff]
  %v7567 = vld [vmem:[#allocation5 + $0x88] sm:$0xff]
  %v7568 = vld [vmem:[#allocation5 + $0x90] sm:$0xff]
  %v7569 = vld [vmem:[#allocation5 + $0x98] sm:$0xff]
  %v7570 = vld [vmem:[#allocation5 + $0xa0] sm:$0xff]
  %v7571 = vld [vmem:[#allocation5 + $0xa8] sm:$0xff]
  %v7572 = vld [vmem:[#allocation5 + $0xb0] sm:$0xff]
  %v7573 = vld [vmem:[#allocation5 + $0xb8] sm:$0xff]
  %v7574 = vld [vmem:[#allocation5 + $0xc0] sm:$0xff]
  %v7575 = vld [vmem:[#allocation5 + $0xc8] sm:$0xff]
  %v7576 = vld [vmem:[#allocation5 + $0xd0] sm:$0xff]
  %v7577 = vld [vmem:[#allocation5 + $0xd8] sm:$0xff]
  %v7578 = vld [vmem:[#allocation5 + $0xe0] sm:$0xff]
  %v7579 = vld [vmem:[#allocation5 + $0xe8] sm:$0xff]
  %v7580 = vld [vmem:[#allocation5 + $0xf0] sm:$0xff]
  %v7581 = vld [vmem:[#allocation5 + $0xf8] sm:$0xff]
  %v7582 = vld [vmem:[#allocation5 + $0x100] sm:$0xff]
  %v7583 = vld [vmem:[#allocation5 + $0x108] sm:$0xff]
  %v7584 = vld [vmem:[#allocation5 + $0x110] sm:$0xff]
  %v7585 = vld [vmem:[#allocation5 + $0x118] sm:$0xff]
  %v7586 = vld [vmem:[#allocation5 + $0x120] sm:$0xff]
  %v7587 = vld [vmem:[#allocation5 + $0x128] sm:$0xff]
  %v7588 = vld [vmem:[#allocation5 + $0x130] sm:$0xff]
  %v7589 = vld [vmem:[#allocation5 + $0x138] sm:$0xff]
  %v7590 = vld [vmem:[#allocation5 + $0x140] sm:$0xff]
  %v7591 = vld [vmem:[#allocation5 + $0x148] sm:$0xff]
  %v7592 = vld [vmem:[#allocation5 + $0x150] sm:$0xff]
  %v7593 = vld [vmem:[#allocation5 + $0x158] sm:$0xff]
  %v7594 = vld [vmem:[#allocation5 + $0x160] sm:$0xff]
  %v7595 = vld [vmem:[#allocation5 + $0x168] sm:$0xff]
  %v7596 = vld [vmem:[#allocation5 + $0x170] sm:$0xff]
  %v7597 = vld [vmem:[#allocation5 + $0x178] sm:$0xff]
  %v7598 = vld [vmem:[#allocation5 + $0x180] sm:$0xff]
  %v7599 = vld [vmem:[#allocation5 + $0x188] sm:$0xff]
  %v7600 = vld [vmem:[#allocation5 + $0x190] sm:$0xff]
  %v7601 = vld [vmem:[#allocation5 + $0x198] sm:$0xff]
  %v7602 = vld [vmem:[#allocation5 + $0x1a0] sm:$0xff]
  %v7603 = vld [vmem:[#allocation5 + $0x1a8] sm:$0xff]
  %v7604 = vld [vmem:[#allocation5 + $0x1b0] sm:$0xff]
  %v7605 = vld [vmem:[#allocation5 + $0x1b8] sm:$0xff]
  %v7606 = vld [vmem:[#allocation5 + $0x1c0] sm:$0xff]
  %v7607 = vld [vmem:[#allocation5 + $0x1c8] sm:$0xff]
  %v7608 = vld [vmem:[#allocation5 + $0x1d0] sm:$0xff]
  %v7609 = vld [vmem:[#allocation5 + $0x1d8] sm:$0xff]
  %v7610 = vld [vmem:[#allocation5 + $0x1e0] sm:$0xff]
  %v7611 = vld [vmem:[#allocation5 + $0x1e8] sm:$0xff]
  %v7612 = vld [vmem:[#allocation5 + $0x1f0] sm:$0xff]
  %v7613 = vld [vmem:[#allocation5 + $0x1f8] sm:$0xff]
  %v7614 = vld [vmem:[#allocation5 + $0x200] sm:$0xff]
  %v7615 = vld [vmem:[#allocation5 + $0x208] sm:$0xff]
  %v7616 = vld [vmem:[#allocation5 + $0x210] sm:$0xff]
  %v7617 = vld [vmem:[#allocation5 + $0x218] sm:$0xff]
  %v7618 = vld [vmem:[#allocation5 + $0x220] sm:$0xff]
  %v7619 = vld [vmem:[#allocation5 + $0x228] sm:$0xff]
  %v7620 = vld [vmem:[#allocation5 + $0x230] sm:$0xff]
  %v7621 = vld [vmem:[#allocation5 + $0x238] sm:$0xff]
  %v7622 = vld [vmem:[#allocation5 + $0x240] sm:$0xff]
  %v7623 = vld [vmem:[#allocation5 + $0x248] sm:$0xff]
  %v7624 = vld [vmem:[#allocation5 + $0x250] sm:$0xff]
  %v7625 = vld [vmem:[#allocation5 + $0x258] sm:$0xff]
  %v7626 = vld [vmem:[#allocation5 + $0x260] sm:$0xff]
  %v7627 = vld [vmem:[#allocation5 + $0x268] sm:$0xff]
  %v7628 = vld [vmem:[#allocation5 + $0x270] sm:$0xff]
  %v7629 = vld [vmem:[#allocation5 + $0x278] sm:$0xff]
  %v7630 = vld [vmem:[#allocation5 + $0x280] sm:$0xff]
  %v7631 = vld [vmem:[#allocation5 + $0x288] sm:$0xff]
  %v7632 = vld [vmem:[#allocation5 + $0x290] sm:$0xff]
  %v7633 = vld [vmem:[#allocation5 + $0x298] sm:$0xff]
  %v7634 = vld [vmem:[#allocation5 + $0x2a0] sm:$0xff]
  %v7635 = vld [vmem:[#allocation5 + $0x2a8] sm:$0xff]
  %v7636 = vld [vmem:[#allocation5 + $0x2b0] sm:$0xff]
  %v7637 = vld [vmem:[#allocation5 + $0x2b8] sm:$0xff]
  %v7638 = vld [vmem:[#allocation5 + $0x2c0] sm:$0xff]
  %v7639 = vld [vmem:[#allocation5 + $0x2c8] sm:$0xff]
  %v7640 = vld [vmem:[#allocation5 + $0x2d0] sm:$0xff]
  %v7641 = vld [vmem:[#allocation5 + $0x2d8] sm:$0xff]
  %v7642 = vld [vmem:[#allocation5 + $0x2e0] sm:$0xff]
  %v7643 = vld [vmem:[#allocation5 + $0x2e8] sm:$0xff]
  %v7644 = vld [vmem:[#allocation5 + $0x2f0] sm:$0xff]
  %v7645 = vld [vmem:[#allocation5 + $0x2f8] sm:$0xff]
  %v7646 = vld [vmem:[#allocation5 + $0x300] sm:$0xff]
  %v7647 = vld [vmem:[#allocation5 + $0x308] sm:$0xff]
  %v7648 = vld [vmem:[#allocation5 + $0x310] sm:$0xff]
  %v7649 = vld [vmem:[#allocation5 + $0x318] sm:$0xff]
  %v7650 = vld [vmem:[#allocation5 + $0x320] sm:$0xff]
  %v7651 = vld [vmem:[#allocation5 + $0x328] sm:$0xff]
  %v7652 = vld [vmem:[#allocation5 + $0x330] sm:$0xff]
  %v7653 = vld [vmem:[#allocation5 + $0x338] sm:$0xff]
  %v7654 = vld [vmem:[#allocation5 + $0x340] sm:$0xff]
  %v7655 = vld [vmem:[#allocation5 + $0x348] sm:$0xff]
  %v7656 = vld [vmem:[#allocation5 + $0x350] sm:$0xff]
  %v7657 = vld [vmem:[#allocation5 + $0x358] sm:$0xff]
  %v7658 = vld [vmem:[#allocation5 + $0x360] sm:$0xff]
  %v7659 = vld [vmem:[#allocation5 + $0x368] sm:$0xff]
  %v7660 = vld [vmem:[#allocation5 + $0x370] sm:$0xff]
  %v7661 = vld [vmem:[#allocation5 + $0x378] sm:$0xff]
  %v7662 = vld [vmem:[#allocation5 + $0x380] sm:$0xff]
  %v7663 = vld [vmem:[#allocation5 + $0x388] sm:$0xff]
  %v7664 = vld [vmem:[#allocation5 + $0x390] sm:$0xff]
  %v7665 = vld [vmem:[#allocation5 + $0x398] sm:$0xff]
  %v7666 = vld [vmem:[#allocation5 + $0x3a0] sm:$0xff]
  %v7667 = vld [vmem:[#allocation5 + $0x3a8] sm:$0xff]
  %v7668 = vld [vmem:[#allocation5 + $0x3b0] sm:$0xff]
  %v7669 = vld [vmem:[#allocation5 + $0x3b8] sm:$0xff]
  %v7670 = vld [vmem:[#allocation5 + $0x3c0] sm:$0xff]
  %v7671 = vld [vmem:[#allocation5 + $0x3c8] sm:$0xff]
  %v7672 = vld [vmem:[#allocation5 + $0x3d0] sm:$0xff]
  %v7673 = vld [vmem:[#allocation5 + $0x3d8] sm:$0xff]
  %v7674 = vld [vmem:[#allocation5 + $0x3e0] sm:$0xff]
  %v7675 = vld [vmem:[#allocation5 + $0x3e8] sm:$0xff]
  %v7676 = vld [vmem:[#allocation5 + $0x3f0] sm:$0xff]
  %v7677 = vld [vmem:[#allocation5 + $0x3f8] sm:$0xff]
  %v7678 = vld [vmem:[#allocation6] sm:$0xff]
  %v7679 = vld [vmem:[#allocation6 + $0x8] sm:$0xff]
  %v7680 = vld [vmem:[#allocation6 + $0x10] sm:$0xff]
  %v7681 = vld [vmem:[#allocation6 + $0x18] sm:$0xff]
  %v7682 = vld [vmem:[#allocation6 + $0x20] sm:$0xff]
  %v7683 = vld [vmem:[#allocation6 + $0x28] sm:$0xff]
  %v7684 = vld [vmem:[#allocation6 + $0x30] sm:$0xff]
  %v7685 = vld [vmem:[#allocation6 + $0x38] sm:$0xff]
  %v7686 = vld [vmem:[#allocation6 + $0x40] sm:$0xff]
  %v7687 = vld [vmem:[#allocation6 + $0x48] sm:$0xff]
  %v7688 = vld [vmem:[#allocation6 + $0x50] sm:$0xff]
  %v7689 = vld [vmem:[#allocation6 + $0x58] sm:$0xff]
  %v7690 = vld [vmem:[#allocation6 + $0x60] sm:$0xff]
  %v7691 = vld [vmem:[#allocation6 + $0x68] sm:$0xff]
  %v7692 = vld [vmem:[#allocation6 + $0x70] sm:$0xff]
  %v7693 = vld [vmem:[#allocation6 + $0x78] sm:$0xff]
  %v7694 = vld [vmem:[#allocation6 + $0x80] sm:$0xff]
  %v7695 = vld [vmem:[#allocation6 + $0x88] sm:$0xff]
  %v7696 = vld [vmem:[#allocation6 + $0x90] sm:$0xff]
  %v7697 = vld [vmem:[#allocation6 + $0x98] sm:$0xff]
  %v7698 = vld [vmem:[#allocation6 + $0xa0] sm:$0xff]
  %v7699 = vld [vmem:[#allocation6 + $0xa8] sm:$0xff]
  %v7700 = vld [vmem:[#allocation6 + $0xb0] sm:$0xff]
  %v7701 = vld [vmem:[#allocation6 + $0xb8] sm:$0xff]
  %v7702 = vld [vmem:[#allocation6 + $0xc0] sm:$0xff]
  %v7703 = vld [vmem:[#allocation6 + $0xc8] sm:$0xff]
  %v7704 = vld [vmem:[#allocation6 + $0xd0] sm:$0xff]
  %v7705 = vld [vmem:[#allocation6 + $0xd8] sm:$0xff]
  %v7706 = vld [vmem:[#allocation6 + $0xe0] sm:$0xff]
  %v7707 = vld [vmem:[#allocation6 + $0xe8] sm:$0xff]
  %v7708 = vld [vmem:[#allocation6 + $0xf0] sm:$0xff]
  %v7709 = vld [vmem:[#allocation6 + $0xf8] sm:$0xff]
  %v7710 = vld [vmem:[#allocation6 + $0x100] sm:$0xff]
  %v7711 = vld [vmem:[#allocation6 + $0x108] sm:$0xff]
  %v7712 = vld [vmem:[#allocation6 + $0x110] sm:$0xff]
  %v7713 = vld [vmem:[#allocation6 + $0x118] sm:$0xff]
  %v7714 = vld [vmem:[#allocation6 + $0x120] sm:$0xff]
  %v7715 = vld [vmem:[#allocation6 + $0x128] sm:$0xff]
  %v7716 = vld [vmem:[#allocation6 + $0x130] sm:$0xff]
  %v7717 = vld [vmem:[#allocation6 + $0x138] sm:$0xff]
  %v7718 = vld [vmem:[#allocation6 + $0x140] sm:$0xff]
  %v7719 = vld [vmem:[#allocation6 + $0x148] sm:$0xff]
  %v7720 = vld [vmem:[#allocation6 + $0x150] sm:$0xff]
  %v7721 = vld [vmem:[#allocation6 + $0x158] sm:$0xff]
  %v7722 = vld [vmem:[#allocation6 + $0x160] sm:$0xff]
  %v7723 = vld [vmem:[#allocation6 + $0x168] sm:$0xff]
  %v7724 = vld [vmem:[#allocation6 + $0x170] sm:$0xff]
  %v7725 = vld [vmem:[#allocation6 + $0x178] sm:$0xff]
  %v7726 = vld [vmem:[#allocation6 + $0x180] sm:$0xff]
  %v7727 = vld [vmem:[#allocation6 + $0x188] sm:$0xff]
  %v7728 = vld [vmem:[#allocation6 + $0x190] sm:$0xff]
  %v7729 = vld [vmem:[#allocation6 + $0x198] sm:$0xff]
  %v7730 = vld [vmem:[#allocation6 + $0x1a0] sm:$0xff]
  %v7731 = vld [vmem:[#allocation6 + $0x1a8] sm:$0xff]
  %v7732 = vld [vmem:[#allocation6 + $0x1b0] sm:$0xff]
  %v7733 = vld [vmem:[#allocation6 + $0x1b8] sm:$0xff]
  %v7734 = vld [vmem:[#allocation6 + $0x1c0] sm:$0xff]
  %v7735 = vld [vmem:[#allocation6 + $0x1c8] sm:$0xff]
  %v7736 = vld [vmem:[#allocation6 + $0x1d0] sm:$0xff]
  %v7737 = vld [vmem:[#allocation6 + $0x1d8] sm:$0xff]
  %v7738 = vld [vmem:[#allocation6 + $0x1e0] sm:$0xff]
  %v7739 = vld [vmem:[#allocation6 + $0x1e8] sm:$0xff]
  %v7740 = vld [vmem:[#allocation6 + $0x1f0] sm:$0xff]
  %v7741 = vld [vmem:[#allocation6 + $0x1f8] sm:$0xff]
  %v7742 = vld [vmem:[#allocation6 + $0x200] sm:$0xff]
  %v7743 = vld [vmem:[#allocation6 + $0x208] sm:$0xff]
  %v7744 = vld [vmem:[#allocation6 + $0x210] sm:$0xff]
  %v7745 = vld [vmem:[#allocation6 + $0x218] sm:$0xff]
  %v7746 = vld [vmem:[#allocation6 + $0x220] sm:$0xff]
  %v7747 = vld [vmem:[#allocation6 + $0x228] sm:$0xff]
  %v7748 = vld [vmem:[#allocation6 + $0x230] sm:$0xff]
  %v7749 = vld [vmem:[#allocation6 + $0x238] sm:$0xff]
  %v7750 = vld [vmem:[#allocation6 + $0x240] sm:$0xff]
  %v7751 = vld [vmem:[#allocation6 + $0x248] sm:$0xff]
  %v7752 = vld [vmem:[#allocation6 + $0x250] sm:$0xff]
  %v7753 = vld [vmem:[#allocation6 + $0x258] sm:$0xff]
  %v7754 = vld [vmem:[#allocation6 + $0x260] sm:$0xff]
  %v7755 = vld [vmem:[#allocation6 + $0x268] sm:$0xff]
  %v7756 = vld [vmem:[#allocation6 + $0x270] sm:$0xff]
  %v7757 = vld [vmem:[#allocation6 + $0x278] sm:$0xff]
  %v7758 = vld [vmem:[#allocation6 + $0x280] sm:$0xff]
  %v7759 = vld [vmem:[#allocation6 + $0x288] sm:$0xff]
  %v7760 = vld [vmem:[#allocation6 + $0x290] sm:$0xff]
  %v7761 = vld [vmem:[#allocation6 + $0x298] sm:$0xff]
  %v7762 = vld [vmem:[#allocation6 + $0x2a0] sm:$0xff]
  %v7763 = vld [vmem:[#allocation6 + $0x2a8] sm:$0xff]
  %v7764 = vld [vmem:[#allocation6 + $0x2b0] sm:$0xff]
  %v7765 = vld [vmem:[#allocation6 + $0x2b8] sm:$0xff]
  %v7766 = vld [vmem:[#allocation6 + $0x2c0] sm:$0xff]
  %v7767 = vld [vmem:[#allocation6 + $0x2c8] sm:$0xff]
  %v7768 = vld [vmem:[#allocation6 + $0x2d0] sm:$0xff]
  %v7769 = vld [vmem:[#allocation6 + $0x2d8] sm:$0xff]
  %v7770 = vld [vmem:[#allocation6 + $0x2e0] sm:$0xff]
  %v7771 = vld [vmem:[#allocation6 + $0x2e8] sm:$0xff]
  %v7772 = vld [vmem:[#allocation6 + $0x2f0] sm:$0xff]
  %v7773 = vld [vmem:[#allocation6 + $0x2f8] sm:$0xff]
  %v7774 = vld [vmem:[#allocation6 + $0x300] sm:$0xff]
  %v7775 = vld [vmem:[#allocation6 + $0x308] sm:$0xff]
  %v7776 = vld [vmem:[#allocation6 + $0x310] sm:$0xff]
  %v7777 = vld [vmem:[#allocation6 + $0x318] sm:$0xff]
  %v7778 = vld [vmem:[#allocation6 + $0x320] sm:$0xff]
  %v7779 = vld [vmem:[#allocation6 + $0x328] sm:$0xff]
  %v7780 = vld [vmem:[#allocation6 + $0x330] sm:$0xff]
  %v7781 = vld [vmem:[#allocation6 + $0x338] sm:$0xff]
  %v7782 = vld [vmem:[#allocation6 + $0x340] sm:$0xff]
  %v7783 = vld [vmem:[#allocation6 + $0x348] sm:$0xff]
  %v7784 = vld [vmem:[#allocation6 + $0x350] sm:$0xff]
  %v7785 = vld [vmem:[#allocation6 + $0x358] sm:$0xff]
  %v7786 = vld [vmem:[#allocation6 + $0x360] sm:$0xff]
  %v7787 = vld [vmem:[#allocation6 + $0x368] sm:$0xff]
  %v7788 = vld [vmem:[#allocation6 + $0x370] sm:$0xff]
  %v7789 = vld [vmem:[#allocation6 + $0x378] sm:$0xff]
  %v7790 = vld [vmem:[#allocation6 + $0x380] sm:$0xff]
  %v7791 = vld [vmem:[#allocation6 + $0x388] sm:$0xff]
  %v7792 = vld [vmem:[#allocation6 + $0x390] sm:$0xff]
  %v7793 = vld [vmem:[#allocation6 + $0x398] sm:$0xff]
  %v7794 = vld [vmem:[#allocation6 + $0x3a0] sm:$0xff]
  %v7795 = vld [vmem:[#allocation6 + $0x3a8] sm:$0xff]
  %v7796 = vld [vmem:[#allocation6 + $0x3b0] sm:$0xff]
  %v7797 = vld [vmem:[#allocation6 + $0x3b8] sm:$0xff]
  %v7798 = vld [vmem:[#allocation6 + $0x3c0] sm:$0xff]
  %v7799 = vld [vmem:[#allocation6 + $0x3c8] sm:$0xff]
  %v7800 = vld [vmem:[#allocation6 + $0x3d0] sm:$0xff]
  %v7801 = vld [vmem:[#allocation6 + $0x3d8] sm:$0xff]
  %v7802 = vld [vmem:[#allocation6 + $0x3e0] sm:$0xff]
  %v7803 = vld [vmem:[#allocation6 + $0x3e8] sm:$0xff]
  %v7804 = vld [vmem:[#allocation6 + $0x3f0] sm:$0xff]
  %v7805 = vld [vmem:[#allocation6 + $0x3f8] sm:$0xff]
  %v7806 = vmul.f32 %v7550, %v7678
  %v7807 = vmul.f32 %v7551, %v7679
  %v7808 = vmul.f32 %v7552, %v7680
  %v7809 = vmul.f32 %v7553, %v7681
  %v7810 = vmul.f32 %v7554, %v7682
  %v7811 = vmul.f32 %v7555, %v7683
  %v7812 = vmul.f32 %v7556, %v7684
  %v7813 = vmul.f32 %v7557, %v7685
  %v7814 = vmul.f32 %v7558, %v7686
  %v7815 = vmul.f32 %v7559, %v7687
  %v7816 = vmul.f32 %v7560, %v7688
  %v7817 = vmul.f32 %v7561, %v7689
  %v7818 = vmul.f32 %v7562, %v7690
  %v7819 = vmul.f32 %v7563, %v7691
  %v7820 = vmul.f32 %v7564, %v7692
  %v7821 = vmul.f32 %v7565, %v7693
  %v7822 = vmul.f32 %v7566, %v7694
  %v7823 = vmul.f32 %v7567, %v7695
  %v7824 = vmul.f32 %v7568, %v7696
  %v7825 = vmul.f32 %v7569, %v7697
  %v7826 = vmul.f32 %v7570, %v7698
  %v7827 = vmul.f32 %v7571, %v7699
  %v7828 = vmul.f32 %v7572, %v7700
  %v7829 = vmul.f32 %v7573, %v7701
  %v7830 = vmul.f32 %v7574, %v7702
  %v7831 = vmul.f32 %v7575, %v7703
  %v7832 = vmul.f32 %v7576, %v7704
  %v7833 = vmul.f32 %v7577, %v7705
  %v7834 = vmul.f32 %v7578, %v7706
  %v7835 = vmul.f32 %v7579, %v7707
  %v7836 = vmul.f32 %v7580, %v7708
  %v7837 = vmul.f32 %v7581, %v7709
  %v7838 = vmul.f32 %v7582, %v7710
  %v7839 = vmul.f32 %v7583, %v7711
  %v7840 = vmul.f32 %v7584, %v7712
  %v7841 = vmul.f32 %v7585, %v7713
  %v7842 = vmul.f32 %v7586, %v7714
  %v7843 = vmul.f32 %v7587, %v7715
  %v7844 = vmul.f32 %v7588, %v7716
  %v7845 = vmul.f32 %v7589, %v7717
  %v7846 = vmul.f32 %v7590, %v7718
  %v7847 = vmul.f32 %v7591, %v7719
  %v7848 = vmul.f32 %v7592, %v7720
  %v7849 = vmul.f32 %v7593, %v7721
  %v7850 = vmul.f32 %v7594, %v7722
  %v7851 = vmul.f32 %v7595, %v7723
  %v7852 = vmul.f32 %v7596, %v7724
  %v7853 = vmul.f32 %v7597, %v7725
  %v7854 = vmul.f32 %v7598, %v7726
  %v7855 = vmul.f32 %v7599, %v7727
  %v7856 = vmul.f32 %v7600, %v7728
  %v7857 = vmul.f32 %v7601, %v7729
  %v7858 = vmul.f32 %v7602, %v7730
  %v7859 = vmul.f32 %v7603, %v7731
  %v7860 = vmul.f32 %v7604, %v7732
  %v7861 = vmul.f32 %v7605, %v7733
  %v7862 = vmul.f32 %v7606, %v7734
  %v7863 = vmul.f32 %v7607, %v7735
  %v7864 = vmul.f32 %v7608, %v7736
  %v7865 = vmul.f32 %v7609, %v7737
  %v7866 = vmul.f32 %v7610, %v7738
  %v7867 = vmul.f32 %v7611, %v7739
  %v7868 = vmul.f32 %v7612, %v7740
  %v7869 = vmul.f32 %v7613, %v7741
  %v7870 = vmul.f32 %v7614, %v7742
  %v7871 = vmul.f32 %v7615, %v7743
  %v7872 = vmul.f32 %v7616, %v7744
  %v7873 = vmul.f32 %v7617, %v7745
  %v7874 = vmul.f32 %v7618, %v7746
  %v7875 = vmul.f32 %v7619, %v7747
  %v7876 = vmul.f32 %v7620, %v7748
  %v7877 = vmul.f32 %v7621, %v7749
  %v7878 = vmul.f32 %v7622, %v7750
  %v7879 = vmul.f32 %v7623, %v7751
  %v7880 = vmul.f32 %v7624, %v7752
  %v7881 = vmul.f32 %v7625, %v7753
  %v7882 = vmul.f32 %v7626, %v7754
  %v7883 = vmul.f32 %v7627, %v7755
  %v7884 = vmul.f32 %v7628, %v7756
  %v7885 = vmul.f32 %v7629, %v7757
  %v7886 = vmul.f32 %v7630, %v7758
  %v7887 = vmul.f32 %v7631, %v7759
  %v7888 = vmul.f32 %v7632, %v7760
  %v7889 = vmul.f32 %v7633, %v7761
  %v7890 = vmul.f32 %v7634, %v7762
  %v7891 = vmul.f32 %v7635, %v7763
  %v7892 = vmul.f32 %v7636, %v7764
  %v7893 = vmul.f32 %v7637, %v7765
  %v7894 = vmul.f32 %v7638, %v7766
  %v7895 = vmul.f32 %v7639, %v7767
  %v7896 = vmul.f32 %v7640, %v7768
  %v7897 = vmul.f32 %v7641, %v7769
  %v7898 = vmul.f32 %v7642, %v7770
  %v7899 = vmul.f32 %v7643, %v7771
  %v7900 = vmul.f32 %v7644, %v7772
  %v7901 = vmul.f32 %v7645, %v7773
  %v7902 = vmul.f32 %v7646, %v7774
  %v7903 = vmul.f32 %v7647, %v7775
  %v7904 = vmul.f32 %v7648, %v7776
  %v7905 = vmul.f32 %v7649, %v7777
  %v7906 = vmul.f32 %v7650, %v7778
  %v7907 = vmul.f32 %v7651, %v7779
  %v7908 = vmul.f32 %v7652, %v7780
  %v7909 = vmul.f32 %v7653, %v7781
  %v7910 = vmul.f32 %v7654, %v7782
  %v7911 = vmul.f32 %v7655, %v7783
  %v7912 = vmul.f32 %v7656, %v7784
  %v7913 = vmul.f32 %v7657, %v7785
  %v7914 = vmul.f32 %v7658, %v7786
  %v7915 = vmul.f32 %v7659, %v7787
  %v7916 = vmul.f32 %v7660, %v7788
  %v7917 = vmul.f32 %v7661, %v7789
  %v7918 = vmul.f32 %v7662, %v7790
  %v7919 = vmul.f32 %v7663, %v7791
  %v7920 = vmul.f32 %v7664, %v7792
  %v7921 = vmul.f32 %v7665, %v7793
  %v7922 = vmul.f32 %v7666, %v7794
  %v7923 = vmul.f32 %v7667, %v7795
  %v7924 = vmul.f32 %v7668, %v7796
  %v7925 = vmul.f32 %v7669, %v7797
  %v7926 = vmul.f32 %v7670, %v7798
  %v7927 = vmul.f32 %v7671, %v7799
  %v7928 = vmul.f32 %v7672, %v7800
  %v7929 = vmul.f32 %v7673, %v7801
  %v7930 = vmul.f32 %v7674, %v7802
  %v7931 = vmul.f32 %v7675, %v7803
  %v7932 = vmul.f32 %v7676, %v7804
  %v7933 = vmul.f32 %v7677, %v7805
  %v7934 = vld [vmem:[%s13] sm:$0xff]
  %v7935 = vld [vmem:[%s13 + $0x8] sm:$0xff]
  %v7936 = vld [vmem:[%s13 + $0x10] sm:$0xff]
  %v7937 = vld [vmem:[%s13 + $0x18] sm:$0xff]
  %v7938 = vld [vmem:[%s13 + $0x20] sm:$0xff]
  %v7939 = vld [vmem:[%s13 + $0x28] sm:$0xff]
  %v7940 = vld [vmem:[%s13 + $0x30] sm:$0xff]
  %v7941 = vld [vmem:[%s13 + $0x38] sm:$0xff]
  %v7942 = vld [vmem:[%s13 + $0x40] sm:$0xff]
  %v7943 = vld [vmem:[%s13 + $0x48] sm:$0xff]
  %v7944 = vld [vmem:[%s13 + $0x50] sm:$0xff]
  %v7945 = vld [vmem:[%s13 + $0x58] sm:$0xff]
  %v7946 = vld [vmem:[%s13 + $0x60] sm:$0xff]
  %v7947 = vld [vmem:[%s13 + $0x68] sm:$0xff]
  %v7948 = vld [vmem:[%s13 + $0x70] sm:$0xff]
  %v7949 = vld [vmem:[%s13 + $0x78] sm:$0xff]
  %v7950 = vld [vmem:[%s13 + $0x80] sm:$0xff]
  %v7951 = vld [vmem:[%s13 + $0x88] sm:$0xff]
  %v7952 = vld [vmem:[%s13 + $0x90] sm:$0xff]
  %v7953 = vld [vmem:[%s13 + $0x98] sm:$0xff]
  %v7954 = vld [vmem:[%s13 + $0xa0] sm:$0xff]
  %v7955 = vld [vmem:[%s13 + $0xa8] sm:$0xff]
  %v7956 = vld [vmem:[%s13 + $0xb0] sm:$0xff]
  %v7957 = vld [vmem:[%s13 + $0xb8] sm:$0xff]
  %v7958 = vld [vmem:[%s13 + $0xc0] sm:$0xff]
  %v7959 = vld [vmem:[%s13 + $0xc8] sm:$0xff]
  %v7960 = vld [vmem:[%s13 + $0xd0] sm:$0xff]
  %v7961 = vld [vmem:[%s13 + $0xd8] sm:$0xff]
  %v7962 = vld [vmem:[%s13 + $0xe0] sm:$0xff]
  %v7963 = vld [vmem:[%s13 + $0xe8] sm:$0xff]
  %v7964 = vld [vmem:[%s13 + $0xf0] sm:$0xff]
  %v7965 = vld [vmem:[%s13 + $0xf8] sm:$0xff]
  %v7966 = vld [vmem:[%s11] sm:$0x1]
  %v7968 = vperm.slane %v7966, 0
  %v7970 = vmul.f32 %v7968, %v3315
  %v7971 = vmul.f32 %v7968, %v3316
  %v7972 = vmul.f32 %v7968, %v3317
  %v7973 = vmul.f32 %v7968, %v3318
  %v7974 = vmul.f32 %v7968, %v3319
  %v7975 = vmul.f32 %v7968, %v3320
  %v7976 = vmul.f32 %v7968, %v3321
  %v7977 = vmul.f32 %v7968, %v3322
  %v7978 = vmul.f32 %v7968, %v3323
  %v7979 = vmul.f32 %v7968, %v3324
  %v7980 = vmul.f32 %v7968, %v3325
  %v7981 = vmul.f32 %v7968, %v3326
  %v7982 = vmul.f32 %v7968, %v3327
  %v7983 = vmul.f32 %v7968, %v3328
  %v7984 = vmul.f32 %v7968, %v3329
  %v7985 = vmul.f32 %v7968, %v3330
  %v7986 = vmul.f32 %v7968, %v3331
  %v7987 = vmul.f32 %v7968, %v3332
  %v7988 = vmul.f32 %v7968, %v3333
  %v7989 = vmul.f32 %v7968, %v3334
  %v7990 = vmul.f32 %v7968, %v3335
  %v7991 = vmul.f32 %v7968, %v3336
  %v7992 = vmul.f32 %v7968, %v3337
  %v7993 = vmul.f32 %v7968, %v3338
  %v7994 = vmul.f32 %v7968, %v3339
  %v7995 = vmul.f32 %v7968, %v3340
  %v7996 = vmul.f32 %v7968, %v3341
  %v7997 = vmul.f32 %v7968, %v3342
  %v7998 = vmul.f32 %v7968, %v3343
  %v7999 = vmul.f32 %v7968, %v3344
  %v8000 = vmul.f32 %v7968, %v3345
  %v8001 = vmul.f32 %v7968, %v3346
  %v8002 = vmul.f32 %v7968, %v3347
  %v8003 = vmul.f32 %v7968, %v3348
  %v8004 = vmul.f32 %v7968, %v3349
  %v8005 = vmul.f32 %v7968, %v3350
  %v8006 = vmul.f32 %v7968, %v3351
  %v8007 = vmul.f32 %v7968, %v3352
  %v8008 = vmul.f32 %v7968, %v3353
  %v8009 = vmul.f32 %v7968, %v3354
  %v8010 = vmul.f32 %v7968, %v3355
  %v8011 = vmul.f32 %v7968, %v3356
  %v8012 = vmul.f32 %v7968, %v3357
  %v8013 = vmul.f32 %v7968, %v3358
  %v8014 = vmul.f32 %v7968, %v3359
  %v8015 = vmul.f32 %v7968, %v3360
  %v8016 = vmul.f32 %v7968, %v3361
  %v8017 = vmul.f32 %v7968, %v3362
  %v8018 = vmul.f32 %v7968, %v3363
  %v8019 = vmul.f32 %v7968, %v3364
  %v8020 = vmul.f32 %v7968, %v3365
  %v8021 = vmul.f32 %v7968, %v3366
  %v8022 = vmul.f32 %v7968, %v3367
  %v8023 = vmul.f32 %v7968, %v3368
  %v8024 = vmul.f32 %v7968, %v3369
  %v8025 = vmul.f32 %v7968, %v3370
  %v8026 = vmul.f32 %v7968, %v3371
  %v8027 = vmul.f32 %v7968, %v3372
  %v8028 = vmul.f32 %v7968, %v3373
  %v8029 = vmul.f32 %v7968, %v3374
  %v8030 = vmul.f32 %v7968, %v3375
  %v8031 = vmul.f32 %v7968, %v3376
  %v8032 = vmul.f32 %v7968, %v3377
  %v8033 = vmul.f32 %v7968, %v3378
  %8034 = vmatpush.msra.mxu0 %v7949
  %8035 = vmatpush.msra.mxu0 %v7948
  %8036 = vmatpush.msra.mxu0 %v7947
  %8037 = vmatpush.msra.mxu0 %v7946
  %8038 = vmatpush.msra.mxu0 %v7945
  %8039 = vmatpush.msra.mxu0 %v7944
  %8040 = vmatpush.msra.mxu0 %v7943
  %8041 = vmatpush.msra.mxu0 %v7942
  %8042 = vmatpush.msra.mxu0 %v7941
  %8043 = vmatpush.msra.mxu0 %v7940
  %8044 = vmatpush.msra.mxu0 %v7939
  %8045 = vmatpush.msra.mxu0 %v7938
  %8046 = vmatpush.msra.mxu0 %v7937
  %8047 = vmatpush.msra.mxu0 %v7936
  %8048 = vmatpush.msra.mxu0 %v7935
  %8049 = vmatpush.msra.mxu0 %v7934
  %8050 = vmatmul.f32.gmra.mxu0 %v7806
  %v8051 = vpop.f32.mrf.mxu0
  %v8052 = vadd.f32 %v7970, %v8051
  %8053 = vmatmul.f32.gmra.mxu0 %v7808
  %v8054 = vpop.f32.mrf.mxu0
  %v8055 = vadd.f32 %v7971, %v8054
  %8056 = vmatmul.f32.gmra.mxu0 %v7810
  %v8057 = vpop.f32.mrf.mxu0
  %v8058 = vadd.f32 %v7972, %v8057
  %8059 = vmatmul.f32.gmra.mxu0 %v7812
  %v8060 = vpop.f32.mrf.mxu0
  %v8061 = vadd.f32 %v7973, %v8060
  %8062 = vmatmul.f32.gmra.mxu0 %v7814
  %v8063 = vpop.f32.mrf.mxu0
  %v8064 = vadd.f32 %v7974, %v8063
  %8065 = vmatmul.f32.gmra.mxu0 %v7816
  %v8066 = vpop.f32.mrf.mxu0
  %v8067 = vadd.f32 %v7975, %v8066
  %8068 = vmatmul.f32.gmra.mxu0 %v7818
  %v8069 = vpop.f32.mrf.mxu0
  %v8070 = vadd.f32 %v7976, %v8069
  %8071 = vmatmul.f32.gmra.mxu0 %v7820
  %v8072 = vpop.f32.mrf.mxu0
  %v8073 = vadd.f32 %v7977, %v8072
  %8074 = vmatmul.f32.gmra.mxu0 %v7822
  %v8075 = vpop.f32.mrf.mxu0
  %v8076 = vadd.f32 %v7978, %v8075
  %8077 = vmatmul.f32.gmra.mxu0 %v7824
  %v8078 = vpop.f32.mrf.mxu0
  %v8079 = vadd.f32 %v7979, %v8078
  %8080 = vmatmul.f32.gmra.mxu0 %v7826
  %v8081 = vpop.f32.mrf.mxu0
  %v8082 = vadd.f32 %v7980, %v8081
  %8083 = vmatmul.f32.gmra.mxu0 %v7828
  %v8084 = vpop.f32.mrf.mxu0
  %v8085 = vadd.f32 %v7981, %v8084
  %8086 = vmatmul.f32.gmra.mxu0 %v7830
  %v8087 = vpop.f32.mrf.mxu0
  %v8088 = vadd.f32 %v7982, %v8087
  %8089 = vmatmul.f32.gmra.mxu0 %v7832
  %v8090 = vpop.f32.mrf.mxu0
  %v8091 = vadd.f32 %v7983, %v8090
  %8092 = vmatmul.f32.gmra.mxu0 %v7834
  %v8093 = vpop.f32.mrf.mxu0
  %v8094 = vadd.f32 %v7984, %v8093
  %8095 = vmatmul.f32.gmra.mxu0 %v7836
  %v8096 = vpop.f32.mrf.mxu0
  %v8097 = vadd.f32 %v7985, %v8096
  %8098 = vmatmul.f32.gmra.mxu0 %v7838
  %v8099 = vpop.f32.mrf.mxu0
  %v8100 = vadd.f32 %v7986, %v8099
  %8101 = vmatmul.f32.gmra.mxu0 %v7840
  %v8102 = vpop.f32.mrf.mxu0
  %v8103 = vadd.f32 %v7987, %v8102
  %8104 = vmatmul.f32.gmra.mxu0 %v7842
  %v8105 = vpop.f32.mrf.mxu0
  %v8106 = vadd.f32 %v7988, %v8105
  %8107 = vmatmul.f32.gmra.mxu0 %v7844
  %v8108 = vpop.f32.mrf.mxu0
  %v8109 = vadd.f32 %v7989, %v8108
  %8110 = vmatmul.f32.gmra.mxu0 %v7846
  %v8111 = vpop.f32.mrf.mxu0
  %v8112 = vadd.f32 %v7990, %v8111
  %8113 = vmatmul.f32.gmra.mxu0 %v7848
  %v8114 = vpop.f32.mrf.mxu0
  %v8115 = vadd.f32 %v7991, %v8114
  %8116 = vmatmul.f32.gmra.mxu0 %v7850
  %v8117 = vpop.f32.mrf.mxu0
  %v8118 = vadd.f32 %v7992, %v8117
  %8119 = vmatmul.f32.gmra.mxu0 %v7852
  %v8120 = vpop.f32.mrf.mxu0
  %v8121 = vadd.f32 %v7993, %v8120
  %8122 = vmatmul.f32.gmra.mxu0 %v7854
  %v8123 = vpop.f32.mrf.mxu0
  %v8124 = vadd.f32 %v7994, %v8123
  %8125 = vmatmul.f32.gmra.mxu0 %v7856
  %v8126 = vpop.f32.mrf.mxu0
  %v8127 = vadd.f32 %v7995, %v8126
  %8128 = vmatmul.f32.gmra.mxu0 %v7858
  %v8129 = vpop.f32.mrf.mxu0
  %v8130 = vadd.f32 %v7996, %v8129
  %8131 = vmatmul.f32.gmra.mxu0 %v7860
  %v8132 = vpop.f32.mrf.mxu0
  %v8133 = vadd.f32 %v7997, %v8132
  %8134 = vmatmul.f32.gmra.mxu0 %v7862
  %v8135 = vpop.f32.mrf.mxu0
  %v8136 = vadd.f32 %v7998, %v8135
  %8137 = vmatmul.f32.gmra.mxu0 %v7864
  %v8138 = vpop.f32.mrf.mxu0
  %v8139 = vadd.f32 %v7999, %v8138
  %8140 = vmatmul.f32.gmra.mxu0 %v7866
  %v8141 = vpop.f32.mrf.mxu0
  %v8142 = vadd.f32 %v8000, %v8141
  %8143 = vmatmul.f32.gmra.mxu0 %v7868
  %v8144 = vpop.f32.mrf.mxu0
  %v8145 = vadd.f32 %v8001, %v8144
  %8146 = vmatmul.f32.gmra.mxu0 %v7870
  %v8147 = vpop.f32.mrf.mxu0
  %v8148 = vadd.f32 %v8002, %v8147
  %8149 = vmatmul.f32.gmra.mxu0 %v7872
  %v8150 = vpop.f32.mrf.mxu0
  %v8151 = vadd.f32 %v8003, %v8150
  %8152 = vmatmul.f32.gmra.mxu0 %v7874
  %v8153 = vpop.f32.mrf.mxu0
  %v8154 = vadd.f32 %v8004, %v8153
  %8155 = vmatmul.f32.gmra.mxu0 %v7876
  %v8156 = vpop.f32.mrf.mxu0
  %v8157 = vadd.f32 %v8005, %v8156
  %8158 = vmatmul.f32.gmra.mxu0 %v7878
  %v8159 = vpop.f32.mrf.mxu0
  %v8160 = vadd.f32 %v8006, %v8159
  %8161 = vmatmul.f32.gmra.mxu0 %v7880
  %v8162 = vpop.f32.mrf.mxu0
  %v8163 = vadd.f32 %v8007, %v8162
  %8164 = vmatmul.f32.gmra.mxu0 %v7882
  %v8165 = vpop.f32.mrf.mxu0
  %v8166 = vadd.f32 %v8008, %v8165
  %8167 = vmatmul.f32.gmra.mxu0 %v7884
  %v8168 = vpop.f32.mrf.mxu0
  %v8169 = vadd.f32 %v8009, %v8168
  %8170 = vmatmul.f32.gmra.mxu0 %v7886
  %v8171 = vpop.f32.mrf.mxu0
  %v8172 = vadd.f32 %v8010, %v8171
  %8173 = vmatmul.f32.gmra.mxu0 %v7888
  %v8174 = vpop.f32.mrf.mxu0
  %v8175 = vadd.f32 %v8011, %v8174
  %8176 = vmatmul.f32.gmra.mxu0 %v7890
  %v8177 = vpop.f32.mrf.mxu0
  %v8178 = vadd.f32 %v8012, %v8177
  %8179 = vmatmul.f32.gmra.mxu0 %v7892
  %v8180 = vpop.f32.mrf.mxu0
  %v8181 = vadd.f32 %v8013, %v8180
  %8182 = vmatmul.f32.gmra.mxu0 %v7894
  %v8183 = vpop.f32.mrf.mxu0
  %v8184 = vadd.f32 %v8014, %v8183
  %8185 = vmatmul.f32.gmra.mxu0 %v7896
  %v8186 = vpop.f32.mrf.mxu0
  %v8187 = vadd.f32 %v8015, %v8186
  %8188 = vmatmul.f32.gmra.mxu0 %v7898
  %v8189 = vpop.f32.mrf.mxu0
  %v8190 = vadd.f32 %v8016, %v8189
  %8191 = vmatmul.f32.gmra.mxu0 %v7900
  %v8192 = vpop.f32.mrf.mxu0
  %v8193 = vadd.f32 %v8017, %v8192
  %8194 = vmatmul.f32.gmra.mxu0 %v7902
  %v8195 = vpop.f32.mrf.mxu0
  %v8196 = vadd.f32 %v8018, %v8195
  %8197 = vmatmul.f32.gmra.mxu0 %v7904
  %v8198 = vpop.f32.mrf.mxu0
  %v8199 = vadd.f32 %v8019, %v8198
  %8200 = vmatmul.f32.gmra.mxu0 %v7906
  %v8201 = vpop.f32.mrf.mxu0
  %v8202 = vadd.f32 %v8020, %v8201
  %8203 = vmatmul.f32.gmra.mxu0 %v7908
  %v8204 = vpop.f32.mrf.mxu0
  %v8205 = vadd.f32 %v8021, %v8204
  %8206 = vmatmul.f32.gmra.mxu0 %v7910
  %v8207 = vpop.f32.mrf.mxu0
  %v8208 = vadd.f32 %v8022, %v8207
  %8209 = vmatmul.f32.gmra.mxu0 %v7912
  %v8210 = vpop.f32.mrf.mxu0
  %v8211 = vadd.f32 %v8023, %v8210
  %8212 = vmatmul.f32.gmra.mxu0 %v7914
  %v8213 = vpop.f32.mrf.mxu0
  %v8214 = vadd.f32 %v8024, %v8213
  %8215 = vmatmul.f32.gmra.mxu0 %v7916
  %v8216 = vpop.f32.mrf.mxu0
  %v8217 = vadd.f32 %v8025, %v8216
  %8218 = vmatmul.f32.gmra.mxu0 %v7918
  %v8219 = vpop.f32.mrf.mxu0
  %v8220 = vadd.f32 %v8026, %v8219
  %8221 = vmatmul.f32.gmra.mxu0 %v7920
  %v8222 = vpop.f32.mrf.mxu0
  %v8223 = vadd.f32 %v8027, %v8222
  %8224 = vmatmul.f32.gmra.mxu0 %v7922
  %v8225 = vpop.f32.mrf.mxu0
  %v8226 = vadd.f32 %v8028, %v8225
  %8227 = vmatmul.f32.gmra.mxu0 %v7924
  %v8228 = vpop.f32.mrf.mxu0
  %v8229 = vadd.f32 %v8029, %v8228
  %8230 = vmatmul.f32.gmra.mxu0 %v7926
  %v8231 = vpop.f32.mrf.mxu0
  %v8232 = vadd.f32 %v8030, %v8231
  %8233 = vmatmul.f32.gmra.mxu0 %v7928
  %v8234 = vpop.f32.mrf.mxu0
  %v8235 = vadd.f32 %v8031, %v8234
  %8236 = vmatmul.f32.gmra.mxu0 %v7930
  %v8237 = vpop.f32.mrf.mxu0
  %v8238 = vadd.f32 %v8032, %v8237
  %8239 = vmatmul.f32.gmra.mxu0 %v7932
  %v8240 = vpop.f32.mrf.mxu0
  %v8241 = vadd.f32 %v8033, %v8240
  %8242 = vdwg.mxu0
  %8243 = vmatpush.msra.mxu0 %v7965
  %8244 = vmatpush.msra.mxu0 %v7964
  %8245 = vmatpush.msra.mxu0 %v7963
  %8246 = vmatpush.msra.mxu0 %v7962
  %8247 = vmatpush.msra.mxu0 %v7961
  %8248 = vmatpush.msra.mxu0 %v7960
  %8249 = vmatpush.msra.mxu0 %v7959
  %8250 = vmatpush.msra.mxu0 %v7958
  %8251 = vmatpush.msra.mxu0 %v7957
  %8252 = vmatpush.msra.mxu0 %v7956
  %8253 = vmatpush.msra.mxu0 %v7955
  %8254 = vmatpush.msra.mxu0 %v7954
  %8255 = vmatpush.msra.mxu0 %v7953
  %8256 = vmatpush.msra.mxu0 %v7952
  %8257 = vmatpush.msra.mxu0 %v7951
  %8258 = vmatpush.msra.mxu0 %v7950
  %8259 = vmatmul.f32.gmra.mxu0 %v7807
  %v8260 = vpop.f32.mrf.mxu0
  %v8261 = vadd.f32 %v8052, %v8260
  %8262 = vmatmul.f32.gmra.mxu0 %v7809
  %v8263 = vpop.f32.mrf.mxu0
  %v8264 = vadd.f32 %v8055, %v8263
  %8265 = vmatmul.f32.gmra.mxu0 %v7811
  %v8266 = vpop.f32.mrf.mxu0
  %v8267 = vadd.f32 %v8058, %v8266
  %8268 = vmatmul.f32.gmra.mxu0 %v7813
  %v8269 = vpop.f32.mrf.mxu0
  %v8270 = vadd.f32 %v8061, %v8269
  %8271 = vmatmul.f32.gmra.mxu0 %v7815
  %v8272 = vpop.f32.mrf.mxu0
  %v8273 = vadd.f32 %v8064, %v8272
  %8274 = vmatmul.f32.gmra.mxu0 %v7817
  %v8275 = vpop.f32.mrf.mxu0
  %v8276 = vadd.f32 %v8067, %v8275
  %8277 = vmatmul.f32.gmra.mxu0 %v7819
  %v8278 = vpop.f32.mrf.mxu0
  %v8279 = vadd.f32 %v8070, %v8278
  %8280 = vmatmul.f32.gmra.mxu0 %v7821
  %v8281 = vpop.f32.mrf.mxu0
  %v8282 = vadd.f32 %v8073, %v8281
  %8283 = vmatmul.f32.gmra.mxu0 %v7823
  %v8284 = vpop.f32.mrf.mxu0
  %v8285 = vadd.f32 %v8076, %v8284
  %8286 = vmatmul.f32.gmra.mxu0 %v7825
  %v8287 = vpop.f32.mrf.mxu0
  %v8288 = vadd.f32 %v8079, %v8287
  %8289 = vmatmul.f32.gmra.mxu0 %v7827
  %v8290 = vpop.f32.mrf.mxu0
  %v8291 = vadd.f32 %v8082, %v8290
  %8292 = vmatmul.f32.gmra.mxu0 %v7829
  %v8293 = vpop.f32.mrf.mxu0
  %v8294 = vadd.f32 %v8085, %v8293
  %8295 = vmatmul.f32.gmra.mxu0 %v7831
  %v8296 = vpop.f32.mrf.mxu0
  %v8297 = vadd.f32 %v8088, %v8296
  %8298 = vmatmul.f32.gmra.mxu0 %v7833
  %v8299 = vpop.f32.mrf.mxu0
  %v8300 = vadd.f32 %v8091, %v8299
  %8301 = vmatmul.f32.gmra.mxu0 %v7835
  %v8302 = vpop.f32.mrf.mxu0
  %v8303 = vadd.f32 %v8094, %v8302
  %8304 = vmatmul.f32.gmra.mxu0 %v7837
  %v8305 = vpop.f32.mrf.mxu0
  %v8306 = vadd.f32 %v8097, %v8305
  %8307 = vmatmul.f32.gmra.mxu0 %v7839
  %v8308 = vpop.f32.mrf.mxu0
  %v8309 = vadd.f32 %v8100, %v8308
  %8310 = vmatmul.f32.gmra.mxu0 %v7841
  %v8311 = vpop.f32.mrf.mxu0
  %v8312 = vadd.f32 %v8103, %v8311
  %8313 = vmatmul.f32.gmra.mxu0 %v7843
  %v8314 = vpop.f32.mrf.mxu0
  %v8315 = vadd.f32 %v8106, %v8314
  %8316 = vmatmul.f32.gmra.mxu0 %v7845
  %v8317 = vpop.f32.mrf.mxu0
  %v8318 = vadd.f32 %v8109, %v8317
  %8319 = vmatmul.f32.gmra.mxu0 %v7847
  %v8320 = vpop.f32.mrf.mxu0
  %v8321 = vadd.f32 %v8112, %v8320
  %8322 = vmatmul.f32.gmra.mxu0 %v7849
  %v8323 = vpop.f32.mrf.mxu0
  %v8324 = vadd.f32 %v8115, %v8323
  %8325 = vmatmul.f32.gmra.mxu0 %v7851
  %v8326 = vpop.f32.mrf.mxu0
  %v8327 = vadd.f32 %v8118, %v8326
  %8328 = vmatmul.f32.gmra.mxu0 %v7853
  %v8329 = vpop.f32.mrf.mxu0
  %v8330 = vadd.f32 %v8121, %v8329
  %8331 = vmatmul.f32.gmra.mxu0 %v7855
  %v8332 = vpop.f32.mrf.mxu0
  %v8333 = vadd.f32 %v8124, %v8332
  %8334 = vmatmul.f32.gmra.mxu0 %v7857
  %v8335 = vpop.f32.mrf.mxu0
  %v8336 = vadd.f32 %v8127, %v8335
  %8337 = vmatmul.f32.gmra.mxu0 %v7859
  %v8338 = vpop.f32.mrf.mxu0
  %v8339 = vadd.f32 %v8130, %v8338
  %8340 = vmatmul.f32.gmra.mxu0 %v7861
  %v8341 = vpop.f32.mrf.mxu0
  %v8342 = vadd.f32 %v8133, %v8341
  %8343 = vmatmul.f32.gmra.mxu0 %v7863
  %v8344 = vpop.f32.mrf.mxu0
  %v8345 = vadd.f32 %v8136, %v8344
  %8346 = vmatmul.f32.gmra.mxu0 %v7865
  %v8347 = vpop.f32.mrf.mxu0
  %v8348 = vadd.f32 %v8139, %v8347
  %8349 = vmatmul.f32.gmra.mxu0 %v7867
  %v8350 = vpop.f32.mrf.mxu0
  %v8351 = vadd.f32 %v8142, %v8350
  %8352 = vmatmul.f32.gmra.mxu0 %v7869
  %v8353 = vpop.f32.mrf.mxu0
  %v8354 = vadd.f32 %v8145, %v8353
  %8355 = vmatmul.f32.gmra.mxu0 %v7871
  %v8356 = vpop.f32.mrf.mxu0
  %v8357 = vadd.f32 %v8148, %v8356
  %8358 = vmatmul.f32.gmra.mxu0 %v7873
  %v8359 = vpop.f32.mrf.mxu0
  %v8360 = vadd.f32 %v8151, %v8359
  %8361 = vmatmul.f32.gmra.mxu0 %v7875
  %v8362 = vpop.f32.mrf.mxu0
  %v8363 = vadd.f32 %v8154, %v8362
  %8364 = vmatmul.f32.gmra.mxu0 %v7877
  %v8365 = vpop.f32.mrf.mxu0
  %v8366 = vadd.f32 %v8157, %v8365
  %8367 = vmatmul.f32.gmra.mxu0 %v7879
  %v8368 = vpop.f32.mrf.mxu0
  %v8369 = vadd.f32 %v8160, %v8368
  %8370 = vmatmul.f32.gmra.mxu0 %v7881
  %v8371 = vpop.f32.mrf.mxu0
  %v8372 = vadd.f32 %v8163, %v8371
  %8373 = vmatmul.f32.gmra.mxu0 %v7883
  %v8374 = vpop.f32.mrf.mxu0
  %v8375 = vadd.f32 %v8166, %v8374
  %8376 = vmatmul.f32.gmra.mxu0 %v7885
  %v8377 = vpop.f32.mrf.mxu0
  %v8378 = vadd.f32 %v8169, %v8377
  %8379 = vmatmul.f32.gmra.mxu0 %v7887
  %v8380 = vpop.f32.mrf.mxu0
  %v8381 = vadd.f32 %v8172, %v8380
  %8382 = vmatmul.f32.gmra.mxu0 %v7889
  %v8383 = vpop.f32.mrf.mxu0
  %v8384 = vadd.f32 %v8175, %v8383
  %8385 = vmatmul.f32.gmra.mxu0 %v7891
  %v8386 = vpop.f32.mrf.mxu0
  %v8387 = vadd.f32 %v8178, %v8386
  %8388 = vmatmul.f32.gmra.mxu0 %v7893
  %v8389 = vpop.f32.mrf.mxu0
  %v8390 = vadd.f32 %v8181, %v8389
  %8391 = vmatmul.f32.gmra.mxu0 %v7895
  %v8392 = vpop.f32.mrf.mxu0
  %v8393 = vadd.f32 %v8184, %v8392
  %8394 = vmatmul.f32.gmra.mxu0 %v7897
  %v8395 = vpop.f32.mrf.mxu0
  %v8396 = vadd.f32 %v8187, %v8395
  %8397 = vmatmul.f32.gmra.mxu0 %v7899
  %v8398 = vpop.f32.mrf.mxu0
  %v8399 = vadd.f32 %v8190, %v8398
  %8400 = vmatmul.f32.gmra.mxu0 %v7901
  %v8401 = vpop.f32.mrf.mxu0
  %v8402 = vadd.f32 %v8193, %v8401
  %8403 = vmatmul.f32.gmra.mxu0 %v7903
  %v8404 = vpop.f32.mrf.mxu0
  %v8405 = vadd.f32 %v8196, %v8404
  %8406 = vmatmul.f32.gmra.mxu0 %v7905
  %v8407 = vpop.f32.mrf.mxu0
  %v8408 = vadd.f32 %v8199, %v8407
  %8409 = vmatmul.f32.gmra.mxu0 %v7907
  %v8410 = vpop.f32.mrf.mxu0
  %v8411 = vadd.f32 %v8202, %v8410
  %8412 = vmatmul.f32.gmra.mxu0 %v7909
  %v8413 = vpop.f32.mrf.mxu0
  %v8414 = vadd.f32 %v8205, %v8413
  %8415 = vmatmul.f32.gmra.mxu0 %v7911
  %v8416 = vpop.f32.mrf.mxu0
  %v8417 = vadd.f32 %v8208, %v8416
  %8418 = vmatmul.f32.gmra.mxu0 %v7913
  %v8419 = vpop.f32.mrf.mxu0
  %v8420 = vadd.f32 %v8211, %v8419
  %8421 = vmatmul.f32.gmra.mxu0 %v7915
  %v8422 = vpop.f32.mrf.mxu0
  %v8423 = vadd.f32 %v8214, %v8422
  %8424 = vmatmul.f32.gmra.mxu0 %v7917
  %v8425 = vpop.f32.mrf.mxu0
  %v8426 = vadd.f32 %v8217, %v8425
  %8427 = vmatmul.f32.gmra.mxu0 %v7919
  %v8428 = vpop.f32.mrf.mxu0
  %v8429 = vadd.f32 %v8220, %v8428
  %8430 = vmatmul.f32.gmra.mxu0 %v7921
  %v8431 = vpop.f32.mrf.mxu0
  %v8432 = vadd.f32 %v8223, %v8431
  %8433 = vmatmul.f32.gmra.mxu0 %v7923
  %v8434 = vpop.f32.mrf.mxu0
  %v8435 = vadd.f32 %v8226, %v8434
  %8436 = vmatmul.f32.gmra.mxu0 %v7925
  %v8437 = vpop.f32.mrf.mxu0
  %v8438 = vadd.f32 %v8229, %v8437
  %8439 = vmatmul.f32.gmra.mxu0 %v7927
  %v8440 = vpop.f32.mrf.mxu0
  %v8441 = vadd.f32 %v8232, %v8440
  %8442 = vmatmul.f32.gmra.mxu0 %v7929
  %v8443 = vpop.f32.mrf.mxu0
  %v8444 = vadd.f32 %v8235, %v8443
  %8445 = vmatmul.f32.gmra.mxu0 %v7931
  %v8446 = vpop.f32.mrf.mxu0
  %v8447 = vadd.f32 %v8238, %v8446
  %8448 = vmatmul.f32.gmra.mxu0 %v7933
  %v8449 = vpop.f32.mrf.mxu0
  %v8450 = vadd.f32 %v8241, %v8449
  %8451 = vdwg.mxu0
  %v8452 = vand.u32 2147483647, %v1884
  %v8453 = vand.u32 2147483647, %v1887
  %v8454 = vand.u32 2147483647, %v1890
  %v8455 = vand.u32 2147483647, %v1893
  %v8456 = vand.u32 2147483647, %v1896
  %v8457 = vand.u32 2147483647, %v1899
  %v8458 = vand.u32 2147483647, %v1902
  %v8459 = vand.u32 2147483647, %v1905
  %v8460 = vand.u32 2147483647, %v1908
  %v8461 = vand.u32 2147483647, %v1911
  %v8462 = vand.u32 2147483647, %v1914
  %v8463 = vand.u32 2147483647, %v1917
  %v8464 = vand.u32 2147483647, %v1920
  %v8465 = vand.u32 2147483647, %v1923
  %v8466 = vand.u32 2147483647, %v1926
  %v8467 = vand.u32 2147483647, %v1929
  %v8468 = vand.u32 2147483647, %v1932
  %v8469 = vand.u32 2147483647, %v1935
  %v8470 = vand.u32 2147483647, %v1938
  %v8471 = vand.u32 2147483647, %v1941
  %v8472 = vand.u32 2147483647, %v1944
  %v8473 = vand.u32 2147483647, %v1947
  %v8474 = vand.u32 2147483647, %v1950
  %v8475 = vand.u32 2147483647, %v1953
  %v8476 = vand.u32 2147483647, %v1956
  %v8477 = vand.u32 2147483647, %v1959
  %v8478 = vand.u32 2147483647, %v1962
  %v8479 = vand.u32 2147483647, %v1965
  %v8480 = vand.u32 2147483647, %v1968
  %v8481 = vand.u32 2147483647, %v1971
  %v8482 = vand.u32 2147483647, %v1974
  %v8483 = vand.u32 2147483647, %v1977
  %v8484 = vand.u32 2147483647, %v1980
  %v8485 = vand.u32 2147483647, %v1983
  %v8486 = vand.u32 2147483647, %v1986
  %v8487 = vand.u32 2147483647, %v1989
  %v8488 = vand.u32 2147483647, %v1992
  %v8489 = vand.u32 2147483647, %v1995
  %v8490 = vand.u32 2147483647, %v1998
  %v8491 = vand.u32 2147483647, %v2001
  %v8492 = vand.u32 2147483647, %v2004
  %v8493 = vand.u32 2147483647, %v2007
  %v8494 = vand.u32 2147483647, %v2010
  %v8495 = vand.u32 2147483647, %v2013
  %v8496 = vand.u32 2147483647, %v2016
  %v8497 = vand.u32 2147483647, %v2019
  %v8498 = vand.u32 2147483647, %v2022
  %v8499 = vand.u32 2147483647, %v2025
  %v8500 = vand.u32 2147483647, %v2028
  %v8501 = vand.u32 2147483647, %v2031
  %v8502 = vand.u32 2147483647, %v2034
  %v8503 = vand.u32 2147483647, %v2037
  %v8504 = vand.u32 2147483647, %v2040
  %v8505 = vand.u32 2147483647, %v2043
  %v8506 = vand.u32 2147483647, %v2046
  %v8507 = vand.u32 2147483647, %v2049
  %v8508 = vand.u32 2147483647, %v2052
  %v8509 = vand.u32 2147483647, %v2055
  %v8510 = vand.u32 2147483647, %v2058
  %v8511 = vand.u32 2147483647, %v2061
  %v8512 = vand.u32 2147483647, %v2064
  %v8513 = vand.u32 2147483647, %v2067
  %v8514 = vand.u32 2147483647, %v2070
  %v8515 = vand.u32 2147483647, %v2073
  %v8516 = vsub.f32 0.0, %v8452
  %v8517 = vsub.f32 0.0, %v8453
  %v8518 = vsub.f32 0.0, %v8454
  %v8519 = vsub.f32 0.0, %v8455
  %v8520 = vsub.f32 0.0, %v8456
  %v8521 = vsub.f32 0.0, %v8457
  %v8522 = vsub.f32 0.0, %v8458
  %v8523 = vsub.f32 0.0, %v8459
  %v8524 = vsub.f32 0.0, %v8460
  %v8525 = vsub.f32 0.0, %v8461
  %v8526 = vsub.f32 0.0, %v8462
  %v8527 = vsub.f32 0.0, %v8463
  %v8528 = vsub.f32 0.0, %v8464
  %v8529 = vsub.f32 0.0, %v8465
  %v8530 = vsub.f32 0.0, %v8466
  %v8531 = vsub.f32 0.0, %v8467
  %v8532 = vsub.f32 0.0, %v8468
  %v8533 = vsub.f32 0.0, %v8469
  %v8534 = vsub.f32 0.0, %v8470
  %v8535 = vsub.f32 0.0, %v8471
  %v8536 = vsub.f32 0.0, %v8472
  %v8537 = vsub.f32 0.0, %v8473
  %v8538 = vsub.f32 0.0, %v8474
  %v8539 = vsub.f32 0.0, %v8475
  %v8540 = vsub.f32 0.0, %v8476
  %v8541 = vsub.f32 0.0, %v8477
  %v8542 = vsub.f32 0.0, %v8478
  %v8543 = vsub.f32 0.0, %v8479
  %v8544 = vsub.f32 0.0, %v8480
  %v8545 = vsub.f32 0.0, %v8481
  %v8546 = vsub.f32 0.0, %v8482
  %v8547 = vsub.f32 0.0, %v8483
  %v8548 = vsub.f32 0.0, %v8484
  %v8549 = vsub.f32 0.0, %v8485
  %v8550 = vsub.f32 0.0, %v8486
  %v8551 = vsub.f32 0.0, %v8487
  %v8552 = vsub.f32 0.0, %v8488
  %v8553 = vsub.f32 0.0, %v8489
  %v8554 = vsub.f32 0.0, %v8490
  %v8555 = vsub.f32 0.0, %v8491
  %v8556 = vsub.f32 0.0, %v8492
  %v8557 = vsub.f32 0.0, %v8493
  %v8558 = vsub.f32 0.0, %v8494
  %v8559 = vsub.f32 0.0, %v8495
  %v8560 = vsub.f32 0.0, %v8496
  %v8561 = vsub.f32 0.0, %v8497
  %v8562 = vsub.f32 0.0, %v8498
  %v8563 = vsub.f32 0.0, %v8499
  %v8564 = vsub.f32 0.0, %v8500
  %v8565 = vsub.f32 0.0, %v8501
  %v8566 = vsub.f32 0.0, %v8502
  %v8567 = vsub.f32 0.0, %v8503
  %v8568 = vsub.f32 0.0, %v8504
  %v8569 = vsub.f32 0.0, %v8505
  %v8570 = vsub.f32 0.0, %v8506
  %v8571 = vsub.f32 0.0, %v8507
  %v8572 = vsub.f32 0.0, %v8508
  %v8573 = vsub.f32 0.0, %v8509
  %v8574 = vsub.f32 0.0, %v8510
  %v8575 = vsub.f32 0.0, %v8511
  %v8576 = vsub.f32 0.0, %v8512
  %v8577 = vsub.f32 0.0, %v8513
  %v8578 = vsub.f32 0.0, %v8514
  %v8579 = vsub.f32 0.0, %v8515
  %v8580 = vmul.f32 %v8516, 1.442695
  %v8581 = vpow.pop %v8580
  %v8582 = vmul.f32 %v8517, 1.442695
  %v8583 = vpow.pop %v8582
  %v8584 = vmul.f32 %v8518, 1.442695
  %v8585 = vpow.pop %v8584
  %v8586 = vmul.f32 %v8519, 1.442695
  %v8587 = vpow.pop %v8586
  %v8588 = vmul.f32 %v8520, 1.442695
  %v8589 = vpow.pop %v8588
  %v8590 = vmul.f32 %v8521, 1.442695
  %v8591 = vpow.pop %v8590
  %v8592 = vmul.f32 %v8522, 1.442695
  %v8593 = vpow.pop %v8592
  %v8594 = vmul.f32 %v8523, 1.442695
  %v8595 = vpow.pop %v8594
  %v8596 = vmul.f32 %v8524, 1.442695
  %v8597 = vpow.pop %v8596
  %v8598 = vmul.f32 %v8525, 1.442695
  %v8599 = vpow.pop %v8598
  %v8600 = vmul.f32 %v8526, 1.442695
  %v8601 = vpow.pop %v8600
  %v8602 = vmul.f32 %v8527, 1.442695
  %v8603 = vpow.pop %v8602
  %v8604 = vmul.f32 %v8528, 1.442695
  %v8605 = vpow.pop %v8604
  %v8606 = vmul.f32 %v8529, 1.442695
  %v8607 = vpow.pop %v8606
  %v8608 = vmul.f32 %v8530, 1.442695
  %v8609 = vpow.pop %v8608
  %v8610 = vmul.f32 %v8531, 1.442695
  %v8611 = vpow.pop %v8610
  %v8612 = vmul.f32 %v8532, 1.442695
  %v8613 = vpow.pop %v8612
  %v8614 = vmul.f32 %v8533, 1.442695
  %v8615 = vpow.pop %v8614
  %v8616 = vmul.f32 %v8534, 1.442695
  %v8617 = vpow.pop %v8616
  %v8618 = vmul.f32 %v8535, 1.442695
  %v8619 = vpow.pop %v8618
  %v8620 = vmul.f32 %v8536, 1.442695
  %v8621 = vpow.pop %v8620
  %v8622 = vmul.f32 %v8537, 1.442695
  %v8623 = vpow.pop %v8622
  %v8624 = vmul.f32 %v8538, 1.442695
  %v8625 = vpow.pop %v8624
  %v8626 = vmul.f32 %v8539, 1.442695
  %v8627 = vpow.pop %v8626
  %v8628 = vmul.f32 %v8540, 1.442695
  %v8629 = vpow.pop %v8628
  %v8630 = vmul.f32 %v8541, 1.442695
  %v8631 = vpow.pop %v8630
  %v8632 = vmul.f32 %v8542, 1.442695
  %v8633 = vpow.pop %v8632
  %v8634 = vmul.f32 %v8543, 1.442695
  %v8635 = vpow.pop %v8634
  %v8636 = vmul.f32 %v8544, 1.442695
  %v8637 = vpow.pop %v8636
  %v8638 = vmul.f32 %v8545, 1.442695
  %v8639 = vpow.pop %v8638
  %v8640 = vmul.f32 %v8546, 1.442695
  %v8641 = vpow.pop %v8640
  %v8642 = vmul.f32 %v8547, 1.442695
  %v8643 = vpow.pop %v8642
  %v8644 = vmul.f32 %v8548, 1.442695
  %v8645 = vpow.pop %v8644
  %v8646 = vmul.f32 %v8549, 1.442695
  %v8647 = vpow.pop %v8646
  %v8648 = vmul.f32 %v8550, 1.442695
  %v8649 = vpow.pop %v8648
  %v8650 = vmul.f32 %v8551, 1.442695
  %v8651 = vpow.pop %v8650
  %v8652 = vmul.f32 %v8552, 1.442695
  %v8653 = vpow.pop %v8652
  %v8654 = vmul.f32 %v8553, 1.442695
  %v8655 = vpow.pop %v8654
  %v8656 = vmul.f32 %v8554, 1.442695
  %v8657 = vpow.pop %v8656
  %v8658 = vmul.f32 %v8555, 1.442695
  %v8659 = vpow.pop %v8658
  %v8660 = vmul.f32 %v8556, 1.442695
  %v8661 = vpow.pop %v8660
  %v8662 = vmul.f32 %v8557, 1.442695
  %v8663 = vpow.pop %v8662
  %v8664 = vmul.f32 %v8558, 1.442695
  %v8665 = vpow.pop %v8664
  %v8666 = vmul.f32 %v8559, 1.442695
  %v8667 = vpow.pop %v8666
  %v8668 = vmul.f32 %v8560, 1.442695
  %v8669 = vpow.pop %v8668
  %v8670 = vmul.f32 %v8561, 1.442695
  %v8671 = vpow.pop %v8670
  %v8672 = vmul.f32 %v8562, 1.442695
  %v8673 = vpow.pop %v8672
  %v8674 = vmul.f32 %v8563, 1.442695
  %v8675 = vpow.pop %v8674
  %v8676 = vmul.f32 %v8564, 1.442695
  %v8677 = vpow.pop %v8676
  %v8678 = vmul.f32 %v8565, 1.442695
  %v8679 = vpow.pop %v8678
  %v8680 = vmul.f32 %v8566, 1.442695
  %v8681 = vpow.pop %v8680
  %v8682 = vmul.f32 %v8567, 1.442695
  %v8683 = vpow.pop %v8682
  %v8684 = vmul.f32 %v8568, 1.442695
  %v8685 = vpow.pop %v8684
  %v8686 = vmul.f32 %v8569, 1.442695
  %v8687 = vpow.pop %v8686
  %v8688 = vmul.f32 %v8570, 1.442695
  %v8689 = vpow.pop %v8688
  %v8690 = vmul.f32 %v8571, 1.442695
  %v8691 = vpow.pop %v8690
  %v8692 = vmul.f32 %v8572, 1.442695
  %v8693 = vpow.pop %v8692
  %v8694 = vmul.f32 %v8573, 1.442695
  %v8695 = vpow.pop %v8694
  %v8696 = vmul.f32 %v8574, 1.442695
  %v8697 = vpow.pop %v8696
  %v8698 = vmul.f32 %v8575, 1.442695
  %v8699 = vpow.pop %v8698
  %v8700 = vmul.f32 %v8576, 1.442695
  %v8701 = vpow.pop %v8700
  %v8702 = vmul.f32 %v8577, 1.442695
  %v8703 = vpow.pop %v8702
  %v8704 = vmul.f32 %v8578, 1.442695
  %v8705 = vpow.pop %v8704
  %v8706 = vmul.f32 %v8579, 1.442695
  %v8707 = vpow.pop %v8706
  %v8708 = vadd.f32 %v8581, 1.0
  %v8709 = vadd.f32 %v8583, 1.0
  %v8710 = vadd.f32 %v8585, 1.0
  %v8711 = vadd.f32 %v8587, 1.0
  %v8712 = vadd.f32 %v8589, 1.0
  %v8713 = vadd.f32 %v8591, 1.0
  %v8714 = vadd.f32 %v8593, 1.0
  %v8715 = vadd.f32 %v8595, 1.0
  %v8716 = vadd.f32 %v8597, 1.0
  %v8717 = vadd.f32 %v8599, 1.0
  %v8718 = vadd.f32 %v8601, 1.0
  %v8719 = vadd.f32 %v8603, 1.0
  %v8720 = vadd.f32 %v8605, 1.0
  %v8721 = vadd.f32 %v8607, 1.0
  %v8722 = vadd.f32 %v8609, 1.0
  %v8723 = vadd.f32 %v8611, 1.0
  %v8724 = vadd.f32 %v8613, 1.0
  %v8725 = vadd.f32 %v8615, 1.0
  %v8726 = vadd.f32 %v8617, 1.0
  %v8727 = vadd.f32 %v8619, 1.0
  %v8728 = vadd.f32 %v8621, 1.0
  %v8729 = vadd.f32 %v8623, 1.0
  %v8730 = vadd.f32 %v8625, 1.0
  %v8731 = vadd.f32 %v8627, 1.0
  %v8732 = vadd.f32 %v8629, 1.0
  %v8733 = vadd.f32 %v8631, 1.0
  %v8734 = vadd.f32 %v8633, 1.0
  %v8735 = vadd.f32 %v8635, 1.0
  %v8736 = vadd.f32 %v8637, 1.0
  %v8737 = vadd.f32 %v8639, 1.0
  %v8738 = vadd.f32 %v8641, 1.0
  %v8739 = vadd.f32 %v8643, 1.0
  %v8740 = vadd.f32 %v8645, 1.0
  %v8741 = vadd.f32 %v8647, 1.0
  %v8742 = vadd.f32 %v8649, 1.0
  %v8743 = vadd.f32 %v8651, 1.0
  %v8744 = vadd.f32 %v8653, 1.0
  %v8745 = vadd.f32 %v8655, 1.0
  %v8746 = vadd.f32 %v8657, 1.0
  %v8747 = vadd.f32 %v8659, 1.0
  %v8748 = vadd.f32 %v8661, 1.0
  %v8749 = vadd.f32 %v8663, 1.0
  %v8750 = vadd.f32 %v8665, 1.0
  %v8751 = vadd.f32 %v8667, 1.0
  %v8752 = vadd.f32 %v8669, 1.0
  %v8753 = vadd.f32 %v8671, 1.0
  %v8754 = vadd.f32 %v8673, 1.0
  %v8755 = vadd.f32 %v8675, 1.0
  %v8756 = vadd.f32 %v8677, 1.0
  %v8757 = vadd.f32 %v8679, 1.0
  %v8758 = vadd.f32 %v8681, 1.0
  %v8759 = vadd.f32 %v8683, 1.0
  %v8760 = vadd.f32 %v8685, 1.0
  %v8761 = vadd.f32 %v8687, 1.0
  %v8762 = vadd.f32 %v8689, 1.0
  %v8763 = vadd.f32 %v8691, 1.0
  %v8764 = vadd.f32 %v8693, 1.0
  %v8765 = vadd.f32 %v8695, 1.0
  %v8766 = vadd.f32 %v8697, 1.0
  %v8767 = vadd.f32 %v8699, 1.0
  %v8768 = vadd.f32 %v8701, 1.0
  %v8769 = vadd.f32 %v8703, 1.0
  %v8770 = vadd.f32 %v8705, 1.0
  %v8771 = vadd.f32 %v8707, 1.0
  %v8772 = vrcp.pop %v8708
  %v8773 = vrcp.pop %v8709
  %v8774 = vrcp.pop %v8710
  %v8775 = vrcp.pop %v8711
  %v8776 = vrcp.pop %v8712
  %v8777 = vrcp.pop %v8713
  %v8778 = vrcp.pop %v8714
  %v8779 = vrcp.pop %v8715
  %v8780 = vrcp.pop %v8716
  %v8781 = vrcp.pop %v8717
  %v8782 = vrcp.pop %v8718
  %v8783 = vrcp.pop %v8719
  %v8784 = vrcp.pop %v8720
  %v8785 = vrcp.pop %v8721
  %v8786 = vrcp.pop %v8722
  %v8787 = vrcp.pop %v8723
  %v8788 = vrcp.pop %v8724
  %v8789 = vrcp.pop %v8725
  %v8790 = vrcp.pop %v8726
  %v8791 = vrcp.pop %v8727
  %v8792 = vrcp.pop %v8728
  %v8793 = vrcp.pop %v8729
  %v8794 = vrcp.pop %v8730
  %v8795 = vrcp.pop %v8731
  %v8796 = vrcp.pop %v8732
  %v8797 = vrcp.pop %v8733
  %v8798 = vrcp.pop %v8734
  %v8799 = vrcp.pop %v8735
  %v8800 = vrcp.pop %v8736
  %v8801 = vrcp.pop %v8737
  %v8802 = vrcp.pop %v8738
  %v8803 = vrcp.pop %v8739
  %v8804 = vrcp.pop %v8740
  %v8805 = vrcp.pop %v8741
  %v8806 = vrcp.pop %v8742
  %v8807 = vrcp.pop %v8743
  %v8808 = vrcp.pop %v8744
  %v8809 = vrcp.pop %v8745
  %v8810 = vrcp.pop %v8746
  %v8811 = vrcp.pop %v8747
  %v8812 = vrcp.pop %v8748
  %v8813 = vrcp.pop %v8749
  %v8814 = vrcp.pop %v8750
  %v8815 = vrcp.pop %v8751
  %v8816 = vrcp.pop %v8752
  %v8817 = vrcp.pop %v8753
  %v8818 = vrcp.pop %v8754
  %v8819 = vrcp.pop %v8755
  %v8820 = vrcp.pop %v8756
  %v8821 = vrcp.pop %v8757
  %v8822 = vrcp.pop %v8758
  %v8823 = vrcp.pop %v8759
  %v8824 = vrcp.pop %v8760
  %v8825 = vrcp.pop %v8761
  %v8826 = vrcp.pop %v8762
  %v8827 = vrcp.pop %v8763
  %v8828 = vrcp.pop %v8764
  %v8829 = vrcp.pop %v8765
  %v8830 = vrcp.pop %v8766
  %v8831 = vrcp.pop %v8767
  %v8832 = vrcp.pop %v8768
  %v8833 = vrcp.pop %v8769
  %v8834 = vrcp.pop %v8770
  %v8835 = vrcp.pop %v8771
  %vm8836 = vcmp.ge.f32.partialorder %v1884, 0.0
  %vm8837 = vcmp.ge.f32.partialorder %v1887, 0.0
  %vm8838 = vcmp.ge.f32.partialorder %v1890, 0.0
  %vm8839 = vcmp.ge.f32.partialorder %v1893, 0.0
  %vm8840 = vcmp.ge.f32.partialorder %v1896, 0.0
  %vm8841 = vcmp.ge.f32.partialorder %v1899, 0.0
  %vm8842 = vcmp.ge.f32.partialorder %v1902, 0.0
  %vm8843 = vcmp.ge.f32.partialorder %v1905, 0.0
  %vm8844 = vcmp.ge.f32.partialorder %v1908, 0.0
  %vm8845 = vcmp.ge.f32.partialorder %v1911, 0.0
  %vm8846 = vcmp.ge.f32.partialorder %v1914, 0.0
  %vm8847 = vcmp.ge.f32.partialorder %v1917, 0.0
  %vm8848 = vcmp.ge.f32.partialorder %v1920, 0.0
  %vm8849 = vcmp.ge.f32.partialorder %v1923, 0.0
  %vm8850 = vcmp.ge.f32.partialorder %v1926, 0.0
  %vm8851 = vcmp.ge.f32.partialorder %v1929, 0.0
  %vm8852 = vcmp.ge.f32.partialorder %v1932, 0.0
  %vm8853 = vcmp.ge.f32.partialorder %v1935, 0.0
  %vm8854 = vcmp.ge.f32.partialorder %v1938, 0.0
  %vm8855 = vcmp.ge.f32.partialorder %v1941, 0.0
  %vm8856 = vcmp.ge.f32.partialorder %v1944, 0.0
  %vm8857 = vcmp.ge.f32.partialorder %v1947, 0.0
  %vm8858 = vcmp.ge.f32.partialorder %v1950, 0.0
  %vm8859 = vcmp.ge.f32.partialorder %v1953, 0.0
  %vm8860 = vcmp.ge.f32.partialorder %v1956, 0.0
  %vm8861 = vcmp.ge.f32.partialorder %v1959, 0.0
  %vm8862 = vcmp.ge.f32.partialorder %v1962, 0.0
  %vm8863 = vcmp.ge.f32.partialorder %v1965, 0.0
  %vm8864 = vcmp.ge.f32.partialorder %v1968, 0.0
  %vm8865 = vcmp.ge.f32.partialorder %v1971, 0.0
  %vm8866 = vcmp.ge.f32.partialorder %v1974, 0.0
  %vm8867 = vcmp.ge.f32.partialorder %v1977, 0.0
  %vm8868 = vcmp.ge.f32.partialorder %v1980, 0.0
  %vm8869 = vcmp.ge.f32.partialorder %v1983, 0.0
  %vm8870 = vcmp.ge.f32.partialorder %v1986, 0.0
  %vm8871 = vcmp.ge.f32.partialorder %v1989, 0.0
  %vm8872 = vcmp.ge.f32.partialorder %v1992, 0.0
  %vm8873 = vcmp.ge.f32.partialorder %v1995, 0.0
  %vm8874 = vcmp.ge.f32.partialorder %v1998, 0.0
  %vm8875 = vcmp.ge.f32.partialorder %v2001, 0.0
  %vm8876 = vcmp.ge.f32.partialorder %v2004, 0.0
  %vm8877 = vcmp.ge.f32.partialorder %v2007, 0.0
  %vm8878 = vcmp.ge.f32.partialorder %v2010, 0.0
  %vm8879 = vcmp.ge.f32.partialorder %v2013, 0.0
  %vm8880 = vcmp.ge.f32.partialorder %v2016, 0.0
  %vm8881 = vcmp.ge.f32.partialorder %v2019, 0.0
  %vm8882 = vcmp.ge.f32.partialorder %v2022, 0.0
  %vm8883 = vcmp.ge.f32.partialorder %v2025, 0.0
  %vm8884 = vcmp.ge.f32.partialorder %v2028, 0.0
  %vm8885 = vcmp.ge.f32.partialorder %v2031, 0.0
  %vm8886 = vcmp.ge.f32.partialorder %v2034, 0.0
  %vm8887 = vcmp.ge.f32.partialorder %v2037, 0.0
  %vm8888 = vcmp.ge.f32.partialorder %v2040, 0.0
  %vm8889 = vcmp.ge.f32.partialorder %v2043, 0.0
  %vm8890 = vcmp.ge.f32.partialorder %v2046, 0.0
  %vm8891 = vcmp.ge.f32.partialorder %v2049, 0.0
  %vm8892 = vcmp.ge.f32.partialorder %v2052, 0.0
  %vm8893 = vcmp.ge.f32.partialorder %v2055, 0.0
  %vm8894 = vcmp.ge.f32.partialorder %v2058, 0.0
  %vm8895 = vcmp.ge.f32.partialorder %v2061, 0.0
  %vm8896 = vcmp.ge.f32.partialorder %v2064, 0.0
  %vm8897 = vcmp.ge.f32.partialorder %v2067, 0.0
  %vm8898 = vcmp.ge.f32.partialorder %v2070, 0.0
  %vm8899 = vcmp.ge.f32.partialorder %v2073, 0.0
  %v8900 = vmul.f32 %v8581, %v8772
  %v8901 = vmul.f32 %v8583, %v8773
  %v8902 = vmul.f32 %v8585, %v8774
  %v8903 = vmul.f32 %v8587, %v8775
  %v8904 = vmul.f32 %v8589, %v8776
  %v8905 = vmul.f32 %v8591, %v8777
  %v8906 = vmul.f32 %v8593, %v8778
  %v8907 = vmul.f32 %v8595, %v8779
  %v8908 = vmul.f32 %v8597, %v8780
  %v8909 = vmul.f32 %v8599, %v8781
  %v8910 = vmul.f32 %v8601, %v8782
  %v8911 = vmul.f32 %v8603, %v8783
  %v8912 = vmul.f32 %v8605, %v8784
  %v8913 = vmul.f32 %v8607, %v8785
  %v8914 = vmul.f32 %v8609, %v8786
  %v8915 = vmul.f32 %v8611, %v8787
  %v8916 = vmul.f32 %v8613, %v8788
  %v8917 = vmul.f32 %v8615, %v8789
  %v8918 = vmul.f32 %v8617, %v8790
  %v8919 = vmul.f32 %v8619, %v8791
  %v8920 = vmul.f32 %v8621, %v8792
  %v8921 = vmul.f32 %v8623, %v8793
  %v8922 = vmul.f32 %v8625, %v8794
  %v8923 = vmul.f32 %v8627, %v8795
  %v8924 = vmul.f32 %v8629, %v8796
  %v8925 = vmul.f32 %v8631, %v8797
  %v8926 = vmul.f32 %v8633, %v8798
  %v8927 = vmul.f32 %v8635, %v8799
  %v8928 = vmul.f32 %v8637, %v8800
  %v8929 = vmul.f32 %v8639, %v8801
  %v8930 = vmul.f32 %v8641, %v8802
  %v8931 = vmul.f32 %v8643, %v8803
  %v8932 = vmul.f32 %v8645, %v8804
  %v8933 = vmul.f32 %v8647, %v8805
  %v8934 = vmul.f32 %v8649, %v8806
  %v8935 = vmul.f32 %v8651, %v8807
  %v8936 = vmul.f32 %v8653, %v8808
  %v8937 = vmul.f32 %v8655, %v8809
  %v8938 = vmul.f32 %v8657, %v8810
  %v8939 = vmul.f32 %v8659, %v8811
  %v8940 = vmul.f32 %v8661, %v8812
  %v8941 = vmul.f32 %v8663, %v8813
  %v8942 = vmul.f32 %v8665, %v8814
  %v8943 = vmul.f32 %v8667, %v8815
  %v8944 = vmul.f32 %v8669, %v8816
  %v8945 = vmul.f32 %v8671, %v8817
  %v8946 = vmul.f32 %v8673, %v8818
  %v8947 = vmul.f32 %v8675, %v8819
  %v8948 = vmul.f32 %v8677, %v8820
  %v8949 = vmul.f32 %v8679, %v8821
  %v8950 = vmul.f32 %v8681, %v8822
  %v8951 = vmul.f32 %v8683, %v8823
  %v8952 = vmul.f32 %v8685, %v8824
  %v8953 = vmul.f32 %v8687, %v8825
  %v8954 = vmul.f32 %v8689, %v8826
  %v8955 = vmul.f32 %v8691, %v8827
  %v8956 = vmul.f32 %v8693, %v8828
  %v8957 = vmul.f32 %v8695, %v8829
  %v8958 = vmul.f32 %v8697, %v8830
  %v8959 = vmul.f32 %v8699, %v8831
  %v8960 = vmul.f32 %v8701, %v8832
  %v8961 = vmul.f32 %v8703, %v8833
  %v8962 = vmul.f32 %v8705, %v8834
  %v8963 = vmul.f32 %v8707, %v8835
  %v8964 = vsel %vm8836, %v8772, %v8900
  %v8965 = vsel %vm8837, %v8773, %v8901
  %v8966 = vsel %vm8838, %v8774, %v8902
  %v8967 = vsel %vm8839, %v8775, %v8903
  %v8968 = vsel %vm8840, %v8776, %v8904
  %v8969 = vsel %vm8841, %v8777, %v8905
  %v8970 = vsel %vm8842, %v8778, %v8906
  %v8971 = vsel %vm8843, %v8779, %v8907
  %v8972 = vsel %vm8844, %v8780, %v8908
  %v8973 = vsel %vm8845, %v8781, %v8909
  %v8974 = vsel %vm8846, %v8782, %v8910
  %v8975 = vsel %vm8847, %v8783, %v8911
  %v8976 = vsel %vm8848, %v8784, %v8912
  %v8977 = vsel %vm8849, %v8785, %v8913
  %v8978 = vsel %vm8850, %v8786, %v8914
  %v8979 = vsel %vm8851, %v8787, %v8915
  %v8980 = vsel %vm8852, %v8788, %v8916
  %v8981 = vsel %vm8853, %v8789, %v8917
  %v8982 = vsel %vm8854, %v8790, %v8918
  %v8983 = vsel %vm8855, %v8791, %v8919
  %v8984 = vsel %vm8856, %v8792, %v8920
  %v8985 = vsel %vm8857, %v8793, %v8921
  %v8986 = vsel %vm8858, %v8794, %v8922
  %v8987 = vsel %vm8859, %v8795, %v8923
  %v8988 = vsel %vm8860, %v8796, %v8924
  %v8989 = vsel %vm8861, %v8797, %v8925
  %v8990 = vsel %vm8862, %v8798, %v8926
  %v8991 = vsel %vm8863, %v8799, %v8927
  %v8992 = vsel %vm8864, %v8800, %v8928
  %v8993 = vsel %vm8865, %v8801, %v8929
  %v8994 = vsel %vm8866, %v8802, %v8930
  %v8995 = vsel %vm8867, %v8803, %v8931
  %v8996 = vsel %vm8868, %v8804, %v8932
  %v8997 = vsel %vm8869, %v8805, %v8933
  %v8998 = vsel %vm8870, %v8806, %v8934
  %v8999 = vsel %vm8871, %v8807, %v8935
  %v9000 = vsel %vm8872, %v8808, %v8936
  %v9001 = vsel %vm8873, %v8809, %v8937
  %v9002 = vsel %vm8874, %v8810, %v8938
  %v9003 = vsel %vm8875, %v8811, %v8939
  %v9004 = vsel %vm8876, %v8812, %v8940
  %v9005 = vsel %vm8877, %v8813, %v8941
  %v9006 = vsel %vm8878, %v8814, %v8942
  %v9007 = vsel %vm8879, %v8815, %v8943
  %v9008 = vsel %vm8880, %v8816, %v8944
  %v9009 = vsel %vm8881, %v8817, %v8945
  %v9010 = vsel %vm8882, %v8818, %v8946
  %v9011 = vsel %vm8883, %v8819, %v8947
  %v9012 = vsel %vm8884, %v8820, %v8948
  %v9013 = vsel %vm8885, %v8821, %v8949
  %v9014 = vsel %vm8886, %v8822, %v8950
  %v9015 = vsel %vm8887, %v8823, %v8951
  %v9016 = vsel %vm8888, %v8824, %v8952
  %v9017 = vsel %vm8889, %v8825, %v8953
  %v9018 = vsel %vm8890, %v8826, %v8954
  %v9019 = vsel %vm8891, %v8827, %v8955
  %v9020 = vsel %vm8892, %v8828, %v8956
  %v9021 = vsel %vm8893, %v8829, %v8957
  %v9022 = vsel %vm8894, %v8830, %v8958
  %v9023 = vsel %vm8895, %v8831, %v8959
  %v9024 = vsel %vm8896, %v8832, %v8960
  %v9025 = vsel %vm8897, %v8833, %v8961
  %v9026 = vsel %vm8898, %v8834, %v8962
  %v9027 = vsel %vm8899, %v8835, %v8963
  %v9028 = vmul.f32 %v1884, %v8964
  %v9029 = vmul.f32 %v1887, %v8965
  %v9030 = vmul.f32 %v1890, %v8966
  %v9031 = vmul.f32 %v1893, %v8967
  %v9032 = vmul.f32 %v1896, %v8968
  %v9033 = vmul.f32 %v1899, %v8969
  %v9034 = vmul.f32 %v1902, %v8970
  %v9035 = vmul.f32 %v1905, %v8971
  %v9036 = vmul.f32 %v1908, %v8972
  %v9037 = vmul.f32 %v1911, %v8973
  %v9038 = vmul.f32 %v1914, %v8974
  %v9039 = vmul.f32 %v1917, %v8975
  %v9040 = vmul.f32 %v1920, %v8976
  %v9041 = vmul.f32 %v1923, %v8977
  %v9042 = vmul.f32 %v1926, %v8978
  %v9043 = vmul.f32 %v1929, %v8979
  %v9044 = vmul.f32 %v1932, %v8980
  %v9045 = vmul.f32 %v1935, %v8981
  %v9046 = vmul.f32 %v1938, %v8982
  %v9047 = vmul.f32 %v1941, %v8983
  %v9048 = vmul.f32 %v1944, %v8984
  %v9049 = vmul.f32 %v1947, %v8985
  %v9050 = vmul.f32 %v1950, %v8986
  %v9051 = vmul.f32 %v1953, %v8987
  %v9052 = vmul.f32 %v1956, %v8988
  %v9053 = vmul.f32 %v1959, %v8989
  %v9054 = vmul.f32 %v1962, %v8990
  %v9055 = vmul.f32 %v1965, %v8991
  %v9056 = vmul.f32 %v1968, %v8992
  %v9057 = vmul.f32 %v1971, %v8993
  %v9058 = vmul.f32 %v1974, %v8994
  %v9059 = vmul.f32 %v1977, %v8995
  %v9060 = vmul.f32 %v1980, %v8996
  %v9061 = vmul.f32 %v1983, %v8997
  %v9062 = vmul.f32 %v1986, %v8998
  %v9063 = vmul.f32 %v1989, %v8999
  %v9064 = vmul.f32 %v1992, %v9000
  %v9065 = vmul.f32 %v1995, %v9001
  %v9066 = vmul.f32 %v1998, %v9002
  %v9067 = vmul.f32 %v2001, %v9003
  %v9068 = vmul.f32 %v2004, %v9004
  %v9069 = vmul.f32 %v2007, %v9005
  %v9070 = vmul.f32 %v2010, %v9006
  %v9071 = vmul.f32 %v2013, %v9007
  %v9072 = vmul.f32 %v2016, %v9008
  %v9073 = vmul.f32 %v2019, %v9009
  %v9074 = vmul.f32 %v2022, %v9010
  %v9075 = vmul.f32 %v2025, %v9011
  %v9076 = vmul.f32 %v2028, %v9012
  %v9077 = vmul.f32 %v2031, %v9013
  %v9078 = vmul.f32 %v2034, %v9014
  %v9079 = vmul.f32 %v2037, %v9015
  %v9080 = vmul.f32 %v2040, %v9016
  %v9081 = vmul.f32 %v2043, %v9017
  %v9082 = vmul.f32 %v2046, %v9018
  %v9083 = vmul.f32 %v2049, %v9019
  %v9084 = vmul.f32 %v2052, %v9020
  %v9085 = vmul.f32 %v2055, %v9021
  %v9086 = vmul.f32 %v2058, %v9022
  %v9087 = vmul.f32 %v2061, %v9023
  %v9088 = vmul.f32 %v2064, %v9024
  %v9089 = vmul.f32 %v2067, %v9025
  %v9090 = vmul.f32 %v2070, %v9026
  %v9091 = vmul.f32 %v2073, %v9027
  %9156 = vrot.lane.b32.xlu0 %v9028, 112
  %v9157 = vpop.permute.xlu0 %9156
  %9158 = vrot.lane.b32.xlu0 %v9029, 112
  %v9159 = vpop.permute.xlu0 %9158
  %9160 = vrot.lane.b32.xlu0 %v9030, 112
  %v9161 = vpop.permute.xlu0 %9160
  %9162 = vrot.lane.b32.xlu0 %v9031, 112
  %v9163 = vpop.permute.xlu0 %9162
  %9164 = vrot.lane.b32.xlu0 %v9032, 112
  %v9165 = vpop.permute.xlu0 %9164
  %9166 = vrot.lane.b32.xlu0 %v9033, 112
  %v9167 = vpop.permute.xlu0 %9166
  %9168 = vrot.lane.b32.xlu0 %v9034, 112
  %v9169 = vpop.permute.xlu0 %9168
  %9170 = vrot.lane.b32.xlu0 %v9035, 112
  %v9171 = vpop.permute.xlu0 %9170
  %9172 = vrot.lane.b32.xlu0 %v9036, 112
  %v9173 = vpop.permute.xlu0 %9172
  %9174 = vrot.lane.b32.xlu0 %v9037, 112
  %v9175 = vpop.permute.xlu0 %9174
  %9176 = vrot.lane.b32.xlu0 %v9038, 112
  %v9177 = vpop.permute.xlu0 %9176
  %9178 = vrot.lane.b32.xlu0 %v9039, 112
  %v9179 = vpop.permute.xlu0 %9178
  %9180 = vrot.lane.b32.xlu0 %v9040, 112
  %v9181 = vpop.permute.xlu0 %9180
  %9182 = vrot.lane.b32.xlu0 %v9041, 112
  %v9183 = vpop.permute.xlu0 %9182
  %9184 = vrot.lane.b32.xlu0 %v9042, 112
  %v9185 = vpop.permute.xlu0 %9184
  %9186 = vrot.lane.b32.xlu0 %v9043, 112
  %v9187 = vpop.permute.xlu0 %9186
  %9188 = vrot.lane.b32.xlu0 %v9044, 112
  %v9189 = vpop.permute.xlu0 %9188
  %9190 = vrot.lane.b32.xlu0 %v9045, 112
  %v9191 = vpop.permute.xlu0 %9190
  %9192 = vrot.lane.b32.xlu0 %v9046, 112
  %v9193 = vpop.permute.xlu0 %9192
  %9194 = vrot.lane.b32.xlu0 %v9047, 112
  %v9195 = vpop.permute.xlu0 %9194
  %9196 = vrot.lane.b32.xlu0 %v9048, 112
  %v9197 = vpop.permute.xlu0 %9196
  %9198 = vrot.lane.b32.xlu0 %v9049, 112
  %v9199 = vpop.permute.xlu0 %9198
  %9200 = vrot.lane.b32.xlu0 %v9050, 112
  %v9201 = vpop.permute.xlu0 %9200
  %9202 = vrot.lane.b32.xlu0 %v9051, 112
  %v9203 = vpop.permute.xlu0 %9202
  %9204 = vrot.lane.b32.xlu0 %v9052, 112
  %v9205 = vpop.permute.xlu0 %9204
  %9206 = vrot.lane.b32.xlu0 %v9053, 112
  %v9207 = vpop.permute.xlu0 %9206
  %9208 = vrot.lane.b32.xlu0 %v9054, 112
  %v9209 = vpop.permute.xlu0 %9208
  %9210 = vrot.lane.b32.xlu0 %v9055, 112
  %v9211 = vpop.permute.xlu0 %9210
  %9212 = vrot.lane.b32.xlu0 %v9056, 112
  %v9213 = vpop.permute.xlu0 %9212
  %9214 = vrot.lane.b32.xlu0 %v9057, 112
  %v9215 = vpop.permute.xlu0 %9214
  %9216 = vrot.lane.b32.xlu0 %v9058, 112
  %v9217 = vpop.permute.xlu0 %9216
  %9218 = vrot.lane.b32.xlu0 %v9059, 112
  %v9219 = vpop.permute.xlu0 %9218
  %9220 = vrot.lane.b32.xlu0 %v9060, 112
  %v9221 = vpop.permute.xlu0 %9220
  %9222 = vrot.lane.b32.xlu0 %v9061, 112
  %v9223 = vpop.permute.xlu0 %9222
  %9224 = vrot.lane.b32.xlu0 %v9062, 112
  %v9225 = vpop.permute.xlu0 %9224
  %9226 = vrot.lane.b32.xlu0 %v9063, 112
  %v9227 = vpop.permute.xlu0 %9226
  %9228 = vrot.lane.b32.xlu0 %v9064, 112
  %v9229 = vpop.permute.xlu0 %9228
  %9230 = vrot.lane.b32.xlu0 %v9065, 112
  %v9231 = vpop.permute.xlu0 %9230
  %9232 = vrot.lane.b32.xlu0 %v9066, 112
  %v9233 = vpop.permute.xlu0 %9232
  %9234 = vrot.lane.b32.xlu0 %v9067, 112
  %v9235 = vpop.permute.xlu0 %9234
  %9236 = vrot.lane.b32.xlu0 %v9068, 112
  %v9237 = vpop.permute.xlu0 %9236
  %9238 = vrot.lane.b32.xlu0 %v9069, 112
  %v9239 = vpop.permute.xlu0 %9238
  %9240 = vrot.lane.b32.xlu0 %v9070, 112
  %v9241 = vpop.permute.xlu0 %9240
  %9242 = vrot.lane.b32.xlu0 %v9071, 112
  %v9243 = vpop.permute.xlu0 %9242
  %9244 = vrot.lane.b32.xlu0 %v9072, 112
  %v9245 = vpop.permute.xlu0 %9244
  %9246 = vrot.lane.b32.xlu0 %v9073, 112
  %v9247 = vpop.permute.xlu0 %9246
  %9248 = vrot.lane.b32.xlu0 %v9074, 112
  %v9249 = vpop.permute.xlu0 %9248
  %9250 = vrot.lane.b32.xlu0 %v9075, 112
  %v9251 = vpop.permute.xlu0 %9250
  %9252 = vrot.lane.b32.xlu0 %v9076, 112
  %v9253 = vpop.permute.xlu0 %9252
  %9254 = vrot.lane.b32.xlu0 %v9077, 112
  %v9255 = vpop.permute.xlu0 %9254
  %9256 = vrot.lane.b32.xlu0 %v9078, 112
  %v9257 = vpop.permute.xlu0 %9256
  %9258 = vrot.lane.b32.xlu0 %v9079, 112
  %v9259 = vpop.permute.xlu0 %9258
  %9260 = vrot.lane.b32.xlu0 %v9080, 112
  %v9261 = vpop.permute.xlu0 %9260
  %9262 = vrot.lane.b32.xlu0 %v9081, 112
  %v9263 = vpop.permute.xlu0 %9262
  %9264 = vrot.lane.b32.xlu0 %v9082, 112
  %v9265 = vpop.permute.xlu0 %9264
  %9266 = vrot.lane.b32.xlu0 %v9083, 112
  %v9267 = vpop.permute.xlu0 %9266
  %9268 = vrot.lane.b32.xlu0 %v9084, 112
  %v9269 = vpop.permute.xlu0 %9268
  %9270 = vrot.lane.b32.xlu0 %v9085, 112
  %v9271 = vpop.permute.xlu0 %9270
  %9272 = vrot.lane.b32.xlu0 %v9086, 112
  %v9273 = vpop.permute.xlu0 %9272
  %9274 = vrot.lane.b32.xlu0 %v9087, 112
  %v9275 = vpop.permute.xlu0 %9274
  %9276 = vrot.lane.b32.xlu0 %v9088, 112
  %v9277 = vpop.permute.xlu0 %9276
  %9278 = vrot.lane.b32.xlu0 %v9089, 112
  %v9279 = vpop.permute.xlu0 %9278
  %9280 = vrot.lane.b32.xlu0 %v9090, 112
  %v9281 = vpop.permute.xlu0 %9280
  %9282 = vrot.lane.b32.xlu0 %v9091, 112
  %v9283 = vpop.permute.xlu0 %9282
  %v9348 = vmul.f32 %v8261, %v9157
  %v9349 = vmul.f32 %v8264, %v9159
  %v9350 = vmul.f32 %v8267, %v9161
  %v9351 = vmul.f32 %v8270, %v9163
  %v9352 = vmul.f32 %v8273, %v9165
  %v9353 = vmul.f32 %v8276, %v9167
  %v9354 = vmul.f32 %v8279, %v9169
  %v9355 = vmul.f32 %v8282, %v9171
  %v9356 = vmul.f32 %v8285, %v9173
  %v9357 = vmul.f32 %v8288, %v9175
  %v9358 = vmul.f32 %v8291, %v9177
  %v9359 = vmul.f32 %v8294, %v9179
  %v9360 = vmul.f32 %v8297, %v9181
  %v9361 = vmul.f32 %v8300, %v9183
  %v9362 = vmul.f32 %v8303, %v9185
  %v9363 = vmul.f32 %v8306, %v9187
  %v9364 = vmul.f32 %v8309, %v9189
  %v9365 = vmul.f32 %v8312, %v9191
  %v9366 = vmul.f32 %v8315, %v9193
  %v9367 = vmul.f32 %v8318, %v9195
  %v9368 = vmul.f32 %v8321, %v9197
  %v9369 = vmul.f32 %v8324, %v9199
  %v9370 = vmul.f32 %v8327, %v9201
  %v9371 = vmul.f32 %v8330, %v9203
  %v9372 = vmul.f32 %v8333, %v9205
  %v9373 = vmul.f32 %v8336, %v9207
  %v9374 = vmul.f32 %v8339, %v9209
  %v9375 = vmul.f32 %v8342, %v9211
  %v9376 = vmul.f32 %v8345, %v9213
  %v9377 = vmul.f32 %v8348, %v9215
  %v9378 = vmul.f32 %v8351, %v9217
  %v9379 = vmul.f32 %v8354, %v9219
  %v9380 = vmul.f32 %v8357, %v9221
  %v9381 = vmul.f32 %v8360, %v9223
  %v9382 = vmul.f32 %v8363, %v9225
  %v9383 = vmul.f32 %v8366, %v9227
  %v9384 = vmul.f32 %v8369, %v9229
  %v9385 = vmul.f32 %v8372, %v9231
  %v9386 = vmul.f32 %v8375, %v9233
  %v9387 = vmul.f32 %v8378, %v9235
  %v9388 = vmul.f32 %v8381, %v9237
  %v9389 = vmul.f32 %v8384, %v9239
  %v9390 = vmul.f32 %v8387, %v9241
  %v9391 = vmul.f32 %v8390, %v9243
  %v9392 = vmul.f32 %v8393, %v9245
  %v9393 = vmul.f32 %v8396, %v9247
  %v9394 = vmul.f32 %v8399, %v9249
  %v9395 = vmul.f32 %v8402, %v9251
  %v9396 = vmul.f32 %v8405, %v9253
  %v9397 = vmul.f32 %v8408, %v9255
  %v9398 = vmul.f32 %v8411, %v9257
  %v9399 = vmul.f32 %v8414, %v9259
  %v9400 = vmul.f32 %v8417, %v9261
  %v9401 = vmul.f32 %v8420, %v9263
  %v9402 = vmul.f32 %v8423, %v9265
  %v9403 = vmul.f32 %v8426, %v9267
  %v9404 = vmul.f32 %v8429, %v9269
  %v9405 = vmul.f32 %v8432, %v9271
  %v9406 = vmul.f32 %v8435, %v9273
  %v9407 = vmul.f32 %v8438, %v9275
  %v9408 = vmul.f32 %v8441, %v9277
  %v9409 = vmul.f32 %v8444, %v9279
  %v9410 = vmul.f32 %v8447, %v9281
  %v9411 = vmul.f32 %v8450, %v9283
  %v9412 = vld [vmem:[%s12] sm:$0xff]
  %v9413 = vld [vmem:[%s12 + $0x8] sm:$0xff]
  %v9415 = vsel %vm2078, %v9348, 0
  %v9418 = vsel %vm2078, %v9349, 0
  %v9421 = vsel %vm2078, %v9350, 0
  %v9424 = vsel %vm2078, %v9351, 0
  %v9427 = vsel %vm2078, %v9352, 0
  %v9430 = vsel %vm2078, %v9353, 0
  %v9433 = vsel %vm2078, %v9354, 0
  %v9436 = vsel %vm2078, %v9355, 0
  %v9439 = vsel %vm2078, %v9356, 0
  %v9442 = vsel %vm2078, %v9357, 0
  %v9445 = vsel %vm2078, %v9358, 0
  %v9448 = vsel %vm2078, %v9359, 0
  %v9451 = vsel %vm2078, %v9360, 0
  %v9454 = vsel %vm2078, %v9361, 0
  %v9457 = vsel %vm2078, %v9362, 0
  %v9460 = vsel %vm2078, %v9363, 0
  %v9463 = vsel %vm2078, %v9364, 0
  %v9466 = vsel %vm2078, %v9365, 0
  %v9469 = vsel %vm2078, %v9366, 0
  %v9472 = vsel %vm2078, %v9367, 0
  %v9475 = vsel %vm2078, %v9368, 0
  %v9478 = vsel %vm2078, %v9369, 0
  %v9481 = vsel %vm2078, %v9370, 0
  %v9484 = vsel %vm2078, %v9371, 0
  %v9487 = vsel %vm2078, %v9372, 0
  %v9490 = vsel %vm2078, %v9373, 0
  %v9493 = vsel %vm2078, %v9374, 0
  %v9496 = vsel %vm2078, %v9375, 0
  %v9499 = vsel %vm2078, %v9376, 0
  %v9502 = vsel %vm2078, %v9377, 0
  %v9505 = vsel %vm2078, %v9378, 0
  %v9508 = vsel %vm2078, %v9379, 0
  %v9511 = vsel %vm2078, %v9380, 0
  %v9514 = vsel %vm2078, %v9381, 0
  %v9517 = vsel %vm2078, %v9382, 0
  %v9520 = vsel %vm2078, %v9383, 0
  %v9523 = vsel %vm2078, %v9384, 0
  %v9526 = vsel %vm2078, %v9385, 0
  %v9529 = vsel %vm2078, %v9386, 0
  %v9532 = vsel %vm2078, %v9387, 0
  %v9535 = vsel %vm2078, %v9388, 0
  %v9538 = vsel %vm2078, %v9389, 0
  %v9541 = vsel %vm2078, %v9390, 0
  %v9544 = vsel %vm2078, %v9391, 0
  %v9547 = vsel %vm2078, %v9392, 0
  %v9550 = vsel %vm2078, %v9393, 0
  %v9553 = vsel %vm2078, %v9394, 0
  %v9556 = vsel %vm2078, %v9395, 0
  %v9559 = vsel %vm2078, %v9396, 0
  %v9562 = vsel %vm2078, %v9397, 0
  %v9565 = vsel %vm2078, %v9398, 0
  %v9568 = vsel %vm2078, %v9399, 0
  %v9571 = vsel %vm2078, %v9400, 0
  %v9574 = vsel %vm2078, %v9401, 0
  %v9577 = vsel %vm2078, %v9402, 0
  %v9580 = vsel %vm2078, %v9403, 0
  %v9583 = vsel %vm2078, %v9404, 0
  %v9586 = vsel %vm2078, %v9405, 0
  %v9589 = vsel %vm2078, %v9406, 0
  %v9592 = vsel %vm2078, %v9407, 0
  %v9595 = vsel %vm2078, %v9408, 0
  %v9598 = vsel %vm2078, %v9409, 0
  %v9601 = vsel %vm2078, %v9410, 0
  %v9604 = vsel %vm2078, %v9411, 0
  %9606 = vmatpush.msra.mxu0 0.0
  %9607 = vmatpush.msra.mxu0 0.0
  %9608 = vmatpush.msra.mxu0 0.0
  %9609 = vmatpush.msra.mxu0 0.0
  %9610 = vmatpush.msra.mxu0 0.0
  %9611 = vmatpush.msra.mxu0 0.0
  %9612 = vmatpush.msra.mxu0 0.0
  %9613 = vmatpush.msra.mxu0 0.0
  %9614 = vmatpush.msra.mxu0 0.0
  %9615 = vmatpush.msra.mxu0 0.0
  %9616 = vmatpush.msra.mxu0 0.0
  %9617 = vmatpush.msra.mxu0 0.0
  %9618 = vmatpush.msra.mxu0 0.0
  %9619 = vmatpush.msra.mxu0 0.0
  %9620 = vmatpush.msra.mxu0 %v9413
  %9621 = vmatpush.msra.mxu0 %v9412
  %9622 = vmatmul.f32.gmra.mxu0 %v9415
  %v9623 = vpop.f32.mrf.mxu0
  %v9624 = vadd.f32 0.0, %v9623
  %9625 = vmatmul.f32.gmra.mxu0 %v9418
  %v9626 = vpop.f32.mrf.mxu0
  %v9627 = vadd.f32 0.0, %v9626
  %9628 = vmatmul.f32.gmra.mxu0 %v9421
  %v9629 = vpop.f32.mrf.mxu0
  %v9630 = vadd.f32 0.0, %v9629
  %9631 = vmatmul.f32.gmra.mxu0 %v9424
  %v9632 = vpop.f32.mrf.mxu0
  %v9633 = vadd.f32 0.0, %v9632
  %9634 = vmatmul.f32.gmra.mxu0 %v9427
  %v9635 = vpop.f32.mrf.mxu0
  %v9636 = vadd.f32 0.0, %v9635
  %9637 = vmatmul.f32.gmra.mxu0 %v9430
  %v9638 = vpop.f32.mrf.mxu0
  %v9639 = vadd.f32 0.0, %v9638
  %9640 = vmatmul.f32.gmra.mxu0 %v9433
  %v9641 = vpop.f32.mrf.mxu0
  %v9642 = vadd.f32 0.0, %v9641
  %9643 = vmatmul.f32.gmra.mxu0 %v9436
  %v9644 = vpop.f32.mrf.mxu0
  %v9645 = vadd.f32 0.0, %v9644
  %9646 = vmatmul.f32.gmra.mxu0 %v9439
  %v9647 = vpop.f32.mrf.mxu0
  %v9648 = vadd.f32 0.0, %v9647
  %9649 = vmatmul.f32.gmra.mxu0 %v9442
  %v9650 = vpop.f32.mrf.mxu0
  %v9651 = vadd.f32 0.0, %v9650
  %9652 = vmatmul.f32.gmra.mxu0 %v9445
  %v9653 = vpop.f32.mrf.mxu0
  %v9654 = vadd.f32 0.0, %v9653
  %9655 = vmatmul.f32.gmra.mxu0 %v9448
  %v9656 = vpop.f32.mrf.mxu0
  %v9657 = vadd.f32 0.0, %v9656
  %9658 = vmatmul.f32.gmra.mxu0 %v9451
  %v9659 = vpop.f32.mrf.mxu0
  %v9660 = vadd.f32 0.0, %v9659
  %9661 = vmatmul.f32.gmra.mxu0 %v9454
  %v9662 = vpop.f32.mrf.mxu0
  %v9663 = vadd.f32 0.0, %v9662
  %9664 = vmatmul.f32.gmra.mxu0 %v9457
  %v9665 = vpop.f32.mrf.mxu0
  %v9666 = vadd.f32 0.0, %v9665
  %9667 = vmatmul.f32.gmra.mxu0 %v9460
  %v9668 = vpop.f32.mrf.mxu0
  %v9669 = vadd.f32 0.0, %v9668
  %9670 = vmatmul.f32.gmra.mxu0 %v9463
  %v9671 = vpop.f32.mrf.mxu0
  %v9672 = vadd.f32 0.0, %v9671
  %9673 = vmatmul.f32.gmra.mxu0 %v9466
  %v9674 = vpop.f32.mrf.mxu0
  %v9675 = vadd.f32 0.0, %v9674
  %9676 = vmatmul.f32.gmra.mxu0 %v9469
  %v9677 = vpop.f32.mrf.mxu0
  %v9678 = vadd.f32 0.0, %v9677
  %9679 = vmatmul.f32.gmra.mxu0 %v9472
  %v9680 = vpop.f32.mrf.mxu0
  %v9681 = vadd.f32 0.0, %v9680
  %9682 = vmatmul.f32.gmra.mxu0 %v9475
  %v9683 = vpop.f32.mrf.mxu0
  %v9684 = vadd.f32 0.0, %v9683
  %9685 = vmatmul.f32.gmra.mxu0 %v9478
  %v9686 = vpop.f32.mrf.mxu0
  %v9687 = vadd.f32 0.0, %v9686
  %9688 = vmatmul.f32.gmra.mxu0 %v9481
  %v9689 = vpop.f32.mrf.mxu0
  %v9690 = vadd.f32 0.0, %v9689
  %9691 = vmatmul.f32.gmra.mxu0 %v9484
  %v9692 = vpop.f32.mrf.mxu0
  %v9693 = vadd.f32 0.0, %v9692
  %9694 = vmatmul.f32.gmra.mxu0 %v9487
  %v9695 = vpop.f32.mrf.mxu0
  %v9696 = vadd.f32 0.0, %v9695
  %9697 = vmatmul.f32.gmra.mxu0 %v9490
  %v9698 = vpop.f32.mrf.mxu0
  %v9699 = vadd.f32 0.0, %v9698
  %9700 = vmatmul.f32.gmra.mxu0 %v9493
  %v9701 = vpop.f32.mrf.mxu0
  %v9702 = vadd.f32 0.0, %v9701
  %9703 = vmatmul.f32.gmra.mxu0 %v9496
  %v9704 = vpop.f32.mrf.mxu0
  %v9705 = vadd.f32 0.0, %v9704
  %9706 = vmatmul.f32.gmra.mxu0 %v9499
  %v9707 = vpop.f32.mrf.mxu0
  %v9708 = vadd.f32 0.0, %v9707
  %9709 = vmatmul.f32.gmra.mxu0 %v9502
  %v9710 = vpop.f32.mrf.mxu0
  %v9711 = vadd.f32 0.0, %v9710
  %9712 = vmatmul.f32.gmra.mxu0 %v9505
  %v9713 = vpop.f32.mrf.mxu0
  %v9714 = vadd.f32 0.0, %v9713
  %9715 = vmatmul.f32.gmra.mxu0 %v9508
  %v9716 = vpop.f32.mrf.mxu0
  %v9717 = vadd.f32 0.0, %v9716
  %9718 = vmatmul.f32.gmra.mxu0 %v9511
  %v9719 = vpop.f32.mrf.mxu0
  %v9720 = vadd.f32 0.0, %v9719
  %9721 = vmatmul.f32.gmra.mxu0 %v9514
  %v9722 = vpop.f32.mrf.mxu0
  %v9723 = vadd.f32 0.0, %v9722
  %9724 = vmatmul.f32.gmra.mxu0 %v9517
  %v9725 = vpop.f32.mrf.mxu0
  %v9726 = vadd.f32 0.0, %v9725
  %9727 = vmatmul.f32.gmra.mxu0 %v9520
  %v9728 = vpop.f32.mrf.mxu0
  %v9729 = vadd.f32 0.0, %v9728
  %9730 = vmatmul.f32.gmra.mxu0 %v9523
  %v9731 = vpop.f32.mrf.mxu0
  %v9732 = vadd.f32 0.0, %v9731
  %9733 = vmatmul.f32.gmra.mxu0 %v9526
  %v9734 = vpop.f32.mrf.mxu0
  %v9735 = vadd.f32 0.0, %v9734
  %9736 = vmatmul.f32.gmra.mxu0 %v9529
  %v9737 = vpop.f32.mrf.mxu0
  %v9738 = vadd.f32 0.0, %v9737
  %9739 = vmatmul.f32.gmra.mxu0 %v9532
  %v9740 = vpop.f32.mrf.mxu0
  %v9741 = vadd.f32 0.0, %v9740
  %9742 = vmatmul.f32.gmra.mxu0 %v9535
  %v9743 = vpop.f32.mrf.mxu0
  %v9744 = vadd.f32 0.0, %v9743
  %9745 = vmatmul.f32.gmra.mxu0 %v9538
  %v9746 = vpop.f32.mrf.mxu0
  %v9747 = vadd.f32 0.0, %v9746
  %9748 = vmatmul.f32.gmra.mxu0 %v9541
  %v9749 = vpop.f32.mrf.mxu0
  %v9750 = vadd.f32 0.0, %v9749
  %9751 = vmatmul.f32.gmra.mxu0 %v9544
  %v9752 = vpop.f32.mrf.mxu0
  %v9753 = vadd.f32 0.0, %v9752
  %9754 = vmatmul.f32.gmra.mxu0 %v9547
  %v9755 = vpop.f32.mrf.mxu0
  %v9756 = vadd.f32 0.0, %v9755
  %9757 = vmatmul.f32.gmra.mxu0 %v9550
  %v9758 = vpop.f32.mrf.mxu0
  %v9759 = vadd.f32 0.0, %v9758
  %9760 = vmatmul.f32.gmra.mxu0 %v9553
  %v9761 = vpop.f32.mrf.mxu0
  %v9762 = vadd.f32 0.0, %v9761
  %9763 = vmatmul.f32.gmra.mxu0 %v9556
  %v9764 = vpop.f32.mrf.mxu0
  %v9765 = vadd.f32 0.0, %v9764
  %9766 = vmatmul.f32.gmra.mxu0 %v9559
  %v9767 = vpop.f32.mrf.mxu0
  %v9768 = vadd.f32 0.0, %v9767
  %9769 = vmatmul.f32.gmra.mxu0 %v9562
  %v9770 = vpop.f32.mrf.mxu0
  %v9771 = vadd.f32 0.0, %v9770
  %9772 = vmatmul.f32.gmra.mxu0 %v9565
  %v9773 = vpop.f32.mrf.mxu0
  %v9774 = vadd.f32 0.0, %v9773
  %9775 = vmatmul.f32.gmra.mxu0 %v9568
  %v9776 = vpop.f32.mrf.mxu0
  %v9777 = vadd.f32 0.0, %v9776
  %9778 = vmatmul.f32.gmra.mxu0 %v9571
  %v9779 = vpop.f32.mrf.mxu0
  %v9780 = vadd.f32 0.0, %v9779
  %9781 = vmatmul.f32.gmra.mxu0 %v9574
  %v9782 = vpop.f32.mrf.mxu0
  %v9783 = vadd.f32 0.0, %v9782
  %9784 = vmatmul.f32.gmra.mxu0 %v9577
  %v9785 = vpop.f32.mrf.mxu0
  %v9786 = vadd.f32 0.0, %v9785
  %9787 = vmatmul.f32.gmra.mxu0 %v9580
  %v9788 = vpop.f32.mrf.mxu0
  %v9789 = vadd.f32 0.0, %v9788
  %9790 = vmatmul.f32.gmra.mxu0 %v9583
  %v9791 = vpop.f32.mrf.mxu0
  %v9792 = vadd.f32 0.0, %v9791
  %9793 = vmatmul.f32.gmra.mxu0 %v9586
  %v9794 = vpop.f32.mrf.mxu0
  %v9795 = vadd.f32 0.0, %v9794
  %9796 = vmatmul.f32.gmra.mxu0 %v9589
  %v9797 = vpop.f32.mrf.mxu0
  %v9798 = vadd.f32 0.0, %v9797
  %9799 = vmatmul.f32.gmra.mxu0 %v9592
  %v9800 = vpop.f32.mrf.mxu0
  %v9801 = vadd.f32 0.0, %v9800
  %9802 = vmatmul.f32.gmra.mxu0 %v9595
  %v9803 = vpop.f32.mrf.mxu0
  %v9804 = vadd.f32 0.0, %v9803
  %9805 = vmatmul.f32.gmra.mxu0 %v9598
  %v9806 = vpop.f32.mrf.mxu0
  %v9807 = vadd.f32 0.0, %v9806
  %9808 = vmatmul.f32.gmra.mxu0 %v9601
  %v9809 = vpop.f32.mrf.mxu0
  %v9810 = vadd.f32 0.0, %v9809
  %9811 = vmatmul.f32.gmra.mxu0 %v9604
  %v9812 = vpop.f32.mrf.mxu0
  %v9813 = vadd.f32 0.0, %v9812
  %9814 = vdwg.mxu0
  %9815 = vst.msk [vmem:[%s14] sm:$0xff] %vm121, %v9624
  %9816 = vst.msk [vmem:[%s14 + $0x8] sm:$0xff] %vm121, %v9627
  %9817 = vst.msk [vmem:[%s14 + $0x10] sm:$0xff] %vm121, %v9630
  %9818 = vst.msk [vmem:[%s14 + $0x18] sm:$0xff] %vm121, %v9633
  %9819 = vst.msk [vmem:[%s14 + $0x20] sm:$0xff] %vm121, %v9636
  %9820 = vst.msk [vmem:[%s14 + $0x28] sm:$0xff] %vm121, %v9639
  %9821 = vst.msk [vmem:[%s14 + $0x30] sm:$0xff] %vm121, %v9642
  %9822 = vst.msk [vmem:[%s14 + $0x38] sm:$0xff] %vm121, %v9645
  %9823 = vst.msk [vmem:[%s14 + $0x40] sm:$0xff] %vm121, %v9648
  %9824 = vst.msk [vmem:[%s14 + $0x48] sm:$0xff] %vm121, %v9651
  %9825 = vst.msk [vmem:[%s14 + $0x50] sm:$0xff] %vm121, %v9654
  %9826 = vst.msk [vmem:[%s14 + $0x58] sm:$0xff] %vm121, %v9657
  %9827 = vst.msk [vmem:[%s14 + $0x60] sm:$0xff] %vm121, %v9660
  %9828 = vst.msk [vmem:[%s14 + $0x68] sm:$0xff] %vm121, %v9663
  %9829 = vst.msk [vmem:[%s14 + $0x70] sm:$0xff] %vm121, %v9666
  %9830 = vst.msk [vmem:[%s14 + $0x78] sm:$0xff] %vm121, %v9669
  %9831 = vst.msk [vmem:[%s14 + $0x80] sm:$0xff] %vm121, %v9672
  %9832 = vst.msk [vmem:[%s14 + $0x88] sm:$0xff] %vm121, %v9675
  %9833 = vst.msk [vmem:[%s14 + $0x90] sm:$0xff] %vm121, %v9678
  %9834 = vst.msk [vmem:[%s14 + $0x98] sm:$0xff] %vm121, %v9681
  %9835 = vst.msk [vmem:[%s14 + $0xa0] sm:$0xff] %vm121, %v9684
  %9836 = vst.msk [vmem:[%s14 + $0xa8] sm:$0xff] %vm121, %v9687
  %9837 = vst.msk [vmem:[%s14 + $0xb0] sm:$0xff] %vm121, %v9690
  %9838 = vst.msk [vmem:[%s14 + $0xb8] sm:$0xff] %vm121, %v9693
  %9839 = vst.msk [vmem:[%s14 + $0xc0] sm:$0xff] %vm121, %v9696
  %9840 = vst.msk [vmem:[%s14 + $0xc8] sm:$0xff] %vm121, %v9699
  %9841 = vst.msk [vmem:[%s14 + $0xd0] sm:$0xff] %vm121, %v9702
  %9842 = vst.msk [vmem:[%s14 + $0xd8] sm:$0xff] %vm121, %v9705
  %9843 = vst.msk [vmem:[%s14 + $0xe0] sm:$0xff] %vm121, %v9708
  %9844 = vst.msk [vmem:[%s14 + $0xe8] sm:$0xff] %vm121, %v9711
  %9845 = vst.msk [vmem:[%s14 + $0xf0] sm:$0xff] %vm121, %v9714
  %9846 = vst.msk [vmem:[%s14 + $0xf8] sm:$0xff] %vm121, %v9717
  %9847 = vst.msk [vmem:[%s14 + $0x100] sm:$0xff] %vm121, %v9720
  %9848 = vst.msk [vmem:[%s14 + $0x108] sm:$0xff] %vm121, %v9723
  %9849 = vst.msk [vmem:[%s14 + $0x110] sm:$0xff] %vm121, %v9726
  %9850 = vst.msk [vmem:[%s14 + $0x118] sm:$0xff] %vm121, %v9729
  %9851 = vst.msk [vmem:[%s14 + $0x120] sm:$0xff] %vm121, %v9732
  %9852 = vst.msk [vmem:[%s14 + $0x128] sm:$0xff] %vm121, %v9735
  %9853 = vst.msk [vmem:[%s14 + $0x130] sm:$0xff] %vm121, %v9738
  %9854 = vst.msk [vmem:[%s14 + $0x138] sm:$0xff] %vm121, %v9741
  %9855 = vst.msk [vmem:[%s14 + $0x140] sm:$0xff] %vm121, %v9744
  %9856 = vst.msk [vmem:[%s14 + $0x148] sm:$0xff] %vm121, %v9747
  %9857 = vst.msk [vmem:[%s14 + $0x150] sm:$0xff] %vm121, %v9750
  %9858 = vst.msk [vmem:[%s14 + $0x158] sm:$0xff] %vm121, %v9753
  %9859 = vst.msk [vmem:[%s14 + $0x160] sm:$0xff] %vm121, %v9756
  %9860 = vst.msk [vmem:[%s14 + $0x168] sm:$0xff] %vm121, %v9759
  %9861 = vst.msk [vmem:[%s14 + $0x170] sm:$0xff] %vm121, %v9762
  %9862 = vst.msk [vmem:[%s14 + $0x178] sm:$0xff] %vm121, %v9765
  %9863 = vst.msk [vmem:[%s14 + $0x180] sm:$0xff] %vm121, %v9768
  %9864 = vst.msk [vmem:[%s14 + $0x188] sm:$0xff] %vm121, %v9771
  %9865 = vst.msk [vmem:[%s14 + $0x190] sm:$0xff] %vm121, %v9774
  %9866 = vst.msk [vmem:[%s14 + $0x198] sm:$0xff] %vm121, %v9777
  %9867 = vst.msk [vmem:[%s14 + $0x1a0] sm:$0xff] %vm121, %v9780
  %9868 = vst.msk [vmem:[%s14 + $0x1a8] sm:$0xff] %vm121, %v9783
  %9869 = vst.msk [vmem:[%s14 + $0x1b0] sm:$0xff] %vm121, %v9786
  %9870 = vst.msk [vmem:[%s14 + $0x1b8] sm:$0xff] %vm121, %v9789
  %9871 = vst.msk [vmem:[%s14 + $0x1c0] sm:$0xff] %vm121, %v9792
  %9872 = vst.msk [vmem:[%s14 + $0x1c8] sm:$0xff] %vm121, %v9795
  %9873 = vst.msk [vmem:[%s14 + $0x1d0] sm:$0xff] %vm121, %v9798
  %9874 = vst.msk [vmem:[%s14 + $0x1d8] sm:$0xff] %vm121, %v9801
  %9875 = vst.msk [vmem:[%s14 + $0x1e0] sm:$0xff] %vm121, %v9804
  %9876 = vst.msk [vmem:[%s14 + $0x1e8] sm:$0xff] %vm121, %v9807
  %9877 = vst.msk [vmem:[%s14 + $0x1f0] sm:$0xff] %vm121, %v9810
  %9878 = vst.msk [vmem:[%s14 + $0x1f8] sm:$0xff] %vm121, %v9813
  // Predicated region
  $region69: #{tpu_custom_call.1} parent=0 // pred_check
    _
  $region70: #{tpu_custom_call.1} parent=0 // pred_check_branch
    %9880 = sbr.rel (0) target = $region72
  $region71: #{tpu_custom_call.1} parent=0 // pred_region
    _
  $region72: #{tpu_custom_call.1} parent=0 // pred_fallthru
    _
  // Predicated region
  $region73: #{tpu_custom_call.1} parent=0 // pred_check
    _
  $region74: #{tpu_custom_call.1} parent=0 // pred_check_branch
    %9882 = sbr.rel (0) target = $region76
  $region75: #{tpu_custom_call.1} parent=0 // pred_region
    _
  $region76: #{tpu_custom_call.1} parent=0 // pred_fallthru
    _

</llo_original>
